<compile_context>
chip_gen: v5e
topology: v5e:2x2
jax: 0.10.0
libtpu: 0.0.40
codegen_flags: <defaults>
</compile_context>

<pallas_src>
import jax
import jax.numpy as jnp
from jax import lax
from jax.experimental import pallas as pl
from jax.experimental.pallas import tpu as pltpu

# ----------------------------- configuration -------------------------------
HIDDEN = 32            # config['hidden_size']
NUM_HEADS = 4
HEAD_DIM = HIDDEN // NUM_HEADS
INTERMEDIATE = 4 * HIDDEN
NUM_LAYERS = 2         # synthetic depth (module keeps hidden_dims = [h]*9)
NUM_CLASSES = 10
PAD_CLASSES = 128      # lane-dense classifier output; sliced to 10 in the wrapper
POOL = 2               # config['pooling_concatenate_size']
LN_EPS = 1e-12         # BertLayerNorm default (pytorch-pretrained-bert)

# row indices inside the stacked per-layer vector params (L, 6, H)
_BO, _G1, _BE1, _B2, _G2, _BE2 = range(6)

# fixed-arity zero index maps for full-array (VMEM-resident) weights
_ZERO_MAPS = {2: lambda i: (0, 0), 3: lambda i: (0, 0, 0)}


def _layernorm(x, g, b):
    mu = jnp.mean(x, axis=-1, keepdims=True)
    var = jnp.mean((x - mu) ** 2, axis=-1, keepdims=True)
    return (x - mu) * lax.rsqrt(var + LN_EPS) * g + b


# ------------------------------ fused kernel --------------------------------
def _vot_fused_kernel(x_ref, w_in_ref, b_in_ref, w_qkv_ref, b_qkv_ref,
                      w_o_ref, w1_ref, b1_ref, w2_ref, vec_ref,
                      w_cls_ref, b_cls_ref, o_ref):
    bt, s_len, cin = x_ref.shape
    rows = bt * s_len

    # ---- voxel embedding / input projection: all examples in one slab ----
    x = x_ref[...].reshape(rows, cin)                               # bf16 (Bt*S, Cin)
    h = jnp.dot(x, w_in_ref[...],
                preferred_element_type=jnp.float32) + b_in_ref[...]  # f32 (Bt*S, H)

    # per-head lane masks (hoisted; values are 0/1 so the bf16 copies are exact)
    lane = lax.broadcasted_iota(jnp.int32, (1, HIDDEN), 1)
    masks_f32 = [
        ((lane >= hh * HEAD_DIM) & (lane < (hh + 1) * HEAD_DIM)).astype(jnp.float32)
        for hh in range(NUM_HEADS)
    ]
    masks_bf16 = [m.astype(jnp.bfloat16) for m in masks_f32]
    scale = 1.0 / float(HEAD_DIM) ** 0.5

    for l in range(NUM_LAYERS):                                     # static unroll
        vec = vec_ref[l]                                            # (6, H) f32

        # ---- fused QKV: one (Bt*S,H)@(H,3H) MXU pass, static lane slices ----
        qkv = jnp.dot(h.astype(jnp.bfloat16), w_qkv_ref[l],
                      preferred_element_type=jnp.float32) + b_qkv_ref[l]
        q = (qkv[:, :HIDDEN] * scale).astype(jnp.bfloat16).reshape(bt, s_len, HIDDEN)
        k = qkv[:, HIDDEN:2 * HIDDEN].astype(jnp.bfloat16).reshape(bt, s_len, HIDDEN)
        v = qkv[:, 2 * HIDDEN:].astype(jnp.bfloat16).reshape(bt, s_len, HIDDEN)

        # ---- multi-head attention with stacked masked-Q copies ----
        # attention_mask buffer in the module is the scalar 1.0 -> no masking.
        # Head-masking Q is mathematically identical to slicing 8-lane heads;
        # stacking the 4 masked copies gives ONE (Bt,4S,H)x(Bt,S,H)^T score
        # matmul and ONE (Bt,4S,S)x(Bt,S,H) context matmul per layer.
        q4 = jnp.concatenate([q * m for m in masks_bf16], axis=1)   # (Bt, NH*S, H)
        scores = jnp.einsum('bqh,bkh->bqk', q4, k,
                            preferred_element_type=jnp.float32)     # (Bt, NH*S, S)
        scores = scores - jnp.max(scores, axis=-1, keepdims=True)
        p = jnp.exp(scores)
        p = p * pl.reciprocal(jnp.sum(p, axis=-1, keepdims=True), approx=True)
        ctx4 = jnp.einsum('bqk,bkh->bqh', p.astype(jnp.bfloat16), v,
                          preferred_element_type=jnp.float32)       # (Bt, NH*S, H)
        # re-concatenate heads: keep only head hh's lanes of its context block
        ctx = jnp.zeros((bt, s_len, HIDDEN), jnp.float32)
        for hh in range(NUM_HEADS):
            ctx = ctx + ctx4[:, hh * s_len:(hh + 1) * s_len, :] * masks_f32[hh]
        ctx = ctx.reshape(rows, HIDDEN)

        attn = jnp.dot(ctx.astype(jnp.bfloat16), w_o_ref[l],
                       preferred_element_type=jnp.float32) + vec[_BO:_BO + 1]
        h1 = _layernorm(h + attn, vec[_G1:_G1 + 1], vec[_BE1:_BE1 + 1])

        # ---- FFN ----
        f = jnp.dot(h1.astype(jnp.bfloat16), w1_ref[l],
                    preferred_element_type=jnp.float32) + b1_ref[l]
        # TODO(synk): pytorch-pretrained-bert uses exact erf GELU; tanh approx here.
        f = jax.nn.gelu(f, approximate=True)
        f = jnp.dot(f.astype(jnp.bfloat16), w2_ref[l],
                    preferred_element_type=jnp.float32) + vec[_B2:_B2 + 1]
        h = _layernorm(h1 + f, vec[_G2:_G2 + 1], vec[_BE2:_BE2 + 1])

    # ---- sequence mean-pool + classifier (lane-dense, padded to 128) ----
    pooled = jnp.mean(h.reshape(bt, s_len, HIDDEN), axis=1)         # (Bt, H)
    o_ref[0] = jnp.dot(pooled.astype(jnp.bfloat16), w_cls_ref[...],
                       preferred_element_type=jnp.float32) + b_cls_ref[...]


# ------------------------------ glue (plain JAX) -----------------------------
def downsample_concatenate(x, kernel):
    """x: (B, H, W, C) -> (B, H/k, W/k, k*k*C), matching the torch reference."""
    b, h, w, c = x.shape
    y = x.reshape(b, h, w // kernel, c * kernel)
    y = jnp.transpose(y, (0, 2, 1, 3))
    y = y.reshape(b, w // kernel, h // kernel, kernel * kernel * c)
    y = jnp.transpose(y, (0, 2, 1, 3))
    return y


_WEIGHT_NAMES = ("w_in", "b_in", "w_qkv", "b_qkv", "w_o", "w1", "b1", "w2",
                 "vec", "w_cls", "b_cls")


def _pick_batch_tile(b):
    # Tiny batches: whole batch per grid step (max MXU row occupancy).
    # Larger batches: up to 8 examples per step, but keep the grid >= 2 so
    # dimension_semantics=("parallel",) shards across both v7x TensorCores.
    if b <= 2:
        return b
    for bt in (8, 4, 2):
        if b % bt == 0 and b // bt >= 2:
            return bt
    return 1


def vot_forward(batch_images, params):
    # batch_images: NCHW (PyTorch layout)
    feats = jnp.transpose(batch_images, (0, 2, 3, 1))               # NHWC
    feats = downsample_concatenate(feats, POOL)                     # (B, H/p, W/p, p*p*3)
    b, hp, wp, cin = feats.shape
    s = hp * wp
    x = feats.reshape(b, s, cin).astype(jnp.bfloat16)               # bf16 input feed

    bt = _pick_batch_tile(b)
    n_tiles = b // bt

    weights = [params[n] for n in _WEIGHT_NAMES]

    in_specs = [pl.BlockSpec((bt, s, cin), lambda i: (i, 0, 0))]
    in_specs += [pl.BlockSpec(w.shape, _ZERO_MAPS[w.ndim]) for w in weights]

    logits = pl.pallas_call(
        _vot_fused_kernel,
        out_shape=jax.ShapeDtypeStruct((n_tiles, bt, PAD_CLASSES), jnp.float32),
        grid=(n_tiles,),
        in_specs=in_specs,
        out_specs=pl.BlockSpec((1, bt, PAD_CLASSES), lambda i: (i, 0, 0)),
        compiler_params=pltpu.CompilerParams(
            dimension_semantics=("parallel",)),
    )(x, *weights)
    return logits.reshape(b, PAD_CLASSES)[:, :NUM_CLASSES]


def init_params(key):
    cin = 3 * POOL ** 2
    scale = 0.02
    k = jax.random.split(key, 6)

    vec = jnp.zeros((NUM_LAYERS, 6, HIDDEN), jnp.float32)
    vec = vec.at[:, _G1, :].set(1.0).at[:, _G2, :].set(1.0)         # LN gains = 1

    def w(rng, shape):
        return (scale * jax.random.normal(rng, shape, jnp.float32)).astype(jnp.bfloat16)

    w_cls = jnp.zeros((HIDDEN, PAD_CLASSES), jnp.float32)
    w_cls = w_cls.at[:, :NUM_CLASSES].set(
        scale * jax.random.normal(k[5], (HIDDEN, NUM_CLASSES), jnp.float32))

    return {
        "w_in": w(k[0], (cin, HIDDEN)),
        "b_in": jnp.zeros((1, HIDDEN), jnp.float32),
        "w_qkv": w(k[1], (NUM_LAYERS, HIDDEN, 3 * HIDDEN)),          # fused Q|K|V
        "b_qkv": jnp.zeros((NUM_LAYERS, 1, 3 * HIDDEN), jnp.float32),
        "w_o": w(k[2], (NUM_LAYERS, HIDDEN, HIDDEN)),
        "w1": w(k[3], (NUM_LAYERS, HIDDEN, INTERMEDIATE)),
        "b1": jnp.zeros((NUM_LAYERS, 1, INTERMEDIATE), jnp.float32),
        "w2": w(k[4], (NUM_LAYERS, INTERMEDIATE, HIDDEN)),
        "vec": vec,                                                  # biases + LN params
        "w_cls": w_cls.astype(jnp.bfloat16),                         # padded to 128 lanes
        "b_cls": jnp.zeros((1, PAD_CLASSES), jnp.float32),
    }


if __name__ == "__main__":
    key = jax.random.PRNGKey(0)
    k_img, k_par = jax.random.split(key)
    # B=2, C=3 (RGB), 16x16 images; pooling_concatenate_size=2 -> seq = 8*8 = 64
    batch_images = jax.random.normal(k_img, (2, 3, 16, 16), jnp.float32)
    params = init_params(k_par)

    logits = jax.jit(vot_forward)(batch_images, params)
    logits = jax.block_until_ready(logits)
    assert logits.shape == (2, NUM_CLASSES), logits.shape
    assert bool(jnp.all(jnp.isfinite(logits)))
    print("KERNEL_OK")
</pallas_src>

<mosaic_0001>
module attributes {stable_mosaic.version = 11 : i64} {
  func.func @_vot_fused_kernel(%arg0: i32, %arg1: memref<2x64x12xbf16, #tpu.memory_space<vmem>>, %arg2: memref<12x32xbf16, #tpu.memory_space<vmem>>, %arg3: memref<1x32xf32, #tpu.memory_space<vmem>>, %arg4: memref<2x32x96xbf16, #tpu.memory_space<vmem>>, %arg5: memref<2x1x96xf32, #tpu.memory_space<vmem>>, %arg6: memref<2x32x32xbf16, #tpu.memory_space<vmem>>, %arg7: memref<2x32x128xbf16, #tpu.memory_space<vmem>>, %arg8: memref<2x1x128xf32, #tpu.memory_space<vmem>>, %arg9: memref<2x128x32xbf16, #tpu.memory_space<vmem>>, %arg10: memref<2x6x32xf32, #tpu.memory_space<vmem>>, %arg11: memref<32x128xbf16, #tpu.memory_space<vmem>>, %arg12: memref<1x128xf32, #tpu.memory_space<vmem>>, %arg13: memref<1x2x128xf32, #tpu.memory_space<vmem>>) attributes {dimension_semantics = [#tpu.dimension_semantics<parallel>], iteration_bounds = array<i64: 1>, scalar_prefetch = 0 : i64, scratch_operands = 0 : i64, tpu.core_type = #tpu.core_type<tc>, window_params = [{transform_indices = @transform_0, window_bounds = array<i64: 2, 64, 12>}, {pipeline_mode = #tpu.pipeline_mode<synchronous>, transform_indices = @transform_1, window_bounds = array<i64: 12, 32>}, {pipeline_mode = #tpu.pipeline_mode<synchronous>, transform_indices = @transform_2, window_bounds = array<i64: 1, 32>}, {pipeline_mode = #tpu.pipeline_mode<synchronous>, transform_indices = @transform_3, window_bounds = array<i64: 2, 32, 96>}, {pipeline_mode = #tpu.pipeline_mode<synchronous>, transform_indices = @transform_4, window_bounds = array<i64: 2, 1, 96>}, {pipeline_mode = #tpu.pipeline_mode<synchronous>, transform_indices = @transform_5, window_bounds = array<i64: 2, 32, 32>}, {pipeline_mode = #tpu.pipeline_mode<synchronous>, transform_indices = @transform_6, window_bounds = array<i64: 2, 32, 128>}, {pipeline_mode = #tpu.pipeline_mode<synchronous>, transform_indices = @transform_7, window_bounds = array<i64: 2, 1, 128>}, {pipeline_mode = #tpu.pipeline_mode<synchronous>, transform_indices = @transform_8, window_bounds = array<i64: 2, 128, 32>}, {pipeline_mode = #tpu.pipeline_mode<synchronous>, transform_indices = @transform_9, window_bounds = array<i64: 2, 6, 32>}, {pipeline_mode = #tpu.pipeline_mode<synchronous>, transform_indices = @transform_10, window_bounds = array<i64: 32, 128>}, {pipeline_mode = #tpu.pipeline_mode<synchronous>, transform_indices = @transform_11, window_bounds = array<i64: 1, 128>}, {transform_indices = @transform_12, window_bounds = array<i64: 1, 2, 128>}]} {
    %c0 = arith.constant 0 : index
    %c0_0 = arith.constant 0 : index
    %c0_1 = arith.constant 0 : index
    %0 = vector.load %arg1[%c0, %c0_0, %c0_1] : memref<2x64x12xbf16, #tpu.memory_space<vmem>>, vector<2x64x12xbf16>
    %1 = vector.shape_cast %0 : vector<2x64x12xbf16> to vector<128x12xbf16>
    %c0_2 = arith.constant 0 : index
    %c0_3 = arith.constant 0 : index
    %2 = vector.load %arg2[%c0_2, %c0_3] : memref<12x32xbf16, #tpu.memory_space<vmem>>, vector<12x32xbf16>
    %cst = arith.constant dense<0.000000e+00> : vector<128x32xf32>
    %3 = tpu.matmul %1, %2, %cst {dimension_numbers = #tpu.dot_dimension_numbers<[1], [0], [0], [1], [0, 0, 1, 1], [], []>} : vector<128x12xbf16>, vector<12x32xbf16>, vector<128x32xf32> -> vector<128x32xf32>
    %c0_4 = arith.constant 0 : index
    %c0_5 = arith.constant 0 : index
    %4 = vector.load %arg3[%c0_4, %c0_5] : memref<1x32xf32, #tpu.memory_space<vmem>>, vector<1x32xf32>
    %5 = vector.broadcast %4 : vector<1x32xf32> to vector<128x32xf32>
    %6 = arith.addf %3, %5 : vector<128x32xf32>
    %7 = tpu.iota {dimensions = array<i32: 1>} : vector<1x32xi32>
    %c0_i32 = arith.constant 0 : i32
    %8 = vector.broadcast %c0_i32 : i32 to vector<1x32xi32>
    %9 = arith.cmpi sge, %7, %8 : vector<1x32xi32>
    %c8_i32 = arith.constant 8 : i32
    %10 = vector.broadcast %c8_i32 : i32 to vector<1x32xi32>
    %11 = arith.cmpi slt, %7, %10 : vector<1x32xi32>
    %12 = arith.andi %9, %11 : vector<1x32xi1>
    %13 = arith.extui %12 : vector<1x32xi1> to vector<1x32xi32>
    %14 = arith.sitofp %13 : vector<1x32xi32> to vector<1x32xf32>
    %c8_i32_6 = arith.constant 8 : i32
    %15 = vector.broadcast %c8_i32_6 : i32 to vector<1x32xi32>
    %16 = arith.cmpi sge, %7, %15 : vector<1x32xi32>
    %c16_i32 = arith.constant 16 : i32
    %17 = vector.broadcast %c16_i32 : i32 to vector<1x32xi32>
    %18 = arith.cmpi slt, %7, %17 : vector<1x32xi32>
    %19 = arith.andi %16, %18 : vector<1x32xi1>
    %20 = arith.extui %19 : vector<1x32xi1> to vector<1x32xi32>
    %21 = arith.sitofp %20 : vector<1x32xi32> to vector<1x32xf32>
    %c16_i32_7 = arith.constant 16 : i32
    %22 = vector.broadcast %c16_i32_7 : i32 to vector<1x32xi32>
    %23 = arith.cmpi sge, %7, %22 : vector<1x32xi32>
    %c24_i32 = arith.constant 24 : i32
    %24 = vector.broadcast %c24_i32 : i32 to vector<1x32xi32>
    %25 = arith.cmpi slt, %7, %24 : vector<1x32xi32>
    %26 = arith.andi %23, %25 : vector<1x32xi1>
    %27 = arith.extui %26 : vector<1x32xi1> to vector<1x32xi32>
    %28 = arith.sitofp %27 : vector<1x32xi32> to vector<1x32xf32>
    %c24_i32_8 = arith.constant 24 : i32
    %29 = vector.broadcast %c24_i32_8 : i32 to vector<1x32xi32>
    %30 = arith.cmpi sge, %7, %29 : vector<1x32xi32>
    %c32_i32 = arith.constant 32 : i32
    %31 = vector.broadcast %c32_i32 : i32 to vector<1x32xi32>
    %32 = arith.cmpi slt, %7, %31 : vector<1x32xi32>
    %33 = arith.andi %30, %32 : vector<1x32xi1>
    %34 = arith.extui %33 : vector<1x32xi1> to vector<1x32xi32>
    %35 = arith.sitofp %34 : vector<1x32xi32> to vector<1x32xf32>
    %36 = arith.truncf %14 : vector<1x32xf32> to vector<1x32xbf16>
    %37 = arith.truncf %21 : vector<1x32xf32> to vector<1x32xbf16>
    %38 = arith.truncf %28 : vector<1x32xf32> to vector<1x32xbf16>
    %39 = arith.truncf %35 : vector<1x32xf32> to vector<1x32xbf16>
    %c0_9 = arith.constant 0 : index
    %c0_10 = arith.constant 0 : index
    %c0_11 = arith.constant 0 : index
    %40 = vector.load %arg10[%c0_9, %c0_10, %c0_11] : memref<2x6x32xf32, #tpu.memory_space<vmem>>, vector<1x6x32xf32>
    %41 = vector.shape_cast %40 : vector<1x6x32xf32> to vector<6x32xf32>
    %42 = arith.truncf %6 : vector<128x32xf32> to vector<128x32xbf16>
    %c0_12 = arith.constant 0 : index
    %c0_13 = arith.constant 0 : index
    %c0_14 = arith.constant 0 : index
    %43 = vector.load %arg4[%c0_12, %c0_13, %c0_14] : memref<2x32x96xbf16, #tpu.memory_space<vmem>>, vector<1x32x96xbf16>
    %44 = vector.shape_cast %43 : vector<1x32x96xbf16> to vector<32x96xbf16>
    %cst_15 = arith.constant dense<0.000000e+00> : vector<128x96xf32>
    %45 = tpu.matmul %42, %44, %cst_15 {dimension_numbers = #tpu.dot_dimension_numbers<[1], [0], [0], [1], [0, 0, 1, 1], [], []>} : vector<128x32xbf16>, vector<32x96xbf16>, vector<128x96xf32> -> vector<128x96xf32>
    %c0_16 = arith.constant 0 : index
    %c0_17 = arith.constant 0 : index
    %c0_18 = arith.constant 0 : index
    %46 = vector.load %arg5[%c0_16, %c0_17, %c0_18] : memref<2x1x96xf32, #tpu.memory_space<vmem>>, vector<1x1x96xf32>
    %47 = vector.shape_cast %46 : vector<1x1x96xf32> to vector<1x96xf32>
    %48 = vector.broadcast %47 : vector<1x96xf32> to vector<128x96xf32>
    %49 = arith.addf %45, %48 : vector<128x96xf32>
    %50 = vector.extract_strided_slice %49 {offsets = [0, 0], sizes = [128, 32], strides = [1, 1]} : vector<128x96xf32> to vector<128x32xf32>
    %cst_19 = arith.constant 0.353553385 : f32
    %51 = vector.broadcast %cst_19 : f32 to vector<128x32xf32>
    %52 = arith.mulf %50, %51 : vector<128x32xf32>
    %53 = arith.truncf %52 : vector<128x32xf32> to vector<128x32xbf16>
    %54 = vector.shape_cast %53 : vector<128x32xbf16> to vector<2x64x32xbf16>
    %55 = vector.extract_strided_slice %49 {offsets = [0, 32], sizes = [128, 32], strides = [1, 1]} : vector<128x96xf32> to vector<128x32xf32>
    %56 = arith.truncf %55 : vector<128x32xf32> to vector<128x32xbf16>
    %57 = vector.shape_cast %56 : vector<128x32xbf16> to vector<2x64x32xbf16>
    %58 = vector.extract_strided_slice %49 {offsets = [0, 64], sizes = [128, 32], strides = [1, 1]} : vector<128x96xf32> to vector<128x32xf32>
    %59 = arith.truncf %58 : vector<128x32xf32> to vector<128x32xbf16>
    %60 = vector.shape_cast %59 : vector<128x32xbf16> to vector<2x64x32xbf16>
    %61 = vector.shape_cast %36 : vector<1x32xbf16> to vector<1x1x32xbf16>
    %62 = vector.broadcast %61 : vector<1x1x32xbf16> to vector<2x64x32xbf16>
    %63 = arith.mulf %54, %62 : vector<2x64x32xbf16>
    %64 = vector.shape_cast %37 : vector<1x32xbf16> to vector<1x1x32xbf16>
    %65 = vector.broadcast %64 : vector<1x1x32xbf16> to vector<2x64x32xbf16>
    %66 = arith.mulf %54, %65 : vector<2x64x32xbf16>
    %67 = vector.shape_cast %38 : vector<1x32xbf16> to vector<1x1x32xbf16>
    %68 = vector.broadcast %67 : vector<1x1x32xbf16> to vector<2x64x32xbf16>
    %69 = arith.mulf %54, %68 : vector<2x64x32xbf16>
    %70 = vector.shape_cast %39 : vector<1x32xbf16> to vector<1x1x32xbf16>
    %71 = vector.broadcast %70 : vector<1x1x32xbf16> to vector<2x64x32xbf16>
    %72 = arith.mulf %54, %71 : vector<2x64x32xbf16>
    %73 = tpu.concatenate %63, %66, %69, %72 in 1 : vector<2x64x32xbf16>, vector<2x64x32xbf16>, vector<2x64x32xbf16>, vector<2x64x32xbf16> -> vector<2x256x32xbf16>
    "tpu.trace_start"() <{level = 10 : i32, message = "bqh,bkh->bqk"}> : () -> ()
    %cst_20 = arith.constant dense<0.000000e+00> : vector<2x256x64xf32>
    %74 = tpu.matmul %73, %57, %cst_20 {dimension_numbers = #tpu.dot_dimension_numbers<[2], [2], [1], [1], [0, 0, 0, 1, 1, 1], [0], [0]>} : vector<2x256x32xbf16>, vector<2x64x32xbf16>, vector<2x256x64xf32> -> vector<2x256x64xf32>
    "tpu.trace_stop"() : () -> ()
    %cst_21 = arith.constant dense<0xFF800000> : vector<2x256xf32>
    %75 = vector.multi_reduction <maximumf>, %74, %cst_21 [2] : vector<2x256x64xf32> to vector<2x256xf32>
    %76 = vector.shape_cast %75 : vector<2x256xf32> to vector<2x256x1xf32>
    %77 = vector.broadcast %76 : vector<2x256x1xf32> to vector<2x256x64xf32>
    %78 = arith.subf %74, %77 : vector<2x256x64xf32>
    %79 = math.exp %78 : vector<2x256x64xf32>
    %cst_22 = arith.constant dense<0.000000e+00> : vector<2x256xf32>
    %80 = vector.multi_reduction <add>, %79, %cst_22 [2] : vector<2x256x64xf32> to vector<2x256xf32>
    %81 = vector.shape_cast %80 : vector<2x256xf32> to vector<2x256x1xf32>
    %82 = tpu.reciprocal %81 {approx = true} : vector<2x256x1xf32> -> vector<2x256x1xf32>
    %83 = vector.broadcast %82 : vector<2x256x1xf32> to vector<2x256x64xf32>
    %84 = arith.mulf %79, %83 : vector<2x256x64xf32>
    %85 = arith.truncf %84 : vector<2x256x64xf32> to vector<2x256x64xbf16>
    "tpu.trace_start"() <{level = 10 : i32, message = "bqk,bkh->bqh"}> : () -> ()
    %cst_23 = arith.constant dense<0.000000e+00> : vector<2x256x32xf32>
    %86 = tpu.matmul %85, %60, %cst_23 {dimension_numbers = #tpu.dot_dimension_numbers<[2], [1], [1], [2], [0, 0, 0, 1, 1, 2], [0], [0]>} : vector<2x256x64xbf16>, vector<2x64x32xbf16>, vector<2x256x32xf32> -> vector<2x256x32xf32>
    %cst_24 = arith.constant 0.000000e+00 : f32
    "tpu.trace_stop"() : () -> ()
    %87 = vector.broadcast %cst_24 : f32 to vector<2x64x32xf32>
    %88 = vector.extract_strided_slice %86 {offsets = [0, 0, 0], sizes = [2, 64, 32], strides = [1, 1, 1]} : vector<2x256x32xf32> to vector<2x64x32xf32>
    %89 = vector.shape_cast %14 : vector<1x32xf32> to vector<1x1x32xf32>
    %90 = vector.broadcast %89 : vector<1x1x32xf32> to vector<2x64x32xf32>
    %91 = arith.mulf %88, %90 : vector<2x64x32xf32>
    %92 = arith.addf %87, %91 : vector<2x64x32xf32>
    %93 = vector.extract_strided_slice %86 {offsets = [0, 64, 0], sizes = [2, 64, 32], strides = [1, 1, 1]} : vector<2x256x32xf32> to vector<2x64x32xf32>
    %94 = vector.shape_cast %21 : vector<1x32xf32> to vector<1x1x32xf32>
    %95 = vector.broadcast %94 : vector<1x1x32xf32> to vector<2x64x32xf32>
    %96 = arith.mulf %93, %95 : vector<2x64x32xf32>
    %97 = arith.addf %92, %96 : vector<2x64x32xf32>
    %98 = vector.extract_strided_slice %86 {offsets = [0, 128, 0], sizes = [2, 64, 32], strides = [1, 1, 1]} : vector<2x256x32xf32> to vector<2x64x32xf32>
    %99 = vector.shape_cast %28 : vector<1x32xf32> to vector<1x1x32xf32>
    %100 = vector.broadcast %99 : vector<1x1x32xf32> to vector<2x64x32xf32>
    %101 = arith.mulf %98, %100 : vector<2x64x32xf32>
    %102 = arith.addf %97, %101 : vector<2x64x32xf32>
    %103 = vector.extract_strided_slice %86 {offsets = [0, 192, 0], sizes = [2, 64, 32], strides = [1, 1, 1]} : vector<2x256x32xf32> to vector<2x64x32xf32>
    %104 = vector.shape_cast %35 : vector<1x32xf32> to vector<1x1x32xf32>
    %105 = vector.broadcast %104 : vector<1x1x32xf32> to vector<2x64x32xf32>
    %106 = arith.mulf %103, %105 : vector<2x64x32xf32>
    %107 = arith.addf %102, %106 : vector<2x64x32xf32>
    %108 = vector.shape_cast %107 : vector<2x64x32xf32> to vector<128x32xf32>
    %109 = arith.truncf %108 : vector<128x32xf32> to vector<128x32xbf16>
    %c0_25 = arith.constant 0 : index
    %c0_26 = arith.constant 0 : index
    %c0_27 = arith.constant 0 : index
    %110 = vector.load %arg6[%c0_25, %c0_26, %c0_27] : memref<2x32x32xbf16, #tpu.memory_space<vmem>>, vector<1x32x32xbf16>
    %111 = vector.shape_cast %110 : vector<1x32x32xbf16> to vector<32x32xbf16>
    %cst_28 = arith.constant dense<0.000000e+00> : vector<128x32xf32>
    %112 = tpu.matmul %109, %111, %cst_28 {dimension_numbers = #tpu.dot_dimension_numbers<[1], [0], [0], [1], [0, 0, 1, 1], [], []>} : vector<128x32xbf16>, vector<32x32xbf16>, vector<128x32xf32> -> vector<128x32xf32>
    %113 = vector.extract_strided_slice %41 {offsets = [0, 0], sizes = [1, 32], strides = [1, 1]} : vector<6x32xf32> to vector<1x32xf32>
    %114 = vector.broadcast %113 : vector<1x32xf32> to vector<128x32xf32>
    %115 = arith.addf %112, %114 : vector<128x32xf32>
    %116 = arith.addf %6, %115 : vector<128x32xf32>
    %117 = vector.extract_strided_slice %41 {offsets = [1, 0], sizes = [1, 32], strides = [1, 1]} : vector<6x32xf32> to vector<1x32xf32>
    %118 = vector.extract_strided_slice %41 {offsets = [2, 0], sizes = [1, 32], strides = [1, 1]} : vector<6x32xf32> to vector<1x32xf32>
    %cst_29 = arith.constant dense<0.000000e+00> : vector<128xf32>
    %119 = vector.multi_reduction <add>, %116, %cst_29 [1] : vector<128x32xf32> to vector<128xf32>
    %120 = vector.shape_cast %119 : vector<128xf32> to vector<128x1xf32>
    %cst_30 = arith.constant 3.200000e+01 : f32
    %121 = vector.broadcast %cst_30 : f32 to vector<128x1xf32>
    %122 = arith.divf %120, %121 : vector<128x1xf32>
    %123 = vector.broadcast %122 : vector<128x1xf32> to vector<128x32xf32>
    %124 = arith.subf %116, %123 : vector<128x32xf32>
    %125 = arith.mulf %124, %124 : vector<128x32xf32>
    %cst_31 = arith.constant dense<0.000000e+00> : vector<128xf32>
    %126 = vector.multi_reduction <add>, %125, %cst_31 [1] : vector<128x32xf32> to vector<128xf32>
    %127 = vector.shape_cast %126 : vector<128xf32> to vector<128x1xf32>
    %cst_32 = arith.constant 3.200000e+01 : f32
    %128 = vector.broadcast %cst_32 : f32 to vector<128x1xf32>
    %129 = arith.divf %127, %128 : vector<128x1xf32>
    %130 = vector.broadcast %122 : vector<128x1xf32> to vector<128x32xf32>
    %131 = arith.subf %116, %130 : vector<128x32xf32>
    %cst_33 = arith.constant 9.99999996E-13 : f32
    %132 = vector.broadcast %cst_33 : f32 to vector<128x1xf32>
    %133 = arith.addf %129, %132 : vector<128x1xf32>
    %134 = math.rsqrt %133 : vector<128x1xf32>
    %135 = vector.broadcast %134 : vector<128x1xf32> to vector<128x32xf32>
    %136 = arith.mulf %131, %135 : vector<128x32xf32>
    %137 = vector.broadcast %117 : vector<1x32xf32> to vector<128x32xf32>
    %138 = arith.mulf %136, %137 : vector<128x32xf32>
    %139 = vector.broadcast %118 : vector<1x32xf32> to vector<128x32xf32>
    %140 = arith.addf %138, %139 : vector<128x32xf32>
    %141 = arith.truncf %140 : vector<128x32xf32> to vector<128x32xbf16>
    %c0_34 = arith.constant 0 : index
    %c0_35 = arith.constant 0 : index
    %c0_36 = arith.constant 0 : index
    %142 = vector.load %arg7[%c0_34, %c0_35, %c0_36] : memref<2x32x128xbf16, #tpu.memory_space<vmem>>, vector<1x32x128xbf16>
    %143 = vector.shape_cast %142 : vector<1x32x128xbf16> to vector<32x128xbf16>
    %cst_37 = arith.constant dense<0.000000e+00> : vector<128x128xf32>
    %144 = tpu.matmul %141, %143, %cst_37 {dimension_numbers = #tpu.dot_dimension_numbers<[1], [0], [0], [1], [0, 0, 1, 1], [], []>} : vector<128x32xbf16>, vector<32x128xbf16>, vector<128x128xf32> -> vector<128x128xf32>
    %c0_38 = arith.constant 0 : index
    %c0_39 = arith.constant 0 : index
    %c0_40 = arith.constant 0 : index
    %145 = vector.load %arg8[%c0_38, %c0_39, %c0_40] : memref<2x1x128xf32, #tpu.memory_space<vmem>>, vector<1x1x128xf32>
    %146 = vector.shape_cast %145 : vector<1x1x128xf32> to vector<1x128xf32>
    %147 = vector.broadcast %146 : vector<1x128xf32> to vector<128x128xf32>
    %148 = arith.addf %144, %147 : vector<128x128xf32>
    %149 = arith.mulf %148, %148 : vector<128x128xf32>
    %150 = arith.mulf %148, %149 : vector<128x128xf32>
    %cst_41 = arith.constant 4.471500e-02 : f32
    %151 = vector.broadcast %cst_41 : f32 to vector<128x128xf32>
    %152 = arith.mulf %151, %150 : vector<128x128xf32>
    %153 = arith.addf %148, %152 : vector<128x128xf32>
    %cst_42 = arith.constant 0.797884583 : f32
    %154 = vector.broadcast %cst_42 : f32 to vector<128x128xf32>
    %155 = arith.mulf %154, %153 : vector<128x128xf32>
    %156 = math.tanh %155 : vector<128x128xf32>
    %cst_43 = arith.constant 1.000000e+00 : f32
    %157 = vector.broadcast %cst_43 : f32 to vector<128x128xf32>
    %158 = arith.addf %157, %156 : vector<128x128xf32>
    %cst_44 = arith.constant 5.000000e-01 : f32
    %159 = vector.broadcast %cst_44 : f32 to vector<128x128xf32>
    %160 = arith.mulf %159, %158 : vector<128x128xf32>
    %161 = arith.mulf %148, %160 : vector<128x128xf32>
    %162 = arith.truncf %161 : vector<128x128xf32> to vector<128x128xbf16>
    %c0_45 = arith.constant 0 : index
    %c0_46 = arith.constant 0 : index
    %c0_47 = arith.constant 0 : index
    %163 = vector.load %arg9[%c0_45, %c0_46, %c0_47] : memref<2x128x32xbf16, #tpu.memory_space<vmem>>, vector<1x128x32xbf16>
    %164 = vector.shape_cast %163 : vector<1x128x32xbf16> to vector<128x32xbf16>
    %cst_48 = arith.constant dense<0.000000e+00> : vector<128x32xf32>
    %165 = tpu.matmul %162, %164, %cst_48 {dimension_numbers = #tpu.dot_dimension_numbers<[1], [0], [0], [1], [0, 0, 1, 1], [], []>} : vector<128x128xbf16>, vector<128x32xbf16>, vector<128x32xf32> -> vector<128x32xf32>
    %166 = vector.extract_strided_slice %41 {offsets = [3, 0], sizes = [1, 32], strides = [1, 1]} : vector<6x32xf32> to vector<1x32xf32>
    %167 = vector.broadcast %166 : vector<1x32xf32> to vector<128x32xf32>
    %168 = arith.addf %165, %167 : vector<128x32xf32>
    %169 = arith.addf %140, %168 : vector<128x32xf32>
    %170 = vector.extract_strided_slice %41 {offsets = [4, 0], sizes = [1, 32], strides = [1, 1]} : vector<6x32xf32> to vector<1x32xf32>
    %171 = vector.extract_strided_slice %41 {offsets = [5, 0], sizes = [1, 32], strides = [1, 1]} : vector<6x32xf32> to vector<1x32xf32>
    %cst_49 = arith.constant dense<0.000000e+00> : vector<128xf32>
    %172 = vector.multi_reduction <add>, %169, %cst_49 [1] : vector<128x32xf32> to vector<128xf32>
    %173 = vector.shape_cast %172 : vector<128xf32> to vector<128x1xf32>
    %cst_50 = arith.constant 3.200000e+01 : f32
    %174 = vector.broadcast %cst_50 : f32 to vector<128x1xf32>
    %175 = arith.divf %173, %174 : vector<128x1xf32>
    %176 = vector.broadcast %175 : vector<128x1xf32> to vector<128x32xf32>
    %177 = arith.subf %169, %176 : vector<128x32xf32>
    %178 = arith.mulf %177, %177 : vector<128x32xf32>
    %cst_51 = arith.constant dense<0.000000e+00> : vector<128xf32>
    %179 = vector.multi_reduction <add>, %178, %cst_51 [1] : vector<128x32xf32> to vector<128xf32>
    %180 = vector.shape_cast %179 : vector<128xf32> to vector<128x1xf32>
    %cst_52 = arith.constant 3.200000e+01 : f32
    %181 = vector.broadcast %cst_52 : f32 to vector<128x1xf32>
    %182 = arith.divf %180, %181 : vector<128x1xf32>
    %183 = vector.broadcast %175 : vector<128x1xf32> to vector<128x32xf32>
    %184 = arith.subf %169, %183 : vector<128x32xf32>
    %cst_53 = arith.constant 9.99999996E-13 : f32
    %185 = vector.broadcast %cst_53 : f32 to vector<128x1xf32>
    %186 = arith.addf %182, %185 : vector<128x1xf32>
    %187 = math.rsqrt %186 : vector<128x1xf32>
    %188 = vector.broadcast %187 : vector<128x1xf32> to vector<128x32xf32>
    %189 = arith.mulf %184, %188 : vector<128x32xf32>
    %190 = vector.broadcast %170 : vector<1x32xf32> to vector<128x32xf32>
    %191 = arith.mulf %189, %190 : vector<128x32xf32>
    %192 = vector.broadcast %171 : vector<1x32xf32> to vector<128x32xf32>
    %193 = arith.addf %191, %192 : vector<128x32xf32>
    %c1 = arith.constant 1 : index
    %c0_54 = arith.constant 0 : index
    %c0_55 = arith.constant 0 : index
    %194 = vector.load %arg10[%c1, %c0_54, %c0_55] : memref<2x6x32xf32, #tpu.memory_space<vmem>>, vector<1x6x32xf32>
    %195 = vector.shape_cast %194 : vector<1x6x32xf32> to vector<6x32xf32>
    %196 = arith.truncf %193 : vector<128x32xf32> to vector<128x32xbf16>
    %c1_56 = arith.constant 1 : index
    %c0_57 = arith.constant 0 : index
    %c0_58 = arith.constant 0 : index
    %197 = vector.load %arg4[%c1_56, %c0_57, %c0_58] : memref<2x32x96xbf16, #tpu.memory_space<vmem>>, vector<1x32x96xbf16>
    %198 = vector.shape_cast %197 : vector<1x32x96xbf16> to vector<32x96xbf16>
    %cst_59 = arith.constant dense<0.000000e+00> : vector<128x96xf32>
    %199 = tpu.matmul %196, %198, %cst_59 {dimension_numbers = #tpu.dot_dimension_numbers<[1], [0], [0], [1], [0, 0, 1, 1], [], []>} : vector<128x32xbf16>, vector<32x96xbf16>, vector<128x96xf32> -> vector<128x96xf32>
    %c1_60 = arith.constant 1 : index
    %c0_61 = arith.constant 0 : index
    %c0_62 = arith.constant 0 : index
    %200 = vector.load %arg5[%c1_60, %c0_61, %c0_62] : memref<2x1x96xf32, #tpu.memory_space<vmem>>, vector<1x1x96xf32>
    %201 = vector.shape_cast %200 : vector<1x1x96xf32> to vector<1x96xf32>
    %202 = vector.broadcast %201 : vector<1x96xf32> to vector<128x96xf32>
    %203 = arith.addf %199, %202 : vector<128x96xf32>
    %204 = vector.extract_strided_slice %203 {offsets = [0, 0], sizes = [128, 32], strides = [1, 1]} : vector<128x96xf32> to vector<128x32xf32>
    %cst_63 = arith.constant 0.353553385 : f32
    %205 = vector.broadcast %cst_63 : f32 to vector<128x32xf32>
    %206 = arith.mulf %204, %205 : vector<128x32xf32>
    %207 = arith.truncf %206 : vector<128x32xf32> to vector<128x32xbf16>
    %208 = vector.shape_cast %207 : vector<128x32xbf16> to vector<2x64x32xbf16>
    %209 = vector.extract_strided_slice %203 {offsets = [0, 32], sizes = [128, 32], strides = [1, 1]} : vector<128x96xf32> to vector<128x32xf32>
    %210 = arith.truncf %209 : vector<128x32xf32> to vector<128x32xbf16>
    %211 = vector.shape_cast %210 : vector<128x32xbf16> to vector<2x64x32xbf16>
    %212 = vector.extract_strided_slice %203 {offsets = [0, 64], sizes = [128, 32], strides = [1, 1]} : vector<128x96xf32> to vector<128x32xf32>
    %213 = arith.truncf %212 : vector<128x32xf32> to vector<128x32xbf16>
    %214 = vector.shape_cast %213 : vector<128x32xbf16> to vector<2x64x32xbf16>
    %215 = vector.shape_cast %36 : vector<1x32xbf16> to vector<1x1x32xbf16>
    %216 = vector.broadcast %215 : vector<1x1x32xbf16> to vector<2x64x32xbf16>
    %217 = arith.mulf %208, %216 : vector<2x64x32xbf16>
    %218 = vector.shape_cast %37 : vector<1x32xbf16> to vector<1x1x32xbf16>
    %219 = vector.broadcast %218 : vector<1x1x32xbf16> to vector<2x64x32xbf16>
    %220 = arith.mulf %208, %219 : vector<2x64x32xbf16>
    %221 = vector.shape_cast %38 : vector<1x32xbf16> to vector<1x1x32xbf16>
    %222 = vector.broadcast %221 : vector<1x1x32xbf16> to vector<2x64x32xbf16>
    %223 = arith.mulf %208, %222 : vector<2x64x32xbf16>
    %224 = vector.shape_cast %39 : vector<1x32xbf16> to vector<1x1x32xbf16>
    %225 = vector.broadcast %224 : vector<1x1x32xbf16> to vector<2x64x32xbf16>
    %226 = arith.mulf %208, %225 : vector<2x64x32xbf16>
    %227 = tpu.concatenate %217, %220, %223, %226 in 1 : vector<2x64x32xbf16>, vector<2x64x32xbf16>, vector<2x64x32xbf16>, vector<2x64x32xbf16> -> vector<2x256x32xbf16>
    "tpu.trace_start"() <{level = 10 : i32, message = "bqh,bkh->bqk"}> : () -> ()
    %cst_64 = arith.constant dense<0.000000e+00> : vector<2x256x64xf32>
    %228 = tpu.matmul %227, %211, %cst_64 {dimension_numbers = #tpu.dot_dimension_numbers<[2], [2], [1], [1], [0, 0, 0, 1, 1, 1], [0], [0]>} : vector<2x256x32xbf16>, vector<2x64x32xbf16>, vector<2x256x64xf32> -> vector<2x256x64xf32>
    "tpu.trace_stop"() : () -> ()
    %cst_65 = arith.constant dense<0xFF800000> : vector<2x256xf32>
    %229 = vector.multi_reduction <maximumf>, %228, %cst_65 [2] : vector<2x256x64xf32> to vector<2x256xf32>
    %230 = vector.shape_cast %229 : vector<2x256xf32> to vector<2x256x1xf32>
    %231 = vector.broadcast %230 : vector<2x256x1xf32> to vector<2x256x64xf32>
    %232 = arith.subf %228, %231 : vector<2x256x64xf32>
    %233 = math.exp %232 : vector<2x256x64xf32>
    %cst_66 = arith.constant dense<0.000000e+00> : vector<2x256xf32>
    %234 = vector.multi_reduction <add>, %233, %cst_66 [2] : vector<2x256x64xf32> to vector<2x256xf32>
    %235 = vector.shape_cast %234 : vector<2x256xf32> to vector<2x256x1xf32>
    %236 = tpu.reciprocal %235 {approx = true} : vector<2x256x1xf32> -> vector<2x256x1xf32>
    %237 = vector.broadcast %236 : vector<2x256x1xf32> to vector<2x256x64xf32>
    %238 = arith.mulf %233, %237 : vector<2x256x64xf32>
    %239 = arith.truncf %238 : vector<2x256x64xf32> to vector<2x256x64xbf16>
    "tpu.trace_start"() <{level = 10 : i32, message = "bqk,bkh->bqh"}> : () -> ()
    %cst_67 = arith.constant dense<0.000000e+00> : vector<2x256x32xf32>
    %240 = tpu.matmul %239, %214, %cst_67 {dimension_numbers = #tpu.dot_dimension_numbers<[2], [1], [1], [2], [0, 0, 0, 1, 1, 2], [0], [0]>} : vector<2x256x64xbf16>, vector<2x64x32xbf16>, vector<2x256x32xf32> -> vector<2x256x32xf32>
    %cst_68 = arith.constant 0.000000e+00 : f32
    "tpu.trace_stop"() : () -> ()
    %241 = vector.broadcast %cst_68 : f32 to vector<2x64x32xf32>
    %242 = vector.extract_strided_slice %240 {offsets = [0, 0, 0], sizes = [2, 64, 32], strides = [1, 1, 1]} : vector<2x256x32xf32> to vector<2x64x32xf32>
    %243 = vector.shape_cast %14 : vector<1x32xf32> to vector<1x1x32xf32>
    %244 = vector.broadcast %243 : vector<1x1x32xf32> to vector<2x64x32xf32>
    %245 = arith.mulf %242, %244 : vector<2x64x32xf32>
    %246 = arith.addf %241, %245 : vector<2x64x32xf32>
    %247 = vector.extract_strided_slice %240 {offsets = [0, 64, 0], sizes = [2, 64, 32], strides = [1, 1, 1]} : vector<2x256x32xf32> to vector<2x64x32xf32>
    %248 = vector.shape_cast %21 : vector<1x32xf32> to vector<1x1x32xf32>
    %249 = vector.broadcast %248 : vector<1x1x32xf32> to vector<2x64x32xf32>
    %250 = arith.mulf %247, %249 : vector<2x64x32xf32>
    %251 = arith.addf %246, %250 : vector<2x64x32xf32>
    %252 = vector.extract_strided_slice %240 {offsets = [0, 128, 0], sizes = [2, 64, 32], strides = [1, 1, 1]} : vector<2x256x32xf32> to vector<2x64x32xf32>
    %253 = vector.shape_cast %28 : vector<1x32xf32> to vector<1x1x32xf32>
    %254 = vector.broadcast %253 : vector<1x1x32xf32> to vector<2x64x32xf32>
    %255 = arith.mulf %252, %254 : vector<2x64x32xf32>
    %256 = arith.addf %251, %255 : vector<2x64x32xf32>
    %257 = vector.extract_strided_slice %240 {offsets = [0, 192, 0], sizes = [2, 64, 32], strides = [1, 1, 1]} : vector<2x256x32xf32> to vector<2x64x32xf32>
    %258 = vector.shape_cast %35 : vector<1x32xf32> to vector<1x1x32xf32>
    %259 = vector.broadcast %258 : vector<1x1x32xf32> to vector<2x64x32xf32>
    %260 = arith.mulf %257, %259 : vector<2x64x32xf32>
    %261 = arith.addf %256, %260 : vector<2x64x32xf32>
    %262 = vector.shape_cast %261 : vector<2x64x32xf32> to vector<128x32xf32>
    %263 = arith.truncf %262 : vector<128x32xf32> to vector<128x32xbf16>
    %c1_69 = arith.constant 1 : index
    %c0_70 = arith.constant 0 : index
    %c0_71 = arith.constant 0 : index
    %264 = vector.load %arg6[%c1_69, %c0_70, %c0_71] : memref<2x32x32xbf16, #tpu.memory_space<vmem>>, vector<1x32x32xbf16>
    %265 = vector.shape_cast %264 : vector<1x32x32xbf16> to vector<32x32xbf16>
    %cst_72 = arith.constant dense<0.000000e+00> : vector<128x32xf32>
    %266 = tpu.matmul %263, %265, %cst_72 {dimension_numbers = #tpu.dot_dimension_numbers<[1], [0], [0], [1], [0, 0, 1, 1], [], []>} : vector<128x32xbf16>, vector<32x32xbf16>, vector<128x32xf32> -> vector<128x32xf32>
    %267 = vector.extract_strided_slice %195 {offsets = [0, 0], sizes = [1, 32], strides = [1, 1]} : vector<6x32xf32> to vector<1x32xf32>
    %268 = vector.broadcast %267 : vector<1x32xf32> to vector<128x32xf32>
    %269 = arith.addf %266, %268 : vector<128x32xf32>
    %270 = arith.addf %193, %269 : vector<128x32xf32>
    %271 = vector.extract_strided_slice %195 {offsets = [1, 0], sizes = [1, 32], strides = [1, 1]} : vector<6x32xf32> to vector<1x32xf32>
    %272 = vector.extract_strided_slice %195 {offsets = [2, 0], sizes = [1, 32], strides = [1, 1]} : vector<6x32xf32> to vector<1x32xf32>
    %cst_73 = arith.constant dense<0.000000e+00> : vector<128xf32>
    %273 = vector.multi_reduction <add>, %270, %cst_73 [1] : vector<128x32xf32> to vector<128xf32>
    %274 = vector.shape_cast %273 : vector<128xf32> to vector<128x1xf32>
    %cst_74 = arith.constant 3.200000e+01 : f32
    %275 = vector.broadcast %cst_74 : f32 to vector<128x1xf32>
    %276 = arith.divf %274, %275 : vector<128x1xf32>
    %277 = vector.broadcast %276 : vector<128x1xf32> to vector<128x32xf32>
    %278 = arith.subf %270, %277 : vector<128x32xf32>
    %279 = arith.mulf %278, %278 : vector<128x32xf32>
    %cst_75 = arith.constant dense<0.000000e+00> : vector<128xf32>
    %280 = vector.multi_reduction <add>, %279, %cst_75 [1] : vector<128x32xf32> to vector<128xf32>
    %281 = vector.shape_cast %280 : vector<128xf32> to vector<128x1xf32>
    %cst_76 = arith.constant 3.200000e+01 : f32
    %282 = vector.broadcast %cst_76 : f32 to vector<128x1xf32>
    %283 = arith.divf %281, %282 : vector<128x1xf32>
    %284 = vector.broadcast %276 : vector<128x1xf32> to vector<128x32xf32>
    %285 = arith.subf %270, %284 : vector<128x32xf32>
    %cst_77 = arith.constant 9.99999996E-13 : f32
    %286 = vector.broadcast %cst_77 : f32 to vector<128x1xf32>
    %287 = arith.addf %283, %286 : vector<128x1xf32>
    %288 = math.rsqrt %287 : vector<128x1xf32>
    %289 = vector.broadcast %288 : vector<128x1xf32> to vector<128x32xf32>
    %290 = arith.mulf %285, %289 : vector<128x32xf32>
    %291 = vector.broadcast %271 : vector<1x32xf32> to vector<128x32xf32>
    %292 = arith.mulf %290, %291 : vector<128x32xf32>
    %293 = vector.broadcast %272 : vector<1x32xf32> to vector<128x32xf32>
    %294 = arith.addf %292, %293 : vector<128x32xf32>
    %295 = arith.truncf %294 : vector<128x32xf32> to vector<128x32xbf16>
    %c1_78 = arith.constant 1 : index
    %c0_79 = arith.constant 0 : index
    %c0_80 = arith.constant 0 : index
    %296 = vector.load %arg7[%c1_78, %c0_79, %c0_80] : memref<2x32x128xbf16, #tpu.memory_space<vmem>>, vector<1x32x128xbf16>
    %297 = vector.shape_cast %296 : vector<1x32x128xbf16> to vector<32x128xbf16>
    %cst_81 = arith.constant dense<0.000000e+00> : vector<128x128xf32>
    %298 = tpu.matmul %295, %297, %cst_81 {dimension_numbers = #tpu.dot_dimension_numbers<[1], [0], [0], [1], [0, 0, 1, 1], [], []>} : vector<128x32xbf16>, vector<32x128xbf16>, vector<128x128xf32> -> vector<128x128xf32>
    %c1_82 = arith.constant 1 : index
    %c0_83 = arith.constant 0 : index
    %c0_84 = arith.constant 0 : index
    %299 = vector.load %arg8[%c1_82, %c0_83, %c0_84] : memref<2x1x128xf32, #tpu.memory_space<vmem>>, vector<1x1x128xf32>
    %300 = vector.shape_cast %299 : vector<1x1x128xf32> to vector<1x128xf32>
    %301 = vector.broadcast %300 : vector<1x128xf32> to vector<128x128xf32>
    %302 = arith.addf %298, %301 : vector<128x128xf32>
    %303 = arith.mulf %302, %302 : vector<128x128xf32>
    %304 = arith.mulf %302, %303 : vector<128x128xf32>
    %cst_85 = arith.constant 4.471500e-02 : f32
    %305 = vector.broadcast %cst_85 : f32 to vector<128x128xf32>
    %306 = arith.mulf %305, %304 : vector<128x128xf32>
    %307 = arith.addf %302, %306 : vector<128x128xf32>
    %cst_86 = arith.constant 0.797884583 : f32
    %308 = vector.broadcast %cst_86 : f32 to vector<128x128xf32>
    %309 = arith.mulf %308, %307 : vector<128x128xf32>
    %310 = math.tanh %309 : vector<128x128xf32>
    %cst_87 = arith.constant 1.000000e+00 : f32
    %311 = vector.broadcast %cst_87 : f32 to vector<128x128xf32>
    %312 = arith.addf %311, %310 : vector<128x128xf32>
    %cst_88 = arith.constant 5.000000e-01 : f32
    %313 = vector.broadcast %cst_88 : f32 to vector<128x128xf32>
    %314 = arith.mulf %313, %312 : vector<128x128xf32>
    %315 = arith.mulf %302, %314 : vector<128x128xf32>
    %316 = arith.truncf %315 : vector<128x128xf32> to vector<128x128xbf16>
    %c1_89 = arith.constant 1 : index
    %c0_90 = arith.constant 0 : index
    %c0_91 = arith.constant 0 : index
    %317 = vector.load %arg9[%c1_89, %c0_90, %c0_91] : memref<2x128x32xbf16, #tpu.memory_space<vmem>>, vector<1x128x32xbf16>
    %318 = vector.shape_cast %317 : vector<1x128x32xbf16> to vector<128x32xbf16>
    %cst_92 = arith.constant dense<0.000000e+00> : vector<128x32xf32>
    %319 = tpu.matmul %316, %318, %cst_92 {dimension_numbers = #tpu.dot_dimension_numbers<[1], [0], [0], [1], [0, 0, 1, 1], [], []>} : vector<128x128xbf16>, vector<128x32xbf16>, vector<128x32xf32> -> vector<128x32xf32>
    %320 = vector.extract_strided_slice %195 {offsets = [3, 0], sizes = [1, 32], strides = [1, 1]} : vector<6x32xf32> to vector<1x32xf32>
    %321 = vector.broadcast %320 : vector<1x32xf32> to vector<128x32xf32>
    %322 = arith.addf %319, %321 : vector<128x32xf32>
    %323 = arith.addf %294, %322 : vector<128x32xf32>
    %324 = vector.extract_strided_slice %195 {offsets = [4, 0], sizes = [1, 32], strides = [1, 1]} : vector<6x32xf32> to vector<1x32xf32>
    %325 = vector.extract_strided_slice %195 {offsets = [5, 0], sizes = [1, 32], strides = [1, 1]} : vector<6x32xf32> to vector<1x32xf32>
    %cst_93 = arith.constant dense<0.000000e+00> : vector<128xf32>
    %326 = vector.multi_reduction <add>, %323, %cst_93 [1] : vector<128x32xf32> to vector<128xf32>
    %327 = vector.shape_cast %326 : vector<128xf32> to vector<128x1xf32>
    %cst_94 = arith.constant 3.200000e+01 : f32
    %328 = vector.broadcast %cst_94 : f32 to vector<128x1xf32>
    %329 = arith.divf %327, %328 : vector<128x1xf32>
    %330 = vector.broadcast %329 : vector<128x1xf32> to vector<128x32xf32>
    %331 = arith.subf %323, %330 : vector<128x32xf32>
    %332 = arith.mulf %331, %331 : vector<128x32xf32>
    %cst_95 = arith.constant dense<0.000000e+00> : vector<128xf32>
    %333 = vector.multi_reduction <add>, %332, %cst_95 [1] : vector<128x32xf32> to vector<128xf32>
    %334 = vector.shape_cast %333 : vector<128xf32> to vector<128x1xf32>
    %cst_96 = arith.constant 3.200000e+01 : f32
    %335 = vector.broadcast %cst_96 : f32 to vector<128x1xf32>
    %336 = arith.divf %334, %335 : vector<128x1xf32>
    %337 = vector.broadcast %329 : vector<128x1xf32> to vector<128x32xf32>
    %338 = arith.subf %323, %337 : vector<128x32xf32>
    %cst_97 = arith.constant 9.99999996E-13 : f32
    %339 = vector.broadcast %cst_97 : f32 to vector<128x1xf32>
    %340 = arith.addf %336, %339 : vector<128x1xf32>
    %341 = math.rsqrt %340 : vector<128x1xf32>
    %342 = vector.broadcast %341 : vector<128x1xf32> to vector<128x32xf32>
    %343 = arith.mulf %338, %342 : vector<128x32xf32>
    %344 = vector.broadcast %324 : vector<1x32xf32> to vector<128x32xf32>
    %345 = arith.mulf %343, %344 : vector<128x32xf32>
    %346 = vector.broadcast %325 : vector<1x32xf32> to vector<128x32xf32>
    %347 = arith.addf %345, %346 : vector<128x32xf32>
    %348 = vector.shape_cast %347 : vector<128x32xf32> to vector<2x64x32xf32>
    %cst_98 = arith.constant dense<0.000000e+00> : vector<2x32xf32>
    %349 = vector.multi_reduction <add>, %348, %cst_98 [1] : vector<2x64x32xf32> to vector<2x32xf32>
    %cst_99 = arith.constant 6.400000e+01 : f32
    %350 = vector.broadcast %cst_99 : f32 to vector<2x32xf32>
    %351 = arith.divf %349, %350 : vector<2x32xf32>
    %352 = arith.truncf %351 : vector<2x32xf32> to vector<2x32xbf16>
    %c0_100 = arith.constant 0 : index
    %c0_101 = arith.constant 0 : index
    %353 = vector.load %arg11[%c0_100, %c0_101] : memref<32x128xbf16, #tpu.memory_space<vmem>>, vector<32x128xbf16>
    %cst_102 = arith.constant dense<0.000000e+00> : vector<2x128xf32>
    %354 = tpu.matmul %352, %353, %cst_102 {dimension_numbers = #tpu.dot_dimension_numbers<[1], [0], [0], [1], [0, 0, 1, 1], [], []>} : vector<2x32xbf16>, vector<32x128xbf16>, vector<2x128xf32> -> vector<2x128xf32>
    %c0_103 = arith.constant 0 : index
    %c0_104 = arith.constant 0 : index
    %355 = vector.load %arg12[%c0_103, %c0_104] : memref<1x128xf32, #tpu.memory_space<vmem>>, vector<1x128xf32>
    %356 = vector.broadcast %355 : vector<1x128xf32> to vector<2x128xf32>
    %357 = arith.addf %354, %356 : vector<2x128xf32>
    %c0_105 = arith.constant 0 : index
    %c0_106 = arith.constant 0 : index
    %c0_107 = arith.constant 0 : index
    %358 = vector.load %arg13[%c0_105, %c0_106, %c0_107] : memref<1x2x128xf32, #tpu.memory_space<vmem>>, vector<1x2x128xf32>
    %359 = vector.shape_cast %358 : vector<1x2x128xf32> to vector<2x128xf32>
    %360 = vector.shape_cast %357 : vector<2x128xf32> to vector<1x2x128xf32>
    tpu.vector_store %arg13[%c0_105, %c0_106, %c0_107], %360 {strides = array<i32>} : memref<1x2x128xf32, #tpu.memory_space<vmem>>, vector<1x2x128xf32>,
    return
  }
  func.func @transform_0(%arg0: i32) -> (i32, i32, i32) {
    %c0_i32 = arith.constant 0 : i32
    %c0_i32_0 = arith.constant 0 : i32
    %c0_i32_1 = arith.constant 0 : i32
    return %arg0, %c0_i32, %c0_i32_0 : i32, i32, i32
  }
  func.func @transform_1(%arg0: i32) -> (i32, i32) {
    %c0_i32 = arith.constant 0 : i32
    %c0_i32_0 = arith.constant 0 : i32
    %c0_i32_1 = arith.constant 0 : i32
    return %c0_i32, %c0_i32_0 : i32, i32
  }
  func.func @transform_2(%arg0: i32) -> (i32, i32) {
    %c0_i32 = arith.constant 0 : i32
    %c0_i32_0 = arith.constant 0 : i32
    %c0_i32_1 = arith.constant 0 : i32
    return %c0_i32, %c0_i32_0 : i32, i32
  }
  func.func @transform_3(%arg0: i32) -> (i32, i32, i32) {
    %c0_i32 = arith.constant 0 : i32
    %c0_i32_0 = arith.constant 0 : i32
    %c0_i32_1 = arith.constant 0 : i32
    %c0_i32_2 = arith.constant 0 : i32
    return %c0_i32, %c0_i32_0, %c0_i32_1 : i32, i32, i32
  }
  func.func @transform_4(%arg0: i32) -> (i32, i32, i32) {
    %c0_i32 = arith.constant 0 : i32
    %c0_i32_0 = arith.constant 0 : i32
    %c0_i32_1 = arith.constant 0 : i32
    %c0_i32_2 = arith.constant 0 : i32
    return %c0_i32, %c0_i32_0, %c0_i32_1 : i32, i32, i32
  }
  func.func @transform_5(%arg0: i32) -> (i32, i32, i32) {
    %c0_i32 = arith.constant 0 : i32
    %c0_i32_0 = arith.constant 0 : i32
    %c0_i32_1 = arith.constant 0 : i32
    %c0_i32_2 = arith.constant 0 : i32
    return %c0_i32, %c0_i32_0, %c0_i32_1 : i32, i32, i32
  }
  func.func @transform_6(%arg0: i32) -> (i32, i32, i32) {
    %c0_i32 = arith.constant 0 : i32
    %c0_i32_0 = arith.constant 0 : i32
    %c0_i32_1 = arith.constant 0 : i32
    %c0_i32_2 = arith.constant 0 : i32
    return %c0_i32, %c0_i32_0, %c0_i32_1 : i32, i32, i32
  }
  func.func @transform_7(%arg0: i32) -> (i32, i32, i32) {
    %c0_i32 = arith.constant 0 : i32
    %c0_i32_0 = arith.constant 0 : i32
    %c0_i32_1 = arith.constant 0 : i32
    %c0_i32_2 = arith.constant 0 : i32
    return %c0_i32, %c0_i32_0, %c0_i32_1 : i32, i32, i32
  }
  func.func @transform_8(%arg0: i32) -> (i32, i32, i32) {
    %c0_i32 = arith.constant 0 : i32
    %c0_i32_0 = arith.constant 0 : i32
    %c0_i32_1 = arith.constant 0 : i32
    %c0_i32_2 = arith.constant 0 : i32
    return %c0_i32, %c0_i32_0, %c0_i32_1 : i32, i32, i32
  }
  func.func @transform_9(%arg0: i32) -> (i32, i32, i32) {
    %c0_i32 = arith.constant 0 : i32
    %c0_i32_0 = arith.constant 0 : i32
    %c0_i32_1 = arith.constant 0 : i32
    %c0_i32_2 = arith.constant 0 : i32
    return %c0_i32, %c0_i32_0, %c0_i32_1 : i32, i32, i32
  }
  func.func @transform_10(%arg0: i32) -> (i32, i32) {
    %c0_i32 = arith.constant 0 : i32
    %c0_i32_0 = arith.constant 0 : i32
    %c0_i32_1 = arith.constant 0 : i32
    return %c0_i32, %c0_i32_0 : i32, i32
  }
  func.func @transform_11(%arg0: i32) -> (i32, i32) {
    %c0_i32 = arith.constant 0 : i32
    %c0_i32_0 = arith.constant 0 : i32
    %c0_i32_1 = arith.constant 0 : i32
    return %c0_i32, %c0_i32_0 : i32, i32
  }
  func.func @transform_12(%arg0: i32) -> (i32, i32, i32) {
    %c0_i32 = arith.constant 0 : i32
    %c0_i32_0 = arith.constant 0 : i32
    %c0_i32_1 = arith.constant 0 : i32
    return %arg0, %c0_i32, %c0_i32_0 : i32, i32, i32
  }
}

</mosaic_0001>

<llo_original>
// kernel: vot_forward.1
$region0: #{vot_forward.1}
  #allocation0 [shape = 'u32[]', space=smem, size = 0x4, offset = 0x4, fixed_abs, tag = 'smem constant byte address 0x4 - core index']
  #allocation1 [shape = 'u32[72,128]{1,0:T(1,128)}', space=vmem, size = 0x9000, scoped, tag = 'internal scratch']
  %s0 = inlined_call_operand.vmem [shape: bf16[2,64,12], index: 0, kind: input, shape index: {}]
  %s1 = inlined_call_operand.vmem [shape: bf16[12,32], index: 1, kind: input, shape index: {}]
  %s2 = inlined_call_operand.vmem [shape: f32[1,32], index: 2, kind: input, shape index: {}]
  %s3 = inlined_call_operand.vmem [shape: bf16[2,32,96], index: 3, kind: input, shape index: {}]
  %s4 = inlined_call_operand.vmem [shape: f32[2,1,96], index: 4, kind: input, shape index: {}]
  %s5 = inlined_call_operand.vmem [shape: bf16[2,32,32], index: 5, kind: input, shape index: {}]
  %s6 = inlined_call_operand.vmem [shape: bf16[2,32,128], index: 6, kind: input, shape index: {}]
  %s7 = inlined_call_operand.vmem [shape: f32[2,1,128], index: 7, kind: input, shape index: {}]
  %s8 = inlined_call_operand.vmem [shape: bf16[2,128,32], index: 8, kind: input, shape index: {}]
  %s9 = inlined_call_operand.vmem [shape: f32[2,6,32], index: 9, kind: input, shape index: {}]
  %s10 = inlined_call_operand.vmem [shape: bf16[32,128], index: 10, kind: input, shape index: {}]
  %s11 = inlined_call_operand.vmem [shape: f32[1,128], index: 11, kind: input, shape index: {}]
  %s12 = inlined_call_operand.hbm [shape: f32[1,2,128], index: 12, kind: output, shape index: {}]
  %s13 = sld [smem:[#allocation0]]
  $region58: #{vot_forward.1} parent=0
    _
  %s15 = ssub.s32 1, %s13
  %s16 = scalar_select 0, %s15, %s13
  $region1: #{vot_forward.1} parent=0
    #allocation2 [shape = 'u8[1024]{0}', space=vmem, size = 0x400, scoped, tag = 'output window, operand 0, single buffered']
    #allocation3 [shape = 's32[1]{0}', space=sflag, size = 0x4, scoped, tag = 'scoped memory for vot_forward.1']
    %17 = vsyncpa [#allocation3], 0
    // Predicated region
    $region2: #{vot_forward.1} parent=1 // pred_check
      _
    $region3: #{vot_forward.1} parent=1 // pred_check_branch
      %19 = sbr.rel (0) target = $region5
    $region4: #{vot_forward.1} parent=1 // pred_region
      _
    $region5: #{vot_forward.1} parent=1 // pred_fallthru
      _
    // Predicated region
    $region6: #{vot_forward.1} parent=1 // pred_check
      _
    $region7: #{vot_forward.1} parent=1 // pred_check_branch
      %21 = sbr.rel (0) target = $region9
    $region8: #{vot_forward.1} parent=1 // pred_region
      _
    $region9: #{vot_forward.1} parent=1 // pred_fallthru
      _
    // Predicated region
    $region10: #{vot_forward.1} parent=1 // pred_check
      _
    $region11: #{vot_forward.1} parent=1 // pred_check_branch
      %23 = sbr.rel (0) target = $region13
    $region12: #{vot_forward.1} parent=1 // pred_region
      _
    $region13: #{vot_forward.1} parent=1 // pred_fallthru
      _
    // Predicated region
    $region14: #{vot_forward.1} parent=1 // pred_check
      _
    $region15: #{vot_forward.1} parent=1 // pred_check_branch
      %25 = sbr.rel (0) target = $region17
    $region16: #{vot_forward.1} parent=1 // pred_region
      _
    $region17: #{vot_forward.1} parent=1 // pred_fallthru
      _
    // Predicated region
    $region18: #{vot_forward.1} parent=1 // pred_check
      _
    $region19: #{vot_forward.1} parent=1 // pred_check_branch
      %27 = sbr.rel (0) target = $region21
    $region20: #{vot_forward.1} parent=1 // pred_region
      _
    $region21: #{vot_forward.1} parent=1 // pred_fallthru
      _
    // Predicated region
    $region22: #{vot_forward.1} parent=1 // pred_check
      _
    $region23: #{vot_forward.1} parent=1 // pred_check_branch
      %29 = sbr.rel (0) target = $region25
    $region24: #{vot_forward.1} parent=1 // pred_region
      _
    $region25: #{vot_forward.1} parent=1 // pred_fallthru
      _
    // Predicated region
    $region26: #{vot_forward.1} parent=1 // pred_check
      _
    $region27: #{vot_forward.1} parent=1 // pred_check_branch
      %31 = sbr.rel (0) target = $region29
    $region28: #{vot_forward.1} parent=1 // pred_region
      _
    $region29: #{vot_forward.1} parent=1 // pred_fallthru
      _
    // Predicated region
    $region30: #{vot_forward.1} parent=1 // pred_check
      _
    $region31: #{vot_forward.1} parent=1 // pred_check_branch
      %33 = sbr.rel (0) target = $region33
    $region32: #{vot_forward.1} parent=1 // pred_region
      _
    $region33: #{vot_forward.1} parent=1 // pred_fallthru
      _
    // Predicated region
    $region34: #{vot_forward.1} parent=1 // pred_check
      _
    $region35: #{vot_forward.1} parent=1 // pred_check_branch
      %35 = sbr.rel (0) target = $region37
    $region36: #{vot_forward.1} parent=1 // pred_region
      _
    $region37: #{vot_forward.1} parent=1 // pred_fallthru
      _
    // Predicated region
    $region38: #{vot_forward.1} parent=1 // pred_check
      _
    $region39: #{vot_forward.1} parent=1 // pred_check_branch
      %37 = sbr.rel (0) target = $region41
    $region40: #{vot_forward.1} parent=1 // pred_region
      _
    $region41: #{vot_forward.1} parent=1 // pred_fallthru
      _
    // Predicated region
    $region42: #{vot_forward.1} parent=1 // pred_check
      _
    $region43: #{vot_forward.1} parent=1 // pred_check_branch
      %39 = sbr.rel (0) target = $region45
    $region44: #{vot_forward.1} parent=1 // pred_region
      _
    $region45: #{vot_forward.1} parent=1 // pred_fallthru
      _
    // Predicated region
    $region46: #{vot_forward.1} parent=1 // pred_check
      _
    $region47: #{vot_forward.1} parent=1 // pred_check_branch
      %41 = sbr.rel (0) target = $region49
    $region48: #{vot_forward.1} parent=1 // pred_region
      _
    $region49: #{vot_forward.1} parent=1 // pred_fallthru
      _
    %v43 = vld [vmem:[%s0] sm:$0xf]
    %v44 = vld [vmem:[%s0 + $0x4] sm:$0xf]
    %v45 = vld [vmem:[%s0 + $0x8] sm:$0xf]
    %v46 = vld [vmem:[%s0 + $0xc] sm:$0xf]
    %v47 = vld [vmem:[%s0 + $0x10] sm:$0xf]
    %v48 = vld [vmem:[%s0 + $0x14] sm:$0xf]
    %v49 = vld [vmem:[%s0 + $0x18] sm:$0xf]
    %v50 = vld [vmem:[%s0 + $0x1c] sm:$0xf]
    %v51 = vld [vmem:[%s0 + $0x20] sm:$0xf]
    %v52 = vld [vmem:[%s0 + $0x24] sm:$0xf]
    %v53 = vld [vmem:[%s0 + $0x28] sm:$0xf]
    %v54 = vld [vmem:[%s0 + $0x2c] sm:$0xf]
    %v55 = vld [vmem:[%s0 + $0x30] sm:$0xf]
    %v56 = vld [vmem:[%s0 + $0x34] sm:$0xf]
    %v57 = vld [vmem:[%s0 + $0x38] sm:$0xf]
    %v58 = vld [vmem:[%s0 + $0x3c] sm:$0xf]
    %v59 = vld [vmem:[%s1] sm:$0xf]
    %v60 = vld [vmem:[%s1 + $0x4] sm:$0x3]
    %v61 = vld [vmem:[%s2] sm:$0x1]
    %v63 = vperm.slane %v61, 0
    %v81 = vunpack.c.l.b16 %v43
    %v82 = vunpack.c.l.b16 %v44
    %v83 = vunpack.c.l.b16 %v45
    %v84 = vunpack.c.l.b16 %v46
    %v85 = vunpack.c.l.b16 %v47
    %v86 = vunpack.c.l.b16 %v48
    %v87 = vunpack.c.l.b16 %v49
    %v88 = vunpack.c.l.b16 %v50
    %v89 = vunpack.c.l.b16 %v51
    %v90 = vunpack.c.l.b16 %v52
    %v91 = vunpack.c.l.b16 %v53
    %v92 = vunpack.c.l.b16 %v54
    %v93 = vunpack.c.l.b16 %v55
    %v94 = vunpack.c.l.b16 %v56
    %v95 = vunpack.c.l.b16 %v57
    %v96 = vunpack.c.l.b16 %v58
    %v97 = vpack.c.b16 %v82, %v81
    %v98 = vpack.c.b16 %v84, %v83
    %v99 = vpack.c.b16 %v86, %v85
    %v100 = vpack.c.b16 %v88, %v87
    %v101 = vpack.c.b16 %v90, %v89
    %v102 = vpack.c.b16 %v92, %v91
    %v103 = vpack.c.b16 %v94, %v93
    %v104 = vpack.c.b16 %v96, %v95
    %v107 = vunpack.c.l.b16 %v59
    %v108 = vunpack.c.l.b16 %v60
    %v109 = vpack.c.b16 %v108, %v107
    %vm110 = vcmask 97280
    %v112 = vsel %vm110, %v97, 0
    %v115 = vsel %vm110, %v98, 0
    %v118 = vsel %vm110, %v99, 0
    %v121 = vsel %vm110, %v100, 0
    %v124 = vsel %vm110, %v101, 0
    %v127 = vsel %vm110, %v102, 0
    %v130 = vsel %vm110, %v103, 0
    %v133 = vsel %vm110, %v104, 0
    %vm135 = vcmask 1045504
    %v137 = vsel %vm135, %v109, 0
    %139 = vmatpush.bf16.msra.mxu0 0
    %140 = vmatpush.bf16.msra.mxu0 0
    %141 = vmatpush.bf16.msra.mxu0 0
    %142 = vmatpush.bf16.msra.mxu0 0
    %143 = vmatpush.bf16.msra.mxu0 0
    %144 = vmatpush.bf16.msra.mxu0 0
    %145 = vmatpush.bf16.msra.mxu0 0
    %146 = vmatpush.bf16.msra.mxu0 %v137
    %147 = vmatmul.bf16.gmra.mxu0 %v112
    %v148 = vpop.f32.mrf.mxu0
    %v149 = vadd.f32 %v63, %v148
    %v150 = vpop.f32.mrf.mxu0
    %v151 = vadd.f32 %v63, %v150
    %152 = vmatmul.bf16.gmra.mxu0 %v115
    %v153 = vpop.f32.mrf.mxu0
    %v154 = vadd.f32 %v63, %v153
    %v155 = vpop.f32.mrf.mxu0
    %v156 = vadd.f32 %v63, %v155
    %157 = vmatmul.bf16.gmra.mxu0 %v118
    %v158 = vpop.f32.mrf.mxu0
    %v159 = vadd.f32 %v63, %v158
    %v160 = vpop.f32.mrf.mxu0
    %v161 = vadd.f32 %v63, %v160
    %162 = vmatmul.bf16.gmra.mxu0 %v121
    %v163 = vpop.f32.mrf.mxu0
    %v164 = vadd.f32 %v63, %v163
    %v165 = vpop.f32.mrf.mxu0
    %v166 = vadd.f32 %v63, %v165
    %167 = vmatmul.bf16.gmra.mxu0 %v124
    %v168 = vpop.f32.mrf.mxu0
    %v169 = vadd.f32 %v63, %v168
    %v170 = vpop.f32.mrf.mxu0
    %v171 = vadd.f32 %v63, %v170
    %172 = vmatmul.bf16.gmra.mxu0 %v127
    %v173 = vpop.f32.mrf.mxu0
    %v174 = vadd.f32 %v63, %v173
    %v175 = vpop.f32.mrf.mxu0
    %v176 = vadd.f32 %v63, %v175
    %177 = vmatmul.bf16.gmra.mxu0 %v130
    %v178 = vpop.f32.mrf.mxu0
    %v179 = vadd.f32 %v63, %v178
    %v180 = vpop.f32.mrf.mxu0
    %v181 = vadd.f32 %v63, %v180
    %182 = vmatmul.bf16.gmra.mxu0 %v133
    %v183 = vpop.f32.mrf.mxu0
    %v184 = vadd.f32 %v63, %v183
    %v185 = vpop.f32.mrf.mxu0
    %v186 = vadd.f32 %v63, %v185
    %187 = vdwg.mxu0
    %v188 = vlaneseq
    %v189 = vand.u32 %v188, 127
    %vm190 = vcmp.ge.s32.totalorder %v189, 0
    %vm191 = vcmp.lt.s32.totalorder %v189, 8
    %vm192 = vmand %vm190, %vm191
    %v193 = vsel %vm192, 1, 0
    %v194 = vcvt.s32.f32 %v193
    %vm195 = vcmp.ge.s32.totalorder %v189, 8
    %vm196 = vcmp.lt.s32.totalorder %v189, 16
    %vm197 = vmand %vm195, %vm196
    %v198 = vsel %vm197, 1, 0
    %v199 = vcvt.s32.f32 %v198
    %vm200 = vcmp.ge.s32.totalorder %v189, 16
    %vm201 = vcmp.lt.s32.totalorder %v189, 24
    %vm202 = vmand %vm200, %vm201
    %v203 = vsel %vm202, 1, 0
    %v204 = vcvt.s32.f32 %v203
    %vm205 = vcmp.ge.s32.totalorder %v189, 24
    %vm206 = vcmp.lt.s32.totalorder %v189, 32
    %vm207 = vmand %vm205, %vm206
    %v208 = vsel %vm207, 1, 0
    %v209 = vcvt.s32.f32 %v208
    %v210 = vpack.c.bf16 %v194, %v194
    %v211 = vpack.c.bf16 %v199, %v199
    %v212 = vpack.c.bf16 %v204, %v204
    %v213 = vpack.c.bf16 %v209, %v209
    %v214 = vld [vmem:[%s9] sm:$0x3f]
    %v215 = vpack.c.bf16 %v151, %v149
    %v216 = vpack.c.bf16 %v156, %v154
    %v217 = vpack.c.bf16 %v161, %v159
    %v218 = vpack.c.bf16 %v166, %v164
    %v219 = vpack.c.bf16 %v171, %v169
    %v220 = vpack.c.bf16 %v176, %v174
    %v221 = vpack.c.bf16 %v181, %v179
    %v222 = vpack.c.bf16 %v186, %v184
    %v223 = vld [vmem:[%s3] sm:$0xf]
    %v224 = vld [vmem:[%s3 + $0x4] sm:$0xf]
    %v225 = vld [vmem:[%s3 + $0x8] sm:$0xf]
    %v226 = vld [vmem:[%s3 + $0xc] sm:$0xf]
    %v227 = vld [vmem:[%s4] sm:$0x1]
    %v229 = vperm.slane %v227, 0
    %v235 = vunpack.c.l.b16 %v223
    %v236 = vunpack.c.l.b16 %v224
    %v237 = vunpack.c.l.b16 %v225
    %v238 = vunpack.c.l.b16 %v226
    %v239 = vpack.c.b16 %v236, %v235
    %v240 = vpack.c.b16 %v238, %v237
    %vm243 = vcmask 261120
    %v245 = vsel %vm243, %v215, 0
    %v248 = vsel %vm243, %v216, 0
    %v251 = vsel %vm243, %v217, 0
    %v254 = vsel %vm243, %v218, 0
    %v257 = vsel %vm243, %v219, 0
    %v260 = vsel %vm243, %v220, 0
    %v263 = vsel %vm243, %v221, 0
    %v266 = vsel %vm243, %v222, 0
    %268 = vmatpush.bf16.msra.mxu0 0
    %269 = vmatpush.bf16.msra.mxu0 0
    %270 = vmatpush.bf16.msra.mxu0 0
    %271 = vmatpush.bf16.msra.mxu0 0
    %272 = vmatpush.bf16.msra.mxu0 0
    %273 = vmatpush.bf16.msra.mxu0 0
    %274 = vmatpush.bf16.msra.mxu0 %v240
    %275 = vmatpush.bf16.msra.mxu0 %v239
    %276 = vmatmul.bf16.gmra.mxu0 %v245
    %v277 = vpop.f32.mrf.mxu0
    %v278 = vadd.f32 %v229, %v277
    %v279 = vpop.f32.mrf.mxu0
    %v280 = vadd.f32 %v229, %v279
    %281 = vmatmul.bf16.gmra.mxu0 %v248
    %v282 = vpop.f32.mrf.mxu0
    %v283 = vadd.f32 %v229, %v282
    %v284 = vpop.f32.mrf.mxu0
    %v285 = vadd.f32 %v229, %v284
    %286 = vmatmul.bf16.gmra.mxu0 %v251
    %v287 = vpop.f32.mrf.mxu0
    %v288 = vadd.f32 %v229, %v287
    %v289 = vpop.f32.mrf.mxu0
    %v290 = vadd.f32 %v229, %v289
    %291 = vmatmul.bf16.gmra.mxu0 %v254
    %v292 = vpop.f32.mrf.mxu0
    %v293 = vadd.f32 %v229, %v292
    %v294 = vpop.f32.mrf.mxu0
    %v295 = vadd.f32 %v229, %v294
    %296 = vmatmul.bf16.gmra.mxu0 %v257
    %v297 = vpop.f32.mrf.mxu0
    %v298 = vadd.f32 %v229, %v297
    %v299 = vpop.f32.mrf.mxu0
    %v300 = vadd.f32 %v229, %v299
    %301 = vmatmul.bf16.gmra.mxu0 %v260
    %v302 = vpop.f32.mrf.mxu0
    %v303 = vadd.f32 %v229, %v302
    %v304 = vpop.f32.mrf.mxu0
    %v305 = vadd.f32 %v229, %v304
    %306 = vmatmul.bf16.gmra.mxu0 %v263
    %v307 = vpop.f32.mrf.mxu0
    %v308 = vadd.f32 %v229, %v307
    %v309 = vpop.f32.mrf.mxu0
    %v310 = vadd.f32 %v229, %v309
    %311 = vmatmul.bf16.gmra.mxu0 %v266
    %v312 = vpop.f32.mrf.mxu0
    %v313 = vadd.f32 %v229, %v312
    %v314 = vpop.f32.mrf.mxu0
    %v315 = vadd.f32 %v229, %v314
    %316 = vdwg.mxu0
    %v317 = vmul.f32 %v278, 0.35355338
    %v318 = vmul.f32 %v280, 0.35355338
    %v319 = vmul.f32 %v283, 0.35355338
    %v320 = vmul.f32 %v285, 0.35355338
    %v321 = vmul.f32 %v288, 0.35355338
    %v322 = vmul.f32 %v290, 0.35355338
    %v323 = vmul.f32 %v293, 0.35355338
    %v324 = vmul.f32 %v295, 0.35355338
    %v325 = vmul.f32 %v298, 0.35355338
    %v326 = vmul.f32 %v300, 0.35355338
    %v327 = vmul.f32 %v303, 0.35355338
    %v328 = vmul.f32 %v305, 0.35355338
    %v329 = vmul.f32 %v308, 0.35355338
    %v330 = vmul.f32 %v310, 0.35355338
    %v331 = vmul.f32 %v313, 0.35355338
    %v332 = vmul.f32 %v315, 0.35355338
    %v333 = vpack.c.bf16 %v317, %v317
    %v334 = vpack.c.bf16 %v318, %v318
    %v335 = vpack.c.bf16 %v319, %v319
    %v336 = vpack.c.bf16 %v320, %v320
    %v337 = vpack.c.bf16 %v321, %v321
    %v338 = vpack.c.bf16 %v322, %v322
    %v339 = vpack.c.bf16 %v323, %v323
    %v340 = vpack.c.bf16 %v324, %v324
    %v341 = vpack.c.bf16 %v325, %v325
    %v342 = vpack.c.bf16 %v326, %v326
    %v343 = vpack.c.bf16 %v327, %v327
    %v344 = vpack.c.bf16 %v328, %v328
    %v345 = vpack.c.bf16 %v329, %v329
    %v346 = vpack.c.bf16 %v330, %v330
    %v347 = vpack.c.bf16 %v331, %v331
    %v348 = vpack.c.bf16 %v332, %v332
    %v349 = vpack.c.bf16 %v278, %v278
    %v350 = vpack.c.bf16 %v280, %v280
    %v351 = vpack.c.bf16 %v283, %v283
    %v352 = vpack.c.bf16 %v285, %v285
    %v353 = vpack.c.bf16 %v288, %v288
    %v354 = vpack.c.bf16 %v290, %v290
    %v355 = vpack.c.bf16 %v293, %v293
    %v356 = vpack.c.bf16 %v295, %v295
    %v357 = vpack.c.bf16 %v298, %v298
    %v358 = vpack.c.bf16 %v300, %v300
    %v359 = vpack.c.bf16 %v303, %v303
    %v360 = vpack.c.bf16 %v305, %v305
    %v361 = vpack.c.bf16 %v308, %v308
    %v362 = vpack.c.bf16 %v310, %v310
    %v363 = vpack.c.bf16 %v313, %v313
    %v364 = vpack.c.bf16 %v315, %v315
    %v365 = vunpack.c.l.bf16 %v333
    %v366 = vunpack.c.l.bf16 %v334
    %v367 = vunpack.c.l.bf16 %v335
    %v368 = vunpack.c.l.bf16 %v336
    %v369 = vunpack.c.l.bf16 %v337
    %v370 = vunpack.c.l.bf16 %v338
    %v371 = vunpack.c.l.bf16 %v339
    %v372 = vunpack.c.l.bf16 %v340
    %v373 = vunpack.c.l.bf16 %v341
    %v374 = vunpack.c.l.bf16 %v342
    %v375 = vunpack.c.l.bf16 %v343
    %v376 = vunpack.c.l.bf16 %v344
    %v377 = vunpack.c.l.bf16 %v345
    %v378 = vunpack.c.l.bf16 %v346
    %v379 = vunpack.c.l.bf16 %v347
    %v380 = vunpack.c.l.bf16 %v348
    %v381 = vunpack.c.l.bf16 %v210
    %v382 = vmul.f32 %v365, %v381
    %v383 = vmul.f32 %v366, %v381
    %v384 = vmul.f32 %v367, %v381
    %v385 = vmul.f32 %v368, %v381
    %v386 = vmul.f32 %v369, %v381
    %v387 = vmul.f32 %v370, %v381
    %v388 = vmul.f32 %v371, %v381
    %v389 = vmul.f32 %v372, %v381
    %v390 = vmul.f32 %v373, %v381
    %v391 = vmul.f32 %v374, %v381
    %v392 = vmul.f32 %v375, %v381
    %v393 = vmul.f32 %v376, %v381
    %v394 = vmul.f32 %v377, %v381
    %v395 = vmul.f32 %v378, %v381
    %v396 = vmul.f32 %v379, %v381
    %v397 = vmul.f32 %v380, %v381
    %v398 = vpack.c.bf16 %v382, %v382
    %v399 = vpack.c.bf16 %v383, %v383
    %v400 = vpack.c.bf16 %v384, %v384
    %v401 = vpack.c.bf16 %v385, %v385
    %v402 = vpack.c.bf16 %v386, %v386
    %v403 = vpack.c.bf16 %v387, %v387
    %v404 = vpack.c.bf16 %v388, %v388
    %v405 = vpack.c.bf16 %v389, %v389
    %v406 = vpack.c.bf16 %v390, %v390
    %v407 = vpack.c.bf16 %v391, %v391
    %v408 = vpack.c.bf16 %v392, %v392
    %v409 = vpack.c.bf16 %v393, %v393
    %v410 = vpack.c.bf16 %v394, %v394
    %v411 = vpack.c.bf16 %v395, %v395
    %v412 = vpack.c.bf16 %v396, %v396
    %v413 = vpack.c.bf16 %v397, %v397
    %v414 = vunpack.c.l.bf16 %v211
    %v415 = vmul.f32 %v365, %v414
    %v416 = vmul.f32 %v366, %v414
    %v417 = vmul.f32 %v367, %v414
    %v418 = vmul.f32 %v368, %v414
    %v419 = vmul.f32 %v369, %v414
    %v420 = vmul.f32 %v370, %v414
    %v421 = vmul.f32 %v371, %v414
    %v422 = vmul.f32 %v372, %v414
    %v423 = vmul.f32 %v373, %v414
    %v424 = vmul.f32 %v374, %v414
    %v425 = vmul.f32 %v375, %v414
    %v426 = vmul.f32 %v376, %v414
    %v427 = vmul.f32 %v377, %v414
    %v428 = vmul.f32 %v378, %v414
    %v429 = vmul.f32 %v379, %v414
    %v430 = vmul.f32 %v380, %v414
    %v431 = vpack.c.bf16 %v415, %v415
    %v432 = vpack.c.bf16 %v416, %v416
    %v433 = vpack.c.bf16 %v417, %v417
    %v434 = vpack.c.bf16 %v418, %v418
    %v435 = vpack.c.bf16 %v419, %v419
    %v436 = vpack.c.bf16 %v420, %v420
    %v437 = vpack.c.bf16 %v421, %v421
    %v438 = vpack.c.bf16 %v422, %v422
    %v439 = vpack.c.bf16 %v423, %v423
    %v440 = vpack.c.bf16 %v424, %v424
    %v441 = vpack.c.bf16 %v425, %v425
    %v442 = vpack.c.bf16 %v426, %v426
    %v443 = vpack.c.bf16 %v427, %v427
    %v444 = vpack.c.bf16 %v428, %v428
    %v445 = vpack.c.bf16 %v429, %v429
    %v446 = vpack.c.bf16 %v430, %v430
    %v447 = vunpack.c.l.bf16 %v212
    %v448 = vmul.f32 %v365, %v447
    %v449 = vmul.f32 %v366, %v447
    %v450 = vmul.f32 %v367, %v447
    %v451 = vmul.f32 %v368, %v447
    %v452 = vmul.f32 %v369, %v447
    %v453 = vmul.f32 %v370, %v447
    %v454 = vmul.f32 %v371, %v447
    %v455 = vmul.f32 %v372, %v447
    %v456 = vmul.f32 %v373, %v447
    %v457 = vmul.f32 %v374, %v447
    %v458 = vmul.f32 %v375, %v447
    %v459 = vmul.f32 %v376, %v447
    %v460 = vmul.f32 %v377, %v447
    %v461 = vmul.f32 %v378, %v447
    %v462 = vmul.f32 %v379, %v447
    %v463 = vmul.f32 %v380, %v447
    %v464 = vpack.c.bf16 %v448, %v448
    %v465 = vpack.c.bf16 %v449, %v449
    %v466 = vpack.c.bf16 %v450, %v450
    %v467 = vpack.c.bf16 %v451, %v451
    %v468 = vpack.c.bf16 %v452, %v452
    %v469 = vpack.c.bf16 %v453, %v453
    %v470 = vpack.c.bf16 %v454, %v454
    %v471 = vpack.c.bf16 %v455, %v455
    %v472 = vpack.c.bf16 %v456, %v456
    %v473 = vpack.c.bf16 %v457, %v457
    %v474 = vpack.c.bf16 %v458, %v458
    %v475 = vpack.c.bf16 %v459, %v459
    %v476 = vpack.c.bf16 %v460, %v460
    %v477 = vpack.c.bf16 %v461, %v461
    %v478 = vpack.c.bf16 %v462, %v462
    %v479 = vpack.c.bf16 %v463, %v463
    %v480 = vunpack.c.l.bf16 %v213
    %v481 = vmul.f32 %v365, %v480
    %v482 = vmul.f32 %v366, %v480
    %v483 = vmul.f32 %v367, %v480
    %v484 = vmul.f32 %v368, %v480
    %v485 = vmul.f32 %v369, %v480
    %v486 = vmul.f32 %v370, %v480
    %v487 = vmul.f32 %v371, %v480
    %v488 = vmul.f32 %v372, %v480
    %v489 = vmul.f32 %v373, %v480
    %v490 = vmul.f32 %v374, %v480
    %v491 = vmul.f32 %v375, %v480
    %v492 = vmul.f32 %v376, %v480
    %v493 = vmul.f32 %v377, %v480
    %v494 = vmul.f32 %v378, %v480
    %v495 = vmul.f32 %v379, %v480
    %v496 = vmul.f32 %v380, %v480
    %v497 = vpack.c.bf16 %v481, %v481
    %v498 = vpack.c.bf16 %v482, %v482
    %v499 = vpack.c.bf16 %v483, %v483
    %v500 = vpack.c.bf16 %v484, %v484
    %v501 = vpack.c.bf16 %v485, %v485
    %v502 = vpack.c.bf16 %v486, %v486
    %v503 = vpack.c.bf16 %v487, %v487
    %v504 = vpack.c.bf16 %v488, %v488
    %v505 = vpack.c.bf16 %v489, %v489
    %v506 = vpack.c.bf16 %v490, %v490
    %v507 = vpack.c.bf16 %v491, %v491
    %v508 = vpack.c.bf16 %v492, %v492
    %v509 = vpack.c.bf16 %v493, %v493
    %v510 = vpack.c.bf16 %v494, %v494
    %v511 = vpack.c.bf16 %v495, %v495
    %v512 = vpack.c.bf16 %v496, %v496
    %v529 = vunpack.c.l.b16 %v398
    %v530 = vunpack.c.l.b16 %v399
    %v531 = vunpack.c.l.b16 %v400
    %v532 = vunpack.c.l.b16 %v401
    %v533 = vunpack.c.l.b16 %v402
    %v534 = vunpack.c.l.b16 %v403
    %v535 = vunpack.c.l.b16 %v404
    %v536 = vunpack.c.l.b16 %v405
    %v537 = vunpack.c.l.b16 %v406
    %v538 = vunpack.c.l.b16 %v407
    %v539 = vunpack.c.l.b16 %v408
    %v540 = vunpack.c.l.b16 %v409
    %v541 = vunpack.c.l.b16 %v410
    %v542 = vunpack.c.l.b16 %v411
    %v543 = vunpack.c.l.b16 %v412
    %v544 = vunpack.c.l.b16 %v413
    %v545 = vpack.c.b16 %v530, %v529
    %v546 = vpack.c.b16 %v532, %v531
    %v547 = vpack.c.b16 %v534, %v533
    %v548 = vpack.c.b16 %v536, %v535
    %v549 = vpack.c.b16 %v538, %v537
    %v550 = vpack.c.b16 %v540, %v539
    %v551 = vpack.c.b16 %v542, %v541
    %v552 = vpack.c.b16 %v544, %v543
    %v569 = vunpack.c.l.b16 %v431
    %v570 = vunpack.c.l.b16 %v432
    %v571 = vunpack.c.l.b16 %v433
    %v572 = vunpack.c.l.b16 %v434
    %v573 = vunpack.c.l.b16 %v435
    %v574 = vunpack.c.l.b16 %v436
    %v575 = vunpack.c.l.b16 %v437
    %v576 = vunpack.c.l.b16 %v438
    %v577 = vunpack.c.l.b16 %v439
    %v578 = vunpack.c.l.b16 %v440
    %v579 = vunpack.c.l.b16 %v441
    %v580 = vunpack.c.l.b16 %v442
    %v581 = vunpack.c.l.b16 %v443
    %v582 = vunpack.c.l.b16 %v444
    %v583 = vunpack.c.l.b16 %v445
    %v584 = vunpack.c.l.b16 %v446
    %v585 = vpack.c.b16 %v570, %v569
    %v586 = vpack.c.b16 %v572, %v571
    %v587 = vpack.c.b16 %v574, %v573
    %v588 = vpack.c.b16 %v576, %v575
    %v589 = vpack.c.b16 %v578, %v577
    %v590 = vpack.c.b16 %v580, %v579
    %v591 = vpack.c.b16 %v582, %v581
    %v592 = vpack.c.b16 %v584, %v583
    %v609 = vunpack.c.l.b16 %v464
    %v610 = vunpack.c.l.b16 %v465
    %v611 = vunpack.c.l.b16 %v466
    %v612 = vunpack.c.l.b16 %v467
    %v613 = vunpack.c.l.b16 %v468
    %v614 = vunpack.c.l.b16 %v469
    %v615 = vunpack.c.l.b16 %v470
    %v616 = vunpack.c.l.b16 %v471
    %v617 = vunpack.c.l.b16 %v472
    %v618 = vunpack.c.l.b16 %v473
    %v619 = vunpack.c.l.b16 %v474
    %v620 = vunpack.c.l.b16 %v475
    %v621 = vunpack.c.l.b16 %v476
    %v622 = vunpack.c.l.b16 %v477
    %v623 = vunpack.c.l.b16 %v478
    %v624 = vunpack.c.l.b16 %v479
    %v625 = vpack.c.b16 %v610, %v609
    %v626 = vpack.c.b16 %v612, %v611
    %v627 = vpack.c.b16 %v614, %v613
    %v628 = vpack.c.b16 %v616, %v615
    %v629 = vpack.c.b16 %v618, %v617
    %v630 = vpack.c.b16 %v620, %v619
    %v631 = vpack.c.b16 %v622, %v621
    %v632 = vpack.c.b16 %v624, %v623
    %v649 = vunpack.c.l.b16 %v497
    %v650 = vunpack.c.l.b16 %v498
    %v651 = vunpack.c.l.b16 %v499
    %v652 = vunpack.c.l.b16 %v500
    %v653 = vunpack.c.l.b16 %v501
    %v654 = vunpack.c.l.b16 %v502
    %v655 = vunpack.c.l.b16 %v503
    %v656 = vunpack.c.l.b16 %v504
    %v657 = vunpack.c.l.b16 %v505
    %v658 = vunpack.c.l.b16 %v506
    %v659 = vunpack.c.l.b16 %v507
    %v660 = vunpack.c.l.b16 %v508
    %v661 = vunpack.c.l.b16 %v509
    %v662 = vunpack.c.l.b16 %v510
    %v663 = vunpack.c.l.b16 %v511
    %v664 = vunpack.c.l.b16 %v512
    %v665 = vpack.c.b16 %v650, %v649
    %v666 = vpack.c.b16 %v652, %v651
    %v667 = vpack.c.b16 %v654, %v653
    %v668 = vpack.c.b16 %v656, %v655
    %v669 = vpack.c.b16 %v658, %v657
    %v670 = vpack.c.b16 %v660, %v659
    %v671 = vpack.c.b16 %v662, %v661
    %v672 = vpack.c.b16 %v664, %v663
    %v681 = vunpack.c.l.b16 %v349
    %v682 = vunpack.c.l.b16 %v350
    %v683 = vunpack.c.l.b16 %v351
    %v684 = vunpack.c.l.b16 %v352
    %v685 = vunpack.c.l.b16 %v353
    %v686 = vunpack.c.l.b16 %v354
    %v687 = vunpack.c.l.b16 %v355
    %v688 = vunpack.c.l.b16 %v356
    %v689 = vpack.c.b16 %v682, %v681
    %v690 = vpack.c.b16 %v684, %v683
    %v691 = vpack.c.b16 %v686, %v685
    %v692 = vpack.c.b16 %v688, %v687
    %693 = vrot.lane.b32.xlu0 %v689, 96
    %v694 = vpop.permute.xlu0 %693
    %695 = vrot.lane.b32.xlu0 %v690, 96
    %v696 = vpop.permute.xlu0 %695
    %697 = vrot.lane.b32.xlu0 %v691, 96
    %v698 = vpop.permute.xlu0 %697
    %699 = vrot.lane.b32.xlu0 %v692, 96
    %v700 = vpop.permute.xlu0 %699
    %v702 = vsel %vm243, %v545, 0
    %v705 = vsel %vm243, %v546, 0
    %v708 = vsel %vm243, %v547, 0
    %v711 = vsel %vm243, %v548, 0
    %v714 = vsel %vm243, %v585, 0
    %v717 = vsel %vm243, %v586, 0
    %v720 = vsel %vm243, %v587, 0
    %v723 = vsel %vm243, %v588, 0
    %v726 = vsel %vm243, %v625, 0
    %v729 = vsel %vm243, %v626, 0
    %v732 = vsel %vm243, %v627, 0
    %v735 = vsel %vm243, %v628, 0
    %v738 = vsel %vm243, %v665, 0
    %v741 = vsel %vm243, %v666, 0
    %v744 = vsel %vm243, %v667, 0
    %v747 = vsel %vm243, %v668, 0
    %v750 = vsel %vm243, %v694, 0
    %v753 = vsel %vm243, %v696, 0
    %v756 = vsel %vm243, %v698, 0
    %v759 = vsel %vm243, %v700, 0
    %761 = vmatpush.bf16.xpose.msra.mxu0 0
    %762 = vmatpush.bf16.xpose.msra.mxu0 0
    %763 = vmatpush.bf16.xpose.msra.mxu0 0
    %764 = vmatpush.bf16.xpose.msra.mxu0 0
    %765 = vmatpush.bf16.xpose.msra.mxu0 %v759
    %766 = vmatpush.bf16.xpose.msra.mxu0 %v756
    %767 = vmatpush.bf16.xpose.msra.mxu0 %v753
    %768 = vmatpush.bf16.xpose.msra.mxu0 %v750
    %769 = vmatmul.bf16.gmra.mxu0 %v702
    %v770 = vpop.f32.mrf.mxu0
    %v771 = vadd.f32 0.0, %v770
    %v772 = vpop.f32.mrf.mxu0
    %v773 = vadd.f32 0.0, %v772
    %774 = vmatmul.bf16.gmra.mxu0 %v705
    %v775 = vpop.f32.mrf.mxu0
    %v776 = vadd.f32 0.0, %v775
    %v777 = vpop.f32.mrf.mxu0
    %v778 = vadd.f32 0.0, %v777
    %779 = vmatmul.bf16.gmra.mxu0 %v708
    %v780 = vpop.f32.mrf.mxu0
    %v781 = vadd.f32 0.0, %v780
    %v782 = vpop.f32.mrf.mxu0
    %v783 = vadd.f32 0.0, %v782
    %784 = vmatmul.bf16.gmra.mxu0 %v711
    %v785 = vpop.f32.mrf.mxu0
    %v786 = vadd.f32 0.0, %v785
    %v787 = vpop.f32.mrf.mxu0
    %v788 = vadd.f32 0.0, %v787
    %789 = vmatmul.bf16.gmra.mxu0 %v714
    %v790 = vpop.f32.mrf.mxu0
    %v791 = vadd.f32 0.0, %v790
    %v792 = vpop.f32.mrf.mxu0
    %v793 = vadd.f32 0.0, %v792
    %794 = vmatmul.bf16.gmra.mxu0 %v717
    %v795 = vpop.f32.mrf.mxu0
    %v796 = vadd.f32 0.0, %v795
    %v797 = vpop.f32.mrf.mxu0
    %v798 = vadd.f32 0.0, %v797
    %799 = vmatmul.bf16.gmra.mxu0 %v720
    %v800 = vpop.f32.mrf.mxu0
    %v801 = vadd.f32 0.0, %v800
    %v802 = vpop.f32.mrf.mxu0
    %v803 = vadd.f32 0.0, %v802
    %804 = vmatmul.bf16.gmra.mxu0 %v723
    %v805 = vpop.f32.mrf.mxu0
    %v806 = vadd.f32 0.0, %v805
    %v807 = vpop.f32.mrf.mxu0
    %v808 = vadd.f32 0.0, %v807
    %809 = vmatmul.bf16.gmra.mxu0 %v726
    %v810 = vpop.f32.mrf.mxu0
    %v811 = vadd.f32 0.0, %v810
    %v812 = vpop.f32.mrf.mxu0
    %v813 = vadd.f32 0.0, %v812
    %814 = vmatmul.bf16.gmra.mxu0 %v729
    %v815 = vpop.f32.mrf.mxu0
    %v816 = vadd.f32 0.0, %v815
    %v817 = vpop.f32.mrf.mxu0
    %v818 = vadd.f32 0.0, %v817
    %819 = vmatmul.bf16.gmra.mxu0 %v732
    %v820 = vpop.f32.mrf.mxu0
    %v821 = vadd.f32 0.0, %v820
    %v822 = vpop.f32.mrf.mxu0
    %v823 = vadd.f32 0.0, %v822
    %824 = vmatmul.bf16.gmra.mxu0 %v735
    %v825 = vpop.f32.mrf.mxu0
    %v826 = vadd.f32 0.0, %v825
    %v827 = vpop.f32.mrf.mxu0
    %v828 = vadd.f32 0.0, %v827
    %829 = vmatmul.bf16.gmra.mxu0 %v738
    %v830 = vpop.f32.mrf.mxu0
    %v831 = vadd.f32 0.0, %v830
    %v832 = vpop.f32.mrf.mxu0
    %v833 = vadd.f32 0.0, %v832
    %834 = vmatmul.bf16.gmra.mxu0 %v741
    %v835 = vpop.f32.mrf.mxu0
    %v836 = vadd.f32 0.0, %v835
    %v837 = vpop.f32.mrf.mxu0
    %v838 = vadd.f32 0.0, %v837
    %839 = vmatmul.bf16.gmra.mxu0 %v744
    %v840 = vpop.f32.mrf.mxu0
    %v841 = vadd.f32 0.0, %v840
    %v842 = vpop.f32.mrf.mxu0
    %v843 = vadd.f32 0.0, %v842
    %844 = vmatmul.bf16.gmra.mxu0 %v747
    %v845 = vpop.f32.mrf.mxu0
    %v846 = vadd.f32 0.0, %v845
    %v847 = vpop.f32.mrf.mxu0
    %v848 = vadd.f32 0.0, %v847
    %849 = vdwg.mxu0
    %v858 = vunpack.c.l.b16 %v357
    %v859 = vunpack.c.l.b16 %v358
    %v860 = vunpack.c.l.b16 %v359
    %v861 = vunpack.c.l.b16 %v360
    %v862 = vunpack.c.l.b16 %v361
    %v863 = vunpack.c.l.b16 %v362
    %v864 = vunpack.c.l.b16 %v363
    %v865 = vunpack.c.l.b16 %v364
    %v866 = vpack.c.b16 %v859, %v858
    %v867 = vpack.c.b16 %v861, %v860
    %v868 = vpack.c.b16 %v863, %v862
    %v869 = vpack.c.b16 %v865, %v864
    %870 = vrot.lane.b32.xlu0 %v866, 96
    %v871 = vpop.permute.xlu0 %870
    %872 = vrot.lane.b32.xlu0 %v867, 96
    %v873 = vpop.permute.xlu0 %872
    %874 = vrot.lane.b32.xlu0 %v868, 96
    %v875 = vpop.permute.xlu0 %874
    %876 = vrot.lane.b32.xlu0 %v869, 96
    %v877 = vpop.permute.xlu0 %876
    %v879 = vsel %vm243, %v549, 0
    %v882 = vsel %vm243, %v550, 0
    %v885 = vsel %vm243, %v551, 0
    %v888 = vsel %vm243, %v552, 0
    %v891 = vsel %vm243, %v589, 0
    %v894 = vsel %vm243, %v590, 0
    %v897 = vsel %vm243, %v591, 0
    %v900 = vsel %vm243, %v592, 0
    %v903 = vsel %vm243, %v629, 0
    %v906 = vsel %vm243, %v630, 0
    %v909 = vsel %vm243, %v631, 0
    %v912 = vsel %vm243, %v632, 0
    %v915 = vsel %vm243, %v669, 0
    %v918 = vsel %vm243, %v670, 0
    %v921 = vsel %vm243, %v671, 0
    %v924 = vsel %vm243, %v672, 0
    %v927 = vsel %vm243, %v871, 0
    %v930 = vsel %vm243, %v873, 0
    %v933 = vsel %vm243, %v875, 0
    %v936 = vsel %vm243, %v877, 0
    %938 = vmatpush.bf16.xpose.msra.mxu0 0
    %939 = vmatpush.bf16.xpose.msra.mxu0 0
    %940 = vmatpush.bf16.xpose.msra.mxu0 0
    %941 = vmatpush.bf16.xpose.msra.mxu0 0
    %942 = vmatpush.bf16.xpose.msra.mxu0 %v936
    %943 = vmatpush.bf16.xpose.msra.mxu0 %v933
    %944 = vmatpush.bf16.xpose.msra.mxu0 %v930
    %945 = vmatpush.bf16.xpose.msra.mxu0 %v927
    %946 = vmatmul.bf16.gmra.mxu0 %v879
    %v947 = vpop.f32.mrf.mxu0
    %v948 = vadd.f32 0.0, %v947
    %v949 = vpop.f32.mrf.mxu0
    %v950 = vadd.f32 0.0, %v949
    %951 = vmatmul.bf16.gmra.mxu0 %v882
    %v952 = vpop.f32.mrf.mxu0
    %v953 = vadd.f32 0.0, %v952
    %v954 = vpop.f32.mrf.mxu0
    %v955 = vadd.f32 0.0, %v954
    %956 = vmatmul.bf16.gmra.mxu0 %v885
    %v957 = vpop.f32.mrf.mxu0
    %v958 = vadd.f32 0.0, %v957
    %v959 = vpop.f32.mrf.mxu0
    %v960 = vadd.f32 0.0, %v959
    %961 = vmatmul.bf16.gmra.mxu0 %v888
    %v962 = vpop.f32.mrf.mxu0
    %v963 = vadd.f32 0.0, %v962
    %v964 = vpop.f32.mrf.mxu0
    %v965 = vadd.f32 0.0, %v964
    %966 = vmatmul.bf16.gmra.mxu0 %v891
    %v967 = vpop.f32.mrf.mxu0
    %v968 = vadd.f32 0.0, %v967
    %v969 = vpop.f32.mrf.mxu0
    %v970 = vadd.f32 0.0, %v969
    %971 = vmatmul.bf16.gmra.mxu0 %v894
    %v972 = vpop.f32.mrf.mxu0
    %v973 = vadd.f32 0.0, %v972
    %v974 = vpop.f32.mrf.mxu0
    %v975 = vadd.f32 0.0, %v974
    %976 = vmatmul.bf16.gmra.mxu0 %v897
    %v977 = vpop.f32.mrf.mxu0
    %v978 = vadd.f32 0.0, %v977
    %v979 = vpop.f32.mrf.mxu0
    %v980 = vadd.f32 0.0, %v979
    %981 = vmatmul.bf16.gmra.mxu0 %v900
    %v982 = vpop.f32.mrf.mxu0
    %v983 = vadd.f32 0.0, %v982
    %v984 = vpop.f32.mrf.mxu0
    %v985 = vadd.f32 0.0, %v984
    %986 = vmatmul.bf16.gmra.mxu0 %v903
    %v987 = vpop.f32.mrf.mxu0
    %v988 = vadd.f32 0.0, %v987
    %v989 = vpop.f32.mrf.mxu0
    %v990 = vadd.f32 0.0, %v989
    %991 = vmatmul.bf16.gmra.mxu0 %v906
    %v992 = vpop.f32.mrf.mxu0
    %v993 = vadd.f32 0.0, %v992
    %v994 = vpop.f32.mrf.mxu0
    %v995 = vadd.f32 0.0, %v994
    %996 = vmatmul.bf16.gmra.mxu0 %v909
    %v997 = vpop.f32.mrf.mxu0
    %v998 = vadd.f32 0.0, %v997
    %v999 = vpop.f32.mrf.mxu0
    %v1000 = vadd.f32 0.0, %v999
    %1001 = vmatmul.bf16.gmra.mxu0 %v912
    %v1002 = vpop.f32.mrf.mxu0
    %v1003 = vadd.f32 0.0, %v1002
    %v1004 = vpop.f32.mrf.mxu0
    %v1005 = vadd.f32 0.0, %v1004
    %1006 = vmatmul.bf16.gmra.mxu0 %v915
    %v1007 = vpop.f32.mrf.mxu0
    %v1008 = vadd.f32 0.0, %v1007
    %v1009 = vpop.f32.mrf.mxu0
    %v1010 = vadd.f32 0.0, %v1009
    %1011 = vmatmul.bf16.gmra.mxu0 %v918
    %v1012 = vpop.f32.mrf.mxu0
    %v1013 = vadd.f32 0.0, %v1012
    %v1014 = vpop.f32.mrf.mxu0
    %v1015 = vadd.f32 0.0, %v1014
    %1016 = vmatmul.bf16.gmra.mxu0 %v921
    %v1017 = vpop.f32.mrf.mxu0
    %v1018 = vadd.f32 0.0, %v1017
    %v1019 = vpop.f32.mrf.mxu0
    %v1020 = vadd.f32 0.0, %v1019
    %1021 = vmatmul.bf16.gmra.mxu0 %v924
    %v1022 = vpop.f32.mrf.mxu0
    %v1023 = vadd.f32 0.0, %v1022
    %v1024 = vpop.f32.mrf.mxu0
    %v1025 = vadd.f32 0.0, %v1024
    %1026 = vdwg.mxu0
    %vm1027 = vcmask 523264
    %v1028 = vsel %vm1027, %v771, -inf
    %1029 = vmax.xlane.f32.xlu0 %v1028
    %v1030 = vpop.xlane.xlu0 %1029
    %v1031 = vsel %vm1027, %v773, -inf
    %1032 = vmax.xlane.f32.xlu0 %v1031
    %v1033 = vpop.xlane.xlu0 %1032
    %v1034 = vsel %vm1027, %v776, -inf
    %1035 = vmax.xlane.f32.xlu0 %v1034
    %v1036 = vpop.xlane.xlu0 %1035
    %v1037 = vsel %vm1027, %v778, -inf
    %1038 = vmax.xlane.f32.xlu0 %v1037
    %v1039 = vpop.xlane.xlu0 %1038
    %v1040 = vsel %vm1027, %v781, -inf
    %1041 = vmax.xlane.f32.xlu0 %v1040
    %v1042 = vpop.xlane.xlu0 %1041
    %v1043 = vsel %vm1027, %v783, -inf
    %1044 = vmax.xlane.f32.xlu0 %v1043
    %v1045 = vpop.xlane.xlu0 %1044
    %v1046 = vsel %vm1027, %v786, -inf
    %1047 = vmax.xlane.f32.xlu0 %v1046
    %v1048 = vpop.xlane.xlu0 %1047
    %v1049 = vsel %vm1027, %v788, -inf
    %1050 = vmax.xlane.f32.xlu0 %v1049
    %v1051 = vpop.xlane.xlu0 %1050
    %v1052 = vsel %vm1027, %v791, -inf
    %1053 = vmax.xlane.f32.xlu0 %v1052
    %v1054 = vpop.xlane.xlu0 %1053
    %v1055 = vsel %vm1027, %v793, -inf
    %1056 = vmax.xlane.f32.xlu0 %v1055
    %v1057 = vpop.xlane.xlu0 %1056
    %v1058 = vsel %vm1027, %v796, -inf
    %1059 = vmax.xlane.f32.xlu0 %v1058
    %v1060 = vpop.xlane.xlu0 %1059
    %v1061 = vsel %vm1027, %v798, -inf
    %1062 = vmax.xlane.f32.xlu0 %v1061
    %v1063 = vpop.xlane.xlu0 %1062
    %v1064 = vsel %vm1027, %v801, -inf
    %1065 = vmax.xlane.f32.xlu0 %v1064
    %v1066 = vpop.xlane.xlu0 %1065
    %v1067 = vsel %vm1027, %v803, -inf
    %1068 = vmax.xlane.f32.xlu0 %v1067
    %v1069 = vpop.xlane.xlu0 %1068
    %v1070 = vsel %vm1027, %v806, -inf
    %1071 = vmax.xlane.f32.xlu0 %v1070
    %v1072 = vpop.xlane.xlu0 %1071
    %v1073 = vsel %vm1027, %v808, -inf
    %1074 = vmax.xlane.f32.xlu0 %v1073
    %v1075 = vpop.xlane.xlu0 %1074
    %v1076 = vsel %vm1027, %v811, -inf
    %1077 = vmax.xlane.f32.xlu0 %v1076
    %v1078 = vpop.xlane.xlu0 %1077
    %v1079 = vsel %vm1027, %v813, -inf
    %1080 = vmax.xlane.f32.xlu0 %v1079
    %v1081 = vpop.xlane.xlu0 %1080
    %v1082 = vsel %vm1027, %v816, -inf
    %1083 = vmax.xlane.f32.xlu0 %v1082
    %v1084 = vpop.xlane.xlu0 %1083
    %v1085 = vsel %vm1027, %v818, -inf
    %1086 = vmax.xlane.f32.xlu0 %v1085
    %v1087 = vpop.xlane.xlu0 %1086
    %v1088 = vsel %vm1027, %v821, -inf
    %1089 = vmax.xlane.f32.xlu0 %v1088
    %v1090 = vpop.xlane.xlu0 %1089
    %v1091 = vsel %vm1027, %v823, -inf
    %1092 = vmax.xlane.f32.xlu0 %v1091
    %v1093 = vpop.xlane.xlu0 %1092
    %v1094 = vsel %vm1027, %v826, -inf
    %1095 = vmax.xlane.f32.xlu0 %v1094
    %v1096 = vpop.xlane.xlu0 %1095
    %v1097 = vsel %vm1027, %v828, -inf
    %1098 = vmax.xlane.f32.xlu0 %v1097
    %v1099 = vpop.xlane.xlu0 %1098
    %v1100 = vsel %vm1027, %v831, -inf
    %1101 = vmax.xlane.f32.xlu0 %v1100
    %v1102 = vpop.xlane.xlu0 %1101
    %v1103 = vsel %vm1027, %v833, -inf
    %1104 = vmax.xlane.f32.xlu0 %v1103
    %v1105 = vpop.xlane.xlu0 %1104
    %v1106 = vsel %vm1027, %v836, -inf
    %1107 = vmax.xlane.f32.xlu0 %v1106
    %v1108 = vpop.xlane.xlu0 %1107
    %v1109 = vsel %vm1027, %v838, -inf
    %1110 = vmax.xlane.f32.xlu0 %v1109
    %v1111 = vpop.xlane.xlu0 %1110
    %v1112 = vsel %vm1027, %v841, -inf
    %1113 = vmax.xlane.f32.xlu0 %v1112
    %v1114 = vpop.xlane.xlu0 %1113
    %v1115 = vsel %vm1027, %v843, -inf
    %1116 = vmax.xlane.f32.xlu0 %v1115
    %v1117 = vpop.xlane.xlu0 %1116
    %v1118 = vsel %vm1027, %v846, -inf
    %1119 = vmax.xlane.f32.xlu0 %v1118
    %v1120 = vpop.xlane.xlu0 %1119
    %v1121 = vsel %vm1027, %v848, -inf
    %1122 = vmax.xlane.f32.xlu0 %v1121
    %v1123 = vpop.xlane.xlu0 %1122
    %v1124 = vsel %vm1027, %v948, -inf
    %1125 = vmax.xlane.f32.xlu0 %v1124
    %v1126 = vpop.xlane.xlu0 %1125
    %v1127 = vsel %vm1027, %v950, -inf
    %1128 = vmax.xlane.f32.xlu0 %v1127
    %v1129 = vpop.xlane.xlu0 %1128
    %v1130 = vsel %vm1027, %v953, -inf
    %1131 = vmax.xlane.f32.xlu0 %v1130
    %v1132 = vpop.xlane.xlu0 %1131
    %v1133 = vsel %vm1027, %v955, -inf
    %1134 = vmax.xlane.f32.xlu0 %v1133
    %v1135 = vpop.xlane.xlu0 %1134
    %v1136 = vsel %vm1027, %v958, -inf
    %1137 = vmax.xlane.f32.xlu0 %v1136
    %v1138 = vpop.xlane.xlu0 %1137
    %v1139 = vsel %vm1027, %v960, -inf
    %1140 = vmax.xlane.f32.xlu0 %v1139
    %v1141 = vpop.xlane.xlu0 %1140
    %v1142 = vsel %vm1027, %v963, -inf
    %1143 = vmax.xlane.f32.xlu0 %v1142
    %v1144 = vpop.xlane.xlu0 %1143
    %v1145 = vsel %vm1027, %v965, -inf
    %1146 = vmax.xlane.f32.xlu0 %v1145
    %v1147 = vpop.xlane.xlu0 %1146
    %v1148 = vsel %vm1027, %v968, -inf
    %1149 = vmax.xlane.f32.xlu0 %v1148
    %v1150 = vpop.xlane.xlu0 %1149
    %v1151 = vsel %vm1027, %v970, -inf
    %1152 = vmax.xlane.f32.xlu0 %v1151
    %v1153 = vpop.xlane.xlu0 %1152
    %v1154 = vsel %vm1027, %v973, -inf
    %1155 = vmax.xlane.f32.xlu0 %v1154
    %v1156 = vpop.xlane.xlu0 %1155
    %v1157 = vsel %vm1027, %v975, -inf
    %1158 = vmax.xlane.f32.xlu0 %v1157
    %v1159 = vpop.xlane.xlu0 %1158
    %v1160 = vsel %vm1027, %v978, -inf
    %1161 = vmax.xlane.f32.xlu0 %v1160
    %v1162 = vpop.xlane.xlu0 %1161
    %v1163 = vsel %vm1027, %v980, -inf
    %1164 = vmax.xlane.f32.xlu0 %v1163
    %v1165 = vpop.xlane.xlu0 %1164
    %v1166 = vsel %vm1027, %v983, -inf
    %1167 = vmax.xlane.f32.xlu0 %v1166
    %v1168 = vpop.xlane.xlu0 %1167
    %v1169 = vsel %vm1027, %v985, -inf
    %1170 = vmax.xlane.f32.xlu0 %v1169
    %v1171 = vpop.xlane.xlu0 %1170
    %v1172 = vsel %vm1027, %v988, -inf
    %1173 = vmax.xlane.f32.xlu0 %v1172
    %v1174 = vpop.xlane.xlu0 %1173
    %v1175 = vsel %vm1027, %v990, -inf
    %1176 = vmax.xlane.f32.xlu0 %v1175
    %v1177 = vpop.xlane.xlu0 %1176
    %v1178 = vsel %vm1027, %v993, -inf
    %1179 = vmax.xlane.f32.xlu0 %v1178
    %v1180 = vpop.xlane.xlu0 %1179
    %v1181 = vsel %vm1027, %v995, -inf
    %1182 = vmax.xlane.f32.xlu0 %v1181
    %v1183 = vpop.xlane.xlu0 %1182
    %v1184 = vsel %vm1027, %v998, -inf
    %1185 = vmax.xlane.f32.xlu0 %v1184
    %v1186 = vpop.xlane.xlu0 %1185
    %v1187 = vsel %vm1027, %v1000, -inf
    %1188 = vmax.xlane.f32.xlu0 %v1187
    %v1189 = vpop.xlane.xlu0 %1188
    %v1190 = vsel %vm1027, %v1003, -inf
    %1191 = vmax.xlane.f32.xlu0 %v1190
    %v1192 = vpop.xlane.xlu0 %1191
    %v1193 = vsel %vm1027, %v1005, -inf
    %1194 = vmax.xlane.f32.xlu0 %v1193
    %v1195 = vpop.xlane.xlu0 %1194
    %v1196 = vsel %vm1027, %v1008, -inf
    %1197 = vmax.xlane.f32.xlu0 %v1196
    %v1198 = vpop.xlane.xlu0 %1197
    %v1199 = vsel %vm1027, %v1010, -inf
    %1200 = vmax.xlane.f32.xlu0 %v1199
    %v1201 = vpop.xlane.xlu0 %1200
    %v1202 = vsel %vm1027, %v1013, -inf
    %1203 = vmax.xlane.f32.xlu0 %v1202
    %v1204 = vpop.xlane.xlu0 %1203
    %v1205 = vsel %vm1027, %v1015, -inf
    %1206 = vmax.xlane.f32.xlu0 %v1205
    %v1207 = vpop.xlane.xlu0 %1206
    %v1208 = vsel %vm1027, %v1018, -inf
    %1209 = vmax.xlane.f32.xlu0 %v1208
    %v1210 = vpop.xlane.xlu0 %1209
    %v1211 = vsel %vm1027, %v1020, -inf
    %1212 = vmax.xlane.f32.xlu0 %v1211
    %v1213 = vpop.xlane.xlu0 %1212
    %v1214 = vsel %vm1027, %v1023, -inf
    %1215 = vmax.xlane.f32.xlu0 %v1214
    %v1216 = vpop.xlane.xlu0 %1215
    %v1217 = vsel %vm1027, %v1025, -inf
    %1218 = vmax.xlane.f32.xlu0 %v1217
    %v1219 = vpop.xlane.xlu0 %1218
    %v1220 = vsub.f32 %v771, %v1030
    %v1221 = vsub.f32 %v773, %v1033
    %v1222 = vsub.f32 %v776, %v1036
    %v1223 = vsub.f32 %v778, %v1039
    %v1224 = vsub.f32 %v781, %v1042
    %v1225 = vsub.f32 %v783, %v1045
    %v1226 = vsub.f32 %v786, %v1048
    %v1227 = vsub.f32 %v788, %v1051
    %v1228 = vsub.f32 %v791, %v1054
    %v1229 = vsub.f32 %v793, %v1057
    %v1230 = vsub.f32 %v796, %v1060
    %v1231 = vsub.f32 %v798, %v1063
    %v1232 = vsub.f32 %v801, %v1066
    %v1233 = vsub.f32 %v803, %v1069
    %v1234 = vsub.f32 %v806, %v1072
    %v1235 = vsub.f32 %v808, %v1075
    %v1236 = vsub.f32 %v811, %v1078
    %v1237 = vsub.f32 %v813, %v1081
    %v1238 = vsub.f32 %v816, %v1084
    %v1239 = vsub.f32 %v818, %v1087
    %v1240 = vsub.f32 %v821, %v1090
    %v1241 = vsub.f32 %v823, %v1093
    %v1242 = vsub.f32 %v826, %v1096
    %v1243 = vsub.f32 %v828, %v1099
    %v1244 = vsub.f32 %v831, %v1102
    %v1245 = vsub.f32 %v833, %v1105
    %v1246 = vsub.f32 %v836, %v1108
    %v1247 = vsub.f32 %v838, %v1111
    %v1248 = vsub.f32 %v841, %v1114
    %v1249 = vsub.f32 %v843, %v1117
    %v1250 = vsub.f32 %v846, %v1120
    %v1251 = vsub.f32 %v848, %v1123
    %v1252 = vsub.f32 %v948, %v1126
    %v1253 = vsub.f32 %v950, %v1129
    %v1254 = vsub.f32 %v953, %v1132
    %v1255 = vsub.f32 %v955, %v1135
    %v1256 = vsub.f32 %v958, %v1138
    %v1257 = vsub.f32 %v960, %v1141
    %v1258 = vsub.f32 %v963, %v1144
    %v1259 = vsub.f32 %v965, %v1147
    %v1260 = vsub.f32 %v968, %v1150
    %v1261 = vsub.f32 %v970, %v1153
    %v1262 = vsub.f32 %v973, %v1156
    %v1263 = vsub.f32 %v975, %v1159
    %v1264 = vsub.f32 %v978, %v1162
    %v1265 = vsub.f32 %v980, %v1165
    %v1266 = vsub.f32 %v983, %v1168
    %v1267 = vsub.f32 %v985, %v1171
    %v1268 = vsub.f32 %v988, %v1174
    %v1269 = vsub.f32 %v990, %v1177
    %v1270 = vsub.f32 %v993, %v1180
    %v1271 = vsub.f32 %v995, %v1183
    %v1272 = vsub.f32 %v998, %v1186
    %v1273 = vsub.f32 %v1000, %v1189
    %v1274 = vsub.f32 %v1003, %v1192
    %v1275 = vsub.f32 %v1005, %v1195
    %v1276 = vsub.f32 %v1008, %v1198
    %v1277 = vsub.f32 %v1010, %v1201
    %v1278 = vsub.f32 %v1013, %v1204
    %v1279 = vsub.f32 %v1015, %v1207
    %v1280 = vsub.f32 %v1018, %v1210
    %v1281 = vsub.f32 %v1020, %v1213
    %v1282 = vsub.f32 %v1023, %v1216
    %v1283 = vsub.f32 %v1025, %v1219
    %v1284 = vmul.f32 %v1220, 1.442695
    %v1285 = vpow.pop %v1284
    %v1286 = vmul.f32 %v1221, 1.442695
    %v1287 = vpow.pop %v1286
    %v1288 = vmul.f32 %v1222, 1.442695
    %v1289 = vpow.pop %v1288
    %v1290 = vmul.f32 %v1223, 1.442695
    %v1291 = vpow.pop %v1290
    %v1292 = vmul.f32 %v1224, 1.442695
    %v1293 = vpow.pop %v1292
    %v1294 = vmul.f32 %v1225, 1.442695
    %v1295 = vpow.pop %v1294
    %v1296 = vmul.f32 %v1226, 1.442695
    %v1297 = vpow.pop %v1296
    %v1298 = vmul.f32 %v1227, 1.442695
    %v1299 = vpow.pop %v1298
    %v1300 = vmul.f32 %v1228, 1.442695
    %v1301 = vpow.pop %v1300
    %v1302 = vmul.f32 %v1229, 1.442695
    %v1303 = vpow.pop %v1302
    %v1304 = vmul.f32 %v1230, 1.442695
    %v1305 = vpow.pop %v1304
    %v1306 = vmul.f32 %v1231, 1.442695
    %v1307 = vpow.pop %v1306
    %v1308 = vmul.f32 %v1232, 1.442695
    %v1309 = vpow.pop %v1308
    %v1310 = vmul.f32 %v1233, 1.442695
    %v1311 = vpow.pop %v1310
    %v1312 = vmul.f32 %v1234, 1.442695
    %v1313 = vpow.pop %v1312
    %v1314 = vmul.f32 %v1235, 1.442695
    %v1315 = vpow.pop %v1314
    %v1316 = vmul.f32 %v1236, 1.442695
    %v1317 = vpow.pop %v1316
    %v1318 = vmul.f32 %v1237, 1.442695
    %v1319 = vpow.pop %v1318
    %v1320 = vmul.f32 %v1238, 1.442695
    %v1321 = vpow.pop %v1320
    %v1322 = vmul.f32 %v1239, 1.442695
    %v1323 = vpow.pop %v1322
    %v1324 = vmul.f32 %v1240, 1.442695
    %v1325 = vpow.pop %v1324
    %v1326 = vmul.f32 %v1241, 1.442695
    %v1327 = vpow.pop %v1326
    %v1328 = vmul.f32 %v1242, 1.442695
    %v1329 = vpow.pop %v1328
    %v1330 = vmul.f32 %v1243, 1.442695
    %v1331 = vpow.pop %v1330
    %v1332 = vmul.f32 %v1244, 1.442695
    %v1333 = vpow.pop %v1332
    %v1334 = vmul.f32 %v1245, 1.442695
    %v1335 = vpow.pop %v1334
    %v1336 = vmul.f32 %v1246, 1.442695
    %v1337 = vpow.pop %v1336
    %v1338 = vmul.f32 %v1247, 1.442695
    %v1339 = vpow.pop %v1338
    %v1340 = vmul.f32 %v1248, 1.442695
    %v1341 = vpow.pop %v1340
    %v1342 = vmul.f32 %v1249, 1.442695
    %v1343 = vpow.pop %v1342
    %v1344 = vmul.f32 %v1250, 1.442695
    %v1345 = vpow.pop %v1344
    %v1346 = vmul.f32 %v1251, 1.442695
    %v1347 = vpow.pop %v1346
    %v1348 = vmul.f32 %v1252, 1.442695
    %v1349 = vpow.pop %v1348
    %v1350 = vmul.f32 %v1253, 1.442695
    %v1351 = vpow.pop %v1350
    %v1352 = vmul.f32 %v1254, 1.442695
    %v1353 = vpow.pop %v1352
    %v1354 = vmul.f32 %v1255, 1.442695
    %v1355 = vpow.pop %v1354
    %v1356 = vmul.f32 %v1256, 1.442695
    %v1357 = vpow.pop %v1356
    %v1358 = vmul.f32 %v1257, 1.442695
    %v1359 = vpow.pop %v1358
    %v1360 = vmul.f32 %v1258, 1.442695
    %v1361 = vpow.pop %v1360
    %v1362 = vmul.f32 %v1259, 1.442695
    %v1363 = vpow.pop %v1362
    %v1364 = vmul.f32 %v1260, 1.442695
    %v1365 = vpow.pop %v1364
    %v1366 = vmul.f32 %v1261, 1.442695
    %v1367 = vpow.pop %v1366
    %v1368 = vmul.f32 %v1262, 1.442695
    %v1369 = vpow.pop %v1368
    %v1370 = vmul.f32 %v1263, 1.442695
    %v1371 = vpow.pop %v1370
    %v1372 = vmul.f32 %v1264, 1.442695
    %v1373 = vpow.pop %v1372
    %v1374 = vmul.f32 %v1265, 1.442695
    %v1375 = vpow.pop %v1374
    %v1376 = vmul.f32 %v1266, 1.442695
    %v1377 = vpow.pop %v1376
    %v1378 = vmul.f32 %v1267, 1.442695
    %v1379 = vpow.pop %v1378
    %v1380 = vmul.f32 %v1268, 1.442695
    %v1381 = vpow.pop %v1380
    %v1382 = vmul.f32 %v1269, 1.442695
    %v1383 = vpow.pop %v1382
    %v1384 = vmul.f32 %v1270, 1.442695
    %v1385 = vpow.pop %v1384
    %v1386 = vmul.f32 %v1271, 1.442695
    %v1387 = vpow.pop %v1386
    %v1388 = vmul.f32 %v1272, 1.442695
    %v1389 = vpow.pop %v1388
    %v1390 = vmul.f32 %v1273, 1.442695
    %v1391 = vpow.pop %v1390
    %v1392 = vmul.f32 %v1274, 1.442695
    %v1393 = vpow.pop %v1392
    %v1394 = vmul.f32 %v1275, 1.442695
    %v1395 = vpow.pop %v1394
    %v1396 = vmul.f32 %v1276, 1.442695
    %v1397 = vpow.pop %v1396
    %v1398 = vmul.f32 %v1277, 1.442695
    %v1399 = vpow.pop %v1398
    %v1400 = vmul.f32 %v1278, 1.442695
    %v1401 = vpow.pop %v1400
    %v1402 = vmul.f32 %v1279, 1.442695
    %v1403 = vpow.pop %v1402
    %v1404 = vmul.f32 %v1280, 1.442695
    %v1405 = vpow.pop %v1404
    %v1406 = vmul.f32 %v1281, 1.442695
    %v1407 = vpow.pop %v1406
    %v1408 = vmul.f32 %v1282, 1.442695
    %v1409 = vpow.pop %v1408
    %v1410 = vmul.f32 %v1283, 1.442695
    %v1411 = vpow.pop %v1410
    %v1412 = vsel %vm1027, %v1285, 0.0
    %1413 = vadd.xlane.f32.xlu0 %v1412
    %v1414 = vpop.xlane.xlu0 %1413
    %v1415 = vsel %vm1027, %v1287, 0.0
    %1416 = vadd.xlane.f32.xlu0 %v1415
    %v1417 = vpop.xlane.xlu0 %1416
    %v1418 = vsel %vm1027, %v1289, 0.0
    %1419 = vadd.xlane.f32.xlu0 %v1418
    %v1420 = vpop.xlane.xlu0 %1419
    %v1421 = vsel %vm1027, %v1291, 0.0
    %1422 = vadd.xlane.f32.xlu0 %v1421
    %v1423 = vpop.xlane.xlu0 %1422
    %v1424 = vsel %vm1027, %v1293, 0.0
    %1425 = vadd.xlane.f32.xlu0 %v1424
    %v1426 = vpop.xlane.xlu0 %1425
    %v1427 = vsel %vm1027, %v1295, 0.0
    %1428 = vadd.xlane.f32.xlu0 %v1427
    %v1429 = vpop.xlane.xlu0 %1428
    %v1430 = vsel %vm1027, %v1297, 0.0
    %1431 = vadd.xlane.f32.xlu0 %v1430
    %v1432 = vpop.xlane.xlu0 %1431
    %v1433 = vsel %vm1027, %v1299, 0.0
    %1434 = vadd.xlane.f32.xlu0 %v1433
    %v1435 = vpop.xlane.xlu0 %1434
    %v1436 = vsel %vm1027, %v1301, 0.0
    %1437 = vadd.xlane.f32.xlu0 %v1436
    %v1438 = vpop.xlane.xlu0 %1437
    %v1439 = vsel %vm1027, %v1303, 0.0
    %1440 = vadd.xlane.f32.xlu0 %v1439
    %v1441 = vpop.xlane.xlu0 %1440
    %v1442 = vsel %vm1027, %v1305, 0.0
    %1443 = vadd.xlane.f32.xlu0 %v1442
    %v1444 = vpop.xlane.xlu0 %1443
    %v1445 = vsel %vm1027, %v1307, 0.0
    %1446 = vadd.xlane.f32.xlu0 %v1445
    %v1447 = vpop.xlane.xlu0 %1446
    %v1448 = vsel %vm1027, %v1309, 0.0
    %1449 = vadd.xlane.f32.xlu0 %v1448
    %v1450 = vpop.xlane.xlu0 %1449
    %v1451 = vsel %vm1027, %v1311, 0.0
    %1452 = vadd.xlane.f32.xlu0 %v1451
    %v1453 = vpop.xlane.xlu0 %1452
    %v1454 = vsel %vm1027, %v1313, 0.0
    %1455 = vadd.xlane.f32.xlu0 %v1454
    %v1456 = vpop.xlane.xlu0 %1455
    %v1457 = vsel %vm1027, %v1315, 0.0
    %1458 = vadd.xlane.f32.xlu0 %v1457
    %v1459 = vpop.xlane.xlu0 %1458
    %v1460 = vsel %vm1027, %v1317, 0.0
    %1461 = vadd.xlane.f32.xlu0 %v1460
    %v1462 = vpop.xlane.xlu0 %1461
    %v1463 = vsel %vm1027, %v1319, 0.0
    %1464 = vadd.xlane.f32.xlu0 %v1463
    %v1465 = vpop.xlane.xlu0 %1464
    %v1466 = vsel %vm1027, %v1321, 0.0
    %1467 = vadd.xlane.f32.xlu0 %v1466
    %v1468 = vpop.xlane.xlu0 %1467
    %v1469 = vsel %vm1027, %v1323, 0.0
    %1470 = vadd.xlane.f32.xlu0 %v1469
    %v1471 = vpop.xlane.xlu0 %1470
    %v1472 = vsel %vm1027, %v1325, 0.0
    %1473 = vadd.xlane.f32.xlu0 %v1472
    %v1474 = vpop.xlane.xlu0 %1473
    %v1475 = vsel %vm1027, %v1327, 0.0
    %1476 = vadd.xlane.f32.xlu0 %v1475
    %v1477 = vpop.xlane.xlu0 %1476
    %v1478 = vsel %vm1027, %v1329, 0.0
    %1479 = vadd.xlane.f32.xlu0 %v1478
    %v1480 = vpop.xlane.xlu0 %1479
    %v1481 = vsel %vm1027, %v1331, 0.0
    %1482 = vadd.xlane.f32.xlu0 %v1481
    %v1483 = vpop.xlane.xlu0 %1482
    %v1484 = vsel %vm1027, %v1333, 0.0
    %1485 = vadd.xlane.f32.xlu0 %v1484
    %v1486 = vpop.xlane.xlu0 %1485
    %v1487 = vsel %vm1027, %v1335, 0.0
    %1488 = vadd.xlane.f32.xlu0 %v1487
    %v1489 = vpop.xlane.xlu0 %1488
    %v1490 = vsel %vm1027, %v1337, 0.0
    %1491 = vadd.xlane.f32.xlu0 %v1490
    %v1492 = vpop.xlane.xlu0 %1491
    %v1493 = vsel %vm1027, %v1339, 0.0
    %1494 = vadd.xlane.f32.xlu0 %v1493
    %v1495 = vpop.xlane.xlu0 %1494
    %v1496 = vsel %vm1027, %v1341, 0.0
    %1497 = vadd.xlane.f32.xlu0 %v1496
    %v1498 = vpop.xlane.xlu0 %1497
    %v1499 = vsel %vm1027, %v1343, 0.0
    %1500 = vadd.xlane.f32.xlu0 %v1499
    %v1501 = vpop.xlane.xlu0 %1500
    %v1502 = vsel %vm1027, %v1345, 0.0
    %1503 = vadd.xlane.f32.xlu0 %v1502
    %v1504 = vpop.xlane.xlu0 %1503
    %v1505 = vsel %vm1027, %v1347, 0.0
    %1506 = vadd.xlane.f32.xlu0 %v1505
    %v1507 = vpop.xlane.xlu0 %1506
    %v1508 = vsel %vm1027, %v1349, 0.0
    %1509 = vadd.xlane.f32.xlu0 %v1508
    %v1510 = vpop.xlane.xlu0 %1509
    %v1511 = vsel %vm1027, %v1351, 0.0
    %1512 = vadd.xlane.f32.xlu0 %v1511
    %v1513 = vpop.xlane.xlu0 %1512
    %v1514 = vsel %vm1027, %v1353, 0.0
    %1515 = vadd.xlane.f32.xlu0 %v1514
    %v1516 = vpop.xlane.xlu0 %1515
    %v1517 = vsel %vm1027, %v1355, 0.0
    %1518 = vadd.xlane.f32.xlu0 %v1517
    %v1519 = vpop.xlane.xlu0 %1518
    %v1520 = vsel %vm1027, %v1357, 0.0
    %1521 = vadd.xlane.f32.xlu0 %v1520
    %v1522 = vpop.xlane.xlu0 %1521
    %v1523 = vsel %vm1027, %v1359, 0.0
    %1524 = vadd.xlane.f32.xlu0 %v1523
    %v1525 = vpop.xlane.xlu0 %1524
    %v1526 = vsel %vm1027, %v1361, 0.0
    %1527 = vadd.xlane.f32.xlu0 %v1526
    %v1528 = vpop.xlane.xlu0 %1527
    %v1529 = vsel %vm1027, %v1363, 0.0
    %1530 = vadd.xlane.f32.xlu0 %v1529
    %v1531 = vpop.xlane.xlu0 %1530
    %v1532 = vsel %vm1027, %v1365, 0.0
    %1533 = vadd.xlane.f32.xlu0 %v1532
    %v1534 = vpop.xlane.xlu0 %1533
    %v1535 = vsel %vm1027, %v1367, 0.0
    %1536 = vadd.xlane.f32.xlu0 %v1535
    %v1537 = vpop.xlane.xlu0 %1536
    %v1538 = vsel %vm1027, %v1369, 0.0
    %1539 = vadd.xlane.f32.xlu0 %v1538
    %v1540 = vpop.xlane.xlu0 %1539
    %v1541 = vsel %vm1027, %v1371, 0.0
    %1542 = vadd.xlane.f32.xlu0 %v1541
    %v1543 = vpop.xlane.xlu0 %1542
    %v1544 = vsel %vm1027, %v1373, 0.0
    %1545 = vadd.xlane.f32.xlu0 %v1544
    %v1546 = vpop.xlane.xlu0 %1545
    %v1547 = vsel %vm1027, %v1375, 0.0
    %1548 = vadd.xlane.f32.xlu0 %v1547
    %v1549 = vpop.xlane.xlu0 %1548
    %v1550 = vsel %vm1027, %v1377, 0.0
    %1551 = vadd.xlane.f32.xlu0 %v1550
    %v1552 = vpop.xlane.xlu0 %1551
    %v1553 = vsel %vm1027, %v1379, 0.0
    %1554 = vadd.xlane.f32.xlu0 %v1553
    %v1555 = vpop.xlane.xlu0 %1554
    %v1556 = vsel %vm1027, %v1381, 0.0
    %1557 = vadd.xlane.f32.xlu0 %v1556
    %v1558 = vpop.xlane.xlu0 %1557
    %v1559 = vsel %vm1027, %v1383, 0.0
    %1560 = vadd.xlane.f32.xlu0 %v1559
    %v1561 = vpop.xlane.xlu0 %1560
    %v1562 = vsel %vm1027, %v1385, 0.0
    %1563 = vadd.xlane.f32.xlu0 %v1562
    %v1564 = vpop.xlane.xlu0 %1563
    %v1565 = vsel %vm1027, %v1387, 0.0
    %1566 = vadd.xlane.f32.xlu0 %v1565
    %v1567 = vpop.xlane.xlu0 %1566
    %v1568 = vsel %vm1027, %v1389, 0.0
    %1569 = vadd.xlane.f32.xlu0 %v1568
    %v1570 = vpop.xlane.xlu0 %1569
    %v1571 = vsel %vm1027, %v1391, 0.0
    %1572 = vadd.xlane.f32.xlu0 %v1571
    %v1573 = vpop.xlane.xlu0 %1572
    %v1574 = vsel %vm1027, %v1393, 0.0
    %1575 = vadd.xlane.f32.xlu0 %v1574
    %v1576 = vpop.xlane.xlu0 %1575
    %v1577 = vsel %vm1027, %v1395, 0.0
    %1578 = vadd.xlane.f32.xlu0 %v1577
    %v1579 = vpop.xlane.xlu0 %1578
    %v1580 = vsel %vm1027, %v1397, 0.0
    %1581 = vadd.xlane.f32.xlu0 %v1580
    %v1582 = vpop.xlane.xlu0 %1581
    %v1583 = vsel %vm1027, %v1399, 0.0
    %1584 = vadd.xlane.f32.xlu0 %v1583
    %v1585 = vpop.xlane.xlu0 %1584
    %v1586 = vsel %vm1027, %v1401, 0.0
    %1587 = vadd.xlane.f32.xlu0 %v1586
    %v1588 = vpop.xlane.xlu0 %1587
    %v1589 = vsel %vm1027, %v1403, 0.0
    %1590 = vadd.xlane.f32.xlu0 %v1589
    %v1591 = vpop.xlane.xlu0 %1590
    %v1592 = vsel %vm1027, %v1405, 0.0
    %1593 = vadd.xlane.f32.xlu0 %v1592
    %v1594 = vpop.xlane.xlu0 %1593
    %v1595 = vsel %vm1027, %v1407, 0.0
    %1596 = vadd.xlane.f32.xlu0 %v1595
    %v1597 = vpop.xlane.xlu0 %1596
    %v1598 = vsel %vm1027, %v1409, 0.0
    %1599 = vadd.xlane.f32.xlu0 %v1598
    %v1600 = vpop.xlane.xlu0 %1599
    %v1601 = vsel %vm1027, %v1411, 0.0
    %1602 = vadd.xlane.f32.xlu0 %v1601
    %v1603 = vpop.xlane.xlu0 %1602
    %v1604 = vrcp.pop %v1414
    %v1605 = vrcp.pop %v1417
    %v1606 = vrcp.pop %v1420
    %v1607 = vrcp.pop %v1423
    %v1608 = vrcp.pop %v1426
    %v1609 = vrcp.pop %v1429
    %v1610 = vrcp.pop %v1432
    %v1611 = vrcp.pop %v1435
    %v1612 = vrcp.pop %v1438
    %v1613 = vrcp.pop %v1441
    %v1614 = vrcp.pop %v1444
    %v1615 = vrcp.pop %v1447
    %v1616 = vrcp.pop %v1450
    %v1617 = vrcp.pop %v1453
    %v1618 = vrcp.pop %v1456
    %v1619 = vrcp.pop %v1459
    %v1620 = vrcp.pop %v1462
    %v1621 = vrcp.pop %v1465
    %v1622 = vrcp.pop %v1468
    %v1623 = vrcp.pop %v1471
    %v1624 = vrcp.pop %v1474
    %v1625 = vrcp.pop %v1477
    %v1626 = vrcp.pop %v1480
    %v1627 = vrcp.pop %v1483
    %v1628 = vrcp.pop %v1486
    %v1629 = vrcp.pop %v1489
    %v1630 = vrcp.pop %v1492
    %v1631 = vrcp.pop %v1495
    %v1632 = vrcp.pop %v1498
    %v1633 = vrcp.pop %v1501
    %v1634 = vrcp.pop %v1504
    %v1635 = vrcp.pop %v1507
    %v1636 = vrcp.pop %v1510
    %v1637 = vrcp.pop %v1513
    %v1638 = vrcp.pop %v1516
    %v1639 = vrcp.pop %v1519
    %v1640 = vrcp.pop %v1522
    %v1641 = vrcp.pop %v1525
    %v1642 = vrcp.pop %v1528
    %v1643 = vrcp.pop %v1531
    %v1644 = vrcp.pop %v1534
    %v1645 = vrcp.pop %v1537
    %v1646 = vrcp.pop %v1540
    %v1647 = vrcp.pop %v1543
    %v1648 = vrcp.pop %v1546
    %v1649 = vrcp.pop %v1549
    %v1650 = vrcp.pop %v1552
    %v1651 = vrcp.pop %v1555
    %v1652 = vrcp.pop %v1558
    %v1653 = vrcp.pop %v1561
    %v1654 = vrcp.pop %v1564
    %v1655 = vrcp.pop %v1567
    %v1656 = vrcp.pop %v1570
    %v1657 = vrcp.pop %v1573
    %v1658 = vrcp.pop %v1576
    %v1659 = vrcp.pop %v1579
    %v1660 = vrcp.pop %v1582
    %v1661 = vrcp.pop %v1585
    %v1662 = vrcp.pop %v1588
    %v1663 = vrcp.pop %v1591
    %v1664 = vrcp.pop %v1594
    %v1665 = vrcp.pop %v1597
    %v1666 = vrcp.pop %v1600
    %v1667 = vrcp.pop %v1603
    %v1668 = vmul.f32 %v1285, %v1604
    %v1669 = vmul.f32 %v1287, %v1605
    %v1670 = vmul.f32 %v1289, %v1606
    %v1671 = vmul.f32 %v1291, %v1607
    %v1672 = vmul.f32 %v1293, %v1608
    %v1673 = vmul.f32 %v1295, %v1609
    %v1674 = vmul.f32 %v1297, %v1610
    %v1675 = vmul.f32 %v1299, %v1611
    %v1676 = vmul.f32 %v1301, %v1612
    %v1677 = vmul.f32 %v1303, %v1613
    %v1678 = vmul.f32 %v1305, %v1614
    %v1679 = vmul.f32 %v1307, %v1615
    %v1680 = vmul.f32 %v1309, %v1616
    %v1681 = vmul.f32 %v1311, %v1617
    %v1682 = vmul.f32 %v1313, %v1618
    %v1683 = vmul.f32 %v1315, %v1619
    %v1684 = vmul.f32 %v1317, %v1620
    %v1685 = vmul.f32 %v1319, %v1621
    %v1686 = vmul.f32 %v1321, %v1622
    %v1687 = vmul.f32 %v1323, %v1623
    %v1688 = vmul.f32 %v1325, %v1624
    %v1689 = vmul.f32 %v1327, %v1625
    %v1690 = vmul.f32 %v1329, %v1626
    %v1691 = vmul.f32 %v1331, %v1627
    %v1692 = vmul.f32 %v1333, %v1628
    %v1693 = vmul.f32 %v1335, %v1629
    %v1694 = vmul.f32 %v1337, %v1630
    %v1695 = vmul.f32 %v1339, %v1631
    %v1696 = vmul.f32 %v1341, %v1632
    %v1697 = vmul.f32 %v1343, %v1633
    %v1698 = vmul.f32 %v1345, %v1634
    %v1699 = vmul.f32 %v1347, %v1635
    %v1700 = vmul.f32 %v1349, %v1636
    %v1701 = vmul.f32 %v1351, %v1637
    %v1702 = vmul.f32 %v1353, %v1638
    %v1703 = vmul.f32 %v1355, %v1639
    %v1704 = vmul.f32 %v1357, %v1640
    %v1705 = vmul.f32 %v1359, %v1641
    %v1706 = vmul.f32 %v1361, %v1642
    %v1707 = vmul.f32 %v1363, %v1643
    %v1708 = vmul.f32 %v1365, %v1644
    %v1709 = vmul.f32 %v1367, %v1645
    %v1710 = vmul.f32 %v1369, %v1646
    %v1711 = vmul.f32 %v1371, %v1647
    %v1712 = vmul.f32 %v1373, %v1648
    %v1713 = vmul.f32 %v1375, %v1649
    %v1714 = vmul.f32 %v1377, %v1650
    %v1715 = vmul.f32 %v1379, %v1651
    %v1716 = vmul.f32 %v1381, %v1652
    %v1717 = vmul.f32 %v1383, %v1653
    %v1718 = vmul.f32 %v1385, %v1654
    %v1719 = vmul.f32 %v1387, %v1655
    %v1720 = vmul.f32 %v1389, %v1656
    %v1721 = vmul.f32 %v1391, %v1657
    %v1722 = vmul.f32 %v1393, %v1658
    %v1723 = vmul.f32 %v1395, %v1659
    %v1724 = vmul.f32 %v1397, %v1660
    %v1725 = vmul.f32 %v1399, %v1661
    %v1726 = vmul.f32 %v1401, %v1662
    %v1727 = vmul.f32 %v1403, %v1663
    %v1728 = vmul.f32 %v1405, %v1664
    %v1729 = vmul.f32 %v1407, %v1665
    %v1730 = vmul.f32 %v1409, %v1666
    %v1731 = vmul.f32 %v1411, %v1667
    %v1732 = vpack.c.bf16 %v1668, %v1668
    %v1733 = vpack.c.bf16 %v1669, %v1669
    %v1734 = vpack.c.bf16 %v1670, %v1670
    %v1735 = vpack.c.bf16 %v1671, %v1671
    %v1736 = vpack.c.bf16 %v1672, %v1672
    %v1737 = vpack.c.bf16 %v1673, %v1673
    %v1738 = vpack.c.bf16 %v1674, %v1674
    %v1739 = vpack.c.bf16 %v1675, %v1675
    %v1740 = vpack.c.bf16 %v1676, %v1676
    %v1741 = vpack.c.bf16 %v1677, %v1677
    %v1742 = vpack.c.bf16 %v1678, %v1678
    %v1743 = vpack.c.bf16 %v1679, %v1679
    %v1744 = vpack.c.bf16 %v1680, %v1680
    %v1745 = vpack.c.bf16 %v1681, %v1681
    %v1746 = vpack.c.bf16 %v1682, %v1682
    %v1747 = vpack.c.bf16 %v1683, %v1683
    %v1748 = vpack.c.bf16 %v1684, %v1684
    %v1749 = vpack.c.bf16 %v1685, %v1685
    %v1750 = vpack.c.bf16 %v1686, %v1686
    %v1751 = vpack.c.bf16 %v1687, %v1687
    %v1752 = vpack.c.bf16 %v1688, %v1688
    %v1753 = vpack.c.bf16 %v1689, %v1689
    %v1754 = vpack.c.bf16 %v1690, %v1690
    %v1755 = vpack.c.bf16 %v1691, %v1691
    %v1756 = vpack.c.bf16 %v1692, %v1692
    %v1757 = vpack.c.bf16 %v1693, %v1693
    %v1758 = vpack.c.bf16 %v1694, %v1694
    %v1759 = vpack.c.bf16 %v1695, %v1695
    %v1760 = vpack.c.bf16 %v1696, %v1696
    %v1761 = vpack.c.bf16 %v1697, %v1697
    %v1762 = vpack.c.bf16 %v1698, %v1698
    %v1763 = vpack.c.bf16 %v1699, %v1699
    %v1764 = vpack.c.bf16 %v1700, %v1700
    %v1765 = vpack.c.bf16 %v1701, %v1701
    %v1766 = vpack.c.bf16 %v1702, %v1702
    %v1767 = vpack.c.bf16 %v1703, %v1703
    %v1768 = vpack.c.bf16 %v1704, %v1704
    %v1769 = vpack.c.bf16 %v1705, %v1705
    %v1770 = vpack.c.bf16 %v1706, %v1706
    %v1771 = vpack.c.bf16 %v1707, %v1707
    %v1772 = vpack.c.bf16 %v1708, %v1708
    %v1773 = vpack.c.bf16 %v1709, %v1709
    %v1774 = vpack.c.bf16 %v1710, %v1710
    %v1775 = vpack.c.bf16 %v1711, %v1711
    %v1776 = vpack.c.bf16 %v1712, %v1712
    %v1777 = vpack.c.bf16 %v1713, %v1713
    %v1778 = vpack.c.bf16 %v1714, %v1714
    %v1779 = vpack.c.bf16 %v1715, %v1715
    %v1780 = vpack.c.bf16 %v1716, %v1716
    %v1781 = vpack.c.bf16 %v1717, %v1717
    %v1782 = vpack.c.bf16 %v1718, %v1718
    %v1783 = vpack.c.bf16 %v1719, %v1719
    %v1784 = vpack.c.bf16 %v1720, %v1720
    %v1785 = vpack.c.bf16 %v1721, %v1721
    %v1786 = vpack.c.bf16 %v1722, %v1722
    %v1787 = vpack.c.bf16 %v1723, %v1723
    %v1788 = vpack.c.bf16 %v1724, %v1724
    %v1789 = vpack.c.bf16 %v1725, %v1725
    %v1790 = vpack.c.bf16 %v1726, %v1726
    %v1791 = vpack.c.bf16 %v1727, %v1727
    %v1792 = vpack.c.bf16 %v1728, %v1728
    %v1793 = vpack.c.bf16 %v1729, %v1729
    %v1794 = vpack.c.bf16 %v1730, %v1730
    %v1795 = vpack.c.bf16 %v1731, %v1731
    %v1828 = vunpack.c.l.b16 %v1732
    %v1829 = vunpack.c.l.b16 %v1733
    %v1830 = vunpack.c.l.b16 %v1734
    %v1831 = vunpack.c.l.b16 %v1735
    %v1832 = vunpack.c.l.b16 %v1736
    %v1833 = vunpack.c.l.b16 %v1737
    %v1834 = vunpack.c.l.b16 %v1738
    %v1835 = vunpack.c.l.b16 %v1739
    %v1836 = vunpack.c.l.b16 %v1740
    %v1837 = vunpack.c.l.b16 %v1741
    %v1838 = vunpack.c.l.b16 %v1742
    %v1839 = vunpack.c.l.b16 %v1743
    %v1840 = vunpack.c.l.b16 %v1744
    %v1841 = vunpack.c.l.b16 %v1745
    %v1842 = vunpack.c.l.b16 %v1746
    %v1843 = vunpack.c.l.b16 %v1747
    %v1844 = vunpack.c.l.b16 %v1748
    %v1845 = vunpack.c.l.b16 %v1749
    %v1846 = vunpack.c.l.b16 %v1750
    %v1847 = vunpack.c.l.b16 %v1751
    %v1848 = vunpack.c.l.b16 %v1752
    %v1849 = vunpack.c.l.b16 %v1753
    %v1850 = vunpack.c.l.b16 %v1754
    %v1851 = vunpack.c.l.b16 %v1755
    %v1852 = vunpack.c.l.b16 %v1756
    %v1853 = vunpack.c.l.b16 %v1757
    %v1854 = vunpack.c.l.b16 %v1758
    %v1855 = vunpack.c.l.b16 %v1759
    %v1856 = vunpack.c.l.b16 %v1760
    %v1857 = vunpack.c.l.b16 %v1761
    %v1858 = vunpack.c.l.b16 %v1762
    %v1859 = vunpack.c.l.b16 %v1763
    %v1860 = vpack.c.b16 %v1829, %v1828
    %v1861 = vpack.c.b16 %v1831, %v1830
    %v1862 = vpack.c.b16 %v1833, %v1832
    %v1863 = vpack.c.b16 %v1835, %v1834
    %v1864 = vpack.c.b16 %v1837, %v1836
    %v1865 = vpack.c.b16 %v1839, %v1838
    %v1866 = vpack.c.b16 %v1841, %v1840
    %v1867 = vpack.c.b16 %v1843, %v1842
    %v1868 = vpack.c.b16 %v1845, %v1844
    %v1869 = vpack.c.b16 %v1847, %v1846
    %v1870 = vpack.c.b16 %v1849, %v1848
    %v1871 = vpack.c.b16 %v1851, %v1850
    %v1872 = vpack.c.b16 %v1853, %v1852
    %v1873 = vpack.c.b16 %v1855, %v1854
    %v1874 = vpack.c.b16 %v1857, %v1856
    %v1875 = vpack.c.b16 %v1859, %v1858
    %1876 = vrot.lane.b32.xlu0 %v689, 64
    %v1877 = vpop.permute.xlu0 %1876
    %1878 = vrot.lane.b32.xlu0 %v690, 64
    %v1879 = vpop.permute.xlu0 %1878
    %1880 = vrot.lane.b32.xlu0 %v691, 64
    %v1881 = vpop.permute.xlu0 %1880
    %1882 = vrot.lane.b32.xlu0 %v692, 64
    %v1883 = vpop.permute.xlu0 %1882
    %v1889 = vsel %vm1027, %v1860, 0
    %v1892 = vsel %vm1027, %v1861, 0
    %v1895 = vsel %vm1027, %v1862, 0
    %v1898 = vsel %vm1027, %v1863, 0
    %v1901 = vsel %vm1027, %v1864, 0
    %v1904 = vsel %vm1027, %v1865, 0
    %v1907 = vsel %vm1027, %v1866, 0
    %v1910 = vsel %vm1027, %v1867, 0
    %v1913 = vsel %vm1027, %v1868, 0
    %v1916 = vsel %vm1027, %v1869, 0
    %v1919 = vsel %vm1027, %v1870, 0
    %v1922 = vsel %vm1027, %v1871, 0
    %v1925 = vsel %vm1027, %v1872, 0
    %v1928 = vsel %vm1027, %v1873, 0
    %v1931 = vsel %vm1027, %v1874, 0
    %v1934 = vsel %vm1027, %v1875, 0
    %1936 = vmatpush.bf16.msra.mxu0 0
    %1937 = vmatpush.bf16.msra.mxu0 0
    %1938 = vmatpush.bf16.msra.mxu0 0
    %1939 = vmatpush.bf16.msra.mxu0 0
    %1940 = vmatpush.bf16.msra.mxu0 %v1883
    %1941 = vmatpush.bf16.msra.mxu0 %v1881
    %1942 = vmatpush.bf16.msra.mxu0 %v1879
    %1943 = vmatpush.bf16.msra.mxu0 %v1877
    %1944 = vmatmul.bf16.gmra.mxu0 %v1889
    %v1945 = vpop.f32.mrf.mxu0
    %v1946 = vadd.f32 0.0, %v1945
    %v1947 = vpop.f32.mrf.mxu0
    %v1948 = vadd.f32 0.0, %v1947
    %1949 = vmatmul.bf16.gmra.mxu0 %v1892
    %v1950 = vpop.f32.mrf.mxu0
    %v1951 = vadd.f32 0.0, %v1950
    %v1952 = vpop.f32.mrf.mxu0
    %v1953 = vadd.f32 0.0, %v1952
    %1954 = vmatmul.bf16.gmra.mxu0 %v1895
    %v1955 = vpop.f32.mrf.mxu0
    %v1956 = vadd.f32 0.0, %v1955
    %v1957 = vpop.f32.mrf.mxu0
    %v1958 = vadd.f32 0.0, %v1957
    %1959 = vmatmul.bf16.gmra.mxu0 %v1898
    %v1960 = vpop.f32.mrf.mxu0
    %v1961 = vadd.f32 0.0, %v1960
    %v1962 = vpop.f32.mrf.mxu0
    %v1963 = vadd.f32 0.0, %v1962
    %1964 = vmatmul.bf16.gmra.mxu0 %v1901
    %v1965 = vpop.f32.mrf.mxu0
    %v1966 = vadd.f32 0.0, %v1965
    %v1967 = vpop.f32.mrf.mxu0
    %v1968 = vadd.f32 0.0, %v1967
    %1969 = vmatmul.bf16.gmra.mxu0 %v1904
    %v1970 = vpop.f32.mrf.mxu0
    %v1971 = vadd.f32 0.0, %v1970
    %v1972 = vpop.f32.mrf.mxu0
    %v1973 = vadd.f32 0.0, %v1972
    %1974 = vmatmul.bf16.gmra.mxu0 %v1907
    %v1975 = vpop.f32.mrf.mxu0
    %v1976 = vadd.f32 0.0, %v1975
    %v1977 = vpop.f32.mrf.mxu0
    %v1978 = vadd.f32 0.0, %v1977
    %1979 = vmatmul.bf16.gmra.mxu0 %v1910
    %v1980 = vpop.f32.mrf.mxu0
    %v1981 = vadd.f32 0.0, %v1980
    %v1982 = vpop.f32.mrf.mxu0
    %v1983 = vadd.f32 0.0, %v1982
    %1984 = vmatmul.bf16.gmra.mxu0 %v1913
    %v1985 = vpop.f32.mrf.mxu0
    %v1986 = vadd.f32 0.0, %v1985
    %v1987 = vpop.f32.mrf.mxu0
    %v1988 = vadd.f32 0.0, %v1987
    %1989 = vmatmul.bf16.gmra.mxu0 %v1916
    %v1990 = vpop.f32.mrf.mxu0
    %v1991 = vadd.f32 0.0, %v1990
    %v1992 = vpop.f32.mrf.mxu0
    %v1993 = vadd.f32 0.0, %v1992
    %1994 = vmatmul.bf16.gmra.mxu0 %v1919
    %v1995 = vpop.f32.mrf.mxu0
    %v1996 = vadd.f32 0.0, %v1995
    %v1997 = vpop.f32.mrf.mxu0
    %v1998 = vadd.f32 0.0, %v1997
    %1999 = vmatmul.bf16.gmra.mxu0 %v1922
    %v2000 = vpop.f32.mrf.mxu0
    %v2001 = vadd.f32 0.0, %v2000
    %v2002 = vpop.f32.mrf.mxu0
    %v2003 = vadd.f32 0.0, %v2002
    %2004 = vmatmul.bf16.gmra.mxu0 %v1925
    %v2005 = vpop.f32.mrf.mxu0
    %v2006 = vadd.f32 0.0, %v2005
    %v2007 = vpop.f32.mrf.mxu0
    %v2008 = vadd.f32 0.0, %v2007
    %2009 = vmatmul.bf16.gmra.mxu0 %v1928
    %v2010 = vpop.f32.mrf.mxu0
    %v2011 = vadd.f32 0.0, %v2010
    %v2012 = vpop.f32.mrf.mxu0
    %v2013 = vadd.f32 0.0, %v2012
    %2014 = vmatmul.bf16.gmra.mxu0 %v1931
    %v2015 = vpop.f32.mrf.mxu0
    %v2016 = vadd.f32 0.0, %v2015
    %v2017 = vpop.f32.mrf.mxu0
    %v2018 = vadd.f32 0.0, %v2017
    %2019 = vmatmul.bf16.gmra.mxu0 %v1934
    %v2020 = vpop.f32.mrf.mxu0
    %v2021 = vadd.f32 0.0, %v2020
    %v2022 = vpop.f32.mrf.mxu0
    %v2023 = vadd.f32 0.0, %v2022
    %2024 = vdwg.mxu0
    %v2057 = vunpack.c.l.b16 %v1764
    %v2058 = vunpack.c.l.b16 %v1765
    %v2059 = vunpack.c.l.b16 %v1766
    %v2060 = vunpack.c.l.b16 %v1767
    %v2061 = vunpack.c.l.b16 %v1768
    %v2062 = vunpack.c.l.b16 %v1769
    %v2063 = vunpack.c.l.b16 %v1770
    %v2064 = vunpack.c.l.b16 %v1771
    %v2065 = vunpack.c.l.b16 %v1772
    %v2066 = vunpack.c.l.b16 %v1773
    %v2067 = vunpack.c.l.b16 %v1774
    %v2068 = vunpack.c.l.b16 %v1775
    %v2069 = vunpack.c.l.b16 %v1776
    %v2070 = vunpack.c.l.b16 %v1777
    %v2071 = vunpack.c.l.b16 %v1778
    %v2072 = vunpack.c.l.b16 %v1779
    %v2073 = vunpack.c.l.b16 %v1780
    %v2074 = vunpack.c.l.b16 %v1781
    %v2075 = vunpack.c.l.b16 %v1782
    %v2076 = vunpack.c.l.b16 %v1783
    %v2077 = vunpack.c.l.b16 %v1784
    %v2078 = vunpack.c.l.b16 %v1785
    %v2079 = vunpack.c.l.b16 %v1786
    %v2080 = vunpack.c.l.b16 %v1787
    %v2081 = vunpack.c.l.b16 %v1788
    %v2082 = vunpack.c.l.b16 %v1789
    %v2083 = vunpack.c.l.b16 %v1790
    %v2084 = vunpack.c.l.b16 %v1791
    %v2085 = vunpack.c.l.b16 %v1792
    %v2086 = vunpack.c.l.b16 %v1793
    %v2087 = vunpack.c.l.b16 %v1794
    %v2088 = vunpack.c.l.b16 %v1795
    %v2089 = vpack.c.b16 %v2058, %v2057
    %v2090 = vpack.c.b16 %v2060, %v2059
    %v2091 = vpack.c.b16 %v2062, %v2061
    %v2092 = vpack.c.b16 %v2064, %v2063
    %v2093 = vpack.c.b16 %v2066, %v2065
    %v2094 = vpack.c.b16 %v2068, %v2067
    %v2095 = vpack.c.b16 %v2070, %v2069
    %v2096 = vpack.c.b16 %v2072, %v2071
    %v2097 = vpack.c.b16 %v2074, %v2073
    %v2098 = vpack.c.b16 %v2076, %v2075
    %v2099 = vpack.c.b16 %v2078, %v2077
    %v2100 = vpack.c.b16 %v2080, %v2079
    %v2101 = vpack.c.b16 %v2082, %v2081
    %v2102 = vpack.c.b16 %v2084, %v2083
    %v2103 = vpack.c.b16 %v2086, %v2085
    %v2104 = vpack.c.b16 %v2088, %v2087
    %2105 = vrot.lane.b32.xlu0 %v866, 64
    %v2106 = vpop.permute.xlu0 %2105
    %2107 = vrot.lane.b32.xlu0 %v867, 64
    %v2108 = vpop.permute.xlu0 %2107
    %2109 = vrot.lane.b32.xlu0 %v868, 64
    %v2110 = vpop.permute.xlu0 %2109
    %2111 = vrot.lane.b32.xlu0 %v869, 64
    %v2112 = vpop.permute.xlu0 %2111
    %v2118 = vsel %vm1027, %v2089, 0
    %v2121 = vsel %vm1027, %v2090, 0
    %v2124 = vsel %vm1027, %v2091, 0
    %v2127 = vsel %vm1027, %v2092, 0
    %v2130 = vsel %vm1027, %v2093, 0
    %v2133 = vsel %vm1027, %v2094, 0
    %v2136 = vsel %vm1027, %v2095, 0
    %v2139 = vsel %vm1027, %v2096, 0
    %v2142 = vsel %vm1027, %v2097, 0
    %v2145 = vsel %vm1027, %v2098, 0
    %v2148 = vsel %vm1027, %v2099, 0
    %v2151 = vsel %vm1027, %v2100, 0
    %v2154 = vsel %vm1027, %v2101, 0
    %v2157 = vsel %vm1027, %v2102, 0
    %v2160 = vsel %vm1027, %v2103, 0
    %v2163 = vsel %vm1027, %v2104, 0
    %2165 = vmatpush.bf16.msra.mxu0 0
    %2166 = vmatpush.bf16.msra.mxu0 0
    %2167 = vmatpush.bf16.msra.mxu0 0
    %2168 = vmatpush.bf16.msra.mxu0 0
    %2169 = vmatpush.bf16.msra.mxu0 %v2112
    %2170 = vmatpush.bf16.msra.mxu0 %v2110
    %2171 = vmatpush.bf16.msra.mxu0 %v2108
    %2172 = vmatpush.bf16.msra.mxu0 %v2106
    %2173 = vmatmul.bf16.gmra.mxu0 %v2118
    %v2174 = vpop.f32.mrf.mxu0
    %v2175 = vadd.f32 0.0, %v2174
    %v2176 = vpop.f32.mrf.mxu0
    %v2177 = vadd.f32 0.0, %v2176
    %2178 = vmatmul.bf16.gmra.mxu0 %v2121
    %v2179 = vpop.f32.mrf.mxu0
    %v2180 = vadd.f32 0.0, %v2179
    %v2181 = vpop.f32.mrf.mxu0
    %v2182 = vadd.f32 0.0, %v2181
    %2183 = vmatmul.bf16.gmra.mxu0 %v2124
    %v2184 = vpop.f32.mrf.mxu0
    %v2185 = vadd.f32 0.0, %v2184
    %v2186 = vpop.f32.mrf.mxu0
    %v2187 = vadd.f32 0.0, %v2186
    %2188 = vmatmul.bf16.gmra.mxu0 %v2127
    %v2189 = vpop.f32.mrf.mxu0
    %v2190 = vadd.f32 0.0, %v2189
    %v2191 = vpop.f32.mrf.mxu0
    %v2192 = vadd.f32 0.0, %v2191
    %2193 = vmatmul.bf16.gmra.mxu0 %v2130
    %v2194 = vpop.f32.mrf.mxu0
    %v2195 = vadd.f32 0.0, %v2194
    %v2196 = vpop.f32.mrf.mxu0
    %v2197 = vadd.f32 0.0, %v2196
    %2198 = vmatmul.bf16.gmra.mxu0 %v2133
    %v2199 = vpop.f32.mrf.mxu0
    %v2200 = vadd.f32 0.0, %v2199
    %v2201 = vpop.f32.mrf.mxu0
    %v2202 = vadd.f32 0.0, %v2201
    %2203 = vmatmul.bf16.gmra.mxu0 %v2136
    %v2204 = vpop.f32.mrf.mxu0
    %v2205 = vadd.f32 0.0, %v2204
    %v2206 = vpop.f32.mrf.mxu0
    %v2207 = vadd.f32 0.0, %v2206
    %2208 = vmatmul.bf16.gmra.mxu0 %v2139
    %v2209 = vpop.f32.mrf.mxu0
    %v2210 = vadd.f32 0.0, %v2209
    %v2211 = vpop.f32.mrf.mxu0
    %v2212 = vadd.f32 0.0, %v2211
    %2213 = vmatmul.bf16.gmra.mxu0 %v2142
    %v2214 = vpop.f32.mrf.mxu0
    %v2215 = vadd.f32 0.0, %v2214
    %v2216 = vpop.f32.mrf.mxu0
    %v2217 = vadd.f32 0.0, %v2216
    %2218 = vmatmul.bf16.gmra.mxu0 %v2145
    %v2219 = vpop.f32.mrf.mxu0
    %v2220 = vadd.f32 0.0, %v2219
    %v2221 = vpop.f32.mrf.mxu0
    %v2222 = vadd.f32 0.0, %v2221
    %2223 = vmatmul.bf16.gmra.mxu0 %v2148
    %v2224 = vpop.f32.mrf.mxu0
    %v2225 = vadd.f32 0.0, %v2224
    %v2226 = vpop.f32.mrf.mxu0
    %v2227 = vadd.f32 0.0, %v2226
    %2228 = vmatmul.bf16.gmra.mxu0 %v2151
    %v2229 = vpop.f32.mrf.mxu0
    %v2230 = vadd.f32 0.0, %v2229
    %v2231 = vpop.f32.mrf.mxu0
    %v2232 = vadd.f32 0.0, %v2231
    %2233 = vmatmul.bf16.gmra.mxu0 %v2154
    %v2234 = vpop.f32.mrf.mxu0
    %v2235 = vadd.f32 0.0, %v2234
    %v2236 = vpop.f32.mrf.mxu0
    %v2237 = vadd.f32 0.0, %v2236
    %2238 = vmatmul.bf16.gmra.mxu0 %v2157
    %v2239 = vpop.f32.mrf.mxu0
    %v2240 = vadd.f32 0.0, %v2239
    %v2241 = vpop.f32.mrf.mxu0
    %v2242 = vadd.f32 0.0, %v2241
    %2243 = vmatmul.bf16.gmra.mxu0 %v2160
    %v2244 = vpop.f32.mrf.mxu0
    %v2245 = vadd.f32 0.0, %v2244
    %v2246 = vpop.f32.mrf.mxu0
    %v2247 = vadd.f32 0.0, %v2246
    %2248 = vmatmul.bf16.gmra.mxu0 %v2163
    %v2249 = vpop.f32.mrf.mxu0
    %v2250 = vadd.f32 0.0, %v2249
    %v2251 = vpop.f32.mrf.mxu0
    %v2252 = vadd.f32 0.0, %v2251
    %2253 = vdwg.mxu0
    %v2254 = vmul.f32 %v1946, %v194
    %v2255 = vmul.f32 %v1948, %v194
    %v2256 = vmul.f32 %v1951, %v194
    %v2257 = vmul.f32 %v1953, %v194
    %v2258 = vmul.f32 %v1956, %v194
    %v2259 = vmul.f32 %v1958, %v194
    %v2260 = vmul.f32 %v1961, %v194
    %v2261 = vmul.f32 %v1963, %v194
    %v2262 = vmul.f32 %v2175, %v194
    %v2263 = vmul.f32 %v2177, %v194
    %v2264 = vmul.f32 %v2180, %v194
    %v2265 = vmul.f32 %v2182, %v194
    %v2266 = vmul.f32 %v2185, %v194
    %v2267 = vmul.f32 %v2187, %v194
    %v2268 = vmul.f32 %v2190, %v194
    %v2269 = vmul.f32 %v2192, %v194
    %v2270 = vadd.f32 %v2254, 0.0
    %v2271 = vadd.f32 %v2255, 0.0
    %v2272 = vadd.f32 %v2256, 0.0
    %v2273 = vadd.f32 %v2257, 0.0
    %v2274 = vadd.f32 %v2258, 0.0
    %v2275 = vadd.f32 %v2259, 0.0
    %v2276 = vadd.f32 %v2260, 0.0
    %v2277 = vadd.f32 %v2261, 0.0
    %v2278 = vadd.f32 %v2262, 0.0
    %v2279 = vadd.f32 %v2263, 0.0
    %v2280 = vadd.f32 %v2264, 0.0
    %v2281 = vadd.f32 %v2265, 0.0
    %v2282 = vadd.f32 %v2266, 0.0
    %v2283 = vadd.f32 %v2267, 0.0
    %v2284 = vadd.f32 %v2268, 0.0
    %v2285 = vadd.f32 %v2269, 0.0
    %v2286 = vmul.f32 %v1966, %v199
    %v2287 = vmul.f32 %v1968, %v199
    %v2288 = vmul.f32 %v1971, %v199
    %v2289 = vmul.f32 %v1973, %v199
    %v2290 = vmul.f32 %v1976, %v199
    %v2291 = vmul.f32 %v1978, %v199
    %v2292 = vmul.f32 %v1981, %v199
    %v2293 = vmul.f32 %v1983, %v199
    %v2294 = vmul.f32 %v2195, %v199
    %v2295 = vmul.f32 %v2197, %v199
    %v2296 = vmul.f32 %v2200, %v199
    %v2297 = vmul.f32 %v2202, %v199
    %v2298 = vmul.f32 %v2205, %v199
    %v2299 = vmul.f32 %v2207, %v199
    %v2300 = vmul.f32 %v2210, %v199
    %v2301 = vmul.f32 %v2212, %v199
    %v2302 = vadd.f32 %v2270, %v2286
    %v2303 = vadd.f32 %v2271, %v2287
    %v2304 = vadd.f32 %v2272, %v2288
    %v2305 = vadd.f32 %v2273, %v2289
    %v2306 = vadd.f32 %v2274, %v2290
    %v2307 = vadd.f32 %v2275, %v2291
    %v2308 = vadd.f32 %v2276, %v2292
    %v2309 = vadd.f32 %v2277, %v2293
    %v2310 = vadd.f32 %v2278, %v2294
    %v2311 = vadd.f32 %v2279, %v2295
    %v2312 = vadd.f32 %v2280, %v2296
    %v2313 = vadd.f32 %v2281, %v2297
    %v2314 = vadd.f32 %v2282, %v2298
    %v2315 = vadd.f32 %v2283, %v2299
    %v2316 = vadd.f32 %v2284, %v2300
    %v2317 = vadd.f32 %v2285, %v2301
    %v2318 = vmul.f32 %v1986, %v204
    %v2319 = vmul.f32 %v1988, %v204
    %v2320 = vmul.f32 %v1991, %v204
    %v2321 = vmul.f32 %v1993, %v204
    %v2322 = vmul.f32 %v1996, %v204
    %v2323 = vmul.f32 %v1998, %v204
    %v2324 = vmul.f32 %v2001, %v204
    %v2325 = vmul.f32 %v2003, %v204
    %v2326 = vmul.f32 %v2215, %v204
    %v2327 = vmul.f32 %v2217, %v204
    %v2328 = vmul.f32 %v2220, %v204
    %v2329 = vmul.f32 %v2222, %v204
    %v2330 = vmul.f32 %v2225, %v204
    %v2331 = vmul.f32 %v2227, %v204
    %v2332 = vmul.f32 %v2230, %v204
    %v2333 = vmul.f32 %v2232, %v204
    %v2334 = vadd.f32 %v2302, %v2318
    %v2335 = vadd.f32 %v2303, %v2319
    %v2336 = vadd.f32 %v2304, %v2320
    %v2337 = vadd.f32 %v2305, %v2321
    %v2338 = vadd.f32 %v2306, %v2322
    %v2339 = vadd.f32 %v2307, %v2323
    %v2340 = vadd.f32 %v2308, %v2324
    %v2341 = vadd.f32 %v2309, %v2325
    %v2342 = vadd.f32 %v2310, %v2326
    %v2343 = vadd.f32 %v2311, %v2327
    %v2344 = vadd.f32 %v2312, %v2328
    %v2345 = vadd.f32 %v2313, %v2329
    %v2346 = vadd.f32 %v2314, %v2330
    %v2347 = vadd.f32 %v2315, %v2331
    %v2348 = vadd.f32 %v2316, %v2332
    %v2349 = vadd.f32 %v2317, %v2333
    %v2350 = vmul.f32 %v2006, %v209
    %v2351 = vmul.f32 %v2008, %v209
    %v2352 = vmul.f32 %v2011, %v209
    %v2353 = vmul.f32 %v2013, %v209
    %v2354 = vmul.f32 %v2016, %v209
    %v2355 = vmul.f32 %v2018, %v209
    %v2356 = vmul.f32 %v2021, %v209
    %v2357 = vmul.f32 %v2023, %v209
    %v2358 = vmul.f32 %v2235, %v209
    %v2359 = vmul.f32 %v2237, %v209
    %v2360 = vmul.f32 %v2240, %v209
    %v2361 = vmul.f32 %v2242, %v209
    %v2362 = vmul.f32 %v2245, %v209
    %v2363 = vmul.f32 %v2247, %v209
    %v2364 = vmul.f32 %v2250, %v209
    %v2365 = vmul.f32 %v2252, %v209
    %v2366 = vadd.f32 %v2334, %v2350
    %v2367 = vadd.f32 %v2335, %v2351
    %v2368 = vadd.f32 %v2336, %v2352
    %v2369 = vadd.f32 %v2337, %v2353
    %v2370 = vadd.f32 %v2338, %v2354
    %v2371 = vadd.f32 %v2339, %v2355
    %v2372 = vadd.f32 %v2340, %v2356
    %v2373 = vadd.f32 %v2341, %v2357
    %v2374 = vadd.f32 %v2342, %v2358
    %v2375 = vadd.f32 %v2343, %v2359
    %v2376 = vadd.f32 %v2344, %v2360
    %v2377 = vadd.f32 %v2345, %v2361
    %v2378 = vadd.f32 %v2346, %v2362
    %v2379 = vadd.f32 %v2347, %v2363
    %v2380 = vadd.f32 %v2348, %v2364
    %v2381 = vadd.f32 %v2349, %v2365
    %v2382 = vpack.c.bf16 %v2367, %v2366
    %v2383 = vpack.c.bf16 %v2369, %v2368
    %v2384 = vpack.c.bf16 %v2371, %v2370
    %v2385 = vpack.c.bf16 %v2373, %v2372
    %v2386 = vpack.c.bf16 %v2375, %v2374
    %v2387 = vpack.c.bf16 %v2377, %v2376
    %v2388 = vpack.c.bf16 %v2379, %v2378
    %v2389 = vpack.c.bf16 %v2381, %v2380
    %v2390 = vld [vmem:[%s5] sm:$0xf]
    %v2391 = vld [vmem:[%s5 + $0x4] sm:$0xf]
    %v2392 = vld [vmem:[%s5 + $0x8] sm:$0xf]
    %v2393 = vld [vmem:[%s5 + $0xc] sm:$0xf]
    %v2394 = vperm.slane %v214, 0
    %v2399 = vunpack.c.l.b16 %v2390
    %v2400 = vunpack.c.l.b16 %v2391
    %v2401 = vunpack.c.l.b16 %v2392
    %v2402 = vunpack.c.l.b16 %v2393
    %v2403 = vpack.c.b16 %v2400, %v2399
    %v2404 = vpack.c.b16 %v2402, %v2401
    %v2408 = vsel %vm243, %v2382, 0
    %v2411 = vsel %vm243, %v2383, 0
    %v2414 = vsel %vm243, %v2384, 0
    %v2417 = vsel %vm243, %v2385, 0
    %v2420 = vsel %vm243, %v2386, 0
    %v2423 = vsel %vm243, %v2387, 0
    %v2426 = vsel %vm243, %v2388, 0
    %v2429 = vsel %vm243, %v2389, 0
    %2431 = vmatpush.bf16.msra.mxu0 0
    %2432 = vmatpush.bf16.msra.mxu0 0
    %2433 = vmatpush.bf16.msra.mxu0 0
    %2434 = vmatpush.bf16.msra.mxu0 0
    %2435 = vmatpush.bf16.msra.mxu0 0
    %2436 = vmatpush.bf16.msra.mxu0 0
    %2437 = vmatpush.bf16.msra.mxu0 %v2404
    %2438 = vmatpush.bf16.msra.mxu0 %v2403
    %2439 = vmatmul.bf16.gmra.mxu0 %v2408
    %v2440 = vpop.f32.mrf.mxu0
    %v2441 = vadd.f32 %v2394, %v2440
    %v2442 = vpop.f32.mrf.mxu0
    %v2443 = vadd.f32 %v2394, %v2442
    %2444 = vmatmul.bf16.gmra.mxu0 %v2411
    %v2445 = vpop.f32.mrf.mxu0
    %v2446 = vadd.f32 %v2394, %v2445
    %v2447 = vpop.f32.mrf.mxu0
    %v2448 = vadd.f32 %v2394, %v2447
    %2449 = vmatmul.bf16.gmra.mxu0 %v2414
    %v2450 = vpop.f32.mrf.mxu0
    %v2451 = vadd.f32 %v2394, %v2450
    %v2452 = vpop.f32.mrf.mxu0
    %v2453 = vadd.f32 %v2394, %v2452
    %2454 = vmatmul.bf16.gmra.mxu0 %v2417
    %v2455 = vpop.f32.mrf.mxu0
    %v2456 = vadd.f32 %v2394, %v2455
    %v2457 = vpop.f32.mrf.mxu0
    %v2458 = vadd.f32 %v2394, %v2457
    %2459 = vmatmul.bf16.gmra.mxu0 %v2420
    %v2460 = vpop.f32.mrf.mxu0
    %v2461 = vadd.f32 %v2394, %v2460
    %v2462 = vpop.f32.mrf.mxu0
    %v2463 = vadd.f32 %v2394, %v2462
    %2464 = vmatmul.bf16.gmra.mxu0 %v2423
    %v2465 = vpop.f32.mrf.mxu0
    %v2466 = vadd.f32 %v2394, %v2465
    %v2467 = vpop.f32.mrf.mxu0
    %v2468 = vadd.f32 %v2394, %v2467
    %2469 = vmatmul.bf16.gmra.mxu0 %v2426
    %v2470 = vpop.f32.mrf.mxu0
    %v2471 = vadd.f32 %v2394, %v2470
    %v2472 = vpop.f32.mrf.mxu0
    %v2473 = vadd.f32 %v2394, %v2472
    %2474 = vmatmul.bf16.gmra.mxu0 %v2429
    %v2475 = vpop.f32.mrf.mxu0
    %v2476 = vadd.f32 %v2394, %v2475
    %v2477 = vpop.f32.mrf.mxu0
    %v2478 = vadd.f32 %v2394, %v2477
    %2479 = vdwg.mxu0
    %v2480 = vadd.f32 %v149, %v2441
    %v2481 = vadd.f32 %v151, %v2443
    %v2482 = vadd.f32 %v154, %v2446
    %v2483 = vadd.f32 %v156, %v2448
    %v2484 = vadd.f32 %v159, %v2451
    %v2485 = vadd.f32 %v161, %v2453
    %v2486 = vadd.f32 %v164, %v2456
    %v2487 = vadd.f32 %v166, %v2458
    %v2488 = vadd.f32 %v169, %v2461
    %v2489 = vadd.f32 %v171, %v2463
    %v2490 = vadd.f32 %v174, %v2466
    %v2491 = vadd.f32 %v176, %v2468
    %v2492 = vadd.f32 %v179, %v2471
    %v2493 = vadd.f32 %v181, %v2473
    %v2494 = vadd.f32 %v184, %v2476
    %v2495 = vadd.f32 %v186, %v2478
    %v2496 = vsel %vm243, %v2480, 0.0
    %2497 = vadd.xlane.f32.xlu0 %v2496
    %v2498 = vpop.xlane.xlu0 %2497
    %v2499 = vsel %vm243, %v2481, 0.0
    %2500 = vadd.xlane.f32.xlu0 %v2499
    %v2501 = vpop.xlane.xlu0 %2500
    %v2502 = vsel %vm243, %v2482, 0.0
    %2503 = vadd.xlane.f32.xlu0 %v2502
    %v2504 = vpop.xlane.xlu0 %2503
    %v2505 = vsel %vm243, %v2483, 0.0
    %2506 = vadd.xlane.f32.xlu0 %v2505
    %v2507 = vpop.xlane.xlu0 %2506
    %v2508 = vsel %vm243, %v2484, 0.0
    %2509 = vadd.xlane.f32.xlu0 %v2508
    %v2510 = vpop.xlane.xlu0 %2509
    %v2511 = vsel %vm243, %v2485, 0.0
    %2512 = vadd.xlane.f32.xlu0 %v2511
    %v2513 = vpop.xlane.xlu0 %2512
    %v2514 = vsel %vm243, %v2486, 0.0
    %2515 = vadd.xlane.f32.xlu0 %v2514
    %v2516 = vpop.xlane.xlu0 %2515
    %v2517 = vsel %vm243, %v2487, 0.0
    %2518 = vadd.xlane.f32.xlu0 %v2517
    %v2519 = vpop.xlane.xlu0 %2518
    %v2520 = vsel %vm243, %v2488, 0.0
    %2521 = vadd.xlane.f32.xlu0 %v2520
    %v2522 = vpop.xlane.xlu0 %2521
    %v2523 = vsel %vm243, %v2489, 0.0
    %2524 = vadd.xlane.f32.xlu0 %v2523
    %v2525 = vpop.xlane.xlu0 %2524
    %v2526 = vsel %vm243, %v2490, 0.0
    %2527 = vadd.xlane.f32.xlu0 %v2526
    %v2528 = vpop.xlane.xlu0 %2527
    %v2529 = vsel %vm243, %v2491, 0.0
    %2530 = vadd.xlane.f32.xlu0 %v2529
    %v2531 = vpop.xlane.xlu0 %2530
    %v2532 = vsel %vm243, %v2492, 0.0
    %2533 = vadd.xlane.f32.xlu0 %v2532
    %v2534 = vpop.xlane.xlu0 %2533
    %v2535 = vsel %vm243, %v2493, 0.0
    %2536 = vadd.xlane.f32.xlu0 %v2535
    %v2537 = vpop.xlane.xlu0 %2536
    %v2538 = vsel %vm243, %v2494, 0.0
    %2539 = vadd.xlane.f32.xlu0 %v2538
    %v2540 = vpop.xlane.xlu0 %2539
    %v2541 = vsel %vm243, %v2495, 0.0
    %2542 = vadd.xlane.f32.xlu0 %v2541
    %v2543 = vpop.xlane.xlu0 %2542
    %v2544 = vrcp.pop 32.0
    %v2545 = vmul.f32 32.0, %v2544
    %v2546 = vsub.f32 1.0, %v2545
    %v2547 = vmul.f32 %v2544, %v2546
    %v2548 = vadd.f32 %v2544, %v2547
    %vm2549 = vweird.f32 %v2544
    %v2550 = vsel %vm2549, %v2544, %v2548
    %v2551 = vmul.f32 %v2498, %v2550
    %v2552 = vmul.f32 %v2501, %v2550
    %v2553 = vmul.f32 %v2504, %v2550
    %v2554 = vmul.f32 %v2507, %v2550
    %v2555 = vmul.f32 %v2510, %v2550
    %v2556 = vmul.f32 %v2513, %v2550
    %v2557 = vmul.f32 %v2516, %v2550
    %v2558 = vmul.f32 %v2519, %v2550
    %v2559 = vmul.f32 %v2522, %v2550
    %v2560 = vmul.f32 %v2525, %v2550
    %v2561 = vmul.f32 %v2528, %v2550
    %v2562 = vmul.f32 %v2531, %v2550
    %v2563 = vmul.f32 %v2534, %v2550
    %v2564 = vmul.f32 %v2537, %v2550
    %v2565 = vmul.f32 %v2540, %v2550
    %v2566 = vmul.f32 %v2543, %v2550
    %v2567 = vsub.f32 %v2480, %v2551
    %v2568 = vsub.f32 %v2481, %v2552
    %v2569 = vsub.f32 %v2482, %v2553
    %v2570 = vsub.f32 %v2483, %v2554
    %v2571 = vsub.f32 %v2484, %v2555
    %v2572 = vsub.f32 %v2485, %v2556
    %v2573 = vsub.f32 %v2486, %v2557
    %v2574 = vsub.f32 %v2487, %v2558
    %v2575 = vsub.f32 %v2488, %v2559
    %v2576 = vsub.f32 %v2489, %v2560
    %v2577 = vsub.f32 %v2490, %v2561
    %v2578 = vsub.f32 %v2491, %v2562
    %v2579 = vsub.f32 %v2492, %v2563
    %v2580 = vsub.f32 %v2493, %v2564
    %v2581 = vsub.f32 %v2494, %v2565
    %v2582 = vsub.f32 %v2495, %v2566
    %v2583 = vmul.f32 %v2567, %v2567
    %v2584 = vmul.f32 %v2568, %v2568
    %v2585 = vmul.f32 %v2569, %v2569
    %v2586 = vmul.f32 %v2570, %v2570
    %v2587 = vmul.f32 %v2571, %v2571
    %v2588 = vmul.f32 %v2572, %v2572
    %v2589 = vmul.f32 %v2573, %v2573
    %v2590 = vmul.f32 %v2574, %v2574
    %v2591 = vmul.f32 %v2575, %v2575
    %v2592 = vmul.f32 %v2576, %v2576
    %v2593 = vmul.f32 %v2577, %v2577
    %v2594 = vmul.f32 %v2578, %v2578
    %v2595 = vmul.f32 %v2579, %v2579
    %v2596 = vmul.f32 %v2580, %v2580
    %v2597 = vmul.f32 %v2581, %v2581
    %v2598 = vmul.f32 %v2582, %v2582
    %v2599 = vsel %vm243, %v2583, 0.0
    %2600 = vadd.xlane.f32.xlu0 %v2599
    %v2601 = vpop.xlane.xlu0 %2600
    %v2602 = vsel %vm243, %v2584, 0.0
    %2603 = vadd.xlane.f32.xlu0 %v2602
    %v2604 = vpop.xlane.xlu0 %2603
    %v2605 = vsel %vm243, %v2585, 0.0
    %2606 = vadd.xlane.f32.xlu0 %v2605
    %v2607 = vpop.xlane.xlu0 %2606
    %v2608 = vsel %vm243, %v2586, 0.0
    %2609 = vadd.xlane.f32.xlu0 %v2608
    %v2610 = vpop.xlane.xlu0 %2609
    %v2611 = vsel %vm243, %v2587, 0.0
    %2612 = vadd.xlane.f32.xlu0 %v2611
    %v2613 = vpop.xlane.xlu0 %2612
    %v2614 = vsel %vm243, %v2588, 0.0
    %2615 = vadd.xlane.f32.xlu0 %v2614
    %v2616 = vpop.xlane.xlu0 %2615
    %v2617 = vsel %vm243, %v2589, 0.0
    %2618 = vadd.xlane.f32.xlu0 %v2617
    %v2619 = vpop.xlane.xlu0 %2618
    %v2620 = vsel %vm243, %v2590, 0.0
    %2621 = vadd.xlane.f32.xlu0 %v2620
    %v2622 = vpop.xlane.xlu0 %2621
    %v2623 = vsel %vm243, %v2591, 0.0
    %2624 = vadd.xlane.f32.xlu0 %v2623
    %v2625 = vpop.xlane.xlu0 %2624
    %v2626 = vsel %vm243, %v2592, 0.0
    %2627 = vadd.xlane.f32.xlu0 %v2626
    %v2628 = vpop.xlane.xlu0 %2627
    %v2629 = vsel %vm243, %v2593, 0.0
    %2630 = vadd.xlane.f32.xlu0 %v2629
    %v2631 = vpop.xlane.xlu0 %2630
    %v2632 = vsel %vm243, %v2594, 0.0
    %2633 = vadd.xlane.f32.xlu0 %v2632
    %v2634 = vpop.xlane.xlu0 %2633
    %v2635 = vsel %vm243, %v2595, 0.0
    %2636 = vadd.xlane.f32.xlu0 %v2635
    %v2637 = vpop.xlane.xlu0 %2636
    %v2638 = vsel %vm243, %v2596, 0.0
    %2639 = vadd.xlane.f32.xlu0 %v2638
    %v2640 = vpop.xlane.xlu0 %2639
    %v2641 = vsel %vm243, %v2597, 0.0
    %2642 = vadd.xlane.f32.xlu0 %v2641
    %v2643 = vpop.xlane.xlu0 %2642
    %v2644 = vsel %vm243, %v2598, 0.0
    %2645 = vadd.xlane.f32.xlu0 %v2644
    %v2646 = vpop.xlane.xlu0 %2645
    %v2647 = vmul.f32 %v2601, %v2550
    %v2648 = vmul.f32 %v2604, %v2550
    %v2649 = vmul.f32 %v2607, %v2550
    %v2650 = vmul.f32 %v2610, %v2550
    %v2651 = vmul.f32 %v2613, %v2550
    %v2652 = vmul.f32 %v2616, %v2550
    %v2653 = vmul.f32 %v2619, %v2550
    %v2654 = vmul.f32 %v2622, %v2550
    %v2655 = vmul.f32 %v2625, %v2550
    %v2656 = vmul.f32 %v2628, %v2550
    %v2657 = vmul.f32 %v2631, %v2550
    %v2658 = vmul.f32 %v2634, %v2550
    %v2659 = vmul.f32 %v2637, %v2550
    %v2660 = vmul.f32 %v2640, %v2550
    %v2661 = vmul.f32 %v2643, %v2550
    %v2662 = vmul.f32 %v2646, %v2550
    %v2663 = vadd.f32 %v2647, 1e-12
    %v2664 = vadd.f32 %v2648, 1e-12
    %v2665 = vadd.f32 %v2649, 1e-12
    %v2666 = vadd.f32 %v2650, 1e-12
    %v2667 = vadd.f32 %v2651, 1e-12
    %v2668 = vadd.f32 %v2652, 1e-12
    %v2669 = vadd.f32 %v2653, 1e-12
    %v2670 = vadd.f32 %v2654, 1e-12
    %v2671 = vadd.f32 %v2655, 1e-12
    %v2672 = vadd.f32 %v2656, 1e-12
    %v2673 = vadd.f32 %v2657, 1e-12
    %v2674 = vadd.f32 %v2658, 1e-12
    %v2675 = vadd.f32 %v2659, 1e-12
    %v2676 = vadd.f32 %v2660, 1e-12
    %v2677 = vadd.f32 %v2661, 1e-12
    %v2678 = vadd.f32 %v2662, 1e-12
    %v2679 = vrsqrt.pop %v2663
    %v2680 = vmul.f32 %v2679, %v2663
    %v2681 = vmul.f32 %v2680, %v2679
    %v2682 = vmul.f32 0.5, %v2681
    %v2683 = vsub.f32 1.5, %v2682
    %v2684 = vmul.f32 %v2679, %v2683
    %vm2685 = vweird.f32 %v2663
    %vm2686 = vweird.f32 %v2679
    %vm2687 = vmor %vm2685, %vm2686
    %v2688 = vsel %vm2687, %v2679, %v2684
    %v2689 = vrsqrt.pop %v2664
    %v2690 = vmul.f32 %v2689, %v2664
    %v2691 = vmul.f32 %v2690, %v2689
    %v2692 = vmul.f32 0.5, %v2691
    %v2693 = vsub.f32 1.5, %v2692
    %v2694 = vmul.f32 %v2689, %v2693
    %vm2695 = vweird.f32 %v2664
    %vm2696 = vweird.f32 %v2689
    %vm2697 = vmor %vm2695, %vm2696
    %v2698 = vsel %vm2697, %v2689, %v2694
    %v2699 = vrsqrt.pop %v2665
    %v2700 = vmul.f32 %v2699, %v2665
    %v2701 = vmul.f32 %v2700, %v2699
    %v2702 = vmul.f32 0.5, %v2701
    %v2703 = vsub.f32 1.5, %v2702
    %v2704 = vmul.f32 %v2699, %v2703
    %vm2705 = vweird.f32 %v2665
    %vm2706 = vweird.f32 %v2699
    %vm2707 = vmor %vm2705, %vm2706
    %v2708 = vsel %vm2707, %v2699, %v2704
    %v2709 = vrsqrt.pop %v2666
    %v2710 = vmul.f32 %v2709, %v2666
    %v2711 = vmul.f32 %v2710, %v2709
    %v2712 = vmul.f32 0.5, %v2711
    %v2713 = vsub.f32 1.5, %v2712
    %v2714 = vmul.f32 %v2709, %v2713
    %vm2715 = vweird.f32 %v2666
    %vm2716 = vweird.f32 %v2709
    %vm2717 = vmor %vm2715, %vm2716
    %v2718 = vsel %vm2717, %v2709, %v2714
    %v2719 = vrsqrt.pop %v2667
    %v2720 = vmul.f32 %v2719, %v2667
    %v2721 = vmul.f32 %v2720, %v2719
    %v2722 = vmul.f32 0.5, %v2721
    %v2723 = vsub.f32 1.5, %v2722
    %v2724 = vmul.f32 %v2719, %v2723
    %vm2725 = vweird.f32 %v2667
    %vm2726 = vweird.f32 %v2719
    %vm2727 = vmor %vm2725, %vm2726
    %v2728 = vsel %vm2727, %v2719, %v2724
    %v2729 = vrsqrt.pop %v2668
    %v2730 = vmul.f32 %v2729, %v2668
    %v2731 = vmul.f32 %v2730, %v2729
    %v2732 = vmul.f32 0.5, %v2731
    %v2733 = vsub.f32 1.5, %v2732
    %v2734 = vmul.f32 %v2729, %v2733
    %vm2735 = vweird.f32 %v2668
    %vm2736 = vweird.f32 %v2729
    %vm2737 = vmor %vm2735, %vm2736
    %v2738 = vsel %vm2737, %v2729, %v2734
    %v2739 = vrsqrt.pop %v2669
    %v2740 = vmul.f32 %v2739, %v2669
    %v2741 = vmul.f32 %v2740, %v2739
    %v2742 = vmul.f32 0.5, %v2741
    %v2743 = vsub.f32 1.5, %v2742
    %v2744 = vmul.f32 %v2739, %v2743
    %vm2745 = vweird.f32 %v2669
    %vm2746 = vweird.f32 %v2739
    %vm2747 = vmor %vm2745, %vm2746
    %v2748 = vsel %vm2747, %v2739, %v2744
    %v2749 = vrsqrt.pop %v2670
    %v2750 = vmul.f32 %v2749, %v2670
    %v2751 = vmul.f32 %v2750, %v2749
    %v2752 = vmul.f32 0.5, %v2751
    %v2753 = vsub.f32 1.5, %v2752
    %v2754 = vmul.f32 %v2749, %v2753
    %vm2755 = vweird.f32 %v2670
    %vm2756 = vweird.f32 %v2749
    %vm2757 = vmor %vm2755, %vm2756
    %v2758 = vsel %vm2757, %v2749, %v2754
    %v2759 = vrsqrt.pop %v2671
    %v2760 = vmul.f32 %v2759, %v2671
    %v2761 = vmul.f32 %v2760, %v2759
    %v2762 = vmul.f32 0.5, %v2761
    %v2763 = vsub.f32 1.5, %v2762
    %v2764 = vmul.f32 %v2759, %v2763
    %vm2765 = vweird.f32 %v2671
    %vm2766 = vweird.f32 %v2759
    %vm2767 = vmor %vm2765, %vm2766
    %v2768 = vsel %vm2767, %v2759, %v2764
    %v2769 = vrsqrt.pop %v2672
    %v2770 = vmul.f32 %v2769, %v2672
    %v2771 = vmul.f32 %v2770, %v2769
    %v2772 = vmul.f32 0.5, %v2771
    %v2773 = vsub.f32 1.5, %v2772
    %v2774 = vmul.f32 %v2769, %v2773
    %vm2775 = vweird.f32 %v2672
    %vm2776 = vweird.f32 %v2769
    %vm2777 = vmor %vm2775, %vm2776
    %v2778 = vsel %vm2777, %v2769, %v2774
    %v2779 = vrsqrt.pop %v2673
    %v2780 = vmul.f32 %v2779, %v2673
    %v2781 = vmul.f32 %v2780, %v2779
    %v2782 = vmul.f32 0.5, %v2781
    %v2783 = vsub.f32 1.5, %v2782
    %v2784 = vmul.f32 %v2779, %v2783
    %vm2785 = vweird.f32 %v2673
    %vm2786 = vweird.f32 %v2779
    %vm2787 = vmor %vm2785, %vm2786
    %v2788 = vsel %vm2787, %v2779, %v2784
    %v2789 = vrsqrt.pop %v2674
    %v2790 = vmul.f32 %v2789, %v2674
    %v2791 = vmul.f32 %v2790, %v2789
    %v2792 = vmul.f32 0.5, %v2791
    %v2793 = vsub.f32 1.5, %v2792
    %v2794 = vmul.f32 %v2789, %v2793
    %vm2795 = vweird.f32 %v2674
    %vm2796 = vweird.f32 %v2789
    %vm2797 = vmor %vm2795, %vm2796
    %v2798 = vsel %vm2797, %v2789, %v2794
    %v2799 = vrsqrt.pop %v2675
    %v2800 = vmul.f32 %v2799, %v2675
    %v2801 = vmul.f32 %v2800, %v2799
    %v2802 = vmul.f32 0.5, %v2801
    %v2803 = vsub.f32 1.5, %v2802
    %v2804 = vmul.f32 %v2799, %v2803
    %vm2805 = vweird.f32 %v2675
    %vm2806 = vweird.f32 %v2799
    %vm2807 = vmor %vm2805, %vm2806
    %v2808 = vsel %vm2807, %v2799, %v2804
    %v2809 = vrsqrt.pop %v2676
    %v2810 = vmul.f32 %v2809, %v2676
    %v2811 = vmul.f32 %v2810, %v2809
    %v2812 = vmul.f32 0.5, %v2811
    %v2813 = vsub.f32 1.5, %v2812
    %v2814 = vmul.f32 %v2809, %v2813
    %vm2815 = vweird.f32 %v2676
    %vm2816 = vweird.f32 %v2809
    %vm2817 = vmor %vm2815, %vm2816
    %v2818 = vsel %vm2817, %v2809, %v2814
    %v2819 = vrsqrt.pop %v2677
    %v2820 = vmul.f32 %v2819, %v2677
    %v2821 = vmul.f32 %v2820, %v2819
    %v2822 = vmul.f32 0.5, %v2821
    %v2823 = vsub.f32 1.5, %v2822
    %v2824 = vmul.f32 %v2819, %v2823
    %vm2825 = vweird.f32 %v2677
    %vm2826 = vweird.f32 %v2819
    %vm2827 = vmor %vm2825, %vm2826
    %v2828 = vsel %vm2827, %v2819, %v2824
    %v2829 = vrsqrt.pop %v2678
    %v2830 = vmul.f32 %v2829, %v2678
    %v2831 = vmul.f32 %v2830, %v2829
    %v2832 = vmul.f32 0.5, %v2831
    %v2833 = vsub.f32 1.5, %v2832
    %v2834 = vmul.f32 %v2829, %v2833
    %vm2835 = vweird.f32 %v2678
    %vm2836 = vweird.f32 %v2829
    %vm2837 = vmor %vm2835, %vm2836
    %v2838 = vsel %vm2837, %v2829, %v2834
    %v2839 = vmul.f32 %v2567, %v2688
    %v2840 = vmul.f32 %v2568, %v2698
    %v2841 = vmul.f32 %v2569, %v2708
    %v2842 = vmul.f32 %v2570, %v2718
    %v2843 = vmul.f32 %v2571, %v2728
    %v2844 = vmul.f32 %v2572, %v2738
    %v2845 = vmul.f32 %v2573, %v2748
    %v2846 = vmul.f32 %v2574, %v2758
    %v2847 = vmul.f32 %v2575, %v2768
    %v2848 = vmul.f32 %v2576, %v2778
    %v2849 = vmul.f32 %v2577, %v2788
    %v2850 = vmul.f32 %v2578, %v2798
    %v2851 = vmul.f32 %v2579, %v2808
    %v2852 = vmul.f32 %v2580, %v2818
    %v2853 = vmul.f32 %v2581, %v2828
    %v2854 = vmul.f32 %v2582, %v2838
    %v2855 = vperm.slane %v214, 1
    %v2856 = vmul.f32 %v2839, %v2855
    %v2857 = vmul.f32 %v2840, %v2855
    %v2858 = vmul.f32 %v2841, %v2855
    %v2859 = vmul.f32 %v2842, %v2855
    %v2860 = vmul.f32 %v2843, %v2855
    %v2861 = vmul.f32 %v2844, %v2855
    %v2862 = vmul.f32 %v2845, %v2855
    %v2863 = vmul.f32 %v2846, %v2855
    %v2864 = vmul.f32 %v2847, %v2855
    %v2865 = vmul.f32 %v2848, %v2855
    %v2866 = vmul.f32 %v2849, %v2855
    %v2867 = vmul.f32 %v2850, %v2855
    %v2868 = vmul.f32 %v2851, %v2855
    %v2869 = vmul.f32 %v2852, %v2855
    %v2870 = vmul.f32 %v2853, %v2855
    %v2871 = vmul.f32 %v2854, %v2855
    %v2872 = vperm.slane %v214, 2
    %v2873 = vadd.f32 %v2856, %v2872
    %v2874 = vadd.f32 %v2857, %v2872
    %v2875 = vadd.f32 %v2858, %v2872
    %v2876 = vadd.f32 %v2859, %v2872
    %v2877 = vadd.f32 %v2860, %v2872
    %v2878 = vadd.f32 %v2861, %v2872
    %v2879 = vadd.f32 %v2862, %v2872
    %v2880 = vadd.f32 %v2863, %v2872
    %v2881 = vadd.f32 %v2864, %v2872
    %v2882 = vadd.f32 %v2865, %v2872
    %v2883 = vadd.f32 %v2866, %v2872
    %v2884 = vadd.f32 %v2867, %v2872
    %v2885 = vadd.f32 %v2868, %v2872
    %v2886 = vadd.f32 %v2869, %v2872
    %v2887 = vadd.f32 %v2870, %v2872
    %v2888 = vadd.f32 %v2871, %v2872
    %v2889 = vpack.c.bf16 %v2874, %v2873
    %v2890 = vpack.c.bf16 %v2876, %v2875
    %v2891 = vpack.c.bf16 %v2878, %v2877
    %v2892 = vpack.c.bf16 %v2880, %v2879
    %v2893 = vpack.c.bf16 %v2882, %v2881
    %v2894 = vpack.c.bf16 %v2884, %v2883
    %v2895 = vpack.c.bf16 %v2886, %v2885
    %v2896 = vpack.c.bf16 %v2888, %v2887
    %v2897 = vld [vmem:[%s6] sm:$0xf]
    %v2898 = vld [vmem:[%s6 + $0x4] sm:$0xf]
    %v2899 = vld [vmem:[%s6 + $0x8] sm:$0xf]
    %v2900 = vld [vmem:[%s6 + $0xc] sm:$0xf]
    %v2901 = vld [vmem:[%s7] sm:$0x1]
    %v2903 = vperm.slane %v2901, 0
    %v2909 = vunpack.c.l.b16 %v2897
    %v2910 = vunpack.c.l.b16 %v2898
    %v2911 = vunpack.c.l.b16 %v2899
    %v2912 = vunpack.c.l.b16 %v2900
    %v2913 = vpack.c.b16 %v2910, %v2909
    %v2914 = vpack.c.b16 %v2912, %v2911
    %v2918 = vsel %vm243, %v2889, 0
    %v2921 = vsel %vm243, %v2890, 0
    %v2924 = vsel %vm243, %v2891, 0
    %v2927 = vsel %vm243, %v2892, 0
    %v2930 = vsel %vm243, %v2893, 0
    %v2933 = vsel %vm243, %v2894, 0
    %v2936 = vsel %vm243, %v2895, 0
    %v2939 = vsel %vm243, %v2896, 0
    %2941 = vmatpush.bf16.msra.mxu0 0
    %2942 = vmatpush.bf16.msra.mxu0 0
    %2943 = vmatpush.bf16.msra.mxu0 0
    %2944 = vmatpush.bf16.msra.mxu0 0
    %2945 = vmatpush.bf16.msra.mxu0 0
    %2946 = vmatpush.bf16.msra.mxu0 0
    %2947 = vmatpush.bf16.msra.mxu0 %v2914
    %2948 = vmatpush.bf16.msra.mxu0 %v2913
    %2949 = vmatmul.bf16.gmra.mxu0 %v2918
    %v2950 = vpop.f32.mrf.mxu0
    %v2951 = vadd.f32 %v2903, %v2950
    %v2952 = vpop.f32.mrf.mxu0
    %v2953 = vadd.f32 %v2903, %v2952
    %2954 = vmatmul.bf16.gmra.mxu0 %v2921
    %v2955 = vpop.f32.mrf.mxu0
    %v2956 = vadd.f32 %v2903, %v2955
    %v2957 = vpop.f32.mrf.mxu0
    %v2958 = vadd.f32 %v2903, %v2957
    %2959 = vmatmul.bf16.gmra.mxu0 %v2924
    %v2960 = vpop.f32.mrf.mxu0
    %v2961 = vadd.f32 %v2903, %v2960
    %v2962 = vpop.f32.mrf.mxu0
    %v2963 = vadd.f32 %v2903, %v2962
    %2964 = vmatmul.bf16.gmra.mxu0 %v2927
    %v2965 = vpop.f32.mrf.mxu0
    %v2966 = vadd.f32 %v2903, %v2965
    %v2967 = vpop.f32.mrf.mxu0
    %v2968 = vadd.f32 %v2903, %v2967
    %2969 = vmatmul.bf16.gmra.mxu0 %v2930
    %v2970 = vpop.f32.mrf.mxu0
    %v2971 = vadd.f32 %v2903, %v2970
    %v2972 = vpop.f32.mrf.mxu0
    %v2973 = vadd.f32 %v2903, %v2972
    %2974 = vmatmul.bf16.gmra.mxu0 %v2933
    %v2975 = vpop.f32.mrf.mxu0
    %v2976 = vadd.f32 %v2903, %v2975
    %v2977 = vpop.f32.mrf.mxu0
    %v2978 = vadd.f32 %v2903, %v2977
    %2979 = vmatmul.bf16.gmra.mxu0 %v2936
    %v2980 = vpop.f32.mrf.mxu0
    %v2981 = vadd.f32 %v2903, %v2980
    %v2982 = vpop.f32.mrf.mxu0
    %v2983 = vadd.f32 %v2903, %v2982
    %2984 = vmatmul.bf16.gmra.mxu0 %v2939
    %v2985 = vpop.f32.mrf.mxu0
    %v2986 = vadd.f32 %v2903, %v2985
    %v2987 = vpop.f32.mrf.mxu0
    %v2988 = vadd.f32 %v2903, %v2987
    %2989 = vdwg.mxu0
    %v2990 = vmul.f32 %v2951, %v2951
    %v2991 = vmul.f32 %v2953, %v2953
    %v2992 = vmul.f32 %v2956, %v2956
    %v2993 = vmul.f32 %v2958, %v2958
    %v2994 = vmul.f32 %v2961, %v2961
    %v2995 = vmul.f32 %v2963, %v2963
    %v2996 = vmul.f32 %v2966, %v2966
    %v2997 = vmul.f32 %v2968, %v2968
    %v2998 = vmul.f32 %v2971, %v2971
    %v2999 = vmul.f32 %v2973, %v2973
    %v3000 = vmul.f32 %v2976, %v2976
    %v3001 = vmul.f32 %v2978, %v2978
    %v3002 = vmul.f32 %v2981, %v2981
    %v3003 = vmul.f32 %v2983, %v2983
    %v3004 = vmul.f32 %v2986, %v2986
    %v3005 = vmul.f32 %v2988, %v2988
    %v3006 = vmul.f32 %v2951, %v2990
    %v3007 = vmul.f32 %v2953, %v2991
    %v3008 = vmul.f32 %v2956, %v2992
    %v3009 = vmul.f32 %v2958, %v2993
    %v3010 = vmul.f32 %v2961, %v2994
    %v3011 = vmul.f32 %v2963, %v2995
    %v3012 = vmul.f32 %v2966, %v2996
    %v3013 = vmul.f32 %v2968, %v2997
    %v3014 = vmul.f32 %v2971, %v2998
    %v3015 = vmul.f32 %v2973, %v2999
    %v3016 = vmul.f32 %v2976, %v3000
    %v3017 = vmul.f32 %v2978, %v3001
    %v3018 = vmul.f32 %v2981, %v3002
    %v3019 = vmul.f32 %v2983, %v3003
    %v3020 = vmul.f32 %v2986, %v3004
    %v3021 = vmul.f32 %v2988, %v3005
    %v3022 = vmul.f32 %v3006, 0.044715
    %v3023 = vmul.f32 %v3007, 0.044715
    %v3024 = vmul.f32 %v3008, 0.044715
    %v3025 = vmul.f32 %v3009, 0.044715
    %v3026 = vmul.f32 %v3010, 0.044715
    %v3027 = vmul.f32 %v3011, 0.044715
    %v3028 = vmul.f32 %v3012, 0.044715
    %v3029 = vmul.f32 %v3013, 0.044715
    %v3030 = vmul.f32 %v3014, 0.044715
    %v3031 = vmul.f32 %v3015, 0.044715
    %v3032 = vmul.f32 %v3016, 0.044715
    %v3033 = vmul.f32 %v3017, 0.044715
    %v3034 = vmul.f32 %v3018, 0.044715
    %v3035 = vmul.f32 %v3019, 0.044715
    %v3036 = vmul.f32 %v3020, 0.044715
    %v3037 = vmul.f32 %v3021, 0.044715
    %v3038 = vadd.f32 %v2951, %v3022
    %v3039 = vadd.f32 %v2953, %v3023
    %v3040 = vadd.f32 %v2956, %v3024
    %v3041 = vadd.f32 %v2958, %v3025
    %v3042 = vadd.f32 %v2961, %v3026
    %v3043 = vadd.f32 %v2963, %v3027
    %v3044 = vadd.f32 %v2966, %v3028
    %v3045 = vadd.f32 %v2968, %v3029
    %v3046 = vadd.f32 %v2971, %v3030
    %v3047 = vadd.f32 %v2973, %v3031
    %v3048 = vadd.f32 %v2976, %v3032
    %v3049 = vadd.f32 %v2978, %v3033
    %v3050 = vadd.f32 %v2981, %v3034
    %v3051 = vadd.f32 %v2983, %v3035
    %v3052 = vadd.f32 %v2986, %v3036
    %v3053 = vadd.f32 %v2988, %v3037
    %v3054 = vmul.f32 %v3038, 0.7978846
    %v3055 = vmul.f32 %v3039, 0.7978846
    %v3056 = vmul.f32 %v3040, 0.7978846
    %v3057 = vmul.f32 %v3041, 0.7978846
    %v3058 = vmul.f32 %v3042, 0.7978846
    %v3059 = vmul.f32 %v3043, 0.7978846
    %v3060 = vmul.f32 %v3044, 0.7978846
    %v3061 = vmul.f32 %v3045, 0.7978846
    %v3062 = vmul.f32 %v3046, 0.7978846
    %v3063 = vmul.f32 %v3047, 0.7978846
    %v3064 = vmul.f32 %v3048, 0.7978846
    %v3065 = vmul.f32 %v3049, 0.7978846
    %v3066 = vmul.f32 %v3050, 0.7978846
    %v3067 = vmul.f32 %v3051, 0.7978846
    %v3068 = vmul.f32 %v3052, 0.7978846
    %v3069 = vmul.f32 %v3053, 0.7978846
    %v3070 = vtanh.pop %v3054
    %v3071 = vtanh.pop %v3055
    %v3072 = vtanh.pop %v3056
    %v3073 = vtanh.pop %v3057
    %v3074 = vtanh.pop %v3058
    %v3075 = vtanh.pop %v3059
    %v3076 = vtanh.pop %v3060
    %v3077 = vtanh.pop %v3061
    %v3078 = vtanh.pop %v3062
    %v3079 = vtanh.pop %v3063
    %v3080 = vtanh.pop %v3064
    %v3081 = vtanh.pop %v3065
    %v3082 = vtanh.pop %v3066
    %v3083 = vtanh.pop %v3067
    %v3084 = vtanh.pop %v3068
    %v3085 = vtanh.pop %v3069
    %v3086 = vadd.f32 %v3070, 1.0
    %v3087 = vadd.f32 %v3071, 1.0
    %v3088 = vadd.f32 %v3072, 1.0
    %v3089 = vadd.f32 %v3073, 1.0
    %v3090 = vadd.f32 %v3074, 1.0
    %v3091 = vadd.f32 %v3075, 1.0
    %v3092 = vadd.f32 %v3076, 1.0
    %v3093 = vadd.f32 %v3077, 1.0
    %v3094 = vadd.f32 %v3078, 1.0
    %v3095 = vadd.f32 %v3079, 1.0
    %v3096 = vadd.f32 %v3080, 1.0
    %v3097 = vadd.f32 %v3081, 1.0
    %v3098 = vadd.f32 %v3082, 1.0
    %v3099 = vadd.f32 %v3083, 1.0
    %v3100 = vadd.f32 %v3084, 1.0
    %v3101 = vadd.f32 %v3085, 1.0
    %v3102 = vmul.f32 %v3086, 0.5
    %v3103 = vmul.f32 %v3087, 0.5
    %v3104 = vmul.f32 %v3088, 0.5
    %v3105 = vmul.f32 %v3089, 0.5
    %v3106 = vmul.f32 %v3090, 0.5
    %v3107 = vmul.f32 %v3091, 0.5
    %v3108 = vmul.f32 %v3092, 0.5
    %v3109 = vmul.f32 %v3093, 0.5
    %v3110 = vmul.f32 %v3094, 0.5
    %v3111 = vmul.f32 %v3095, 0.5
    %v3112 = vmul.f32 %v3096, 0.5
    %v3113 = vmul.f32 %v3097, 0.5
    %v3114 = vmul.f32 %v3098, 0.5
    %v3115 = vmul.f32 %v3099, 0.5
    %v3116 = vmul.f32 %v3100, 0.5
    %v3117 = vmul.f32 %v3101, 0.5
    %v3118 = vmul.f32 %v2951, %v3102
    %v3119 = vmul.f32 %v2953, %v3103
    %v3120 = vmul.f32 %v2956, %v3104
    %v3121 = vmul.f32 %v2958, %v3105
    %v3122 = vmul.f32 %v2961, %v3106
    %v3123 = vmul.f32 %v2963, %v3107
    %v3124 = vmul.f32 %v2966, %v3108
    %v3125 = vmul.f32 %v2968, %v3109
    %v3126 = vmul.f32 %v2971, %v3110
    %v3127 = vmul.f32 %v2973, %v3111
    %v3128 = vmul.f32 %v2976, %v3112
    %v3129 = vmul.f32 %v2978, %v3113
    %v3130 = vmul.f32 %v2981, %v3114
    %v3131 = vmul.f32 %v2983, %v3115
    %v3132 = vmul.f32 %v2986, %v3116
    %v3133 = vmul.f32 %v2988, %v3117
    %v3134 = vpack.c.bf16 %v3119, %v3118
    %v3135 = vpack.c.bf16 %v3121, %v3120
    %v3136 = vpack.c.bf16 %v3123, %v3122
    %v3137 = vpack.c.bf16 %v3125, %v3124
    %v3138 = vpack.c.bf16 %v3127, %v3126
    %v3139 = vpack.c.bf16 %v3129, %v3128
    %v3140 = vpack.c.bf16 %v3131, %v3130
    %v3141 = vpack.c.bf16 %v3133, %v3132
    %v3142 = vld [vmem:[%s8] sm:$0xf]
    %v3143 = vld [vmem:[%s8 + $0x4] sm:$0xf]
    %v3144 = vld [vmem:[%s8 + $0x8] sm:$0xf]
    %v3145 = vld [vmem:[%s8 + $0xc] sm:$0xf]
    %v3146 = vld [vmem:[%s8 + $0x10] sm:$0xf]
    %v3147 = vld [vmem:[%s8 + $0x14] sm:$0xf]
    %v3148 = vld [vmem:[%s8 + $0x18] sm:$0xf]
    %v3149 = vld [vmem:[%s8 + $0x1c] sm:$0xf]
    %v3150 = vld [vmem:[%s8 + $0x20] sm:$0xf]
    %v3151 = vld [vmem:[%s8 + $0x24] sm:$0xf]
    %v3152 = vld [vmem:[%s8 + $0x28] sm:$0xf]
    %v3153 = vld [vmem:[%s8 + $0x2c] sm:$0xf]
    %v3154 = vld [vmem:[%s8 + $0x30] sm:$0xf]
    %v3155 = vld [vmem:[%s8 + $0x34] sm:$0xf]
    %v3156 = vld [vmem:[%s8 + $0x38] sm:$0xf]
    %v3157 = vld [vmem:[%s8 + $0x3c] sm:$0xf]
    %v3158 = vperm.slane %v214, 3
    %v3175 = vunpack.c.l.b16 %v3142
    %v3176 = vunpack.c.l.b16 %v3143
    %v3177 = vunpack.c.l.b16 %v3144
    %v3178 = vunpack.c.l.b16 %v3145
    %v3179 = vunpack.c.l.b16 %v3146
    %v3180 = vunpack.c.l.b16 %v3147
    %v3181 = vunpack.c.l.b16 %v3148
    %v3182 = vunpack.c.l.b16 %v3149
    %v3183 = vunpack.c.l.b16 %v3150
    %v3184 = vunpack.c.l.b16 %v3151
    %v3185 = vunpack.c.l.b16 %v3152
    %v3186 = vunpack.c.l.b16 %v3153
    %v3187 = vunpack.c.l.b16 %v3154
    %v3188 = vunpack.c.l.b16 %v3155
    %v3189 = vunpack.c.l.b16 %v3156
    %v3190 = vunpack.c.l.b16 %v3157
    %v3191 = vpack.c.b16 %v3176, %v3175
    %v3192 = vpack.c.b16 %v3178, %v3177
    %v3193 = vpack.c.b16 %v3180, %v3179
    %v3194 = vpack.c.b16 %v3182, %v3181
    %v3195 = vpack.c.b16 %v3184, %v3183
    %v3196 = vpack.c.b16 %v3186, %v3185
    %v3197 = vpack.c.b16 %v3188, %v3187
    %v3198 = vpack.c.b16 %v3190, %v3189
    %3207 = vmatpush.bf16.msra.mxu0 %v3198
    %3208 = vmatpush.bf16.msra.mxu0 %v3197
    %3209 = vmatpush.bf16.msra.mxu0 %v3196
    %3210 = vmatpush.bf16.msra.mxu0 %v3195
    %3211 = vmatpush.bf16.msra.mxu0 %v3194
    %3212 = vmatpush.bf16.msra.mxu0 %v3193
    %3213 = vmatpush.bf16.msra.mxu0 %v3192
    %3214 = vmatpush.bf16.msra.mxu0 %v3191
    %3215 = vmatmul.bf16.gmra.mxu0 %v3134
    %v3216 = vpop.f32.mrf.mxu0
    %v3217 = vadd.f32 %v3158, %v3216
    %v3218 = vpop.f32.mrf.mxu0
    %v3219 = vadd.f32 %v3158, %v3218
    %3220 = vmatmul.bf16.gmra.mxu0 %v3135
    %v3221 = vpop.f32.mrf.mxu0
    %v3222 = vadd.f32 %v3158, %v3221
    %v3223 = vpop.f32.mrf.mxu0
    %v3224 = vadd.f32 %v3158, %v3223
    %3225 = vmatmul.bf16.gmra.mxu0 %v3136
    %v3226 = vpop.f32.mrf.mxu0
    %v3227 = vadd.f32 %v3158, %v3226
    %v3228 = vpop.f32.mrf.mxu0
    %v3229 = vadd.f32 %v3158, %v3228
    %3230 = vmatmul.bf16.gmra.mxu0 %v3137
    %v3231 = vpop.f32.mrf.mxu0
    %v3232 = vadd.f32 %v3158, %v3231
    %v3233 = vpop.f32.mrf.mxu0
    %v3234 = vadd.f32 %v3158, %v3233
    %3235 = vmatmul.bf16.gmra.mxu0 %v3138
    %v3236 = vpop.f32.mrf.mxu0
    %v3237 = vadd.f32 %v3158, %v3236
    %v3238 = vpop.f32.mrf.mxu0
    %v3239 = vadd.f32 %v3158, %v3238
    %3240 = vmatmul.bf16.gmra.mxu0 %v3139
    %v3241 = vpop.f32.mrf.mxu0
    %v3242 = vadd.f32 %v3158, %v3241
    %v3243 = vpop.f32.mrf.mxu0
    %v3244 = vadd.f32 %v3158, %v3243
    %3245 = vmatmul.bf16.gmra.mxu0 %v3140
    %v3246 = vpop.f32.mrf.mxu0
    %v3247 = vadd.f32 %v3158, %v3246
    %v3248 = vpop.f32.mrf.mxu0
    %v3249 = vadd.f32 %v3158, %v3248
    %3250 = vmatmul.bf16.gmra.mxu0 %v3141
    %v3251 = vpop.f32.mrf.mxu0
    %v3252 = vadd.f32 %v3158, %v3251
    %v3253 = vpop.f32.mrf.mxu0
    %v3254 = vadd.f32 %v3158, %v3253
    %3255 = vdwg.mxu0
    %v3256 = vadd.f32 %v2873, %v3217
    %v3257 = vadd.f32 %v2874, %v3219
    %v3258 = vadd.f32 %v2875, %v3222
    %v3259 = vadd.f32 %v2876, %v3224
    %v3260 = vadd.f32 %v2877, %v3227
    %v3261 = vadd.f32 %v2878, %v3229
    %v3262 = vadd.f32 %v2879, %v3232
    %v3263 = vadd.f32 %v2880, %v3234
    %v3264 = vadd.f32 %v2881, %v3237
    %v3265 = vadd.f32 %v2882, %v3239
    %v3266 = vadd.f32 %v2883, %v3242
    %v3267 = vadd.f32 %v2884, %v3244
    %v3268 = vadd.f32 %v2885, %v3247
    %v3269 = vadd.f32 %v2886, %v3249
    %v3270 = vadd.f32 %v2887, %v3252
    %v3271 = vadd.f32 %v2888, %v3254
    %v3272 = vsel %vm243, %v3256, 0.0
    %3273 = vadd.xlane.f32.xlu0 %v3272
    %v3274 = vpop.xlane.xlu0 %3273
    %v3275 = vsel %vm243, %v3257, 0.0
    %3276 = vadd.xlane.f32.xlu0 %v3275
    %v3277 = vpop.xlane.xlu0 %3276
    %v3278 = vsel %vm243, %v3258, 0.0
    %3279 = vadd.xlane.f32.xlu0 %v3278
    %v3280 = vpop.xlane.xlu0 %3279
    %v3281 = vsel %vm243, %v3259, 0.0
    %3282 = vadd.xlane.f32.xlu0 %v3281
    %v3283 = vpop.xlane.xlu0 %3282
    %v3284 = vsel %vm243, %v3260, 0.0
    %3285 = vadd.xlane.f32.xlu0 %v3284
    %v3286 = vpop.xlane.xlu0 %3285
    %v3287 = vsel %vm243, %v3261, 0.0
    %3288 = vadd.xlane.f32.xlu0 %v3287
    %v3289 = vpop.xlane.xlu0 %3288
    %v3290 = vsel %vm243, %v3262, 0.0
    %3291 = vadd.xlane.f32.xlu0 %v3290
    %v3292 = vpop.xlane.xlu0 %3291
    %v3293 = vsel %vm243, %v3263, 0.0
    %3294 = vadd.xlane.f32.xlu0 %v3293
    %v3295 = vpop.xlane.xlu0 %3294
    %v3296 = vsel %vm243, %v3264, 0.0
    %3297 = vadd.xlane.f32.xlu0 %v3296
    %v3298 = vpop.xlane.xlu0 %3297
    %v3299 = vsel %vm243, %v3265, 0.0
    %3300 = vadd.xlane.f32.xlu0 %v3299
    %v3301 = vpop.xlane.xlu0 %3300
    %v3302 = vsel %vm243, %v3266, 0.0
    %3303 = vadd.xlane.f32.xlu0 %v3302
    %v3304 = vpop.xlane.xlu0 %3303
    %v3305 = vsel %vm243, %v3267, 0.0
    %3306 = vadd.xlane.f32.xlu0 %v3305
    %v3307 = vpop.xlane.xlu0 %3306
    %v3308 = vsel %vm243, %v3268, 0.0
    %3309 = vadd.xlane.f32.xlu0 %v3308
    %v3310 = vpop.xlane.xlu0 %3309
    %v3311 = vsel %vm243, %v3269, 0.0
    %3312 = vadd.xlane.f32.xlu0 %v3311
    %v3313 = vpop.xlane.xlu0 %3312
    %v3314 = vsel %vm243, %v3270, 0.0
    %3315 = vadd.xlane.f32.xlu0 %v3314
    %v3316 = vpop.xlane.xlu0 %3315
    %v3317 = vsel %vm243, %v3271, 0.0
    %3318 = vadd.xlane.f32.xlu0 %v3317
    %v3319 = vpop.xlane.xlu0 %3318
    %v3320 = vmul.f32 %v3274, %v2550
    %v3321 = vmul.f32 %v3277, %v2550
    %v3322 = vmul.f32 %v3280, %v2550
    %v3323 = vmul.f32 %v3283, %v2550
    %v3324 = vmul.f32 %v3286, %v2550
    %v3325 = vmul.f32 %v3289, %v2550
    %v3326 = vmul.f32 %v3292, %v2550
    %v3327 = vmul.f32 %v3295, %v2550
    %v3328 = vmul.f32 %v3298, %v2550
    %v3329 = vmul.f32 %v3301, %v2550
    %v3330 = vmul.f32 %v3304, %v2550
    %v3331 = vmul.f32 %v3307, %v2550
    %v3332 = vmul.f32 %v3310, %v2550
    %v3333 = vmul.f32 %v3313, %v2550
    %v3334 = vmul.f32 %v3316, %v2550
    %v3335 = vmul.f32 %v3319, %v2550
    %v3336 = vsub.f32 %v3256, %v3320
    %v3337 = vsub.f32 %v3257, %v3321
    %v3338 = vsub.f32 %v3258, %v3322
    %v3339 = vsub.f32 %v3259, %v3323
    %v3340 = vsub.f32 %v3260, %v3324
    %v3341 = vsub.f32 %v3261, %v3325
    %v3342 = vsub.f32 %v3262, %v3326
    %v3343 = vsub.f32 %v3263, %v3327
    %v3344 = vsub.f32 %v3264, %v3328
    %v3345 = vsub.f32 %v3265, %v3329
    %v3346 = vsub.f32 %v3266, %v3330
    %v3347 = vsub.f32 %v3267, %v3331
    %v3348 = vsub.f32 %v3268, %v3332
    %v3349 = vsub.f32 %v3269, %v3333
    %v3350 = vsub.f32 %v3270, %v3334
    %v3351 = vsub.f32 %v3271, %v3335
    %v3352 = vmul.f32 %v3336, %v3336
    %v3353 = vmul.f32 %v3337, %v3337
    %v3354 = vmul.f32 %v3338, %v3338
    %v3355 = vmul.f32 %v3339, %v3339
    %v3356 = vmul.f32 %v3340, %v3340
    %v3357 = vmul.f32 %v3341, %v3341
    %v3358 = vmul.f32 %v3342, %v3342
    %v3359 = vmul.f32 %v3343, %v3343
    %v3360 = vmul.f32 %v3344, %v3344
    %v3361 = vmul.f32 %v3345, %v3345
    %v3362 = vmul.f32 %v3346, %v3346
    %v3363 = vmul.f32 %v3347, %v3347
    %v3364 = vmul.f32 %v3348, %v3348
    %v3365 = vmul.f32 %v3349, %v3349
    %v3366 = vmul.f32 %v3350, %v3350
    %v3367 = vmul.f32 %v3351, %v3351
    %v3368 = vsel %vm243, %v3352, 0.0
    %3369 = vadd.xlane.f32.xlu0 %v3368
    %v3370 = vpop.xlane.xlu0 %3369
    %v3371 = vsel %vm243, %v3353, 0.0
    %3372 = vadd.xlane.f32.xlu0 %v3371
    %v3373 = vpop.xlane.xlu0 %3372
    %v3374 = vsel %vm243, %v3354, 0.0
    %3375 = vadd.xlane.f32.xlu0 %v3374
    %v3376 = vpop.xlane.xlu0 %3375
    %v3377 = vsel %vm243, %v3355, 0.0
    %3378 = vadd.xlane.f32.xlu0 %v3377
    %v3379 = vpop.xlane.xlu0 %3378
    %v3380 = vsel %vm243, %v3356, 0.0
    %3381 = vadd.xlane.f32.xlu0 %v3380
    %v3382 = vpop.xlane.xlu0 %3381
    %v3383 = vsel %vm243, %v3357, 0.0
    %3384 = vadd.xlane.f32.xlu0 %v3383
    %v3385 = vpop.xlane.xlu0 %3384
    %v3386 = vsel %vm243, %v3358, 0.0
    %3387 = vadd.xlane.f32.xlu0 %v3386
    %v3388 = vpop.xlane.xlu0 %3387
    %v3389 = vsel %vm243, %v3359, 0.0
    %3390 = vadd.xlane.f32.xlu0 %v3389
    %v3391 = vpop.xlane.xlu0 %3390
    %v3392 = vsel %vm243, %v3360, 0.0
    %3393 = vadd.xlane.f32.xlu0 %v3392
    %v3394 = vpop.xlane.xlu0 %3393
    %v3395 = vsel %vm243, %v3361, 0.0
    %3396 = vadd.xlane.f32.xlu0 %v3395
    %v3397 = vpop.xlane.xlu0 %3396
    %v3398 = vsel %vm243, %v3362, 0.0
    %3399 = vadd.xlane.f32.xlu0 %v3398
    %v3400 = vpop.xlane.xlu0 %3399
    %v3401 = vsel %vm243, %v3363, 0.0
    %3402 = vadd.xlane.f32.xlu0 %v3401
    %v3403 = vpop.xlane.xlu0 %3402
    %v3404 = vsel %vm243, %v3364, 0.0
    %3405 = vadd.xlane.f32.xlu0 %v3404
    %v3406 = vpop.xlane.xlu0 %3405
    %v3407 = vsel %vm243, %v3365, 0.0
    %3408 = vadd.xlane.f32.xlu0 %v3407
    %v3409 = vpop.xlane.xlu0 %3408
    %v3410 = vsel %vm243, %v3366, 0.0
    %3411 = vadd.xlane.f32.xlu0 %v3410
    %v3412 = vpop.xlane.xlu0 %3411
    %v3413 = vsel %vm243, %v3367, 0.0
    %3414 = vadd.xlane.f32.xlu0 %v3413
    %v3415 = vpop.xlane.xlu0 %3414
    %v3416 = vmul.f32 %v3370, %v2550
    %v3417 = vmul.f32 %v3373, %v2550
    %v3418 = vmul.f32 %v3376, %v2550
    %v3419 = vmul.f32 %v3379, %v2550
    %v3420 = vmul.f32 %v3382, %v2550
    %v3421 = vmul.f32 %v3385, %v2550
    %v3422 = vmul.f32 %v3388, %v2550
    %v3423 = vmul.f32 %v3391, %v2550
    %v3424 = vmul.f32 %v3394, %v2550
    %v3425 = vmul.f32 %v3397, %v2550
    %v3426 = vmul.f32 %v3400, %v2550
    %v3427 = vmul.f32 %v3403, %v2550
    %v3428 = vmul.f32 %v3406, %v2550
    %v3429 = vmul.f32 %v3409, %v2550
    %v3430 = vmul.f32 %v3412, %v2550
    %v3431 = vmul.f32 %v3415, %v2550
    %v3432 = vadd.f32 %v3416, 1e-12
    %v3433 = vadd.f32 %v3417, 1e-12
    %v3434 = vadd.f32 %v3418, 1e-12
    %v3435 = vadd.f32 %v3419, 1e-12
    %v3436 = vadd.f32 %v3420, 1e-12
    %v3437 = vadd.f32 %v3421, 1e-12
    %v3438 = vadd.f32 %v3422, 1e-12
    %v3439 = vadd.f32 %v3423, 1e-12
    %v3440 = vadd.f32 %v3424, 1e-12
    %v3441 = vadd.f32 %v3425, 1e-12
    %v3442 = vadd.f32 %v3426, 1e-12
    %v3443 = vadd.f32 %v3427, 1e-12
    %v3444 = vadd.f32 %v3428, 1e-12
    %v3445 = vadd.f32 %v3429, 1e-12
    %v3446 = vadd.f32 %v3430, 1e-12
    %v3447 = vadd.f32 %v3431, 1e-12
    %v3448 = vrsqrt.pop %v3432
    %v3449 = vmul.f32 %v3448, %v3432
    %v3450 = vmul.f32 %v3449, %v3448
    %v3451 = vmul.f32 0.5, %v3450
    %v3452 = vsub.f32 1.5, %v3451
    %v3453 = vmul.f32 %v3448, %v3452
    %vm3454 = vweird.f32 %v3432
    %vm3455 = vweird.f32 %v3448
    %vm3456 = vmor %vm3454, %vm3455
    %v3457 = vsel %vm3456, %v3448, %v3453
    %v3458 = vrsqrt.pop %v3433
    %v3459 = vmul.f32 %v3458, %v3433
    %v3460 = vmul.f32 %v3459, %v3458
    %v3461 = vmul.f32 0.5, %v3460
    %v3462 = vsub.f32 1.5, %v3461
    %v3463 = vmul.f32 %v3458, %v3462
    %vm3464 = vweird.f32 %v3433
    %vm3465 = vweird.f32 %v3458
    %vm3466 = vmor %vm3464, %vm3465
    %v3467 = vsel %vm3466, %v3458, %v3463
    %v3468 = vrsqrt.pop %v3434
    %v3469 = vmul.f32 %v3468, %v3434
    %v3470 = vmul.f32 %v3469, %v3468
    %v3471 = vmul.f32 0.5, %v3470
    %v3472 = vsub.f32 1.5, %v3471
    %v3473 = vmul.f32 %v3468, %v3472
    %vm3474 = vweird.f32 %v3434
    %vm3475 = vweird.f32 %v3468
    %vm3476 = vmor %vm3474, %vm3475
    %v3477 = vsel %vm3476, %v3468, %v3473
    %v3478 = vrsqrt.pop %v3435
    %v3479 = vmul.f32 %v3478, %v3435
    %v3480 = vmul.f32 %v3479, %v3478
    %v3481 = vmul.f32 0.5, %v3480
    %v3482 = vsub.f32 1.5, %v3481
    %v3483 = vmul.f32 %v3478, %v3482
    %vm3484 = vweird.f32 %v3435
    %vm3485 = vweird.f32 %v3478
    %vm3486 = vmor %vm3484, %vm3485
    %v3487 = vsel %vm3486, %v3478, %v3483
    %v3488 = vrsqrt.pop %v3436
    %v3489 = vmul.f32 %v3488, %v3436
    %v3490 = vmul.f32 %v3489, %v3488
    %v3491 = vmul.f32 0.5, %v3490
    %v3492 = vsub.f32 1.5, %v3491
    %v3493 = vmul.f32 %v3488, %v3492
    %vm3494 = vweird.f32 %v3436
    %vm3495 = vweird.f32 %v3488
    %vm3496 = vmor %vm3494, %vm3495
    %v3497 = vsel %vm3496, %v3488, %v3493
    %v3498 = vrsqrt.pop %v3437
    %v3499 = vmul.f32 %v3498, %v3437
    %v3500 = vmul.f32 %v3499, %v3498
    %v3501 = vmul.f32 0.5, %v3500
    %v3502 = vsub.f32 1.5, %v3501
    %v3503 = vmul.f32 %v3498, %v3502
    %vm3504 = vweird.f32 %v3437
    %vm3505 = vweird.f32 %v3498
    %vm3506 = vmor %vm3504, %vm3505
    %v3507 = vsel %vm3506, %v3498, %v3503
    %v3508 = vrsqrt.pop %v3438
    %v3509 = vmul.f32 %v3508, %v3438
    %v3510 = vmul.f32 %v3509, %v3508
    %v3511 = vmul.f32 0.5, %v3510
    %v3512 = vsub.f32 1.5, %v3511
    %v3513 = vmul.f32 %v3508, %v3512
    %vm3514 = vweird.f32 %v3438
    %vm3515 = vweird.f32 %v3508
    %vm3516 = vmor %vm3514, %vm3515
    %v3517 = vsel %vm3516, %v3508, %v3513
    %v3518 = vrsqrt.pop %v3439
    %v3519 = vmul.f32 %v3518, %v3439
    %v3520 = vmul.f32 %v3519, %v3518
    %v3521 = vmul.f32 0.5, %v3520
    %v3522 = vsub.f32 1.5, %v3521
    %v3523 = vmul.f32 %v3518, %v3522
    %vm3524 = vweird.f32 %v3439
    %vm3525 = vweird.f32 %v3518
    %vm3526 = vmor %vm3524, %vm3525
    %v3527 = vsel %vm3526, %v3518, %v3523
    %v3528 = vrsqrt.pop %v3440
    %v3529 = vmul.f32 %v3528, %v3440
    %v3530 = vmul.f32 %v3529, %v3528
    %v3531 = vmul.f32 0.5, %v3530
    %v3532 = vsub.f32 1.5, %v3531
    %v3533 = vmul.f32 %v3528, %v3532
    %vm3534 = vweird.f32 %v3440
    %vm3535 = vweird.f32 %v3528
    %vm3536 = vmor %vm3534, %vm3535
    %v3537 = vsel %vm3536, %v3528, %v3533
    %v3538 = vrsqrt.pop %v3441
    %v3539 = vmul.f32 %v3538, %v3441
    %v3540 = vmul.f32 %v3539, %v3538
    %v3541 = vmul.f32 0.5, %v3540
    %v3542 = vsub.f32 1.5, %v3541
    %v3543 = vmul.f32 %v3538, %v3542
    %vm3544 = vweird.f32 %v3441
    %vm3545 = vweird.f32 %v3538
    %vm3546 = vmor %vm3544, %vm3545
    %v3547 = vsel %vm3546, %v3538, %v3543
    %v3548 = vrsqrt.pop %v3442
    %v3549 = vmul.f32 %v3548, %v3442
    %v3550 = vmul.f32 %v3549, %v3548
    %v3551 = vmul.f32 0.5, %v3550
    %v3552 = vsub.f32 1.5, %v3551
    %v3553 = vmul.f32 %v3548, %v3552
    %vm3554 = vweird.f32 %v3442
    %vm3555 = vweird.f32 %v3548
    %vm3556 = vmor %vm3554, %vm3555
    %v3557 = vsel %vm3556, %v3548, %v3553
    %v3558 = vrsqrt.pop %v3443
    %v3559 = vmul.f32 %v3558, %v3443
    %v3560 = vmul.f32 %v3559, %v3558
    %v3561 = vmul.f32 0.5, %v3560
    %v3562 = vsub.f32 1.5, %v3561
    %v3563 = vmul.f32 %v3558, %v3562
    %vm3564 = vweird.f32 %v3443
    %vm3565 = vweird.f32 %v3558
    %vm3566 = vmor %vm3564, %vm3565
    %v3567 = vsel %vm3566, %v3558, %v3563
    %v3568 = vrsqrt.pop %v3444
    %v3569 = vmul.f32 %v3568, %v3444
    %v3570 = vmul.f32 %v3569, %v3568
    %v3571 = vmul.f32 0.5, %v3570
    %v3572 = vsub.f32 1.5, %v3571
    %v3573 = vmul.f32 %v3568, %v3572
    %vm3574 = vweird.f32 %v3444
    %vm3575 = vweird.f32 %v3568
    %vm3576 = vmor %vm3574, %vm3575
    %v3577 = vsel %vm3576, %v3568, %v3573
    %v3578 = vrsqrt.pop %v3445
    %v3579 = vmul.f32 %v3578, %v3445
    %v3580 = vmul.f32 %v3579, %v3578
    %v3581 = vmul.f32 0.5, %v3580
    %v3582 = vsub.f32 1.5, %v3581
    %v3583 = vmul.f32 %v3578, %v3582
    %vm3584 = vweird.f32 %v3445
    %vm3585 = vweird.f32 %v3578
    %vm3586 = vmor %vm3584, %vm3585
    %v3587 = vsel %vm3586, %v3578, %v3583
    %v3588 = vrsqrt.pop %v3446
    %v3589 = vmul.f32 %v3588, %v3446
    %v3590 = vmul.f32 %v3589, %v3588
    %v3591 = vmul.f32 0.5, %v3590
    %v3592 = vsub.f32 1.5, %v3591
    %v3593 = vmul.f32 %v3588, %v3592
    %vm3594 = vweird.f32 %v3446
    %vm3595 = vweird.f32 %v3588
    %vm3596 = vmor %vm3594, %vm3595
    %v3597 = vsel %vm3596, %v3588, %v3593
    %v3598 = vrsqrt.pop %v3447
    %v3599 = vmul.f32 %v3598, %v3447
    %v3600 = vmul.f32 %v3599, %v3598
    %v3601 = vmul.f32 0.5, %v3600
    %v3602 = vsub.f32 1.5, %v3601
    %v3603 = vmul.f32 %v3598, %v3602
    %vm3604 = vweird.f32 %v3447
    %vm3605 = vweird.f32 %v3598
    %vm3606 = vmor %vm3604, %vm3605
    %v3607 = vsel %vm3606, %v3598, %v3603
    %v3608 = vmul.f32 %v3336, %v3457
    %v3609 = vmul.f32 %v3337, %v3467
    %v3610 = vmul.f32 %v3338, %v3477
    %v3611 = vmul.f32 %v3339, %v3487
    %v3612 = vmul.f32 %v3340, %v3497
    %v3613 = vmul.f32 %v3341, %v3507
    %v3614 = vmul.f32 %v3342, %v3517
    %v3615 = vmul.f32 %v3343, %v3527
    %v3616 = vmul.f32 %v3344, %v3537
    %v3617 = vmul.f32 %v3345, %v3547
    %v3618 = vmul.f32 %v3346, %v3557
    %v3619 = vmul.f32 %v3347, %v3567
    %v3620 = vmul.f32 %v3348, %v3577
    %v3621 = vmul.f32 %v3349, %v3587
    %v3622 = vmul.f32 %v3350, %v3597
    %v3623 = vmul.f32 %v3351, %v3607
    %v3624 = vperm.slane %v214, 4
    %v3625 = vmul.f32 %v3608, %v3624
    %v3626 = vmul.f32 %v3609, %v3624
    %v3627 = vmul.f32 %v3610, %v3624
    %v3628 = vmul.f32 %v3611, %v3624
    %v3629 = vmul.f32 %v3612, %v3624
    %v3630 = vmul.f32 %v3613, %v3624
    %v3631 = vmul.f32 %v3614, %v3624
    %v3632 = vmul.f32 %v3615, %v3624
    %v3633 = vmul.f32 %v3616, %v3624
    %v3634 = vmul.f32 %v3617, %v3624
    %v3635 = vmul.f32 %v3618, %v3624
    %v3636 = vmul.f32 %v3619, %v3624
    %v3637 = vmul.f32 %v3620, %v3624
    %v3638 = vmul.f32 %v3621, %v3624
    %v3639 = vmul.f32 %v3622, %v3624
    %v3640 = vmul.f32 %v3623, %v3624
    %v3641 = vperm.slane %v214, 5
    %v3642 = vadd.f32 %v3625, %v3641
    %v3643 = vadd.f32 %v3626, %v3641
    %v3644 = vadd.f32 %v3627, %v3641
    %v3645 = vadd.f32 %v3628, %v3641
    %v3646 = vadd.f32 %v3629, %v3641
    %v3647 = vadd.f32 %v3630, %v3641
    %v3648 = vadd.f32 %v3631, %v3641
    %v3649 = vadd.f32 %v3632, %v3641
    %v3650 = vadd.f32 %v3633, %v3641
    %v3651 = vadd.f32 %v3634, %v3641
    %v3652 = vadd.f32 %v3635, %v3641
    %v3653 = vadd.f32 %v3636, %v3641
    %v3654 = vadd.f32 %v3637, %v3641
    %v3655 = vadd.f32 %v3638, %v3641
    %v3656 = vadd.f32 %v3639, %v3641
    %v3657 = vadd.f32 %v3640, %v3641
    %s3658 = scalar_lea.vmem %s9, 8
    %v3659 = vld [vmem:[%s3658] sm:$0x3f]
    %v3660 = vpack.c.bf16 %v3643, %v3642
    %v3661 = vpack.c.bf16 %v3645, %v3644
    %v3662 = vpack.c.bf16 %v3647, %v3646
    %v3663 = vpack.c.bf16 %v3649, %v3648
    %v3664 = vpack.c.bf16 %v3651, %v3650
    %v3665 = vpack.c.bf16 %v3653, %v3652
    %v3666 = vpack.c.bf16 %v3655, %v3654
    %v3667 = vpack.c.bf16 %v3657, %v3656
    %s3668 = scalar_lea.vmem %s3, 16
    %v3669 = vld [vmem:[%s3668] sm:$0xf]
    %v3670 = vld [vmem:[%s3668 + $0x4] sm:$0xf]
    %v3671 = vld [vmem:[%s3668 + $0x8] sm:$0xf]
    %v3672 = vld [vmem:[%s3668 + $0xc] sm:$0xf]
    %s3673 = scalar_lea.vmem %s4, 1
    %v3674 = vld [vmem:[%s3673] sm:$0x1]
    %v3676 = vperm.slane %v3674, 0
    %v3682 = vunpack.c.l.b16 %v3669
    %v3683 = vunpack.c.l.b16 %v3670
    %v3684 = vunpack.c.l.b16 %v3671
    %v3685 = vunpack.c.l.b16 %v3672
    %v3686 = vpack.c.b16 %v3683, %v3682
    %v3687 = vpack.c.b16 %v3685, %v3684
    %v3691 = vsel %vm243, %v3660, 0
    %v3694 = vsel %vm243, %v3661, 0
    %v3697 = vsel %vm243, %v3662, 0
    %v3700 = vsel %vm243, %v3663, 0
    %v3703 = vsel %vm243, %v3664, 0
    %v3706 = vsel %vm243, %v3665, 0
    %v3709 = vsel %vm243, %v3666, 0
    %v3712 = vsel %vm243, %v3667, 0
    %3714 = vmatpush.bf16.msra.mxu0 0
    %3715 = vmatpush.bf16.msra.mxu0 0
    %3716 = vmatpush.bf16.msra.mxu0 0
    %3717 = vmatpush.bf16.msra.mxu0 0
    %3718 = vmatpush.bf16.msra.mxu0 0
    %3719 = vmatpush.bf16.msra.mxu0 0
    %3720 = vmatpush.bf16.msra.mxu0 %v3687
    %3721 = vmatpush.bf16.msra.mxu0 %v3686
    %3722 = vmatmul.bf16.gmra.mxu0 %v3691
    %v3723 = vpop.f32.mrf.mxu0
    %v3724 = vadd.f32 %v3676, %v3723
    %v3725 = vpop.f32.mrf.mxu0
    %v3726 = vadd.f32 %v3676, %v3725
    %3727 = vmatmul.bf16.gmra.mxu0 %v3694
    %v3728 = vpop.f32.mrf.mxu0
    %v3729 = vadd.f32 %v3676, %v3728
    %v3730 = vpop.f32.mrf.mxu0
    %v3731 = vadd.f32 %v3676, %v3730
    %3732 = vmatmul.bf16.gmra.mxu0 %v3697
    %v3733 = vpop.f32.mrf.mxu0
    %v3734 = vadd.f32 %v3676, %v3733
    %v3735 = vpop.f32.mrf.mxu0
    %v3736 = vadd.f32 %v3676, %v3735
    %3737 = vmatmul.bf16.gmra.mxu0 %v3700
    %v3738 = vpop.f32.mrf.mxu0
    %v3739 = vadd.f32 %v3676, %v3738
    %v3740 = vpop.f32.mrf.mxu0
    %v3741 = vadd.f32 %v3676, %v3740
    %3742 = vmatmul.bf16.gmra.mxu0 %v3703
    %v3743 = vpop.f32.mrf.mxu0
    %v3744 = vadd.f32 %v3676, %v3743
    %v3745 = vpop.f32.mrf.mxu0
    %v3746 = vadd.f32 %v3676, %v3745
    %3747 = vmatmul.bf16.gmra.mxu0 %v3706
    %v3748 = vpop.f32.mrf.mxu0
    %v3749 = vadd.f32 %v3676, %v3748
    %v3750 = vpop.f32.mrf.mxu0
    %v3751 = vadd.f32 %v3676, %v3750
    %3752 = vmatmul.bf16.gmra.mxu0 %v3709
    %v3753 = vpop.f32.mrf.mxu0
    %v3754 = vadd.f32 %v3676, %v3753
    %v3755 = vpop.f32.mrf.mxu0
    %v3756 = vadd.f32 %v3676, %v3755
    %3757 = vmatmul.bf16.gmra.mxu0 %v3712
    %v3758 = vpop.f32.mrf.mxu0
    %v3759 = vadd.f32 %v3676, %v3758
    %v3760 = vpop.f32.mrf.mxu0
    %v3761 = vadd.f32 %v3676, %v3760
    %3762 = vdwg.mxu0
    %v3763 = vmul.f32 %v3724, 0.35355338
    %v3764 = vmul.f32 %v3726, 0.35355338
    %v3765 = vmul.f32 %v3729, 0.35355338
    %v3766 = vmul.f32 %v3731, 0.35355338
    %v3767 = vmul.f32 %v3734, 0.35355338
    %v3768 = vmul.f32 %v3736, 0.35355338
    %v3769 = vmul.f32 %v3739, 0.35355338
    %v3770 = vmul.f32 %v3741, 0.35355338
    %v3771 = vmul.f32 %v3744, 0.35355338
    %v3772 = vmul.f32 %v3746, 0.35355338
    %v3773 = vmul.f32 %v3749, 0.35355338
    %v3774 = vmul.f32 %v3751, 0.35355338
    %v3775 = vmul.f32 %v3754, 0.35355338
    %v3776 = vmul.f32 %v3756, 0.35355338
    %v3777 = vmul.f32 %v3759, 0.35355338
    %v3778 = vmul.f32 %v3761, 0.35355338
    %v3779 = vpack.c.bf16 %v3763, %v3763
    %v3780 = vpack.c.bf16 %v3764, %v3764
    %v3781 = vpack.c.bf16 %v3765, %v3765
    %v3782 = vpack.c.bf16 %v3766, %v3766
    %v3783 = vpack.c.bf16 %v3767, %v3767
    %v3784 = vpack.c.bf16 %v3768, %v3768
    %v3785 = vpack.c.bf16 %v3769, %v3769
    %v3786 = vpack.c.bf16 %v3770, %v3770
    %v3787 = vpack.c.bf16 %v3771, %v3771
    %v3788 = vpack.c.bf16 %v3772, %v3772
    %v3789 = vpack.c.bf16 %v3773, %v3773
    %v3790 = vpack.c.bf16 %v3774, %v3774
    %v3791 = vpack.c.bf16 %v3775, %v3775
    %v3792 = vpack.c.bf16 %v3776, %v3776
    %v3793 = vpack.c.bf16 %v3777, %v3777
    %v3794 = vpack.c.bf16 %v3778, %v3778
    %v3795 = vpack.c.bf16 %v3724, %v3724
    %v3796 = vpack.c.bf16 %v3726, %v3726
    %v3797 = vpack.c.bf16 %v3729, %v3729
    %v3798 = vpack.c.bf16 %v3731, %v3731
    %v3799 = vpack.c.bf16 %v3734, %v3734
    %v3800 = vpack.c.bf16 %v3736, %v3736
    %v3801 = vpack.c.bf16 %v3739, %v3739
    %v3802 = vpack.c.bf16 %v3741, %v3741
    %v3803 = vpack.c.bf16 %v3744, %v3744
    %v3804 = vpack.c.bf16 %v3746, %v3746
    %v3805 = vpack.c.bf16 %v3749, %v3749
    %v3806 = vpack.c.bf16 %v3751, %v3751
    %v3807 = vpack.c.bf16 %v3754, %v3754
    %v3808 = vpack.c.bf16 %v3756, %v3756
    %v3809 = vpack.c.bf16 %v3759, %v3759
    %v3810 = vpack.c.bf16 %v3761, %v3761
    %v3811 = vunpack.c.l.bf16 %v3779
    %v3812 = vunpack.c.l.bf16 %v3780
    %v3813 = vunpack.c.l.bf16 %v3781
    %v3814 = vunpack.c.l.bf16 %v3782
    %v3815 = vunpack.c.l.bf16 %v3783
    %v3816 = vunpack.c.l.bf16 %v3784
    %v3817 = vunpack.c.l.bf16 %v3785
    %v3818 = vunpack.c.l.bf16 %v3786
    %v3819 = vunpack.c.l.bf16 %v3787
    %v3820 = vunpack.c.l.bf16 %v3788
    %v3821 = vunpack.c.l.bf16 %v3789
    %v3822 = vunpack.c.l.bf16 %v3790
    %v3823 = vunpack.c.l.bf16 %v3791
    %v3824 = vunpack.c.l.bf16 %v3792
    %v3825 = vunpack.c.l.bf16 %v3793
    %v3826 = vunpack.c.l.bf16 %v3794
    %v3827 = vmul.f32 %v3811, %v381
    %v3828 = vmul.f32 %v3812, %v381
    %v3829 = vmul.f32 %v3813, %v381
    %v3830 = vmul.f32 %v3814, %v381
    %v3831 = vmul.f32 %v3815, %v381
    %v3832 = vmul.f32 %v3816, %v381
    %v3833 = vmul.f32 %v3817, %v381
    %v3834 = vmul.f32 %v3818, %v381
    %v3835 = vmul.f32 %v3819, %v381
    %v3836 = vmul.f32 %v3820, %v381
    %v3837 = vmul.f32 %v3821, %v381
    %v3838 = vmul.f32 %v3822, %v381
    %v3839 = vmul.f32 %v3823, %v381
    %v3840 = vmul.f32 %v3824, %v381
    %v3841 = vmul.f32 %v3825, %v381
    %v3842 = vmul.f32 %v3826, %v381
    %v3843 = vpack.c.bf16 %v3827, %v3827
    %v3844 = vpack.c.bf16 %v3828, %v3828
    %v3845 = vpack.c.bf16 %v3829, %v3829
    %v3846 = vpack.c.bf16 %v3830, %v3830
    %v3847 = vpack.c.bf16 %v3831, %v3831
    %v3848 = vpack.c.bf16 %v3832, %v3832
    %v3849 = vpack.c.bf16 %v3833, %v3833
    %v3850 = vpack.c.bf16 %v3834, %v3834
    %v3851 = vpack.c.bf16 %v3835, %v3835
    %v3852 = vpack.c.bf16 %v3836, %v3836
    %v3853 = vpack.c.bf16 %v3837, %v3837
    %v3854 = vpack.c.bf16 %v3838, %v3838
    %v3855 = vpack.c.bf16 %v3839, %v3839
    %v3856 = vpack.c.bf16 %v3840, %v3840
    %v3857 = vpack.c.bf16 %v3841, %v3841
    %v3858 = vpack.c.bf16 %v3842, %v3842
    %v3859 = vmul.f32 %v3811, %v414
    %v3860 = vmul.f32 %v3812, %v414
    %v3861 = vmul.f32 %v3813, %v414
    %v3862 = vmul.f32 %v3814, %v414
    %v3863 = vmul.f32 %v3815, %v414
    %v3864 = vmul.f32 %v3816, %v414
    %v3865 = vmul.f32 %v3817, %v414
    %v3866 = vmul.f32 %v3818, %v414
    %v3867 = vmul.f32 %v3819, %v414
    %v3868 = vmul.f32 %v3820, %v414
    %v3869 = vmul.f32 %v3821, %v414
    %v3870 = vmul.f32 %v3822, %v414
    %v3871 = vmul.f32 %v3823, %v414
    %v3872 = vmul.f32 %v3824, %v414
    %v3873 = vmul.f32 %v3825, %v414
    %v3874 = vmul.f32 %v3826, %v414
    %v3875 = vpack.c.bf16 %v3859, %v3859
    %v3876 = vpack.c.bf16 %v3860, %v3860
    %v3877 = vpack.c.bf16 %v3861, %v3861
    %v3878 = vpack.c.bf16 %v3862, %v3862
    %v3879 = vpack.c.bf16 %v3863, %v3863
    %v3880 = vpack.c.bf16 %v3864, %v3864
    %v3881 = vpack.c.bf16 %v3865, %v3865
    %v3882 = vpack.c.bf16 %v3866, %v3866
    %v3883 = vpack.c.bf16 %v3867, %v3867
    %v3884 = vpack.c.bf16 %v3868, %v3868
    %v3885 = vpack.c.bf16 %v3869, %v3869
    %v3886 = vpack.c.bf16 %v3870, %v3870
    %v3887 = vpack.c.bf16 %v3871, %v3871
    %v3888 = vpack.c.bf16 %v3872, %v3872
    %v3889 = vpack.c.bf16 %v3873, %v3873
    %v3890 = vpack.c.bf16 %v3874, %v3874
    %v3891 = vmul.f32 %v3811, %v447
    %v3892 = vmul.f32 %v3812, %v447
    %v3893 = vmul.f32 %v3813, %v447
    %v3894 = vmul.f32 %v3814, %v447
    %v3895 = vmul.f32 %v3815, %v447
    %v3896 = vmul.f32 %v3816, %v447
    %v3897 = vmul.f32 %v3817, %v447
    %v3898 = vmul.f32 %v3818, %v447
    %v3899 = vmul.f32 %v3819, %v447
    %v3900 = vmul.f32 %v3820, %v447
    %v3901 = vmul.f32 %v3821, %v447
    %v3902 = vmul.f32 %v3822, %v447
    %v3903 = vmul.f32 %v3823, %v447
    %v3904 = vmul.f32 %v3824, %v447
    %v3905 = vmul.f32 %v3825, %v447
    %v3906 = vmul.f32 %v3826, %v447
    %v3907 = vpack.c.bf16 %v3891, %v3891
    %v3908 = vpack.c.bf16 %v3892, %v3892
    %v3909 = vpack.c.bf16 %v3893, %v3893
    %v3910 = vpack.c.bf16 %v3894, %v3894
    %v3911 = vpack.c.bf16 %v3895, %v3895
    %v3912 = vpack.c.bf16 %v3896, %v3896
    %v3913 = vpack.c.bf16 %v3897, %v3897
    %v3914 = vpack.c.bf16 %v3898, %v3898
    %v3915 = vpack.c.bf16 %v3899, %v3899
    %v3916 = vpack.c.bf16 %v3900, %v3900
    %v3917 = vpack.c.bf16 %v3901, %v3901
    %v3918 = vpack.c.bf16 %v3902, %v3902
    %v3919 = vpack.c.bf16 %v3903, %v3903
    %v3920 = vpack.c.bf16 %v3904, %v3904
    %v3921 = vpack.c.bf16 %v3905, %v3905
    %v3922 = vpack.c.bf16 %v3906, %v3906
    %v3923 = vmul.f32 %v3811, %v480
    %v3924 = vmul.f32 %v3812, %v480
    %v3925 = vmul.f32 %v3813, %v480
    %v3926 = vmul.f32 %v3814, %v480
    %v3927 = vmul.f32 %v3815, %v480
    %v3928 = vmul.f32 %v3816, %v480
    %v3929 = vmul.f32 %v3817, %v480
    %v3930 = vmul.f32 %v3818, %v480
    %v3931 = vmul.f32 %v3819, %v480
    %v3932 = vmul.f32 %v3820, %v480
    %v3933 = vmul.f32 %v3821, %v480
    %v3934 = vmul.f32 %v3822, %v480
    %v3935 = vmul.f32 %v3823, %v480
    %v3936 = vmul.f32 %v3824, %v480
    %v3937 = vmul.f32 %v3825, %v480
    %v3938 = vmul.f32 %v3826, %v480
    %v3939 = vpack.c.bf16 %v3923, %v3923
    %v3940 = vpack.c.bf16 %v3924, %v3924
    %v3941 = vpack.c.bf16 %v3925, %v3925
    %v3942 = vpack.c.bf16 %v3926, %v3926
    %v3943 = vpack.c.bf16 %v3927, %v3927
    %v3944 = vpack.c.bf16 %v3928, %v3928
    %v3945 = vpack.c.bf16 %v3929, %v3929
    %v3946 = vpack.c.bf16 %v3930, %v3930
    %v3947 = vpack.c.bf16 %v3931, %v3931
    %v3948 = vpack.c.bf16 %v3932, %v3932
    %v3949 = vpack.c.bf16 %v3933, %v3933
    %v3950 = vpack.c.bf16 %v3934, %v3934
    %v3951 = vpack.c.bf16 %v3935, %v3935
    %v3952 = vpack.c.bf16 %v3936, %v3936
    %v3953 = vpack.c.bf16 %v3937, %v3937
    %v3954 = vpack.c.bf16 %v3938, %v3938
    %v3971 = vunpack.c.l.b16 %v3843
    %v3972 = vunpack.c.l.b16 %v3844
    %v3973 = vunpack.c.l.b16 %v3845
    %v3974 = vunpack.c.l.b16 %v3846
    %v3975 = vunpack.c.l.b16 %v3847
    %v3976 = vunpack.c.l.b16 %v3848
    %v3977 = vunpack.c.l.b16 %v3849
    %v3978 = vunpack.c.l.b16 %v3850
    %v3979 = vunpack.c.l.b16 %v3851
    %v3980 = vunpack.c.l.b16 %v3852
    %v3981 = vunpack.c.l.b16 %v3853
    %v3982 = vunpack.c.l.b16 %v3854
    %v3983 = vunpack.c.l.b16 %v3855
    %v3984 = vunpack.c.l.b16 %v3856
    %v3985 = vunpack.c.l.b16 %v3857
    %v3986 = vunpack.c.l.b16 %v3858
    %v3987 = vpack.c.b16 %v3972, %v3971
    %v3988 = vpack.c.b16 %v3974, %v3973
    %v3989 = vpack.c.b16 %v3976, %v3975
    %v3990 = vpack.c.b16 %v3978, %v3977
    %v3991 = vpack.c.b16 %v3980, %v3979
    %v3992 = vpack.c.b16 %v3982, %v3981
    %v3993 = vpack.c.b16 %v3984, %v3983
    %v3994 = vpack.c.b16 %v3986, %v3985
    %v4011 = vunpack.c.l.b16 %v3875
    %v4012 = vunpack.c.l.b16 %v3876
    %v4013 = vunpack.c.l.b16 %v3877
    %v4014 = vunpack.c.l.b16 %v3878
    %v4015 = vunpack.c.l.b16 %v3879
    %v4016 = vunpack.c.l.b16 %v3880
    %v4017 = vunpack.c.l.b16 %v3881
    %v4018 = vunpack.c.l.b16 %v3882
    %v4019 = vunpack.c.l.b16 %v3883
    %v4020 = vunpack.c.l.b16 %v3884
    %v4021 = vunpack.c.l.b16 %v3885
    %v4022 = vunpack.c.l.b16 %v3886
    %v4023 = vunpack.c.l.b16 %v3887
    %v4024 = vunpack.c.l.b16 %v3888
    %v4025 = vunpack.c.l.b16 %v3889
    %v4026 = vunpack.c.l.b16 %v3890
    %v4027 = vpack.c.b16 %v4012, %v4011
    %v4028 = vpack.c.b16 %v4014, %v4013
    %v4029 = vpack.c.b16 %v4016, %v4015
    %v4030 = vpack.c.b16 %v4018, %v4017
    %v4031 = vpack.c.b16 %v4020, %v4019
    %v4032 = vpack.c.b16 %v4022, %v4021
    %v4033 = vpack.c.b16 %v4024, %v4023
    %v4034 = vpack.c.b16 %v4026, %v4025
    %v4051 = vunpack.c.l.b16 %v3907
    %v4052 = vunpack.c.l.b16 %v3908
    %v4053 = vunpack.c.l.b16 %v3909
    %v4054 = vunpack.c.l.b16 %v3910
    %v4055 = vunpack.c.l.b16 %v3911
    %v4056 = vunpack.c.l.b16 %v3912
    %v4057 = vunpack.c.l.b16 %v3913
    %v4058 = vunpack.c.l.b16 %v3914
    %v4059 = vunpack.c.l.b16 %v3915
    %v4060 = vunpack.c.l.b16 %v3916
    %v4061 = vunpack.c.l.b16 %v3917
    %v4062 = vunpack.c.l.b16 %v3918
    %v4063 = vunpack.c.l.b16 %v3919
    %v4064 = vunpack.c.l.b16 %v3920
    %v4065 = vunpack.c.l.b16 %v3921
    %v4066 = vunpack.c.l.b16 %v3922
    %v4067 = vpack.c.b16 %v4052, %v4051
    %v4068 = vpack.c.b16 %v4054, %v4053
    %v4069 = vpack.c.b16 %v4056, %v4055
    %v4070 = vpack.c.b16 %v4058, %v4057
    %v4071 = vpack.c.b16 %v4060, %v4059
    %v4072 = vpack.c.b16 %v4062, %v4061
    %v4073 = vpack.c.b16 %v4064, %v4063
    %v4074 = vpack.c.b16 %v4066, %v4065
    %v4091 = vunpack.c.l.b16 %v3939
    %v4092 = vunpack.c.l.b16 %v3940
    %v4093 = vunpack.c.l.b16 %v3941
    %v4094 = vunpack.c.l.b16 %v3942
    %v4095 = vunpack.c.l.b16 %v3943
    %v4096 = vunpack.c.l.b16 %v3944
    %v4097 = vunpack.c.l.b16 %v3945
    %v4098 = vunpack.c.l.b16 %v3946
    %v4099 = vunpack.c.l.b16 %v3947
    %v4100 = vunpack.c.l.b16 %v3948
    %v4101 = vunpack.c.l.b16 %v3949
    %v4102 = vunpack.c.l.b16 %v3950
    %v4103 = vunpack.c.l.b16 %v3951
    %v4104 = vunpack.c.l.b16 %v3952
    %v4105 = vunpack.c.l.b16 %v3953
    %v4106 = vunpack.c.l.b16 %v3954
    %v4107 = vpack.c.b16 %v4092, %v4091
    %v4108 = vpack.c.b16 %v4094, %v4093
    %v4109 = vpack.c.b16 %v4096, %v4095
    %v4110 = vpack.c.b16 %v4098, %v4097
    %v4111 = vpack.c.b16 %v4100, %v4099
    %v4112 = vpack.c.b16 %v4102, %v4101
    %v4113 = vpack.c.b16 %v4104, %v4103
    %v4114 = vpack.c.b16 %v4106, %v4105
    %v4123 = vunpack.c.l.b16 %v3795
    %v4124 = vunpack.c.l.b16 %v3796
    %v4125 = vunpack.c.l.b16 %v3797
    %v4126 = vunpack.c.l.b16 %v3798
    %v4127 = vunpack.c.l.b16 %v3799
    %v4128 = vunpack.c.l.b16 %v3800
    %v4129 = vunpack.c.l.b16 %v3801
    %v4130 = vunpack.c.l.b16 %v3802
    %v4131 = vpack.c.b16 %v4124, %v4123
    %v4132 = vpack.c.b16 %v4126, %v4125
    %v4133 = vpack.c.b16 %v4128, %v4127
    %v4134 = vpack.c.b16 %v4130, %v4129
    %4135 = vrot.lane.b32.xlu0 %v4131, 96
    %v4136 = vpop.permute.xlu0 %4135
    %4137 = vrot.lane.b32.xlu0 %v4132, 96
    %v4138 = vpop.permute.xlu0 %4137
    %4139 = vrot.lane.b32.xlu0 %v4133, 96
    %v4140 = vpop.permute.xlu0 %4139
    %4141 = vrot.lane.b32.xlu0 %v4134, 96
    %v4142 = vpop.permute.xlu0 %4141
    %v4144 = vsel %vm243, %v3987, 0
    %v4147 = vsel %vm243, %v3988, 0
    %v4150 = vsel %vm243, %v3989, 0
    %v4153 = vsel %vm243, %v3990, 0
    %v4156 = vsel %vm243, %v4027, 0
    %v4159 = vsel %vm243, %v4028, 0
    %v4162 = vsel %vm243, %v4029, 0
    %v4165 = vsel %vm243, %v4030, 0
    %v4168 = vsel %vm243, %v4067, 0
    %v4171 = vsel %vm243, %v4068, 0
    %v4174 = vsel %vm243, %v4069, 0
    %v4177 = vsel %vm243, %v4070, 0
    %v4180 = vsel %vm243, %v4107, 0
    %v4183 = vsel %vm243, %v4108, 0
    %v4186 = vsel %vm243, %v4109, 0
    %v4189 = vsel %vm243, %v4110, 0
    %v4192 = vsel %vm243, %v4136, 0
    %v4195 = vsel %vm243, %v4138, 0
    %v4198 = vsel %vm243, %v4140, 0
    %v4201 = vsel %vm243, %v4142, 0
    %4203 = vmatpush.bf16.xpose.msra.mxu0 0
    %4204 = vmatpush.bf16.xpose.msra.mxu0 0
    %4205 = vmatpush.bf16.xpose.msra.mxu0 0
    %4206 = vmatpush.bf16.xpose.msra.mxu0 0
    %4207 = vmatpush.bf16.xpose.msra.mxu0 %v4201
    %4208 = vmatpush.bf16.xpose.msra.mxu0 %v4198
    %4209 = vmatpush.bf16.xpose.msra.mxu0 %v4195
    %4210 = vmatpush.bf16.xpose.msra.mxu0 %v4192
    %4211 = vmatmul.bf16.gmra.mxu0 %v4144
    %v4212 = vpop.f32.mrf.mxu0
    %v4213 = vadd.f32 0.0, %v4212
    %v4214 = vpop.f32.mrf.mxu0
    %v4215 = vadd.f32 0.0, %v4214
    %4216 = vmatmul.bf16.gmra.mxu0 %v4147
    %v4217 = vpop.f32.mrf.mxu0
    %v4218 = vadd.f32 0.0, %v4217
    %v4219 = vpop.f32.mrf.mxu0
    %v4220 = vadd.f32 0.0, %v4219
    %4221 = vmatmul.bf16.gmra.mxu0 %v4150
    %v4222 = vpop.f32.mrf.mxu0
    %v4223 = vadd.f32 0.0, %v4222
    %v4224 = vpop.f32.mrf.mxu0
    %v4225 = vadd.f32 0.0, %v4224
    %4226 = vmatmul.bf16.gmra.mxu0 %v4153
    %v4227 = vpop.f32.mrf.mxu0
    %v4228 = vadd.f32 0.0, %v4227
    %v4229 = vpop.f32.mrf.mxu0
    %v4230 = vadd.f32 0.0, %v4229
    %4231 = vmatmul.bf16.gmra.mxu0 %v4156
    %v4232 = vpop.f32.mrf.mxu0
    %v4233 = vadd.f32 0.0, %v4232
    %v4234 = vpop.f32.mrf.mxu0
    %v4235 = vadd.f32 0.0, %v4234
    %4236 = vmatmul.bf16.gmra.mxu0 %v4159
    %v4237 = vpop.f32.mrf.mxu0
    %v4238 = vadd.f32 0.0, %v4237
    %v4239 = vpop.f32.mrf.mxu0
    %v4240 = vadd.f32 0.0, %v4239
    %4241 = vmatmul.bf16.gmra.mxu0 %v4162
    %v4242 = vpop.f32.mrf.mxu0
    %v4243 = vadd.f32 0.0, %v4242
    %v4244 = vpop.f32.mrf.mxu0
    %v4245 = vadd.f32 0.0, %v4244
    %4246 = vmatmul.bf16.gmra.mxu0 %v4165
    %v4247 = vpop.f32.mrf.mxu0
    %v4248 = vadd.f32 0.0, %v4247
    %v4249 = vpop.f32.mrf.mxu0
    %v4250 = vadd.f32 0.0, %v4249
    %4251 = vmatmul.bf16.gmra.mxu0 %v4168
    %v4252 = vpop.f32.mrf.mxu0
    %v4253 = vadd.f32 0.0, %v4252
    %v4254 = vpop.f32.mrf.mxu0
    %v4255 = vadd.f32 0.0, %v4254
    %4256 = vmatmul.bf16.gmra.mxu0 %v4171
    %v4257 = vpop.f32.mrf.mxu0
    %v4258 = vadd.f32 0.0, %v4257
    %v4259 = vpop.f32.mrf.mxu0
    %v4260 = vadd.f32 0.0, %v4259
    %4261 = vmatmul.bf16.gmra.mxu0 %v4174
    %v4262 = vpop.f32.mrf.mxu0
    %v4263 = vadd.f32 0.0, %v4262
    %v4264 = vpop.f32.mrf.mxu0
    %v4265 = vadd.f32 0.0, %v4264
    %4266 = vmatmul.bf16.gmra.mxu0 %v4177
    %v4267 = vpop.f32.mrf.mxu0
    %v4268 = vadd.f32 0.0, %v4267
    %v4269 = vpop.f32.mrf.mxu0
    %v4270 = vadd.f32 0.0, %v4269
    %4271 = vmatmul.bf16.gmra.mxu0 %v4180
    %v4272 = vpop.f32.mrf.mxu0
    %v4273 = vadd.f32 0.0, %v4272
    %v4274 = vpop.f32.mrf.mxu0
    %v4275 = vadd.f32 0.0, %v4274
    %4276 = vmatmul.bf16.gmra.mxu0 %v4183
    %v4277 = vpop.f32.mrf.mxu0
    %v4278 = vadd.f32 0.0, %v4277
    %v4279 = vpop.f32.mrf.mxu0
    %v4280 = vadd.f32 0.0, %v4279
    %4281 = vmatmul.bf16.gmra.mxu0 %v4186
    %v4282 = vpop.f32.mrf.mxu0
    %v4283 = vadd.f32 0.0, %v4282
    %v4284 = vpop.f32.mrf.mxu0
    %v4285 = vadd.f32 0.0, %v4284
    %4286 = vmatmul.bf16.gmra.mxu0 %v4189
    %v4287 = vpop.f32.mrf.mxu0
    %v4288 = vadd.f32 0.0, %v4287
    %v4289 = vpop.f32.mrf.mxu0
    %v4290 = vadd.f32 0.0, %v4289
    %4291 = vdwg.mxu0
    %v4300 = vunpack.c.l.b16 %v3803
    %v4301 = vunpack.c.l.b16 %v3804
    %v4302 = vunpack.c.l.b16 %v3805
    %v4303 = vunpack.c.l.b16 %v3806
    %v4304 = vunpack.c.l.b16 %v3807
    %v4305 = vunpack.c.l.b16 %v3808
    %v4306 = vunpack.c.l.b16 %v3809
    %v4307 = vunpack.c.l.b16 %v3810
    %v4308 = vpack.c.b16 %v4301, %v4300
    %v4309 = vpack.c.b16 %v4303, %v4302
    %v4310 = vpack.c.b16 %v4305, %v4304
    %v4311 = vpack.c.b16 %v4307, %v4306
    %4312 = vrot.lane.b32.xlu0 %v4308, 96
    %v4313 = vpop.permute.xlu0 %4312
    %4314 = vrot.lane.b32.xlu0 %v4309, 96
    %v4315 = vpop.permute.xlu0 %4314
    %4316 = vrot.lane.b32.xlu0 %v4310, 96
    %v4317 = vpop.permute.xlu0 %4316
    %4318 = vrot.lane.b32.xlu0 %v4311, 96
    %v4319 = vpop.permute.xlu0 %4318
    %v4321 = vsel %vm243, %v3991, 0
    %v4324 = vsel %vm243, %v3992, 0
    %v4327 = vsel %vm243, %v3993, 0
    %v4330 = vsel %vm243, %v3994, 0
    %v4333 = vsel %vm243, %v4031, 0
    %v4336 = vsel %vm243, %v4032, 0
    %v4339 = vsel %vm243, %v4033, 0
    %v4342 = vsel %vm243, %v4034, 0
    %v4345 = vsel %vm243, %v4071, 0
    %v4348 = vsel %vm243, %v4072, 0
    %v4351 = vsel %vm243, %v4073, 0
    %v4354 = vsel %vm243, %v4074, 0
    %v4357 = vsel %vm243, %v4111, 0
    %v4360 = vsel %vm243, %v4112, 0
    %v4363 = vsel %vm243, %v4113, 0
    %v4366 = vsel %vm243, %v4114, 0
    %v4369 = vsel %vm243, %v4313, 0
    %v4372 = vsel %vm243, %v4315, 0
    %v4375 = vsel %vm243, %v4317, 0
    %v4378 = vsel %vm243, %v4319, 0
    %4380 = vmatpush.bf16.xpose.msra.mxu0 0
    %4381 = vmatpush.bf16.xpose.msra.mxu0 0
    %4382 = vmatpush.bf16.xpose.msra.mxu0 0
    %4383 = vmatpush.bf16.xpose.msra.mxu0 0
    %4384 = vmatpush.bf16.xpose.msra.mxu0 %v4378
    %4385 = vmatpush.bf16.xpose.msra.mxu0 %v4375
    %4386 = vmatpush.bf16.xpose.msra.mxu0 %v4372
    %4387 = vmatpush.bf16.xpose.msra.mxu0 %v4369
    %4388 = vmatmul.bf16.gmra.mxu0 %v4321
    %v4389 = vpop.f32.mrf.mxu0
    %v4390 = vadd.f32 0.0, %v4389
    %v4391 = vpop.f32.mrf.mxu0
    %v4392 = vadd.f32 0.0, %v4391
    %4393 = vmatmul.bf16.gmra.mxu0 %v4324
    %v4394 = vpop.f32.mrf.mxu0
    %v4395 = vadd.f32 0.0, %v4394
    %v4396 = vpop.f32.mrf.mxu0
    %v4397 = vadd.f32 0.0, %v4396
    %4398 = vmatmul.bf16.gmra.mxu0 %v4327
    %v4399 = vpop.f32.mrf.mxu0
    %v4400 = vadd.f32 0.0, %v4399
    %v4401 = vpop.f32.mrf.mxu0
    %v4402 = vadd.f32 0.0, %v4401
    %4403 = vmatmul.bf16.gmra.mxu0 %v4330
    %v4404 = vpop.f32.mrf.mxu0
    %v4405 = vadd.f32 0.0, %v4404
    %v4406 = vpop.f32.mrf.mxu0
    %v4407 = vadd.f32 0.0, %v4406
    %4408 = vmatmul.bf16.gmra.mxu0 %v4333
    %v4409 = vpop.f32.mrf.mxu0
    %v4410 = vadd.f32 0.0, %v4409
    %v4411 = vpop.f32.mrf.mxu0
    %v4412 = vadd.f32 0.0, %v4411
    %4413 = vmatmul.bf16.gmra.mxu0 %v4336
    %v4414 = vpop.f32.mrf.mxu0
    %v4415 = vadd.f32 0.0, %v4414
    %v4416 = vpop.f32.mrf.mxu0
    %v4417 = vadd.f32 0.0, %v4416
    %4418 = vmatmul.bf16.gmra.mxu0 %v4339
    %v4419 = vpop.f32.mrf.mxu0
    %v4420 = vadd.f32 0.0, %v4419
    %v4421 = vpop.f32.mrf.mxu0
    %v4422 = vadd.f32 0.0, %v4421
    %4423 = vmatmul.bf16.gmra.mxu0 %v4342
    %v4424 = vpop.f32.mrf.mxu0
    %v4425 = vadd.f32 0.0, %v4424
    %v4426 = vpop.f32.mrf.mxu0
    %v4427 = vadd.f32 0.0, %v4426
    %4428 = vmatmul.bf16.gmra.mxu0 %v4345
    %v4429 = vpop.f32.mrf.mxu0
    %v4430 = vadd.f32 0.0, %v4429
    %v4431 = vpop.f32.mrf.mxu0
    %v4432 = vadd.f32 0.0, %v4431
    %4433 = vmatmul.bf16.gmra.mxu0 %v4348
    %v4434 = vpop.f32.mrf.mxu0
    %v4435 = vadd.f32 0.0, %v4434
    %v4436 = vpop.f32.mrf.mxu0
    %v4437 = vadd.f32 0.0, %v4436
    %4438 = vmatmul.bf16.gmra.mxu0 %v4351
    %v4439 = vpop.f32.mrf.mxu0
    %v4440 = vadd.f32 0.0, %v4439
    %v4441 = vpop.f32.mrf.mxu0
    %v4442 = vadd.f32 0.0, %v4441
    %4443 = vmatmul.bf16.gmra.mxu0 %v4354
    %v4444 = vpop.f32.mrf.mxu0
    %v4445 = vadd.f32 0.0, %v4444
    %v4446 = vpop.f32.mrf.mxu0
    %v4447 = vadd.f32 0.0, %v4446
    %4448 = vmatmul.bf16.gmra.mxu0 %v4357
    %v4449 = vpop.f32.mrf.mxu0
    %v4450 = vadd.f32 0.0, %v4449
    %v4451 = vpop.f32.mrf.mxu0
    %v4452 = vadd.f32 0.0, %v4451
    %4453 = vmatmul.bf16.gmra.mxu0 %v4360
    %v4454 = vpop.f32.mrf.mxu0
    %v4455 = vadd.f32 0.0, %v4454
    %v4456 = vpop.f32.mrf.mxu0
    %v4457 = vadd.f32 0.0, %v4456
    %4458 = vmatmul.bf16.gmra.mxu0 %v4363
    %v4459 = vpop.f32.mrf.mxu0
    %v4460 = vadd.f32 0.0, %v4459
    %v4461 = vpop.f32.mrf.mxu0
    %v4462 = vadd.f32 0.0, %v4461
    %4463 = vmatmul.bf16.gmra.mxu0 %v4366
    %v4464 = vpop.f32.mrf.mxu0
    %v4465 = vadd.f32 0.0, %v4464
    %v4466 = vpop.f32.mrf.mxu0
    %v4467 = vadd.f32 0.0, %v4466
    %4468 = vdwg.mxu0
    %v4469 = vsel %vm1027, %v4213, -inf
    %4470 = vmax.xlane.f32.xlu0 %v4469
    %v4471 = vpop.xlane.xlu0 %4470
    %v4472 = vsel %vm1027, %v4215, -inf
    %4473 = vmax.xlane.f32.xlu0 %v4472
    %v4474 = vpop.xlane.xlu0 %4473
    %v4475 = vsel %vm1027, %v4218, -inf
    %4476 = vmax.xlane.f32.xlu0 %v4475
    %v4477 = vpop.xlane.xlu0 %4476
    %v4478 = vsel %vm1027, %v4220, -inf
    %4479 = vmax.xlane.f32.xlu0 %v4478
    %v4480 = vpop.xlane.xlu0 %4479
    %v4481 = vsel %vm1027, %v4223, -inf
    %4482 = vmax.xlane.f32.xlu0 %v4481
    %v4483 = vpop.xlane.xlu0 %4482
    %v4484 = vsel %vm1027, %v4225, -inf
    %4485 = vmax.xlane.f32.xlu0 %v4484
    %v4486 = vpop.xlane.xlu0 %4485
    %v4487 = vsel %vm1027, %v4228, -inf
    %4488 = vmax.xlane.f32.xlu0 %v4487
    %v4489 = vpop.xlane.xlu0 %4488
    %v4490 = vsel %vm1027, %v4230, -inf
    %4491 = vmax.xlane.f32.xlu0 %v4490
    %v4492 = vpop.xlane.xlu0 %4491
    %v4493 = vsel %vm1027, %v4233, -inf
    %4494 = vmax.xlane.f32.xlu0 %v4493
    %v4495 = vpop.xlane.xlu0 %4494
    %v4496 = vsel %vm1027, %v4235, -inf
    %4497 = vmax.xlane.f32.xlu0 %v4496
    %v4498 = vpop.xlane.xlu0 %4497
    %v4499 = vsel %vm1027, %v4238, -inf
    %4500 = vmax.xlane.f32.xlu0 %v4499
    %v4501 = vpop.xlane.xlu0 %4500
    %v4502 = vsel %vm1027, %v4240, -inf
    %4503 = vmax.xlane.f32.xlu0 %v4502
    %v4504 = vpop.xlane.xlu0 %4503
    %v4505 = vsel %vm1027, %v4243, -inf
    %4506 = vmax.xlane.f32.xlu0 %v4505
    %v4507 = vpop.xlane.xlu0 %4506
    %v4508 = vsel %vm1027, %v4245, -inf
    %4509 = vmax.xlane.f32.xlu0 %v4508
    %v4510 = vpop.xlane.xlu0 %4509
    %v4511 = vsel %vm1027, %v4248, -inf
    %4512 = vmax.xlane.f32.xlu0 %v4511
    %v4513 = vpop.xlane.xlu0 %4512
    %v4514 = vsel %vm1027, %v4250, -inf
    %4515 = vmax.xlane.f32.xlu0 %v4514
    %v4516 = vpop.xlane.xlu0 %4515
    %v4517 = vsel %vm1027, %v4253, -inf
    %4518 = vmax.xlane.f32.xlu0 %v4517
    %v4519 = vpop.xlane.xlu0 %4518
    %v4520 = vsel %vm1027, %v4255, -inf
    %4521 = vmax.xlane.f32.xlu0 %v4520
    %v4522 = vpop.xlane.xlu0 %4521
    %v4523 = vsel %vm1027, %v4258, -inf
    %4524 = vmax.xlane.f32.xlu0 %v4523
    %v4525 = vpop.xlane.xlu0 %4524
    %v4526 = vsel %vm1027, %v4260, -inf
    %4527 = vmax.xlane.f32.xlu0 %v4526
    %v4528 = vpop.xlane.xlu0 %4527
    %v4529 = vsel %vm1027, %v4263, -inf
    %4530 = vmax.xlane.f32.xlu0 %v4529
    %v4531 = vpop.xlane.xlu0 %4530
    %v4532 = vsel %vm1027, %v4265, -inf
    %4533 = vmax.xlane.f32.xlu0 %v4532
    %v4534 = vpop.xlane.xlu0 %4533
    %v4535 = vsel %vm1027, %v4268, -inf
    %4536 = vmax.xlane.f32.xlu0 %v4535
    %v4537 = vpop.xlane.xlu0 %4536
    %v4538 = vsel %vm1027, %v4270, -inf
    %4539 = vmax.xlane.f32.xlu0 %v4538
    %v4540 = vpop.xlane.xlu0 %4539
    %v4541 = vsel %vm1027, %v4273, -inf
    %4542 = vmax.xlane.f32.xlu0 %v4541
    %v4543 = vpop.xlane.xlu0 %4542
    %v4544 = vsel %vm1027, %v4275, -inf
    %4545 = vmax.xlane.f32.xlu0 %v4544
    %v4546 = vpop.xlane.xlu0 %4545
    %v4547 = vsel %vm1027, %v4278, -inf
    %4548 = vmax.xlane.f32.xlu0 %v4547
    %v4549 = vpop.xlane.xlu0 %4548
    %v4550 = vsel %vm1027, %v4280, -inf
    %4551 = vmax.xlane.f32.xlu0 %v4550
    %v4552 = vpop.xlane.xlu0 %4551
    %v4553 = vsel %vm1027, %v4283, -inf
    %4554 = vmax.xlane.f32.xlu0 %v4553
    %v4555 = vpop.xlane.xlu0 %4554
    %v4556 = vsel %vm1027, %v4285, -inf
    %4557 = vmax.xlane.f32.xlu0 %v4556
    %v4558 = vpop.xlane.xlu0 %4557
    %v4559 = vsel %vm1027, %v4288, -inf
    %4560 = vmax.xlane.f32.xlu0 %v4559
    %v4561 = vpop.xlane.xlu0 %4560
    %v4562 = vsel %vm1027, %v4290, -inf
    %4563 = vmax.xlane.f32.xlu0 %v4562
    %v4564 = vpop.xlane.xlu0 %4563
    %v4565 = vsel %vm1027, %v4390, -inf
    %4566 = vmax.xlane.f32.xlu0 %v4565
    %v4567 = vpop.xlane.xlu0 %4566
    %v4568 = vsel %vm1027, %v4392, -inf
    %4569 = vmax.xlane.f32.xlu0 %v4568
    %v4570 = vpop.xlane.xlu0 %4569
    %v4571 = vsel %vm1027, %v4395, -inf
    %4572 = vmax.xlane.f32.xlu0 %v4571
    %v4573 = vpop.xlane.xlu0 %4572
    %v4574 = vsel %vm1027, %v4397, -inf
    %4575 = vmax.xlane.f32.xlu0 %v4574
    %v4576 = vpop.xlane.xlu0 %4575
    %v4577 = vsel %vm1027, %v4400, -inf
    %4578 = vmax.xlane.f32.xlu0 %v4577
    %v4579 = vpop.xlane.xlu0 %4578
    %v4580 = vsel %vm1027, %v4402, -inf
    %4581 = vmax.xlane.f32.xlu0 %v4580
    %v4582 = vpop.xlane.xlu0 %4581
    %v4583 = vsel %vm1027, %v4405, -inf
    %4584 = vmax.xlane.f32.xlu0 %v4583
    %v4585 = vpop.xlane.xlu0 %4584
    %v4586 = vsel %vm1027, %v4407, -inf
    %4587 = vmax.xlane.f32.xlu0 %v4586
    %v4588 = vpop.xlane.xlu0 %4587
    %v4589 = vsel %vm1027, %v4410, -inf
    %4590 = vmax.xlane.f32.xlu0 %v4589
    %v4591 = vpop.xlane.xlu0 %4590
    %v4592 = vsel %vm1027, %v4412, -inf
    %4593 = vmax.xlane.f32.xlu0 %v4592
    %v4594 = vpop.xlane.xlu0 %4593
    %v4595 = vsel %vm1027, %v4415, -inf
    %4596 = vmax.xlane.f32.xlu0 %v4595
    %v4597 = vpop.xlane.xlu0 %4596
    %v4598 = vsel %vm1027, %v4417, -inf
    %4599 = vmax.xlane.f32.xlu0 %v4598
    %v4600 = vpop.xlane.xlu0 %4599
    %v4601 = vsel %vm1027, %v4420, -inf
    %4602 = vmax.xlane.f32.xlu0 %v4601
    %v4603 = vpop.xlane.xlu0 %4602
    %v4604 = vsel %vm1027, %v4422, -inf
    %4605 = vmax.xlane.f32.xlu0 %v4604
    %v4606 = vpop.xlane.xlu0 %4605
    %v4607 = vsel %vm1027, %v4425, -inf
    %4608 = vmax.xlane.f32.xlu0 %v4607
    %v4609 = vpop.xlane.xlu0 %4608
    %v4610 = vsel %vm1027, %v4427, -inf
    %4611 = vmax.xlane.f32.xlu0 %v4610
    %v4612 = vpop.xlane.xlu0 %4611
    %v4613 = vsel %vm1027, %v4430, -inf
    %4614 = vmax.xlane.f32.xlu0 %v4613
    %v4615 = vpop.xlane.xlu0 %4614
    %v4616 = vsel %vm1027, %v4432, -inf
    %4617 = vmax.xlane.f32.xlu0 %v4616
    %v4618 = vpop.xlane.xlu0 %4617
    %v4619 = vsel %vm1027, %v4435, -inf
    %4620 = vmax.xlane.f32.xlu0 %v4619
    %v4621 = vpop.xlane.xlu0 %4620
    %v4622 = vsel %vm1027, %v4437, -inf
    %4623 = vmax.xlane.f32.xlu0 %v4622
    %v4624 = vpop.xlane.xlu0 %4623
    %v4625 = vsel %vm1027, %v4440, -inf
    %4626 = vmax.xlane.f32.xlu0 %v4625
    %v4627 = vpop.xlane.xlu0 %4626
    %v4628 = vsel %vm1027, %v4442, -inf
    %4629 = vmax.xlane.f32.xlu0 %v4628
    %v4630 = vpop.xlane.xlu0 %4629
    %v4631 = vsel %vm1027, %v4445, -inf
    %4632 = vmax.xlane.f32.xlu0 %v4631
    %v4633 = vpop.xlane.xlu0 %4632
    %v4634 = vsel %vm1027, %v4447, -inf
    %4635 = vmax.xlane.f32.xlu0 %v4634
    %v4636 = vpop.xlane.xlu0 %4635
    %v4637 = vsel %vm1027, %v4450, -inf
    %4638 = vmax.xlane.f32.xlu0 %v4637
    %v4639 = vpop.xlane.xlu0 %4638
    %v4640 = vsel %vm1027, %v4452, -inf
    %4641 = vmax.xlane.f32.xlu0 %v4640
    %v4642 = vpop.xlane.xlu0 %4641
    %v4643 = vsel %vm1027, %v4455, -inf
    %4644 = vmax.xlane.f32.xlu0 %v4643
    %v4645 = vpop.xlane.xlu0 %4644
    %v4646 = vsel %vm1027, %v4457, -inf
    %4647 = vmax.xlane.f32.xlu0 %v4646
    %v4648 = vpop.xlane.xlu0 %4647
    %v4649 = vsel %vm1027, %v4460, -inf
    %4650 = vmax.xlane.f32.xlu0 %v4649
    %v4651 = vpop.xlane.xlu0 %4650
    %v4652 = vsel %vm1027, %v4462, -inf
    %4653 = vmax.xlane.f32.xlu0 %v4652
    %v4654 = vpop.xlane.xlu0 %4653
    %v4655 = vsel %vm1027, %v4465, -inf
    %4656 = vmax.xlane.f32.xlu0 %v4655
    %v4657 = vpop.xlane.xlu0 %4656
    %v4658 = vsel %vm1027, %v4467, -inf
    %4659 = vmax.xlane.f32.xlu0 %v4658
    %v4660 = vpop.xlane.xlu0 %4659
    %v4661 = vsub.f32 %v4213, %v4471
    %v4662 = vsub.f32 %v4215, %v4474
    %v4663 = vsub.f32 %v4218, %v4477
    %v4664 = vsub.f32 %v4220, %v4480
    %v4665 = vsub.f32 %v4223, %v4483
    %v4666 = vsub.f32 %v4225, %v4486
    %v4667 = vsub.f32 %v4228, %v4489
    %v4668 = vsub.f32 %v4230, %v4492
    %v4669 = vsub.f32 %v4233, %v4495
    %v4670 = vsub.f32 %v4235, %v4498
    %v4671 = vsub.f32 %v4238, %v4501
    %v4672 = vsub.f32 %v4240, %v4504
    %v4673 = vsub.f32 %v4243, %v4507
    %v4674 = vsub.f32 %v4245, %v4510
    %v4675 = vsub.f32 %v4248, %v4513
    %v4676 = vsub.f32 %v4250, %v4516
    %v4677 = vsub.f32 %v4253, %v4519
    %v4678 = vsub.f32 %v4255, %v4522
    %v4679 = vsub.f32 %v4258, %v4525
    %v4680 = vsub.f32 %v4260, %v4528
    %v4681 = vsub.f32 %v4263, %v4531
    %v4682 = vsub.f32 %v4265, %v4534
    %v4683 = vsub.f32 %v4268, %v4537
    %v4684 = vsub.f32 %v4270, %v4540
    %v4685 = vsub.f32 %v4273, %v4543
    %v4686 = vsub.f32 %v4275, %v4546
    %v4687 = vsub.f32 %v4278, %v4549
    %v4688 = vsub.f32 %v4280, %v4552
    %v4689 = vsub.f32 %v4283, %v4555
    %v4690 = vsub.f32 %v4285, %v4558
    %v4691 = vsub.f32 %v4288, %v4561
    %v4692 = vsub.f32 %v4290, %v4564
    %v4693 = vsub.f32 %v4390, %v4567
    %v4694 = vsub.f32 %v4392, %v4570
    %v4695 = vsub.f32 %v4395, %v4573
    %v4696 = vsub.f32 %v4397, %v4576
    %v4697 = vsub.f32 %v4400, %v4579
    %v4698 = vsub.f32 %v4402, %v4582
    %v4699 = vsub.f32 %v4405, %v4585
    %v4700 = vsub.f32 %v4407, %v4588
    %v4701 = vsub.f32 %v4410, %v4591
    %v4702 = vsub.f32 %v4412, %v4594
    %v4703 = vsub.f32 %v4415, %v4597
    %v4704 = vsub.f32 %v4417, %v4600
    %v4705 = vsub.f32 %v4420, %v4603
    %v4706 = vsub.f32 %v4422, %v4606
    %v4707 = vsub.f32 %v4425, %v4609
    %v4708 = vsub.f32 %v4427, %v4612
    %v4709 = vsub.f32 %v4430, %v4615
    %v4710 = vsub.f32 %v4432, %v4618
    %v4711 = vsub.f32 %v4435, %v4621
    %v4712 = vsub.f32 %v4437, %v4624
    %v4713 = vsub.f32 %v4440, %v4627
    %v4714 = vsub.f32 %v4442, %v4630
    %v4715 = vsub.f32 %v4445, %v4633
    %v4716 = vsub.f32 %v4447, %v4636
    %v4717 = vsub.f32 %v4450, %v4639
    %v4718 = vsub.f32 %v4452, %v4642
    %v4719 = vsub.f32 %v4455, %v4645
    %v4720 = vsub.f32 %v4457, %v4648
    %v4721 = vsub.f32 %v4460, %v4651
    %v4722 = vsub.f32 %v4462, %v4654
    %v4723 = vsub.f32 %v4465, %v4657
    %v4724 = vsub.f32 %v4467, %v4660
    %v4725 = vmul.f32 %v4661, 1.442695
    %v4726 = vpow.pop %v4725
    %v4727 = vmul.f32 %v4662, 1.442695
    %v4728 = vpow.pop %v4727
    %v4729 = vmul.f32 %v4663, 1.442695
    %v4730 = vpow.pop %v4729
    %v4731 = vmul.f32 %v4664, 1.442695
    %v4732 = vpow.pop %v4731
    %v4733 = vmul.f32 %v4665, 1.442695
    %v4734 = vpow.pop %v4733
    %v4735 = vmul.f32 %v4666, 1.442695
    %v4736 = vpow.pop %v4735
    %v4737 = vmul.f32 %v4667, 1.442695
    %v4738 = vpow.pop %v4737
    %v4739 = vmul.f32 %v4668, 1.442695
    %v4740 = vpow.pop %v4739
    %v4741 = vmul.f32 %v4669, 1.442695
    %v4742 = vpow.pop %v4741
    %v4743 = vmul.f32 %v4670, 1.442695
    %v4744 = vpow.pop %v4743
    %v4745 = vmul.f32 %v4671, 1.442695
    %v4746 = vpow.pop %v4745
    %v4747 = vmul.f32 %v4672, 1.442695
    %v4748 = vpow.pop %v4747
    %v4749 = vmul.f32 %v4673, 1.442695
    %v4750 = vpow.pop %v4749
    %v4751 = vmul.f32 %v4674, 1.442695
    %v4752 = vpow.pop %v4751
    %v4753 = vmul.f32 %v4675, 1.442695
    %v4754 = vpow.pop %v4753
    %v4755 = vmul.f32 %v4676, 1.442695
    %v4756 = vpow.pop %v4755
    %v4757 = vmul.f32 %v4677, 1.442695
    %v4758 = vpow.pop %v4757
    %v4759 = vmul.f32 %v4678, 1.442695
    %v4760 = vpow.pop %v4759
    %v4761 = vmul.f32 %v4679, 1.442695
    %v4762 = vpow.pop %v4761
    %v4763 = vmul.f32 %v4680, 1.442695
    %v4764 = vpow.pop %v4763
    %v4765 = vmul.f32 %v4681, 1.442695
    %v4766 = vpow.pop %v4765
    %v4767 = vmul.f32 %v4682, 1.442695
    %v4768 = vpow.pop %v4767
    %v4769 = vmul.f32 %v4683, 1.442695
    %v4770 = vpow.pop %v4769
    %v4771 = vmul.f32 %v4684, 1.442695
    %v4772 = vpow.pop %v4771
    %v4773 = vmul.f32 %v4685, 1.442695
    %v4774 = vpow.pop %v4773
    %v4775 = vmul.f32 %v4686, 1.442695
    %v4776 = vpow.pop %v4775
    %v4777 = vmul.f32 %v4687, 1.442695
    %v4778 = vpow.pop %v4777
    %v4779 = vmul.f32 %v4688, 1.442695
    %v4780 = vpow.pop %v4779
    %v4781 = vmul.f32 %v4689, 1.442695
    %v4782 = vpow.pop %v4781
    %v4783 = vmul.f32 %v4690, 1.442695
    %v4784 = vpow.pop %v4783
    %v4785 = vmul.f32 %v4691, 1.442695
    %v4786 = vpow.pop %v4785
    %v4787 = vmul.f32 %v4692, 1.442695
    %v4788 = vpow.pop %v4787
    %v4789 = vmul.f32 %v4693, 1.442695
    %v4790 = vpow.pop %v4789
    %v4791 = vmul.f32 %v4694, 1.442695
    %v4792 = vpow.pop %v4791
    %v4793 = vmul.f32 %v4695, 1.442695
    %v4794 = vpow.pop %v4793
    %v4795 = vmul.f32 %v4696, 1.442695
    %v4796 = vpow.pop %v4795
    %v4797 = vmul.f32 %v4697, 1.442695
    %v4798 = vpow.pop %v4797
    %v4799 = vmul.f32 %v4698, 1.442695
    %v4800 = vpow.pop %v4799
    %v4801 = vmul.f32 %v4699, 1.442695
    %v4802 = vpow.pop %v4801
    %v4803 = vmul.f32 %v4700, 1.442695
    %v4804 = vpow.pop %v4803
    %v4805 = vmul.f32 %v4701, 1.442695
    %v4806 = vpow.pop %v4805
    %v4807 = vmul.f32 %v4702, 1.442695
    %v4808 = vpow.pop %v4807
    %v4809 = vmul.f32 %v4703, 1.442695
    %v4810 = vpow.pop %v4809
    %v4811 = vmul.f32 %v4704, 1.442695
    %v4812 = vpow.pop %v4811
    %v4813 = vmul.f32 %v4705, 1.442695
    %v4814 = vpow.pop %v4813
    %v4815 = vmul.f32 %v4706, 1.442695
    %v4816 = vpow.pop %v4815
    %v4817 = vmul.f32 %v4707, 1.442695
    %v4818 = vpow.pop %v4817
    %v4819 = vmul.f32 %v4708, 1.442695
    %v4820 = vpow.pop %v4819
    %v4821 = vmul.f32 %v4709, 1.442695
    %v4822 = vpow.pop %v4821
    %v4823 = vmul.f32 %v4710, 1.442695
    %v4824 = vpow.pop %v4823
    %v4825 = vmul.f32 %v4711, 1.442695
    %v4826 = vpow.pop %v4825
    %v4827 = vmul.f32 %v4712, 1.442695
    %v4828 = vpow.pop %v4827
    %v4829 = vmul.f32 %v4713, 1.442695
    %v4830 = vpow.pop %v4829
    %v4831 = vmul.f32 %v4714, 1.442695
    %v4832 = vpow.pop %v4831
    %v4833 = vmul.f32 %v4715, 1.442695
    %v4834 = vpow.pop %v4833
    %v4835 = vmul.f32 %v4716, 1.442695
    %v4836 = vpow.pop %v4835
    %v4837 = vmul.f32 %v4717, 1.442695
    %v4838 = vpow.pop %v4837
    %v4839 = vmul.f32 %v4718, 1.442695
    %v4840 = vpow.pop %v4839
    %v4841 = vmul.f32 %v4719, 1.442695
    %v4842 = vpow.pop %v4841
    %v4843 = vmul.f32 %v4720, 1.442695
    %v4844 = vpow.pop %v4843
    %v4845 = vmul.f32 %v4721, 1.442695
    %v4846 = vpow.pop %v4845
    %v4847 = vmul.f32 %v4722, 1.442695
    %v4848 = vpow.pop %v4847
    %v4849 = vmul.f32 %v4723, 1.442695
    %v4850 = vpow.pop %v4849
    %v4851 = vmul.f32 %v4724, 1.442695
    %v4852 = vpow.pop %v4851
    %v4853 = vsel %vm1027, %v4726, 0.0
    %4854 = vadd.xlane.f32.xlu0 %v4853
    %v4855 = vpop.xlane.xlu0 %4854
    %v4856 = vsel %vm1027, %v4728, 0.0
    %4857 = vadd.xlane.f32.xlu0 %v4856
    %v4858 = vpop.xlane.xlu0 %4857
    %v4859 = vsel %vm1027, %v4730, 0.0
    %4860 = vadd.xlane.f32.xlu0 %v4859
    %v4861 = vpop.xlane.xlu0 %4860
    %v4862 = vsel %vm1027, %v4732, 0.0
    %4863 = vadd.xlane.f32.xlu0 %v4862
    %v4864 = vpop.xlane.xlu0 %4863
    %v4865 = vsel %vm1027, %v4734, 0.0
    %4866 = vadd.xlane.f32.xlu0 %v4865
    %v4867 = vpop.xlane.xlu0 %4866
    %v4868 = vsel %vm1027, %v4736, 0.0
    %4869 = vadd.xlane.f32.xlu0 %v4868
    %v4870 = vpop.xlane.xlu0 %4869
    %v4871 = vsel %vm1027, %v4738, 0.0
    %4872 = vadd.xlane.f32.xlu0 %v4871
    %v4873 = vpop.xlane.xlu0 %4872
    %v4874 = vsel %vm1027, %v4740, 0.0
    %4875 = vadd.xlane.f32.xlu0 %v4874
    %v4876 = vpop.xlane.xlu0 %4875
    %v4877 = vsel %vm1027, %v4742, 0.0
    %4878 = vadd.xlane.f32.xlu0 %v4877
    %v4879 = vpop.xlane.xlu0 %4878
    %v4880 = vsel %vm1027, %v4744, 0.0
    %4881 = vadd.xlane.f32.xlu0 %v4880
    %v4882 = vpop.xlane.xlu0 %4881
    %v4883 = vsel %vm1027, %v4746, 0.0
    %4884 = vadd.xlane.f32.xlu0 %v4883
    %v4885 = vpop.xlane.xlu0 %4884
    %v4886 = vsel %vm1027, %v4748, 0.0
    %4887 = vadd.xlane.f32.xlu0 %v4886
    %v4888 = vpop.xlane.xlu0 %4887
    %v4889 = vsel %vm1027, %v4750, 0.0
    %4890 = vadd.xlane.f32.xlu0 %v4889
    %v4891 = vpop.xlane.xlu0 %4890
    %v4892 = vsel %vm1027, %v4752, 0.0
    %4893 = vadd.xlane.f32.xlu0 %v4892
    %v4894 = vpop.xlane.xlu0 %4893
    %v4895 = vsel %vm1027, %v4754, 0.0
    %4896 = vadd.xlane.f32.xlu0 %v4895
    %v4897 = vpop.xlane.xlu0 %4896
    %v4898 = vsel %vm1027, %v4756, 0.0
    %4899 = vadd.xlane.f32.xlu0 %v4898
    %v4900 = vpop.xlane.xlu0 %4899
    %v4901 = vsel %vm1027, %v4758, 0.0
    %4902 = vadd.xlane.f32.xlu0 %v4901
    %v4903 = vpop.xlane.xlu0 %4902
    %v4904 = vsel %vm1027, %v4760, 0.0
    %4905 = vadd.xlane.f32.xlu0 %v4904
    %v4906 = vpop.xlane.xlu0 %4905
    %v4907 = vsel %vm1027, %v4762, 0.0
    %4908 = vadd.xlane.f32.xlu0 %v4907
    %v4909 = vpop.xlane.xlu0 %4908
    %v4910 = vsel %vm1027, %v4764, 0.0
    %4911 = vadd.xlane.f32.xlu0 %v4910
    %v4912 = vpop.xlane.xlu0 %4911
    %v4913 = vsel %vm1027, %v4766, 0.0
    %4914 = vadd.xlane.f32.xlu0 %v4913
    %v4915 = vpop.xlane.xlu0 %4914
    %v4916 = vsel %vm1027, %v4768, 0.0
    %4917 = vadd.xlane.f32.xlu0 %v4916
    %v4918 = vpop.xlane.xlu0 %4917
    %v4919 = vsel %vm1027, %v4770, 0.0
    %4920 = vadd.xlane.f32.xlu0 %v4919
    %v4921 = vpop.xlane.xlu0 %4920
    %v4922 = vsel %vm1027, %v4772, 0.0
    %4923 = vadd.xlane.f32.xlu0 %v4922
    %v4924 = vpop.xlane.xlu0 %4923
    %v4925 = vsel %vm1027, %v4774, 0.0
    %4926 = vadd.xlane.f32.xlu0 %v4925
    %v4927 = vpop.xlane.xlu0 %4926
    %v4928 = vsel %vm1027, %v4776, 0.0
    %4929 = vadd.xlane.f32.xlu0 %v4928
    %v4930 = vpop.xlane.xlu0 %4929
    %v4931 = vsel %vm1027, %v4778, 0.0
    %4932 = vadd.xlane.f32.xlu0 %v4931
    %v4933 = vpop.xlane.xlu0 %4932
    %v4934 = vsel %vm1027, %v4780, 0.0
    %4935 = vadd.xlane.f32.xlu0 %v4934
    %v4936 = vpop.xlane.xlu0 %4935
    %v4937 = vsel %vm1027, %v4782, 0.0
    %4938 = vadd.xlane.f32.xlu0 %v4937
    %v4939 = vpop.xlane.xlu0 %4938
    %v4940 = vsel %vm1027, %v4784, 0.0
    %4941 = vadd.xlane.f32.xlu0 %v4940
    %v4942 = vpop.xlane.xlu0 %4941
    %v4943 = vsel %vm1027, %v4786, 0.0
    %4944 = vadd.xlane.f32.xlu0 %v4943
    %v4945 = vpop.xlane.xlu0 %4944
    %v4946 = vsel %vm1027, %v4788, 0.0
    %4947 = vadd.xlane.f32.xlu0 %v4946
    %v4948 = vpop.xlane.xlu0 %4947
    %v4949 = vsel %vm1027, %v4790, 0.0
    %4950 = vadd.xlane.f32.xlu0 %v4949
    %v4951 = vpop.xlane.xlu0 %4950
    %v4952 = vsel %vm1027, %v4792, 0.0
    %4953 = vadd.xlane.f32.xlu0 %v4952
    %v4954 = vpop.xlane.xlu0 %4953
    %v4955 = vsel %vm1027, %v4794, 0.0
    %4956 = vadd.xlane.f32.xlu0 %v4955
    %v4957 = vpop.xlane.xlu0 %4956
    %v4958 = vsel %vm1027, %v4796, 0.0
    %4959 = vadd.xlane.f32.xlu0 %v4958
    %v4960 = vpop.xlane.xlu0 %4959
    %v4961 = vsel %vm1027, %v4798, 0.0
    %4962 = vadd.xlane.f32.xlu0 %v4961
    %v4963 = vpop.xlane.xlu0 %4962
    %v4964 = vsel %vm1027, %v4800, 0.0
    %4965 = vadd.xlane.f32.xlu0 %v4964
    %v4966 = vpop.xlane.xlu0 %4965
    %v4967 = vsel %vm1027, %v4802, 0.0
    %4968 = vadd.xlane.f32.xlu0 %v4967
    %v4969 = vpop.xlane.xlu0 %4968
    %v4970 = vsel %vm1027, %v4804, 0.0
    %4971 = vadd.xlane.f32.xlu0 %v4970
    %v4972 = vpop.xlane.xlu0 %4971
    %v4973 = vsel %vm1027, %v4806, 0.0
    %4974 = vadd.xlane.f32.xlu0 %v4973
    %v4975 = vpop.xlane.xlu0 %4974
    %v4976 = vsel %vm1027, %v4808, 0.0
    %4977 = vadd.xlane.f32.xlu0 %v4976
    %v4978 = vpop.xlane.xlu0 %4977
    %v4979 = vsel %vm1027, %v4810, 0.0
    %4980 = vadd.xlane.f32.xlu0 %v4979
    %v4981 = vpop.xlane.xlu0 %4980
    %v4982 = vsel %vm1027, %v4812, 0.0
    %4983 = vadd.xlane.f32.xlu0 %v4982
    %v4984 = vpop.xlane.xlu0 %4983
    %v4985 = vsel %vm1027, %v4814, 0.0
    %4986 = vadd.xlane.f32.xlu0 %v4985
    %v4987 = vpop.xlane.xlu0 %4986
    %v4988 = vsel %vm1027, %v4816, 0.0
    %4989 = vadd.xlane.f32.xlu0 %v4988
    %v4990 = vpop.xlane.xlu0 %4989
    %v4991 = vsel %vm1027, %v4818, 0.0
    %4992 = vadd.xlane.f32.xlu0 %v4991
    %v4993 = vpop.xlane.xlu0 %4992
    %v4994 = vsel %vm1027, %v4820, 0.0
    %4995 = vadd.xlane.f32.xlu0 %v4994
    %v4996 = vpop.xlane.xlu0 %4995
    %v4997 = vsel %vm1027, %v4822, 0.0
    %4998 = vadd.xlane.f32.xlu0 %v4997
    %v4999 = vpop.xlane.xlu0 %4998
    %v5000 = vsel %vm1027, %v4824, 0.0
    %5001 = vadd.xlane.f32.xlu0 %v5000
    %v5002 = vpop.xlane.xlu0 %5001
    %v5003 = vsel %vm1027, %v4826, 0.0
    %5004 = vadd.xlane.f32.xlu0 %v5003
    %v5005 = vpop.xlane.xlu0 %5004
    %v5006 = vsel %vm1027, %v4828, 0.0
    %5007 = vadd.xlane.f32.xlu0 %v5006
    %v5008 = vpop.xlane.xlu0 %5007
    %v5009 = vsel %vm1027, %v4830, 0.0
    %5010 = vadd.xlane.f32.xlu0 %v5009
    %v5011 = vpop.xlane.xlu0 %5010
    %v5012 = vsel %vm1027, %v4832, 0.0
    %5013 = vadd.xlane.f32.xlu0 %v5012
    %v5014 = vpop.xlane.xlu0 %5013
    %v5015 = vsel %vm1027, %v4834, 0.0
    %5016 = vadd.xlane.f32.xlu0 %v5015
    %v5017 = vpop.xlane.xlu0 %5016
    %v5018 = vsel %vm1027, %v4836, 0.0
    %5019 = vadd.xlane.f32.xlu0 %v5018
    %v5020 = vpop.xlane.xlu0 %5019
    %v5021 = vsel %vm1027, %v4838, 0.0
    %5022 = vadd.xlane.f32.xlu0 %v5021
    %v5023 = vpop.xlane.xlu0 %5022
    %v5024 = vsel %vm1027, %v4840, 0.0
    %5025 = vadd.xlane.f32.xlu0 %v5024
    %v5026 = vpop.xlane.xlu0 %5025
    %v5027 = vsel %vm1027, %v4842, 0.0
    %5028 = vadd.xlane.f32.xlu0 %v5027
    %v5029 = vpop.xlane.xlu0 %5028
    %v5030 = vsel %vm1027, %v4844, 0.0
    %5031 = vadd.xlane.f32.xlu0 %v5030
    %v5032 = vpop.xlane.xlu0 %5031
    %v5033 = vsel %vm1027, %v4846, 0.0
    %5034 = vadd.xlane.f32.xlu0 %v5033
    %v5035 = vpop.xlane.xlu0 %5034
    %v5036 = vsel %vm1027, %v4848, 0.0
    %5037 = vadd.xlane.f32.xlu0 %v5036
    %v5038 = vpop.xlane.xlu0 %5037
    %v5039 = vsel %vm1027, %v4850, 0.0
    %5040 = vadd.xlane.f32.xlu0 %v5039
    %v5041 = vpop.xlane.xlu0 %5040
    %v5042 = vsel %vm1027, %v4852, 0.0
    %5043 = vadd.xlane.f32.xlu0 %v5042
    %v5044 = vpop.xlane.xlu0 %5043
    %v5045 = vrcp.pop %v4855
    %v5046 = vrcp.pop %v4858
    %v5047 = vrcp.pop %v4861
    %v5048 = vrcp.pop %v4864
    %v5049 = vrcp.pop %v4867
    %v5050 = vrcp.pop %v4870
    %v5051 = vrcp.pop %v4873
    %v5052 = vrcp.pop %v4876
    %v5053 = vrcp.pop %v4879
    %v5054 = vrcp.pop %v4882
    %v5055 = vrcp.pop %v4885
    %v5056 = vrcp.pop %v4888
    %v5057 = vrcp.pop %v4891
    %v5058 = vrcp.pop %v4894
    %v5059 = vrcp.pop %v4897
    %v5060 = vrcp.pop %v4900
    %v5061 = vrcp.pop %v4903
    %v5062 = vrcp.pop %v4906
    %v5063 = vrcp.pop %v4909
    %v5064 = vrcp.pop %v4912
    %v5065 = vrcp.pop %v4915
    %v5066 = vrcp.pop %v4918
    %v5067 = vrcp.pop %v4921
    %v5068 = vrcp.pop %v4924
    %v5069 = vrcp.pop %v4927
    %v5070 = vrcp.pop %v4930
    %v5071 = vrcp.pop %v4933
    %v5072 = vrcp.pop %v4936
    %v5073 = vrcp.pop %v4939
    %v5074 = vrcp.pop %v4942
    %v5075 = vrcp.pop %v4945
    %v5076 = vrcp.pop %v4948
    %v5077 = vrcp.pop %v4951
    %v5078 = vrcp.pop %v4954
    %v5079 = vrcp.pop %v4957
    %v5080 = vrcp.pop %v4960
    %v5081 = vrcp.pop %v4963
    %v5082 = vrcp.pop %v4966
    %v5083 = vrcp.pop %v4969
    %v5084 = vrcp.pop %v4972
    %v5085 = vrcp.pop %v4975
    %v5086 = vrcp.pop %v4978
    %v5087 = vrcp.pop %v4981
    %v5088 = vrcp.pop %v4984
    %v5089 = vrcp.pop %v4987
    %v5090 = vrcp.pop %v4990
    %v5091 = vrcp.pop %v4993
    %v5092 = vrcp.pop %v4996
    %v5093 = vrcp.pop %v4999
    %v5094 = vrcp.pop %v5002
    %v5095 = vrcp.pop %v5005
    %v5096 = vrcp.pop %v5008
    %v5097 = vrcp.pop %v5011
    %v5098 = vrcp.pop %v5014
    %v5099 = vrcp.pop %v5017
    %v5100 = vrcp.pop %v5020
    %v5101 = vrcp.pop %v5023
    %v5102 = vrcp.pop %v5026
    %v5103 = vrcp.pop %v5029
    %v5104 = vrcp.pop %v5032
    %v5105 = vrcp.pop %v5035
    %v5106 = vrcp.pop %v5038
    %v5107 = vrcp.pop %v5041
    %v5108 = vrcp.pop %v5044
    %v5109 = vmul.f32 %v4726, %v5045
    %v5110 = vmul.f32 %v4728, %v5046
    %v5111 = vmul.f32 %v4730, %v5047
    %v5112 = vmul.f32 %v4732, %v5048
    %v5113 = vmul.f32 %v4734, %v5049
    %v5114 = vmul.f32 %v4736, %v5050
    %v5115 = vmul.f32 %v4738, %v5051
    %v5116 = vmul.f32 %v4740, %v5052
    %v5117 = vmul.f32 %v4742, %v5053
    %v5118 = vmul.f32 %v4744, %v5054
    %v5119 = vmul.f32 %v4746, %v5055
    %v5120 = vmul.f32 %v4748, %v5056
    %v5121 = vmul.f32 %v4750, %v5057
    %v5122 = vmul.f32 %v4752, %v5058
    %v5123 = vmul.f32 %v4754, %v5059
    %v5124 = vmul.f32 %v4756, %v5060
    %v5125 = vmul.f32 %v4758, %v5061
    %v5126 = vmul.f32 %v4760, %v5062
    %v5127 = vmul.f32 %v4762, %v5063
    %v5128 = vmul.f32 %v4764, %v5064
    %v5129 = vmul.f32 %v4766, %v5065
    %v5130 = vmul.f32 %v4768, %v5066
    %v5131 = vmul.f32 %v4770, %v5067
    %v5132 = vmul.f32 %v4772, %v5068
    %v5133 = vmul.f32 %v4774, %v5069
    %v5134 = vmul.f32 %v4776, %v5070
    %v5135 = vmul.f32 %v4778, %v5071
    %v5136 = vmul.f32 %v4780, %v5072
    %v5137 = vmul.f32 %v4782, %v5073
    %v5138 = vmul.f32 %v4784, %v5074
    %v5139 = vmul.f32 %v4786, %v5075
    %v5140 = vmul.f32 %v4788, %v5076
    %v5141 = vmul.f32 %v4790, %v5077
    %v5142 = vmul.f32 %v4792, %v5078
    %v5143 = vmul.f32 %v4794, %v5079
    %v5144 = vmul.f32 %v4796, %v5080
    %v5145 = vmul.f32 %v4798, %v5081
    %v5146 = vmul.f32 %v4800, %v5082
    %v5147 = vmul.f32 %v4802, %v5083
    %v5148 = vmul.f32 %v4804, %v5084
    %v5149 = vmul.f32 %v4806, %v5085
    %v5150 = vmul.f32 %v4808, %v5086
    %v5151 = vmul.f32 %v4810, %v5087
    %v5152 = vmul.f32 %v4812, %v5088
    %v5153 = vmul.f32 %v4814, %v5089
    %v5154 = vmul.f32 %v4816, %v5090
    %v5155 = vmul.f32 %v4818, %v5091
    %v5156 = vmul.f32 %v4820, %v5092
    %v5157 = vmul.f32 %v4822, %v5093
    %v5158 = vmul.f32 %v4824, %v5094
    %v5159 = vmul.f32 %v4826, %v5095
    %v5160 = vmul.f32 %v4828, %v5096
    %v5161 = vmul.f32 %v4830, %v5097
    %v5162 = vmul.f32 %v4832, %v5098
    %v5163 = vmul.f32 %v4834, %v5099
    %v5164 = vmul.f32 %v4836, %v5100
    %v5165 = vmul.f32 %v4838, %v5101
    %v5166 = vmul.f32 %v4840, %v5102
    %v5167 = vmul.f32 %v4842, %v5103
    %v5168 = vmul.f32 %v4844, %v5104
    %v5169 = vmul.f32 %v4846, %v5105
    %v5170 = vmul.f32 %v4848, %v5106
    %v5171 = vmul.f32 %v4850, %v5107
    %v5172 = vmul.f32 %v4852, %v5108
    %v5173 = vpack.c.bf16 %v5109, %v5109
    %v5174 = vpack.c.bf16 %v5110, %v5110
    %v5175 = vpack.c.bf16 %v5111, %v5111
    %v5176 = vpack.c.bf16 %v5112, %v5112
    %v5177 = vpack.c.bf16 %v5113, %v5113
    %v5178 = vpack.c.bf16 %v5114, %v5114
    %v5179 = vpack.c.bf16 %v5115, %v5115
    %v5180 = vpack.c.bf16 %v5116, %v5116
    %v5181 = vpack.c.bf16 %v5117, %v5117
    %v5182 = vpack.c.bf16 %v5118, %v5118
    %v5183 = vpack.c.bf16 %v5119, %v5119
    %v5184 = vpack.c.bf16 %v5120, %v5120
    %v5185 = vpack.c.bf16 %v5121, %v5121
    %v5186 = vpack.c.bf16 %v5122, %v5122
    %v5187 = vpack.c.bf16 %v5123, %v5123
    %v5188 = vpack.c.bf16 %v5124, %v5124
    %v5189 = vpack.c.bf16 %v5125, %v5125
    %v5190 = vpack.c.bf16 %v5126, %v5126
    %v5191 = vpack.c.bf16 %v5127, %v5127
    %v5192 = vpack.c.bf16 %v5128, %v5128
    %v5193 = vpack.c.bf16 %v5129, %v5129
    %v5194 = vpack.c.bf16 %v5130, %v5130
    %v5195 = vpack.c.bf16 %v5131, %v5131
    %v5196 = vpack.c.bf16 %v5132, %v5132
    %v5197 = vpack.c.bf16 %v5133, %v5133
    %v5198 = vpack.c.bf16 %v5134, %v5134
    %v5199 = vpack.c.bf16 %v5135, %v5135
    %v5200 = vpack.c.bf16 %v5136, %v5136
    %v5201 = vpack.c.bf16 %v5137, %v5137
    %v5202 = vpack.c.bf16 %v5138, %v5138
    %v5203 = vpack.c.bf16 %v5139, %v5139
    %v5204 = vpack.c.bf16 %v5140, %v5140
    %v5205 = vpack.c.bf16 %v5141, %v5141
    %v5206 = vpack.c.bf16 %v5142, %v5142
    %v5207 = vpack.c.bf16 %v5143, %v5143
    %v5208 = vpack.c.bf16 %v5144, %v5144
    %v5209 = vpack.c.bf16 %v5145, %v5145
    %v5210 = vpack.c.bf16 %v5146, %v5146
    %v5211 = vpack.c.bf16 %v5147, %v5147
    %v5212 = vpack.c.bf16 %v5148, %v5148
    %v5213 = vpack.c.bf16 %v5149, %v5149
    %v5214 = vpack.c.bf16 %v5150, %v5150
    %v5215 = vpack.c.bf16 %v5151, %v5151
    %v5216 = vpack.c.bf16 %v5152, %v5152
    %v5217 = vpack.c.bf16 %v5153, %v5153
    %v5218 = vpack.c.bf16 %v5154, %v5154
    %v5219 = vpack.c.bf16 %v5155, %v5155
    %v5220 = vpack.c.bf16 %v5156, %v5156
    %v5221 = vpack.c.bf16 %v5157, %v5157
    %v5222 = vpack.c.bf16 %v5158, %v5158
    %v5223 = vpack.c.bf16 %v5159, %v5159
    %v5224 = vpack.c.bf16 %v5160, %v5160
    %v5225 = vpack.c.bf16 %v5161, %v5161
    %v5226 = vpack.c.bf16 %v5162, %v5162
    %v5227 = vpack.c.bf16 %v5163, %v5163
    %v5228 = vpack.c.bf16 %v5164, %v5164
    %v5229 = vpack.c.bf16 %v5165, %v5165
    %v5230 = vpack.c.bf16 %v5166, %v5166
    %v5231 = vpack.c.bf16 %v5167, %v5167
    %v5232 = vpack.c.bf16 %v5168, %v5168
    %v5233 = vpack.c.bf16 %v5169, %v5169
    %v5234 = vpack.c.bf16 %v5170, %v5170
    %v5235 = vpack.c.bf16 %v5171, %v5171
    %v5236 = vpack.c.bf16 %v5172, %v5172
    %v5269 = vunpack.c.l.b16 %v5173
    %v5270 = vunpack.c.l.b16 %v5174
    %v5271 = vunpack.c.l.b16 %v5175
    %v5272 = vunpack.c.l.b16 %v5176
    %v5273 = vunpack.c.l.b16 %v5177
    %v5274 = vunpack.c.l.b16 %v5178
    %v5275 = vunpack.c.l.b16 %v5179
    %v5276 = vunpack.c.l.b16 %v5180
    %v5277 = vunpack.c.l.b16 %v5181
    %v5278 = vunpack.c.l.b16 %v5182
    %v5279 = vunpack.c.l.b16 %v5183
    %v5280 = vunpack.c.l.b16 %v5184
    %v5281 = vunpack.c.l.b16 %v5185
    %v5282 = vunpack.c.l.b16 %v5186
    %v5283 = vunpack.c.l.b16 %v5187
    %v5284 = vunpack.c.l.b16 %v5188
    %v5285 = vunpack.c.l.b16 %v5189
    %v5286 = vunpack.c.l.b16 %v5190
    %v5287 = vunpack.c.l.b16 %v5191
    %v5288 = vunpack.c.l.b16 %v5192
    %v5289 = vunpack.c.l.b16 %v5193
    %v5290 = vunpack.c.l.b16 %v5194
    %v5291 = vunpack.c.l.b16 %v5195
    %v5292 = vunpack.c.l.b16 %v5196
    %v5293 = vunpack.c.l.b16 %v5197
    %v5294 = vunpack.c.l.b16 %v5198
    %v5295 = vunpack.c.l.b16 %v5199
    %v5296 = vunpack.c.l.b16 %v5200
    %v5297 = vunpack.c.l.b16 %v5201
    %v5298 = vunpack.c.l.b16 %v5202
    %v5299 = vunpack.c.l.b16 %v5203
    %v5300 = vunpack.c.l.b16 %v5204
    %v5301 = vpack.c.b16 %v5270, %v5269
    %v5302 = vpack.c.b16 %v5272, %v5271
    %v5303 = vpack.c.b16 %v5274, %v5273
    %v5304 = vpack.c.b16 %v5276, %v5275
    %v5305 = vpack.c.b16 %v5278, %v5277
    %v5306 = vpack.c.b16 %v5280, %v5279
    %v5307 = vpack.c.b16 %v5282, %v5281
    %v5308 = vpack.c.b16 %v5284, %v5283
    %v5309 = vpack.c.b16 %v5286, %v5285
    %v5310 = vpack.c.b16 %v5288, %v5287
    %v5311 = vpack.c.b16 %v5290, %v5289
    %v5312 = vpack.c.b16 %v5292, %v5291
    %v5313 = vpack.c.b16 %v5294, %v5293
    %v5314 = vpack.c.b16 %v5296, %v5295
    %v5315 = vpack.c.b16 %v5298, %v5297
    %v5316 = vpack.c.b16 %v5300, %v5299
    %5317 = vrot.lane.b32.xlu0 %v4131, 64
    %v5318 = vpop.permute.xlu0 %5317
    %5319 = vrot.lane.b32.xlu0 %v4132, 64
    %v5320 = vpop.permute.xlu0 %5319
    %5321 = vrot.lane.b32.xlu0 %v4133, 64
    %v5322 = vpop.permute.xlu0 %5321
    %5323 = vrot.lane.b32.xlu0 %v4134, 64
    %v5324 = vpop.permute.xlu0 %5323
    %v5330 = vsel %vm1027, %v5301, 0
    %v5333 = vsel %vm1027, %v5302, 0
    %v5336 = vsel %vm1027, %v5303, 0
    %v5339 = vsel %vm1027, %v5304, 0
    %v5342 = vsel %vm1027, %v5305, 0
    %v5345 = vsel %vm1027, %v5306, 0
    %v5348 = vsel %vm1027, %v5307, 0
    %v5351 = vsel %vm1027, %v5308, 0
    %v5354 = vsel %vm1027, %v5309, 0
    %v5357 = vsel %vm1027, %v5310, 0
    %v5360 = vsel %vm1027, %v5311, 0
    %v5363 = vsel %vm1027, %v5312, 0
    %v5366 = vsel %vm1027, %v5313, 0
    %v5369 = vsel %vm1027, %v5314, 0
    %v5372 = vsel %vm1027, %v5315, 0
    %v5375 = vsel %vm1027, %v5316, 0
    %5377 = vmatpush.bf16.msra.mxu0 0
    %5378 = vmatpush.bf16.msra.mxu0 0
    %5379 = vmatpush.bf16.msra.mxu0 0
    %5380 = vmatpush.bf16.msra.mxu0 0
    %5381 = vmatpush.bf16.msra.mxu0 %v5324
    %5382 = vmatpush.bf16.msra.mxu0 %v5322
    %5383 = vmatpush.bf16.msra.mxu0 %v5320
    %5384 = vmatpush.bf16.msra.mxu0 %v5318
    %5385 = vmatmul.bf16.gmra.mxu0 %v5330
    %v5386 = vpop.f32.mrf.mxu0
    %v5387 = vadd.f32 0.0, %v5386
    %v5388 = vpop.f32.mrf.mxu0
    %v5389 = vadd.f32 0.0, %v5388
    %5390 = vmatmul.bf16.gmra.mxu0 %v5333
    %v5391 = vpop.f32.mrf.mxu0
    %v5392 = vadd.f32 0.0, %v5391
    %v5393 = vpop.f32.mrf.mxu0
    %v5394 = vadd.f32 0.0, %v5393
    %5395 = vmatmul.bf16.gmra.mxu0 %v5336
    %v5396 = vpop.f32.mrf.mxu0
    %v5397 = vadd.f32 0.0, %v5396
    %v5398 = vpop.f32.mrf.mxu0
    %v5399 = vadd.f32 0.0, %v5398
    %5400 = vmatmul.bf16.gmra.mxu0 %v5339
    %v5401 = vpop.f32.mrf.mxu0
    %v5402 = vadd.f32 0.0, %v5401
    %v5403 = vpop.f32.mrf.mxu0
    %v5404 = vadd.f32 0.0, %v5403
    %5405 = vmatmul.bf16.gmra.mxu0 %v5342
    %v5406 = vpop.f32.mrf.mxu0
    %v5407 = vadd.f32 0.0, %v5406
    %v5408 = vpop.f32.mrf.mxu0
    %v5409 = vadd.f32 0.0, %v5408
    %5410 = vmatmul.bf16.gmra.mxu0 %v5345
    %v5411 = vpop.f32.mrf.mxu0
    %v5412 = vadd.f32 0.0, %v5411
    %v5413 = vpop.f32.mrf.mxu0
    %v5414 = vadd.f32 0.0, %v5413
    %5415 = vmatmul.bf16.gmra.mxu0 %v5348
    %v5416 = vpop.f32.mrf.mxu0
    %v5417 = vadd.f32 0.0, %v5416
    %v5418 = vpop.f32.mrf.mxu0
    %v5419 = vadd.f32 0.0, %v5418
    %5420 = vmatmul.bf16.gmra.mxu0 %v5351
    %v5421 = vpop.f32.mrf.mxu0
    %v5422 = vadd.f32 0.0, %v5421
    %v5423 = vpop.f32.mrf.mxu0
    %v5424 = vadd.f32 0.0, %v5423
    %5425 = vmatmul.bf16.gmra.mxu0 %v5354
    %v5426 = vpop.f32.mrf.mxu0
    %v5427 = vadd.f32 0.0, %v5426
    %v5428 = vpop.f32.mrf.mxu0
    %v5429 = vadd.f32 0.0, %v5428
    %5430 = vmatmul.bf16.gmra.mxu0 %v5357
    %v5431 = vpop.f32.mrf.mxu0
    %v5432 = vadd.f32 0.0, %v5431
    %v5433 = vpop.f32.mrf.mxu0
    %v5434 = vadd.f32 0.0, %v5433
    %5435 = vmatmul.bf16.gmra.mxu0 %v5360
    %v5436 = vpop.f32.mrf.mxu0
    %v5437 = vadd.f32 0.0, %v5436
    %v5438 = vpop.f32.mrf.mxu0
    %v5439 = vadd.f32 0.0, %v5438
    %5440 = vmatmul.bf16.gmra.mxu0 %v5363
    %v5441 = vpop.f32.mrf.mxu0
    %v5442 = vadd.f32 0.0, %v5441
    %v5443 = vpop.f32.mrf.mxu0
    %v5444 = vadd.f32 0.0, %v5443
    %5445 = vmatmul.bf16.gmra.mxu0 %v5366
    %v5446 = vpop.f32.mrf.mxu0
    %v5447 = vadd.f32 0.0, %v5446
    %v5448 = vpop.f32.mrf.mxu0
    %v5449 = vadd.f32 0.0, %v5448
    %5450 = vmatmul.bf16.gmra.mxu0 %v5369
    %v5451 = vpop.f32.mrf.mxu0
    %v5452 = vadd.f32 0.0, %v5451
    %v5453 = vpop.f32.mrf.mxu0
    %v5454 = vadd.f32 0.0, %v5453
    %5455 = vmatmul.bf16.gmra.mxu0 %v5372
    %v5456 = vpop.f32.mrf.mxu0
    %v5457 = vadd.f32 0.0, %v5456
    %v5458 = vpop.f32.mrf.mxu0
    %v5459 = vadd.f32 0.0, %v5458
    %5460 = vmatmul.bf16.gmra.mxu0 %v5375
    %v5461 = vpop.f32.mrf.mxu0
    %v5462 = vadd.f32 0.0, %v5461
    %v5463 = vpop.f32.mrf.mxu0
    %v5464 = vadd.f32 0.0, %v5463
    %5465 = vdwg.mxu0
    %v5498 = vunpack.c.l.b16 %v5205
    %v5499 = vunpack.c.l.b16 %v5206
    %v5500 = vunpack.c.l.b16 %v5207
    %v5501 = vunpack.c.l.b16 %v5208
    %v5502 = vunpack.c.l.b16 %v5209
    %v5503 = vunpack.c.l.b16 %v5210
    %v5504 = vunpack.c.l.b16 %v5211
    %v5505 = vunpack.c.l.b16 %v5212
    %v5506 = vunpack.c.l.b16 %v5213
    %v5507 = vunpack.c.l.b16 %v5214
    %v5508 = vunpack.c.l.b16 %v5215
    %v5509 = vunpack.c.l.b16 %v5216
    %v5510 = vunpack.c.l.b16 %v5217
    %v5511 = vunpack.c.l.b16 %v5218
    %v5512 = vunpack.c.l.b16 %v5219
    %v5513 = vunpack.c.l.b16 %v5220
    %v5514 = vunpack.c.l.b16 %v5221
    %v5515 = vunpack.c.l.b16 %v5222
    %v5516 = vunpack.c.l.b16 %v5223
    %v5517 = vunpack.c.l.b16 %v5224
    %v5518 = vunpack.c.l.b16 %v5225
    %v5519 = vunpack.c.l.b16 %v5226
    %v5520 = vunpack.c.l.b16 %v5227
    %v5521 = vunpack.c.l.b16 %v5228
    %v5522 = vunpack.c.l.b16 %v5229
    %v5523 = vunpack.c.l.b16 %v5230
    %v5524 = vunpack.c.l.b16 %v5231
    %v5525 = vunpack.c.l.b16 %v5232
    %v5526 = vunpack.c.l.b16 %v5233
    %v5527 = vunpack.c.l.b16 %v5234
    %v5528 = vunpack.c.l.b16 %v5235
    %v5529 = vunpack.c.l.b16 %v5236
    %v5530 = vpack.c.b16 %v5499, %v5498
    %v5531 = vpack.c.b16 %v5501, %v5500
    %v5532 = vpack.c.b16 %v5503, %v5502
    %v5533 = vpack.c.b16 %v5505, %v5504
    %v5534 = vpack.c.b16 %v5507, %v5506
    %v5535 = vpack.c.b16 %v5509, %v5508
    %v5536 = vpack.c.b16 %v5511, %v5510
    %v5537 = vpack.c.b16 %v5513, %v5512
    %v5538 = vpack.c.b16 %v5515, %v5514
    %v5539 = vpack.c.b16 %v5517, %v5516
    %v5540 = vpack.c.b16 %v5519, %v5518
    %v5541 = vpack.c.b16 %v5521, %v5520
    %v5542 = vpack.c.b16 %v5523, %v5522
    %v5543 = vpack.c.b16 %v5525, %v5524
    %v5544 = vpack.c.b16 %v5527, %v5526
    %v5545 = vpack.c.b16 %v5529, %v5528
    %5546 = vrot.lane.b32.xlu0 %v4308, 64
    %v5547 = vpop.permute.xlu0 %5546
    %5548 = vrot.lane.b32.xlu0 %v4309, 64
    %v5549 = vpop.permute.xlu0 %5548
    %5550 = vrot.lane.b32.xlu0 %v4310, 64
    %v5551 = vpop.permute.xlu0 %5550
    %5552 = vrot.lane.b32.xlu0 %v4311, 64
    %v5553 = vpop.permute.xlu0 %5552
    %v5559 = vsel %vm1027, %v5530, 0
    %v5562 = vsel %vm1027, %v5531, 0
    %v5565 = vsel %vm1027, %v5532, 0
    %v5568 = vsel %vm1027, %v5533, 0
    %v5571 = vsel %vm1027, %v5534, 0
    %v5574 = vsel %vm1027, %v5535, 0
    %v5577 = vsel %vm1027, %v5536, 0
    %v5580 = vsel %vm1027, %v5537, 0
    %v5583 = vsel %vm1027, %v5538, 0
    %v5586 = vsel %vm1027, %v5539, 0
    %v5589 = vsel %vm1027, %v5540, 0
    %v5592 = vsel %vm1027, %v5541, 0
    %v5595 = vsel %vm1027, %v5542, 0
    %v5598 = vsel %vm1027, %v5543, 0
    %v5601 = vsel %vm1027, %v5544, 0
    %v5604 = vsel %vm1027, %v5545, 0
    %5606 = vmatpush.bf16.msra.mxu0 0
    %5607 = vmatpush.bf16.msra.mxu0 0
    %5608 = vmatpush.bf16.msra.mxu0 0
    %5609 = vmatpush.bf16.msra.mxu0 0
    %5610 = vmatpush.bf16.msra.mxu0 %v5553
    %5611 = vmatpush.bf16.msra.mxu0 %v5551
    %5612 = vmatpush.bf16.msra.mxu0 %v5549
    %5613 = vmatpush.bf16.msra.mxu0 %v5547
    %5614 = vmatmul.bf16.gmra.mxu0 %v5559
    %v5615 = vpop.f32.mrf.mxu0
    %v5616 = vadd.f32 0.0, %v5615
    %v5617 = vpop.f32.mrf.mxu0
    %v5618 = vadd.f32 0.0, %v5617
    %5619 = vmatmul.bf16.gmra.mxu0 %v5562
    %v5620 = vpop.f32.mrf.mxu0
    %v5621 = vadd.f32 0.0, %v5620
    %v5622 = vpop.f32.mrf.mxu0
    %v5623 = vadd.f32 0.0, %v5622
    %5624 = vmatmul.bf16.gmra.mxu0 %v5565
    %v5625 = vpop.f32.mrf.mxu0
    %v5626 = vadd.f32 0.0, %v5625
    %v5627 = vpop.f32.mrf.mxu0
    %v5628 = vadd.f32 0.0, %v5627
    %5629 = vmatmul.bf16.gmra.mxu0 %v5568
    %v5630 = vpop.f32.mrf.mxu0
    %v5631 = vadd.f32 0.0, %v5630
    %v5632 = vpop.f32.mrf.mxu0
    %v5633 = vadd.f32 0.0, %v5632
    %5634 = vmatmul.bf16.gmra.mxu0 %v5571
    %v5635 = vpop.f32.mrf.mxu0
    %v5636 = vadd.f32 0.0, %v5635
    %v5637 = vpop.f32.mrf.mxu0
    %v5638 = vadd.f32 0.0, %v5637
    %5639 = vmatmul.bf16.gmra.mxu0 %v5574
    %v5640 = vpop.f32.mrf.mxu0
    %v5641 = vadd.f32 0.0, %v5640
    %v5642 = vpop.f32.mrf.mxu0
    %v5643 = vadd.f32 0.0, %v5642
    %5644 = vmatmul.bf16.gmra.mxu0 %v5577
    %v5645 = vpop.f32.mrf.mxu0
    %v5646 = vadd.f32 0.0, %v5645
    %v5647 = vpop.f32.mrf.mxu0
    %v5648 = vadd.f32 0.0, %v5647
    %5649 = vmatmul.bf16.gmra.mxu0 %v5580
    %v5650 = vpop.f32.mrf.mxu0
    %v5651 = vadd.f32 0.0, %v5650
    %v5652 = vpop.f32.mrf.mxu0
    %v5653 = vadd.f32 0.0, %v5652
    %5654 = vmatmul.bf16.gmra.mxu0 %v5583
    %v5655 = vpop.f32.mrf.mxu0
    %v5656 = vadd.f32 0.0, %v5655
    %v5657 = vpop.f32.mrf.mxu0
    %v5658 = vadd.f32 0.0, %v5657
    %5659 = vmatmul.bf16.gmra.mxu0 %v5586
    %v5660 = vpop.f32.mrf.mxu0
    %v5661 = vadd.f32 0.0, %v5660
    %v5662 = vpop.f32.mrf.mxu0
    %v5663 = vadd.f32 0.0, %v5662
    %5664 = vmatmul.bf16.gmra.mxu0 %v5589
    %v5665 = vpop.f32.mrf.mxu0
    %v5666 = vadd.f32 0.0, %v5665
    %v5667 = vpop.f32.mrf.mxu0
    %v5668 = vadd.f32 0.0, %v5667
    %5669 = vmatmul.bf16.gmra.mxu0 %v5592
    %v5670 = vpop.f32.mrf.mxu0
    %v5671 = vadd.f32 0.0, %v5670
    %v5672 = vpop.f32.mrf.mxu0
    %v5673 = vadd.f32 0.0, %v5672
    %5674 = vmatmul.bf16.gmra.mxu0 %v5595
    %v5675 = vpop.f32.mrf.mxu0
    %v5676 = vadd.f32 0.0, %v5675
    %v5677 = vpop.f32.mrf.mxu0
    %v5678 = vadd.f32 0.0, %v5677
    %5679 = vmatmul.bf16.gmra.mxu0 %v5598
    %v5680 = vpop.f32.mrf.mxu0
    %v5681 = vadd.f32 0.0, %v5680
    %v5682 = vpop.f32.mrf.mxu0
    %v5683 = vadd.f32 0.0, %v5682
    %5684 = vmatmul.bf16.gmra.mxu0 %v5601
    %v5685 = vpop.f32.mrf.mxu0
    %v5686 = vadd.f32 0.0, %v5685
    %v5687 = vpop.f32.mrf.mxu0
    %v5688 = vadd.f32 0.0, %v5687
    %5689 = vmatmul.bf16.gmra.mxu0 %v5604
    %v5690 = vpop.f32.mrf.mxu0
    %v5691 = vadd.f32 0.0, %v5690
    %v5692 = vpop.f32.mrf.mxu0
    %v5693 = vadd.f32 0.0, %v5692
    %5694 = vdwg.mxu0
    %v5695 = vmul.f32 %v5387, %v194
    %v5696 = vmul.f32 %v5389, %v194
    %v5697 = vmul.f32 %v5392, %v194
    %v5698 = vmul.f32 %v5394, %v194
    %v5699 = vmul.f32 %v5397, %v194
    %v5700 = vmul.f32 %v5399, %v194
    %v5701 = vmul.f32 %v5402, %v194
    %v5702 = vmul.f32 %v5404, %v194
    %v5703 = vmul.f32 %v5616, %v194
    %v5704 = vmul.f32 %v5618, %v194
    %v5705 = vmul.f32 %v5621, %v194
    %v5706 = vmul.f32 %v5623, %v194
    %v5707 = vmul.f32 %v5626, %v194
    %v5708 = vmul.f32 %v5628, %v194
    %v5709 = vmul.f32 %v5631, %v194
    %v5710 = vmul.f32 %v5633, %v194
    %v5711 = vadd.f32 %v5695, 0.0
    %v5712 = vadd.f32 %v5696, 0.0
    %v5713 = vadd.f32 %v5697, 0.0
    %v5714 = vadd.f32 %v5698, 0.0
    %v5715 = vadd.f32 %v5699, 0.0
    %v5716 = vadd.f32 %v5700, 0.0
    %v5717 = vadd.f32 %v5701, 0.0
    %v5718 = vadd.f32 %v5702, 0.0
    %v5719 = vadd.f32 %v5703, 0.0
    %v5720 = vadd.f32 %v5704, 0.0
    %v5721 = vadd.f32 %v5705, 0.0
    %v5722 = vadd.f32 %v5706, 0.0
    %v5723 = vadd.f32 %v5707, 0.0
    %v5724 = vadd.f32 %v5708, 0.0
    %v5725 = vadd.f32 %v5709, 0.0
    %v5726 = vadd.f32 %v5710, 0.0
    %v5727 = vmul.f32 %v5407, %v199
    %v5728 = vmul.f32 %v5409, %v199
    %v5729 = vmul.f32 %v5412, %v199
    %v5730 = vmul.f32 %v5414, %v199
    %v5731 = vmul.f32 %v5417, %v199
    %v5732 = vmul.f32 %v5419, %v199
    %v5733 = vmul.f32 %v5422, %v199
    %v5734 = vmul.f32 %v5424, %v199
    %v5735 = vmul.f32 %v5636, %v199
    %v5736 = vmul.f32 %v5638, %v199
    %v5737 = vmul.f32 %v5641, %v199
    %v5738 = vmul.f32 %v5643, %v199
    %v5739 = vmul.f32 %v5646, %v199
    %v5740 = vmul.f32 %v5648, %v199
    %v5741 = vmul.f32 %v5651, %v199
    %v5742 = vmul.f32 %v5653, %v199
    %v5743 = vadd.f32 %v5711, %v5727
    %v5744 = vadd.f32 %v5712, %v5728
    %v5745 = vadd.f32 %v5713, %v5729
    %v5746 = vadd.f32 %v5714, %v5730
    %v5747 = vadd.f32 %v5715, %v5731
    %v5748 = vadd.f32 %v5716, %v5732
    %v5749 = vadd.f32 %v5717, %v5733
    %v5750 = vadd.f32 %v5718, %v5734
    %v5751 = vadd.f32 %v5719, %v5735
    %v5752 = vadd.f32 %v5720, %v5736
    %v5753 = vadd.f32 %v5721, %v5737
    %v5754 = vadd.f32 %v5722, %v5738
    %v5755 = vadd.f32 %v5723, %v5739
    %v5756 = vadd.f32 %v5724, %v5740
    %v5757 = vadd.f32 %v5725, %v5741
    %v5758 = vadd.f32 %v5726, %v5742
    %v5759 = vmul.f32 %v5427, %v204
    %v5760 = vmul.f32 %v5429, %v204
    %v5761 = vmul.f32 %v5432, %v204
    %v5762 = vmul.f32 %v5434, %v204
    %v5763 = vmul.f32 %v5437, %v204
    %v5764 = vmul.f32 %v5439, %v204
    %v5765 = vmul.f32 %v5442, %v204
    %v5766 = vmul.f32 %v5444, %v204
    %v5767 = vmul.f32 %v5656, %v204
    %v5768 = vmul.f32 %v5658, %v204
    %v5769 = vmul.f32 %v5661, %v204
    %v5770 = vmul.f32 %v5663, %v204
    %v5771 = vmul.f32 %v5666, %v204
    %v5772 = vmul.f32 %v5668, %v204
    %v5773 = vmul.f32 %v5671, %v204
    %v5774 = vmul.f32 %v5673, %v204
    %v5775 = vadd.f32 %v5743, %v5759
    %v5776 = vadd.f32 %v5744, %v5760
    %v5777 = vadd.f32 %v5745, %v5761
    %v5778 = vadd.f32 %v5746, %v5762
    %v5779 = vadd.f32 %v5747, %v5763
    %v5780 = vadd.f32 %v5748, %v5764
    %v5781 = vadd.f32 %v5749, %v5765
    %v5782 = vadd.f32 %v5750, %v5766
    %v5783 = vadd.f32 %v5751, %v5767
    %v5784 = vadd.f32 %v5752, %v5768
    %v5785 = vadd.f32 %v5753, %v5769
    %v5786 = vadd.f32 %v5754, %v5770
    %v5787 = vadd.f32 %v5755, %v5771
    %v5788 = vadd.f32 %v5756, %v5772
    %v5789 = vadd.f32 %v5757, %v5773
    %v5790 = vadd.f32 %v5758, %v5774
    %v5791 = vmul.f32 %v5447, %v209
    %v5792 = vmul.f32 %v5449, %v209
    %v5793 = vmul.f32 %v5452, %v209
    %v5794 = vmul.f32 %v5454, %v209
    %v5795 = vmul.f32 %v5457, %v209
    %v5796 = vmul.f32 %v5459, %v209
    %v5797 = vmul.f32 %v5462, %v209
    %v5798 = vmul.f32 %v5464, %v209
    %v5799 = vmul.f32 %v5676, %v209
    %v5800 = vmul.f32 %v5678, %v209
    %v5801 = vmul.f32 %v5681, %v209
    %v5802 = vmul.f32 %v5683, %v209
    %v5803 = vmul.f32 %v5686, %v209
    %v5804 = vmul.f32 %v5688, %v209
    %v5805 = vmul.f32 %v5691, %v209
    %v5806 = vmul.f32 %v5693, %v209
    %v5807 = vadd.f32 %v5775, %v5791
    %v5808 = vadd.f32 %v5776, %v5792
    %v5809 = vadd.f32 %v5777, %v5793
    %v5810 = vadd.f32 %v5778, %v5794
    %v5811 = vadd.f32 %v5779, %v5795
    %v5812 = vadd.f32 %v5780, %v5796
    %v5813 = vadd.f32 %v5781, %v5797
    %v5814 = vadd.f32 %v5782, %v5798
    %v5815 = vadd.f32 %v5783, %v5799
    %v5816 = vadd.f32 %v5784, %v5800
    %v5817 = vadd.f32 %v5785, %v5801
    %v5818 = vadd.f32 %v5786, %v5802
    %v5819 = vadd.f32 %v5787, %v5803
    %v5820 = vadd.f32 %v5788, %v5804
    %v5821 = vadd.f32 %v5789, %v5805
    %v5822 = vadd.f32 %v5790, %v5806
    %v5823 = vpack.c.bf16 %v5808, %v5807
    %v5824 = vpack.c.bf16 %v5810, %v5809
    %v5825 = vpack.c.bf16 %v5812, %v5811
    %v5826 = vpack.c.bf16 %v5814, %v5813
    %v5827 = vpack.c.bf16 %v5816, %v5815
    %v5828 = vpack.c.bf16 %v5818, %v5817
    %v5829 = vpack.c.bf16 %v5820, %v5819
    %v5830 = vpack.c.bf16 %v5822, %v5821
    %s5831 = scalar_lea.vmem %s5, 16
    %v5832 = vld [vmem:[%s5831] sm:$0xf]
    %v5833 = vld [vmem:[%s5831 + $0x4] sm:$0xf]
    %v5834 = vld [vmem:[%s5831 + $0x8] sm:$0xf]
    %v5835 = vld [vmem:[%s5831 + $0xc] sm:$0xf]
    %v5836 = vperm.slane %v3659, 0
    %v5841 = vunpack.c.l.b16 %v5832
    %v5842 = vunpack.c.l.b16 %v5833
    %v5843 = vunpack.c.l.b16 %v5834
    %v5844 = vunpack.c.l.b16 %v5835
    %v5845 = vpack.c.b16 %v5842, %v5841
    %v5846 = vpack.c.b16 %v5844, %v5843
    %v5850 = vsel %vm243, %v5823, 0
    %v5853 = vsel %vm243, %v5824, 0
    %v5856 = vsel %vm243, %v5825, 0
    %v5859 = vsel %vm243, %v5826, 0
    %v5862 = vsel %vm243, %v5827, 0
    %v5865 = vsel %vm243, %v5828, 0
    %v5868 = vsel %vm243, %v5829, 0
    %v5871 = vsel %vm243, %v5830, 0
    %5873 = vmatpush.bf16.msra.mxu0 0
    %5874 = vmatpush.bf16.msra.mxu0 0
    %5875 = vmatpush.bf16.msra.mxu0 0
    %5876 = vmatpush.bf16.msra.mxu0 0
    %5877 = vmatpush.bf16.msra.mxu0 0
    %5878 = vmatpush.bf16.msra.mxu0 0
    %5879 = vmatpush.bf16.msra.mxu0 %v5846
    %5880 = vmatpush.bf16.msra.mxu0 %v5845
    %5881 = vmatmul.bf16.gmra.mxu0 %v5850
    %v5882 = vpop.f32.mrf.mxu0
    %v5883 = vadd.f32 %v5836, %v5882
    %v5884 = vpop.f32.mrf.mxu0
    %v5885 = vadd.f32 %v5836, %v5884
    %5886 = vmatmul.bf16.gmra.mxu0 %v5853
    %v5887 = vpop.f32.mrf.mxu0
    %v5888 = vadd.f32 %v5836, %v5887
    %v5889 = vpop.f32.mrf.mxu0
    %v5890 = vadd.f32 %v5836, %v5889
    %5891 = vmatmul.bf16.gmra.mxu0 %v5856
    %v5892 = vpop.f32.mrf.mxu0
    %v5893 = vadd.f32 %v5836, %v5892
    %v5894 = vpop.f32.mrf.mxu0
    %v5895 = vadd.f32 %v5836, %v5894
    %5896 = vmatmul.bf16.gmra.mxu0 %v5859
    %v5897 = vpop.f32.mrf.mxu0
    %v5898 = vadd.f32 %v5836, %v5897
    %v5899 = vpop.f32.mrf.mxu0
    %v5900 = vadd.f32 %v5836, %v5899
    %5901 = vmatmul.bf16.gmra.mxu0 %v5862
    %v5902 = vpop.f32.mrf.mxu0
    %v5903 = vadd.f32 %v5836, %v5902
    %v5904 = vpop.f32.mrf.mxu0
    %v5905 = vadd.f32 %v5836, %v5904
    %5906 = vmatmul.bf16.gmra.mxu0 %v5865
    %v5907 = vpop.f32.mrf.mxu0
    %v5908 = vadd.f32 %v5836, %v5907
    %v5909 = vpop.f32.mrf.mxu0
    %v5910 = vadd.f32 %v5836, %v5909
    %5911 = vmatmul.bf16.gmra.mxu0 %v5868
    %v5912 = vpop.f32.mrf.mxu0
    %v5913 = vadd.f32 %v5836, %v5912
    %v5914 = vpop.f32.mrf.mxu0
    %v5915 = vadd.f32 %v5836, %v5914
    %5916 = vmatmul.bf16.gmra.mxu0 %v5871
    %v5917 = vpop.f32.mrf.mxu0
    %v5918 = vadd.f32 %v5836, %v5917
    %v5919 = vpop.f32.mrf.mxu0
    %v5920 = vadd.f32 %v5836, %v5919
    %5921 = vdwg.mxu0
    %v5922 = vadd.f32 %v3642, %v5883
    %v5923 = vadd.f32 %v3643, %v5885
    %v5924 = vadd.f32 %v3644, %v5888
    %v5925 = vadd.f32 %v3645, %v5890
    %v5926 = vadd.f32 %v3646, %v5893
    %v5927 = vadd.f32 %v3647, %v5895
    %v5928 = vadd.f32 %v3648, %v5898
    %v5929 = vadd.f32 %v3649, %v5900
    %v5930 = vadd.f32 %v3650, %v5903
    %v5931 = vadd.f32 %v3651, %v5905
    %v5932 = vadd.f32 %v3652, %v5908
    %v5933 = vadd.f32 %v3653, %v5910
    %v5934 = vadd.f32 %v3654, %v5913
    %v5935 = vadd.f32 %v3655, %v5915
    %v5936 = vadd.f32 %v3656, %v5918
    %v5937 = vadd.f32 %v3657, %v5920
    %v5938 = vsel %vm243, %v5922, 0.0
    %5939 = vadd.xlane.f32.xlu0 %v5938
    %v5940 = vpop.xlane.xlu0 %5939
    %v5941 = vsel %vm243, %v5923, 0.0
    %5942 = vadd.xlane.f32.xlu0 %v5941
    %v5943 = vpop.xlane.xlu0 %5942
    %v5944 = vsel %vm243, %v5924, 0.0
    %5945 = vadd.xlane.f32.xlu0 %v5944
    %v5946 = vpop.xlane.xlu0 %5945
    %v5947 = vsel %vm243, %v5925, 0.0
    %5948 = vadd.xlane.f32.xlu0 %v5947
    %v5949 = vpop.xlane.xlu0 %5948
    %v5950 = vsel %vm243, %v5926, 0.0
    %5951 = vadd.xlane.f32.xlu0 %v5950
    %v5952 = vpop.xlane.xlu0 %5951
    %v5953 = vsel %vm243, %v5927, 0.0
    %5954 = vadd.xlane.f32.xlu0 %v5953
    %v5955 = vpop.xlane.xlu0 %5954
    %v5956 = vsel %vm243, %v5928, 0.0
    %5957 = vadd.xlane.f32.xlu0 %v5956
    %v5958 = vpop.xlane.xlu0 %5957
    %v5959 = vsel %vm243, %v5929, 0.0
    %5960 = vadd.xlane.f32.xlu0 %v5959
    %v5961 = vpop.xlane.xlu0 %5960
    %v5962 = vsel %vm243, %v5930, 0.0
    %5963 = vadd.xlane.f32.xlu0 %v5962
    %v5964 = vpop.xlane.xlu0 %5963
    %v5965 = vsel %vm243, %v5931, 0.0
    %5966 = vadd.xlane.f32.xlu0 %v5965
    %v5967 = vpop.xlane.xlu0 %5966
    %v5968 = vsel %vm243, %v5932, 0.0
    %5969 = vadd.xlane.f32.xlu0 %v5968
    %v5970 = vpop.xlane.xlu0 %5969
    %v5971 = vsel %vm243, %v5933, 0.0
    %5972 = vadd.xlane.f32.xlu0 %v5971
    %v5973 = vpop.xlane.xlu0 %5972
    %v5974 = vsel %vm243, %v5934, 0.0
    %5975 = vadd.xlane.f32.xlu0 %v5974
    %v5976 = vpop.xlane.xlu0 %5975
    %v5977 = vsel %vm243, %v5935, 0.0
    %5978 = vadd.xlane.f32.xlu0 %v5977
    %v5979 = vpop.xlane.xlu0 %5978
    %v5980 = vsel %vm243, %v5936, 0.0
    %5981 = vadd.xlane.f32.xlu0 %v5980
    %v5982 = vpop.xlane.xlu0 %5981
    %v5983 = vsel %vm243, %v5937, 0.0
    %5984 = vadd.xlane.f32.xlu0 %v5983
    %v5985 = vpop.xlane.xlu0 %5984
    %v5986 = vmul.f32 %v5940, %v2550
    %v5987 = vmul.f32 %v5943, %v2550
    %v5988 = vmul.f32 %v5946, %v2550
    %v5989 = vmul.f32 %v5949, %v2550
    %v5990 = vmul.f32 %v5952, %v2550
    %v5991 = vmul.f32 %v5955, %v2550
    %v5992 = vmul.f32 %v5958, %v2550
    %v5993 = vmul.f32 %v5961, %v2550
    %v5994 = vmul.f32 %v5964, %v2550
    %v5995 = vmul.f32 %v5967, %v2550
    %v5996 = vmul.f32 %v5970, %v2550
    %v5997 = vmul.f32 %v5973, %v2550
    %v5998 = vmul.f32 %v5976, %v2550
    %v5999 = vmul.f32 %v5979, %v2550
    %v6000 = vmul.f32 %v5982, %v2550
    %v6001 = vmul.f32 %v5985, %v2550
    %v6002 = vsub.f32 %v5922, %v5986
    %v6003 = vsub.f32 %v5923, %v5987
    %v6004 = vsub.f32 %v5924, %v5988
    %v6005 = vsub.f32 %v5925, %v5989
    %v6006 = vsub.f32 %v5926, %v5990
    %v6007 = vsub.f32 %v5927, %v5991
    %v6008 = vsub.f32 %v5928, %v5992
    %v6009 = vsub.f32 %v5929, %v5993
    %v6010 = vsub.f32 %v5930, %v5994
    %v6011 = vsub.f32 %v5931, %v5995
    %v6012 = vsub.f32 %v5932, %v5996
    %v6013 = vsub.f32 %v5933, %v5997
    %v6014 = vsub.f32 %v5934, %v5998
    %v6015 = vsub.f32 %v5935, %v5999
    %v6016 = vsub.f32 %v5936, %v6000
    %v6017 = vsub.f32 %v5937, %v6001
    %v6018 = vmul.f32 %v6002, %v6002
    %v6019 = vmul.f32 %v6003, %v6003
    %v6020 = vmul.f32 %v6004, %v6004
    %v6021 = vmul.f32 %v6005, %v6005
    %v6022 = vmul.f32 %v6006, %v6006
    %v6023 = vmul.f32 %v6007, %v6007
    %v6024 = vmul.f32 %v6008, %v6008
    %v6025 = vmul.f32 %v6009, %v6009
    %v6026 = vmul.f32 %v6010, %v6010
    %v6027 = vmul.f32 %v6011, %v6011
    %v6028 = vmul.f32 %v6012, %v6012
    %v6029 = vmul.f32 %v6013, %v6013
    %v6030 = vmul.f32 %v6014, %v6014
    %v6031 = vmul.f32 %v6015, %v6015
    %v6032 = vmul.f32 %v6016, %v6016
    %v6033 = vmul.f32 %v6017, %v6017
    %v6034 = vsel %vm243, %v6018, 0.0
    %6035 = vadd.xlane.f32.xlu0 %v6034
    %v6036 = vpop.xlane.xlu0 %6035
    %v6037 = vsel %vm243, %v6019, 0.0
    %6038 = vadd.xlane.f32.xlu0 %v6037
    %v6039 = vpop.xlane.xlu0 %6038
    %v6040 = vsel %vm243, %v6020, 0.0
    %6041 = vadd.xlane.f32.xlu0 %v6040
    %v6042 = vpop.xlane.xlu0 %6041
    %v6043 = vsel %vm243, %v6021, 0.0
    %6044 = vadd.xlane.f32.xlu0 %v6043
    %v6045 = vpop.xlane.xlu0 %6044
    %v6046 = vsel %vm243, %v6022, 0.0
    %6047 = vadd.xlane.f32.xlu0 %v6046
    %v6048 = vpop.xlane.xlu0 %6047
    %v6049 = vsel %vm243, %v6023, 0.0
    %6050 = vadd.xlane.f32.xlu0 %v6049
    %v6051 = vpop.xlane.xlu0 %6050
    %v6052 = vsel %vm243, %v6024, 0.0
    %6053 = vadd.xlane.f32.xlu0 %v6052
    %v6054 = vpop.xlane.xlu0 %6053
    %v6055 = vsel %vm243, %v6025, 0.0
    %6056 = vadd.xlane.f32.xlu0 %v6055
    %v6057 = vpop.xlane.xlu0 %6056
    %v6058 = vsel %vm243, %v6026, 0.0
    %6059 = vadd.xlane.f32.xlu0 %v6058
    %v6060 = vpop.xlane.xlu0 %6059
    %v6061 = vsel %vm243, %v6027, 0.0
    %6062 = vadd.xlane.f32.xlu0 %v6061
    %v6063 = vpop.xlane.xlu0 %6062
    %v6064 = vsel %vm243, %v6028, 0.0
    %6065 = vadd.xlane.f32.xlu0 %v6064
    %v6066 = vpop.xlane.xlu0 %6065
    %v6067 = vsel %vm243, %v6029, 0.0
    %6068 = vadd.xlane.f32.xlu0 %v6067
    %v6069 = vpop.xlane.xlu0 %6068
    %v6070 = vsel %vm243, %v6030, 0.0
    %6071 = vadd.xlane.f32.xlu0 %v6070
    %v6072 = vpop.xlane.xlu0 %6071
    %v6073 = vsel %vm243, %v6031, 0.0
    %6074 = vadd.xlane.f32.xlu0 %v6073
    %v6075 = vpop.xlane.xlu0 %6074
    %v6076 = vsel %vm243, %v6032, 0.0
    %6077 = vadd.xlane.f32.xlu0 %v6076
    %v6078 = vpop.xlane.xlu0 %6077
    %v6079 = vsel %vm243, %v6033, 0.0
    %6080 = vadd.xlane.f32.xlu0 %v6079
    %v6081 = vpop.xlane.xlu0 %6080
    %v6082 = vmul.f32 %v6036, %v2550
    %v6083 = vmul.f32 %v6039, %v2550
    %v6084 = vmul.f32 %v6042, %v2550
    %v6085 = vmul.f32 %v6045, %v2550
    %v6086 = vmul.f32 %v6048, %v2550
    %v6087 = vmul.f32 %v6051, %v2550
    %v6088 = vmul.f32 %v6054, %v2550
    %v6089 = vmul.f32 %v6057, %v2550
    %v6090 = vmul.f32 %v6060, %v2550
    %v6091 = vmul.f32 %v6063, %v2550
    %v6092 = vmul.f32 %v6066, %v2550
    %v6093 = vmul.f32 %v6069, %v2550
    %v6094 = vmul.f32 %v6072, %v2550
    %v6095 = vmul.f32 %v6075, %v2550
    %v6096 = vmul.f32 %v6078, %v2550
    %v6097 = vmul.f32 %v6081, %v2550
    %v6098 = vadd.f32 %v6082, 1e-12
    %v6099 = vadd.f32 %v6083, 1e-12
    %v6100 = vadd.f32 %v6084, 1e-12
    %v6101 = vadd.f32 %v6085, 1e-12
    %v6102 = vadd.f32 %v6086, 1e-12
    %v6103 = vadd.f32 %v6087, 1e-12
    %v6104 = vadd.f32 %v6088, 1e-12
    %v6105 = vadd.f32 %v6089, 1e-12
    %v6106 = vadd.f32 %v6090, 1e-12
    %v6107 = vadd.f32 %v6091, 1e-12
    %v6108 = vadd.f32 %v6092, 1e-12
    %v6109 = vadd.f32 %v6093, 1e-12
    %v6110 = vadd.f32 %v6094, 1e-12
    %v6111 = vadd.f32 %v6095, 1e-12
    %v6112 = vadd.f32 %v6096, 1e-12
    %v6113 = vadd.f32 %v6097, 1e-12
    %v6114 = vrsqrt.pop %v6098
    %v6115 = vmul.f32 %v6114, %v6098
    %v6116 = vmul.f32 %v6115, %v6114
    %v6117 = vmul.f32 0.5, %v6116
    %v6118 = vsub.f32 1.5, %v6117
    %v6119 = vmul.f32 %v6114, %v6118
    %vm6120 = vweird.f32 %v6098
    %vm6121 = vweird.f32 %v6114
    %vm6122 = vmor %vm6120, %vm6121
    %v6123 = vsel %vm6122, %v6114, %v6119
    %v6124 = vrsqrt.pop %v6099
    %v6125 = vmul.f32 %v6124, %v6099
    %v6126 = vmul.f32 %v6125, %v6124
    %v6127 = vmul.f32 0.5, %v6126
    %v6128 = vsub.f32 1.5, %v6127
    %v6129 = vmul.f32 %v6124, %v6128
    %vm6130 = vweird.f32 %v6099
    %vm6131 = vweird.f32 %v6124
    %vm6132 = vmor %vm6130, %vm6131
    %v6133 = vsel %vm6132, %v6124, %v6129
    %v6134 = vrsqrt.pop %v6100
    %v6135 = vmul.f32 %v6134, %v6100
    %v6136 = vmul.f32 %v6135, %v6134
    %v6137 = vmul.f32 0.5, %v6136
    %v6138 = vsub.f32 1.5, %v6137
    %v6139 = vmul.f32 %v6134, %v6138
    %vm6140 = vweird.f32 %v6100
    %vm6141 = vweird.f32 %v6134
    %vm6142 = vmor %vm6140, %vm6141
    %v6143 = vsel %vm6142, %v6134, %v6139
    %v6144 = vrsqrt.pop %v6101
    %v6145 = vmul.f32 %v6144, %v6101
    %v6146 = vmul.f32 %v6145, %v6144
    %v6147 = vmul.f32 0.5, %v6146
    %v6148 = vsub.f32 1.5, %v6147
    %v6149 = vmul.f32 %v6144, %v6148
    %vm6150 = vweird.f32 %v6101
    %vm6151 = vweird.f32 %v6144
    %vm6152 = vmor %vm6150, %vm6151
    %v6153 = vsel %vm6152, %v6144, %v6149
    %v6154 = vrsqrt.pop %v6102
    %v6155 = vmul.f32 %v6154, %v6102
    %v6156 = vmul.f32 %v6155, %v6154
    %v6157 = vmul.f32 0.5, %v6156
    %v6158 = vsub.f32 1.5, %v6157
    %v6159 = vmul.f32 %v6154, %v6158
    %vm6160 = vweird.f32 %v6102
    %vm6161 = vweird.f32 %v6154
    %vm6162 = vmor %vm6160, %vm6161
    %v6163 = vsel %vm6162, %v6154, %v6159
    %v6164 = vrsqrt.pop %v6103
    %v6165 = vmul.f32 %v6164, %v6103
    %v6166 = vmul.f32 %v6165, %v6164
    %v6167 = vmul.f32 0.5, %v6166
    %v6168 = vsub.f32 1.5, %v6167
    %v6169 = vmul.f32 %v6164, %v6168
    %vm6170 = vweird.f32 %v6103
    %vm6171 = vweird.f32 %v6164
    %vm6172 = vmor %vm6170, %vm6171
    %v6173 = vsel %vm6172, %v6164, %v6169
    %v6174 = vrsqrt.pop %v6104
    %v6175 = vmul.f32 %v6174, %v6104
    %v6176 = vmul.f32 %v6175, %v6174
    %v6177 = vmul.f32 0.5, %v6176
    %v6178 = vsub.f32 1.5, %v6177
    %v6179 = vmul.f32 %v6174, %v6178
    %vm6180 = vweird.f32 %v6104
    %vm6181 = vweird.f32 %v6174
    %vm6182 = vmor %vm6180, %vm6181
    %v6183 = vsel %vm6182, %v6174, %v6179
    %v6184 = vrsqrt.pop %v6105
    %v6185 = vmul.f32 %v6184, %v6105
    %v6186 = vmul.f32 %v6185, %v6184
    %v6187 = vmul.f32 0.5, %v6186
    %v6188 = vsub.f32 1.5, %v6187
    %v6189 = vmul.f32 %v6184, %v6188
    %vm6190 = vweird.f32 %v6105
    %vm6191 = vweird.f32 %v6184
    %vm6192 = vmor %vm6190, %vm6191
    %v6193 = vsel %vm6192, %v6184, %v6189
    %v6194 = vrsqrt.pop %v6106
    %v6195 = vmul.f32 %v6194, %v6106
    %v6196 = vmul.f32 %v6195, %v6194
    %v6197 = vmul.f32 0.5, %v6196
    %v6198 = vsub.f32 1.5, %v6197
    %v6199 = vmul.f32 %v6194, %v6198
    %vm6200 = vweird.f32 %v6106
    %vm6201 = vweird.f32 %v6194
    %vm6202 = vmor %vm6200, %vm6201
    %v6203 = vsel %vm6202, %v6194, %v6199
    %v6204 = vrsqrt.pop %v6107
    %v6205 = vmul.f32 %v6204, %v6107
    %v6206 = vmul.f32 %v6205, %v6204
    %v6207 = vmul.f32 0.5, %v6206
    %v6208 = vsub.f32 1.5, %v6207
    %v6209 = vmul.f32 %v6204, %v6208
    %vm6210 = vweird.f32 %v6107
    %vm6211 = vweird.f32 %v6204
    %vm6212 = vmor %vm6210, %vm6211
    %v6213 = vsel %vm6212, %v6204, %v6209
    %v6214 = vrsqrt.pop %v6108
    %v6215 = vmul.f32 %v6214, %v6108
    %v6216 = vmul.f32 %v6215, %v6214
    %v6217 = vmul.f32 0.5, %v6216
    %v6218 = vsub.f32 1.5, %v6217
    %v6219 = vmul.f32 %v6214, %v6218
    %vm6220 = vweird.f32 %v6108
    %vm6221 = vweird.f32 %v6214
    %vm6222 = vmor %vm6220, %vm6221
    %v6223 = vsel %vm6222, %v6214, %v6219
    %v6224 = vrsqrt.pop %v6109
    %v6225 = vmul.f32 %v6224, %v6109
    %v6226 = vmul.f32 %v6225, %v6224
    %v6227 = vmul.f32 0.5, %v6226
    %v6228 = vsub.f32 1.5, %v6227
    %v6229 = vmul.f32 %v6224, %v6228
    %vm6230 = vweird.f32 %v6109
    %vm6231 = vweird.f32 %v6224
    %vm6232 = vmor %vm6230, %vm6231
    %v6233 = vsel %vm6232, %v6224, %v6229
    %v6234 = vrsqrt.pop %v6110
    %v6235 = vmul.f32 %v6234, %v6110
    %v6236 = vmul.f32 %v6235, %v6234
    %v6237 = vmul.f32 0.5, %v6236
    %v6238 = vsub.f32 1.5, %v6237
    %v6239 = vmul.f32 %v6234, %v6238
    %vm6240 = vweird.f32 %v6110
    %vm6241 = vweird.f32 %v6234
    %vm6242 = vmor %vm6240, %vm6241
    %v6243 = vsel %vm6242, %v6234, %v6239
    %v6244 = vrsqrt.pop %v6111
    %v6245 = vmul.f32 %v6244, %v6111
    %v6246 = vmul.f32 %v6245, %v6244
    %v6247 = vmul.f32 0.5, %v6246
    %v6248 = vsub.f32 1.5, %v6247
    %v6249 = vmul.f32 %v6244, %v6248
    %vm6250 = vweird.f32 %v6111
    %vm6251 = vweird.f32 %v6244
    %vm6252 = vmor %vm6250, %vm6251
    %v6253 = vsel %vm6252, %v6244, %v6249
    %v6254 = vrsqrt.pop %v6112
    %v6255 = vmul.f32 %v6254, %v6112
    %v6256 = vmul.f32 %v6255, %v6254
    %v6257 = vmul.f32 0.5, %v6256
    %v6258 = vsub.f32 1.5, %v6257
    %v6259 = vmul.f32 %v6254, %v6258
    %vm6260 = vweird.f32 %v6112
    %vm6261 = vweird.f32 %v6254
    %vm6262 = vmor %vm6260, %vm6261
    %v6263 = vsel %vm6262, %v6254, %v6259
    %v6264 = vrsqrt.pop %v6113
    %v6265 = vmul.f32 %v6264, %v6113
    %v6266 = vmul.f32 %v6265, %v6264
    %v6267 = vmul.f32 0.5, %v6266
    %v6268 = vsub.f32 1.5, %v6267
    %v6269 = vmul.f32 %v6264, %v6268
    %vm6270 = vweird.f32 %v6113
    %vm6271 = vweird.f32 %v6264
    %vm6272 = vmor %vm6270, %vm6271
    %v6273 = vsel %vm6272, %v6264, %v6269
    %v6274 = vmul.f32 %v6002, %v6123
    %v6275 = vmul.f32 %v6003, %v6133
    %v6276 = vmul.f32 %v6004, %v6143
    %v6277 = vmul.f32 %v6005, %v6153
    %v6278 = vmul.f32 %v6006, %v6163
    %v6279 = vmul.f32 %v6007, %v6173
    %v6280 = vmul.f32 %v6008, %v6183
    %v6281 = vmul.f32 %v6009, %v6193
    %v6282 = vmul.f32 %v6010, %v6203
    %v6283 = vmul.f32 %v6011, %v6213
    %v6284 = vmul.f32 %v6012, %v6223
    %v6285 = vmul.f32 %v6013, %v6233
    %v6286 = vmul.f32 %v6014, %v6243
    %v6287 = vmul.f32 %v6015, %v6253
    %v6288 = vmul.f32 %v6016, %v6263
    %v6289 = vmul.f32 %v6017, %v6273
    %v6290 = vperm.slane %v3659, 1
    %v6291 = vmul.f32 %v6274, %v6290
    %v6292 = vmul.f32 %v6275, %v6290
    %v6293 = vmul.f32 %v6276, %v6290
    %v6294 = vmul.f32 %v6277, %v6290
    %v6295 = vmul.f32 %v6278, %v6290
    %v6296 = vmul.f32 %v6279, %v6290
    %v6297 = vmul.f32 %v6280, %v6290
    %v6298 = vmul.f32 %v6281, %v6290
    %v6299 = vmul.f32 %v6282, %v6290
    %v6300 = vmul.f32 %v6283, %v6290
    %v6301 = vmul.f32 %v6284, %v6290
    %v6302 = vmul.f32 %v6285, %v6290
    %v6303 = vmul.f32 %v6286, %v6290
    %v6304 = vmul.f32 %v6287, %v6290
    %v6305 = vmul.f32 %v6288, %v6290
    %v6306 = vmul.f32 %v6289, %v6290
    %v6307 = vperm.slane %v3659, 2
    %v6308 = vadd.f32 %v6291, %v6307
    %v6309 = vadd.f32 %v6292, %v6307
    %v6310 = vadd.f32 %v6293, %v6307
    %v6311 = vadd.f32 %v6294, %v6307
    %v6312 = vadd.f32 %v6295, %v6307
    %v6313 = vadd.f32 %v6296, %v6307
    %v6314 = vadd.f32 %v6297, %v6307
    %v6315 = vadd.f32 %v6298, %v6307
    %v6316 = vadd.f32 %v6299, %v6307
    %v6317 = vadd.f32 %v6300, %v6307
    %v6318 = vadd.f32 %v6301, %v6307
    %v6319 = vadd.f32 %v6302, %v6307
    %v6320 = vadd.f32 %v6303, %v6307
    %v6321 = vadd.f32 %v6304, %v6307
    %v6322 = vadd.f32 %v6305, %v6307
    %v6323 = vadd.f32 %v6306, %v6307
    %v6324 = vpack.c.bf16 %v6309, %v6308
    %v6325 = vpack.c.bf16 %v6311, %v6310
    %v6326 = vpack.c.bf16 %v6313, %v6312
    %v6327 = vpack.c.bf16 %v6315, %v6314
    %v6328 = vpack.c.bf16 %v6317, %v6316
    %v6329 = vpack.c.bf16 %v6319, %v6318
    %v6330 = vpack.c.bf16 %v6321, %v6320
    %v6331 = vpack.c.bf16 %v6323, %v6322
    %s6332 = scalar_lea.vmem %s6, 16
    %v6333 = vld [vmem:[%s6332] sm:$0xf]
    %v6334 = vld [vmem:[%s6332 + $0x4] sm:$0xf]
    %v6335 = vld [vmem:[%s6332 + $0x8] sm:$0xf]
    %v6336 = vld [vmem:[%s6332 + $0xc] sm:$0xf]
    %s6337 = scalar_lea.vmem %s7, 1
    %v6338 = vld [vmem:[%s6337] sm:$0x1]
    %v6340 = vperm.slane %v6338, 0
    %v6346 = vunpack.c.l.b16 %v6333
    %v6347 = vunpack.c.l.b16 %v6334
    %v6348 = vunpack.c.l.b16 %v6335
    %v6349 = vunpack.c.l.b16 %v6336
    %v6350 = vpack.c.b16 %v6347, %v6346
    %v6351 = vpack.c.b16 %v6349, %v6348
    %v6355 = vsel %vm243, %v6324, 0
    %v6358 = vsel %vm243, %v6325, 0
    %v6361 = vsel %vm243, %v6326, 0
    %v6364 = vsel %vm243, %v6327, 0
    %v6367 = vsel %vm243, %v6328, 0
    %v6370 = vsel %vm243, %v6329, 0
    %v6373 = vsel %vm243, %v6330, 0
    %v6376 = vsel %vm243, %v6331, 0
    %6378 = vmatpush.bf16.msra.mxu0 0
    %6379 = vmatpush.bf16.msra.mxu0 0
    %6380 = vmatpush.bf16.msra.mxu0 0
    %6381 = vmatpush.bf16.msra.mxu0 0
    %6382 = vmatpush.bf16.msra.mxu0 0
    %6383 = vmatpush.bf16.msra.mxu0 0
    %6384 = vmatpush.bf16.msra.mxu0 %v6351
    %6385 = vmatpush.bf16.msra.mxu0 %v6350
    %6386 = vmatmul.bf16.gmra.mxu0 %v6355
    %v6387 = vpop.f32.mrf.mxu0
    %v6388 = vadd.f32 %v6340, %v6387
    %v6389 = vpop.f32.mrf.mxu0
    %v6390 = vadd.f32 %v6340, %v6389
    %6391 = vmatmul.bf16.gmra.mxu0 %v6358
    %v6392 = vpop.f32.mrf.mxu0
    %v6393 = vadd.f32 %v6340, %v6392
    %v6394 = vpop.f32.mrf.mxu0
    %v6395 = vadd.f32 %v6340, %v6394
    %6396 = vmatmul.bf16.gmra.mxu0 %v6361
    %v6397 = vpop.f32.mrf.mxu0
    %v6398 = vadd.f32 %v6340, %v6397
    %v6399 = vpop.f32.mrf.mxu0
    %v6400 = vadd.f32 %v6340, %v6399
    %6401 = vmatmul.bf16.gmra.mxu0 %v6364
    %v6402 = vpop.f32.mrf.mxu0
    %v6403 = vadd.f32 %v6340, %v6402
    %v6404 = vpop.f32.mrf.mxu0
    %v6405 = vadd.f32 %v6340, %v6404
    %6406 = vmatmul.bf16.gmra.mxu0 %v6367
    %v6407 = vpop.f32.mrf.mxu0
    %v6408 = vadd.f32 %v6340, %v6407
    %v6409 = vpop.f32.mrf.mxu0
    %v6410 = vadd.f32 %v6340, %v6409
    %6411 = vmatmul.bf16.gmra.mxu0 %v6370
    %v6412 = vpop.f32.mrf.mxu0
    %v6413 = vadd.f32 %v6340, %v6412
    %v6414 = vpop.f32.mrf.mxu0
    %v6415 = vadd.f32 %v6340, %v6414
    %6416 = vmatmul.bf16.gmra.mxu0 %v6373
    %v6417 = vpop.f32.mrf.mxu0
    %v6418 = vadd.f32 %v6340, %v6417
    %v6419 = vpop.f32.mrf.mxu0
    %v6420 = vadd.f32 %v6340, %v6419
    %6421 = vmatmul.bf16.gmra.mxu0 %v6376
    %v6422 = vpop.f32.mrf.mxu0
    %v6423 = vadd.f32 %v6340, %v6422
    %v6424 = vpop.f32.mrf.mxu0
    %v6425 = vadd.f32 %v6340, %v6424
    %6426 = vdwg.mxu0
    %v6427 = vmul.f32 %v6388, %v6388
    %v6428 = vmul.f32 %v6390, %v6390
    %v6429 = vmul.f32 %v6393, %v6393
    %v6430 = vmul.f32 %v6395, %v6395
    %v6431 = vmul.f32 %v6398, %v6398
    %v6432 = vmul.f32 %v6400, %v6400
    %v6433 = vmul.f32 %v6403, %v6403
    %v6434 = vmul.f32 %v6405, %v6405
    %v6435 = vmul.f32 %v6408, %v6408
    %v6436 = vmul.f32 %v6410, %v6410
    %v6437 = vmul.f32 %v6413, %v6413
    %v6438 = vmul.f32 %v6415, %v6415
    %v6439 = vmul.f32 %v6418, %v6418
    %v6440 = vmul.f32 %v6420, %v6420
    %v6441 = vmul.f32 %v6423, %v6423
    %v6442 = vmul.f32 %v6425, %v6425
    %v6443 = vmul.f32 %v6388, %v6427
    %v6444 = vmul.f32 %v6390, %v6428
    %v6445 = vmul.f32 %v6393, %v6429
    %v6446 = vmul.f32 %v6395, %v6430
    %v6447 = vmul.f32 %v6398, %v6431
    %v6448 = vmul.f32 %v6400, %v6432
    %v6449 = vmul.f32 %v6403, %v6433
    %v6450 = vmul.f32 %v6405, %v6434
    %v6451 = vmul.f32 %v6408, %v6435
    %v6452 = vmul.f32 %v6410, %v6436
    %v6453 = vmul.f32 %v6413, %v6437
    %v6454 = vmul.f32 %v6415, %v6438
    %v6455 = vmul.f32 %v6418, %v6439
    %v6456 = vmul.f32 %v6420, %v6440
    %v6457 = vmul.f32 %v6423, %v6441
    %v6458 = vmul.f32 %v6425, %v6442
    %v6459 = vmul.f32 %v6443, 0.044715
    %v6460 = vmul.f32 %v6444, 0.044715
    %v6461 = vmul.f32 %v6445, 0.044715
    %v6462 = vmul.f32 %v6446, 0.044715
    %v6463 = vmul.f32 %v6447, 0.044715
    %v6464 = vmul.f32 %v6448, 0.044715
    %v6465 = vmul.f32 %v6449, 0.044715
    %v6466 = vmul.f32 %v6450, 0.044715
    %v6467 = vmul.f32 %v6451, 0.044715
    %v6468 = vmul.f32 %v6452, 0.044715
    %v6469 = vmul.f32 %v6453, 0.044715
    %v6470 = vmul.f32 %v6454, 0.044715
    %v6471 = vmul.f32 %v6455, 0.044715
    %v6472 = vmul.f32 %v6456, 0.044715
    %v6473 = vmul.f32 %v6457, 0.044715
    %v6474 = vmul.f32 %v6458, 0.044715
    %v6475 = vadd.f32 %v6388, %v6459
    %v6476 = vadd.f32 %v6390, %v6460
    %v6477 = vadd.f32 %v6393, %v6461
    %v6478 = vadd.f32 %v6395, %v6462
    %v6479 = vadd.f32 %v6398, %v6463
    %v6480 = vadd.f32 %v6400, %v6464
    %v6481 = vadd.f32 %v6403, %v6465
    %v6482 = vadd.f32 %v6405, %v6466
    %v6483 = vadd.f32 %v6408, %v6467
    %v6484 = vadd.f32 %v6410, %v6468
    %v6485 = vadd.f32 %v6413, %v6469
    %v6486 = vadd.f32 %v6415, %v6470
    %v6487 = vadd.f32 %v6418, %v6471
    %v6488 = vadd.f32 %v6420, %v6472
    %v6489 = vadd.f32 %v6423, %v6473
    %v6490 = vadd.f32 %v6425, %v6474
    %v6491 = vmul.f32 %v6475, 0.7978846
    %v6492 = vmul.f32 %v6476, 0.7978846
    %v6493 = vmul.f32 %v6477, 0.7978846
    %v6494 = vmul.f32 %v6478, 0.7978846
    %v6495 = vmul.f32 %v6479, 0.7978846
    %v6496 = vmul.f32 %v6480, 0.7978846
    %v6497 = vmul.f32 %v6481, 0.7978846
    %v6498 = vmul.f32 %v6482, 0.7978846
    %v6499 = vmul.f32 %v6483, 0.7978846
    %v6500 = vmul.f32 %v6484, 0.7978846
    %v6501 = vmul.f32 %v6485, 0.7978846
    %v6502 = vmul.f32 %v6486, 0.7978846
    %v6503 = vmul.f32 %v6487, 0.7978846
    %v6504 = vmul.f32 %v6488, 0.7978846
    %v6505 = vmul.f32 %v6489, 0.7978846
    %v6506 = vmul.f32 %v6490, 0.7978846
    %v6507 = vtanh.pop %v6491
    %v6508 = vtanh.pop %v6492
    %v6509 = vtanh.pop %v6493
    %v6510 = vtanh.pop %v6494
    %v6511 = vtanh.pop %v6495
    %v6512 = vtanh.pop %v6496
    %v6513 = vtanh.pop %v6497
    %v6514 = vtanh.pop %v6498
    %v6515 = vtanh.pop %v6499
    %v6516 = vtanh.pop %v6500
    %v6517 = vtanh.pop %v6501
    %v6518 = vtanh.pop %v6502
    %v6519 = vtanh.pop %v6503
    %v6520 = vtanh.pop %v6504
    %v6521 = vtanh.pop %v6505
    %v6522 = vtanh.pop %v6506
    %v6523 = vadd.f32 %v6507, 1.0
    %v6524 = vadd.f32 %v6508, 1.0
    %v6525 = vadd.f32 %v6509, 1.0
    %v6526 = vadd.f32 %v6510, 1.0
    %v6527 = vadd.f32 %v6511, 1.0
    %v6528 = vadd.f32 %v6512, 1.0
    %v6529 = vadd.f32 %v6513, 1.0
    %v6530 = vadd.f32 %v6514, 1.0
    %v6531 = vadd.f32 %v6515, 1.0
    %v6532 = vadd.f32 %v6516, 1.0
    %v6533 = vadd.f32 %v6517, 1.0
    %v6534 = vadd.f32 %v6518, 1.0
    %v6535 = vadd.f32 %v6519, 1.0
    %v6536 = vadd.f32 %v6520, 1.0
    %v6537 = vadd.f32 %v6521, 1.0
    %v6538 = vadd.f32 %v6522, 1.0
    %v6539 = vmul.f32 %v6523, 0.5
    %v6540 = vmul.f32 %v6524, 0.5
    %v6541 = vmul.f32 %v6525, 0.5
    %v6542 = vmul.f32 %v6526, 0.5
    %v6543 = vmul.f32 %v6527, 0.5
    %v6544 = vmul.f32 %v6528, 0.5
    %v6545 = vmul.f32 %v6529, 0.5
    %v6546 = vmul.f32 %v6530, 0.5
    %v6547 = vmul.f32 %v6531, 0.5
    %v6548 = vmul.f32 %v6532, 0.5
    %v6549 = vmul.f32 %v6533, 0.5
    %v6550 = vmul.f32 %v6534, 0.5
    %v6551 = vmul.f32 %v6535, 0.5
    %v6552 = vmul.f32 %v6536, 0.5
    %v6553 = vmul.f32 %v6537, 0.5
    %v6554 = vmul.f32 %v6538, 0.5
    %v6555 = vmul.f32 %v6388, %v6539
    %v6556 = vmul.f32 %v6390, %v6540
    %v6557 = vmul.f32 %v6393, %v6541
    %v6558 = vmul.f32 %v6395, %v6542
    %v6559 = vmul.f32 %v6398, %v6543
    %v6560 = vmul.f32 %v6400, %v6544
    %v6561 = vmul.f32 %v6403, %v6545
    %v6562 = vmul.f32 %v6405, %v6546
    %v6563 = vmul.f32 %v6408, %v6547
    %v6564 = vmul.f32 %v6410, %v6548
    %v6565 = vmul.f32 %v6413, %v6549
    %v6566 = vmul.f32 %v6415, %v6550
    %v6567 = vmul.f32 %v6418, %v6551
    %v6568 = vmul.f32 %v6420, %v6552
    %v6569 = vmul.f32 %v6423, %v6553
    %v6570 = vmul.f32 %v6425, %v6554
    %v6571 = vpack.c.bf16 %v6556, %v6555
    %v6572 = vpack.c.bf16 %v6558, %v6557
    %v6573 = vpack.c.bf16 %v6560, %v6559
    %v6574 = vpack.c.bf16 %v6562, %v6561
    %v6575 = vpack.c.bf16 %v6564, %v6563
    %v6576 = vpack.c.bf16 %v6566, %v6565
    %v6577 = vpack.c.bf16 %v6568, %v6567
    %v6578 = vpack.c.bf16 %v6570, %v6569
    %s6579 = scalar_lea.vmem %s8, 64
    %v6580 = vld [vmem:[%s6579] sm:$0xf]
    %v6581 = vld [vmem:[%s6579 + $0x4] sm:$0xf]
    %v6582 = vld [vmem:[%s6579 + $0x8] sm:$0xf]
    %v6583 = vld [vmem:[%s6579 + $0xc] sm:$0xf]
    %v6584 = vld [vmem:[%s6579 + $0x10] sm:$0xf]
    %v6585 = vld [vmem:[%s6579 + $0x14] sm:$0xf]
    %v6586 = vld [vmem:[%s6579 + $0x18] sm:$0xf]
    %v6587 = vld [vmem:[%s6579 + $0x1c] sm:$0xf]
    %v6588 = vld [vmem:[%s6579 + $0x20] sm:$0xf]
    %v6589 = vld [vmem:[%s6579 + $0x24] sm:$0xf]
    %v6590 = vld [vmem:[%s6579 + $0x28] sm:$0xf]
    %v6591 = vld [vmem:[%s6579 + $0x2c] sm:$0xf]
    %v6592 = vld [vmem:[%s6579 + $0x30] sm:$0xf]
    %v6593 = vld [vmem:[%s6579 + $0x34] sm:$0xf]
    %v6594 = vld [vmem:[%s6579 + $0x38] sm:$0xf]
    %v6595 = vld [vmem:[%s6579 + $0x3c] sm:$0xf]
    %v6596 = vperm.slane %v3659, 3
    %v6613 = vunpack.c.l.b16 %v6580
    %v6614 = vunpack.c.l.b16 %v6581
    %v6615 = vunpack.c.l.b16 %v6582
    %v6616 = vunpack.c.l.b16 %v6583
    %v6617 = vunpack.c.l.b16 %v6584
    %v6618 = vunpack.c.l.b16 %v6585
    %v6619 = vunpack.c.l.b16 %v6586
    %v6620 = vunpack.c.l.b16 %v6587
    %v6621 = vunpack.c.l.b16 %v6588
    %v6622 = vunpack.c.l.b16 %v6589
    %v6623 = vunpack.c.l.b16 %v6590
    %v6624 = vunpack.c.l.b16 %v6591
    %v6625 = vunpack.c.l.b16 %v6592
    %v6626 = vunpack.c.l.b16 %v6593
    %v6627 = vunpack.c.l.b16 %v6594
    %v6628 = vunpack.c.l.b16 %v6595
    %v6629 = vpack.c.b16 %v6614, %v6613
    %v6630 = vpack.c.b16 %v6616, %v6615
    %v6631 = vpack.c.b16 %v6618, %v6617
    %v6632 = vpack.c.b16 %v6620, %v6619
    %v6633 = vpack.c.b16 %v6622, %v6621
    %v6634 = vpack.c.b16 %v6624, %v6623
    %v6635 = vpack.c.b16 %v6626, %v6625
    %v6636 = vpack.c.b16 %v6628, %v6627
    %6645 = vmatpush.bf16.msra.mxu0 %v6636
    %6646 = vmatpush.bf16.msra.mxu0 %v6635
    %6647 = vmatpush.bf16.msra.mxu0 %v6634
    %6648 = vmatpush.bf16.msra.mxu0 %v6633
    %6649 = vmatpush.bf16.msra.mxu0 %v6632
    %6650 = vmatpush.bf16.msra.mxu0 %v6631
    %6651 = vmatpush.bf16.msra.mxu0 %v6630
    %6652 = vmatpush.bf16.msra.mxu0 %v6629
    %6653 = vmatmul.bf16.gmra.mxu0 %v6571
    %v6654 = vpop.f32.mrf.mxu0
    %v6655 = vadd.f32 %v6596, %v6654
    %v6656 = vpop.f32.mrf.mxu0
    %v6657 = vadd.f32 %v6596, %v6656
    %6658 = vmatmul.bf16.gmra.mxu0 %v6572
    %v6659 = vpop.f32.mrf.mxu0
    %v6660 = vadd.f32 %v6596, %v6659
    %v6661 = vpop.f32.mrf.mxu0
    %v6662 = vadd.f32 %v6596, %v6661
    %6663 = vmatmul.bf16.gmra.mxu0 %v6573
    %v6664 = vpop.f32.mrf.mxu0
    %v6665 = vadd.f32 %v6596, %v6664
    %v6666 = vpop.f32.mrf.mxu0
    %v6667 = vadd.f32 %v6596, %v6666
    %6668 = vmatmul.bf16.gmra.mxu0 %v6574
    %v6669 = vpop.f32.mrf.mxu0
    %v6670 = vadd.f32 %v6596, %v6669
    %v6671 = vpop.f32.mrf.mxu0
    %v6672 = vadd.f32 %v6596, %v6671
    %6673 = vmatmul.bf16.gmra.mxu0 %v6575
    %v6674 = vpop.f32.mrf.mxu0
    %v6675 = vadd.f32 %v6596, %v6674
    %v6676 = vpop.f32.mrf.mxu0
    %v6677 = vadd.f32 %v6596, %v6676
    %6678 = vmatmul.bf16.gmra.mxu0 %v6576
    %v6679 = vpop.f32.mrf.mxu0
    %v6680 = vadd.f32 %v6596, %v6679
    %v6681 = vpop.f32.mrf.mxu0
    %v6682 = vadd.f32 %v6596, %v6681
    %6683 = vmatmul.bf16.gmra.mxu0 %v6577
    %v6684 = vpop.f32.mrf.mxu0
    %v6685 = vadd.f32 %v6596, %v6684
    %v6686 = vpop.f32.mrf.mxu0
    %v6687 = vadd.f32 %v6596, %v6686
    %6688 = vmatmul.bf16.gmra.mxu0 %v6578
    %v6689 = vpop.f32.mrf.mxu0
    %v6690 = vadd.f32 %v6596, %v6689
    %v6691 = vpop.f32.mrf.mxu0
    %v6692 = vadd.f32 %v6596, %v6691
    %6693 = vdwg.mxu0
    %v6694 = vadd.f32 %v6308, %v6655
    %v6695 = vadd.f32 %v6309, %v6657
    %v6696 = vadd.f32 %v6310, %v6660
    %v6697 = vadd.f32 %v6311, %v6662
    %v6698 = vadd.f32 %v6312, %v6665
    %v6699 = vadd.f32 %v6313, %v6667
    %v6700 = vadd.f32 %v6314, %v6670
    %v6701 = vadd.f32 %v6315, %v6672
    %v6702 = vadd.f32 %v6316, %v6675
    %v6703 = vadd.f32 %v6317, %v6677
    %v6704 = vadd.f32 %v6318, %v6680
    %v6705 = vadd.f32 %v6319, %v6682
    %v6706 = vadd.f32 %v6320, %v6685
    %v6707 = vadd.f32 %v6321, %v6687
    %v6708 = vadd.f32 %v6322, %v6690
    %v6709 = vadd.f32 %v6323, %v6692
    %v6710 = vsel %vm243, %v6694, 0.0
    %6711 = vadd.xlane.f32.xlu0 %v6710
    %v6712 = vpop.xlane.xlu0 %6711
    %v6713 = vsel %vm243, %v6695, 0.0
    %6714 = vadd.xlane.f32.xlu0 %v6713
    %v6715 = vpop.xlane.xlu0 %6714
    %v6716 = vsel %vm243, %v6696, 0.0
    %6717 = vadd.xlane.f32.xlu0 %v6716
    %v6718 = vpop.xlane.xlu0 %6717
    %v6719 = vsel %vm243, %v6697, 0.0
    %6720 = vadd.xlane.f32.xlu0 %v6719
    %v6721 = vpop.xlane.xlu0 %6720
    %v6722 = vsel %vm243, %v6698, 0.0
    %6723 = vadd.xlane.f32.xlu0 %v6722
    %v6724 = vpop.xlane.xlu0 %6723
    %v6725 = vsel %vm243, %v6699, 0.0
    %6726 = vadd.xlane.f32.xlu0 %v6725
    %v6727 = vpop.xlane.xlu0 %6726
    %v6728 = vsel %vm243, %v6700, 0.0
    %6729 = vadd.xlane.f32.xlu0 %v6728
    %v6730 = vpop.xlane.xlu0 %6729
    %v6731 = vsel %vm243, %v6701, 0.0
    %6732 = vadd.xlane.f32.xlu0 %v6731
    %v6733 = vpop.xlane.xlu0 %6732
    %v6734 = vsel %vm243, %v6702, 0.0
    %6735 = vadd.xlane.f32.xlu0 %v6734
    %v6736 = vpop.xlane.xlu0 %6735
    %v6737 = vsel %vm243, %v6703, 0.0
    %6738 = vadd.xlane.f32.xlu0 %v6737
    %v6739 = vpop.xlane.xlu0 %6738
    %v6740 = vsel %vm243, %v6704, 0.0
    %6741 = vadd.xlane.f32.xlu0 %v6740
    %v6742 = vpop.xlane.xlu0 %6741
    %v6743 = vsel %vm243, %v6705, 0.0
    %6744 = vadd.xlane.f32.xlu0 %v6743
    %v6745 = vpop.xlane.xlu0 %6744
    %v6746 = vsel %vm243, %v6706, 0.0
    %6747 = vadd.xlane.f32.xlu0 %v6746
    %v6748 = vpop.xlane.xlu0 %6747
    %v6749 = vsel %vm243, %v6707, 0.0
    %6750 = vadd.xlane.f32.xlu0 %v6749
    %v6751 = vpop.xlane.xlu0 %6750
    %v6752 = vsel %vm243, %v6708, 0.0
    %6753 = vadd.xlane.f32.xlu0 %v6752
    %v6754 = vpop.xlane.xlu0 %6753
    %v6755 = vsel %vm243, %v6709, 0.0
    %6756 = vadd.xlane.f32.xlu0 %v6755
    %v6757 = vpop.xlane.xlu0 %6756
    %v6758 = vmul.f32 %v6712, %v2550
    %v6759 = vmul.f32 %v6715, %v2550
    %v6760 = vmul.f32 %v6718, %v2550
    %v6761 = vmul.f32 %v6721, %v2550
    %v6762 = vmul.f32 %v6724, %v2550
    %v6763 = vmul.f32 %v6727, %v2550
    %v6764 = vmul.f32 %v6730, %v2550
    %v6765 = vmul.f32 %v6733, %v2550
    %v6766 = vmul.f32 %v6736, %v2550
    %v6767 = vmul.f32 %v6739, %v2550
    %v6768 = vmul.f32 %v6742, %v2550
    %v6769 = vmul.f32 %v6745, %v2550
    %v6770 = vmul.f32 %v6748, %v2550
    %v6771 = vmul.f32 %v6751, %v2550
    %v6772 = vmul.f32 %v6754, %v2550
    %v6773 = vmul.f32 %v6757, %v2550
    %v6774 = vsub.f32 %v6694, %v6758
    %v6775 = vsub.f32 %v6695, %v6759
    %v6776 = vsub.f32 %v6696, %v6760
    %v6777 = vsub.f32 %v6697, %v6761
    %v6778 = vsub.f32 %v6698, %v6762
    %v6779 = vsub.f32 %v6699, %v6763
    %v6780 = vsub.f32 %v6700, %v6764
    %v6781 = vsub.f32 %v6701, %v6765
    %v6782 = vsub.f32 %v6702, %v6766
    %v6783 = vsub.f32 %v6703, %v6767
    %v6784 = vsub.f32 %v6704, %v6768
    %v6785 = vsub.f32 %v6705, %v6769
    %v6786 = vsub.f32 %v6706, %v6770
    %v6787 = vsub.f32 %v6707, %v6771
    %v6788 = vsub.f32 %v6708, %v6772
    %v6789 = vsub.f32 %v6709, %v6773
    %v6790 = vmul.f32 %v6774, %v6774
    %v6791 = vmul.f32 %v6775, %v6775
    %v6792 = vmul.f32 %v6776, %v6776
    %v6793 = vmul.f32 %v6777, %v6777
    %v6794 = vmul.f32 %v6778, %v6778
    %v6795 = vmul.f32 %v6779, %v6779
    %v6796 = vmul.f32 %v6780, %v6780
    %v6797 = vmul.f32 %v6781, %v6781
    %v6798 = vmul.f32 %v6782, %v6782
    %v6799 = vmul.f32 %v6783, %v6783
    %v6800 = vmul.f32 %v6784, %v6784
    %v6801 = vmul.f32 %v6785, %v6785
    %v6802 = vmul.f32 %v6786, %v6786
    %v6803 = vmul.f32 %v6787, %v6787
    %v6804 = vmul.f32 %v6788, %v6788
    %v6805 = vmul.f32 %v6789, %v6789
    %v6806 = vsel %vm243, %v6790, 0.0
    %6807 = vadd.xlane.f32.xlu0 %v6806
    %v6808 = vpop.xlane.xlu0 %6807
    %v6809 = vsel %vm243, %v6791, 0.0
    %6810 = vadd.xlane.f32.xlu0 %v6809
    %v6811 = vpop.xlane.xlu0 %6810
    %v6812 = vsel %vm243, %v6792, 0.0
    %6813 = vadd.xlane.f32.xlu0 %v6812
    %v6814 = vpop.xlane.xlu0 %6813
    %v6815 = vsel %vm243, %v6793, 0.0
    %6816 = vadd.xlane.f32.xlu0 %v6815
    %v6817 = vpop.xlane.xlu0 %6816
    %v6818 = vsel %vm243, %v6794, 0.0
    %6819 = vadd.xlane.f32.xlu0 %v6818
    %v6820 = vpop.xlane.xlu0 %6819
    %v6821 = vsel %vm243, %v6795, 0.0
    %6822 = vadd.xlane.f32.xlu0 %v6821
    %v6823 = vpop.xlane.xlu0 %6822
    %v6824 = vsel %vm243, %v6796, 0.0
    %6825 = vadd.xlane.f32.xlu0 %v6824
    %v6826 = vpop.xlane.xlu0 %6825
    %v6827 = vsel %vm243, %v6797, 0.0
    %6828 = vadd.xlane.f32.xlu0 %v6827
    %v6829 = vpop.xlane.xlu0 %6828
    %v6830 = vsel %vm243, %v6798, 0.0
    %6831 = vadd.xlane.f32.xlu0 %v6830
    %v6832 = vpop.xlane.xlu0 %6831
    %v6833 = vsel %vm243, %v6799, 0.0
    %6834 = vadd.xlane.f32.xlu0 %v6833
    %v6835 = vpop.xlane.xlu0 %6834
    %v6836 = vsel %vm243, %v6800, 0.0
    %6837 = vadd.xlane.f32.xlu0 %v6836
    %v6838 = vpop.xlane.xlu0 %6837
    %v6839 = vsel %vm243, %v6801, 0.0
    %6840 = vadd.xlane.f32.xlu0 %v6839
    %v6841 = vpop.xlane.xlu0 %6840
    %v6842 = vsel %vm243, %v6802, 0.0
    %6843 = vadd.xlane.f32.xlu0 %v6842
    %v6844 = vpop.xlane.xlu0 %6843
    %v6845 = vsel %vm243, %v6803, 0.0
    %6846 = vadd.xlane.f32.xlu0 %v6845
    %v6847 = vpop.xlane.xlu0 %6846
    %v6848 = vsel %vm243, %v6804, 0.0
    %6849 = vadd.xlane.f32.xlu0 %v6848
    %v6850 = vpop.xlane.xlu0 %6849
    %v6851 = vsel %vm243, %v6805, 0.0
    %6852 = vadd.xlane.f32.xlu0 %v6851
    %v6853 = vpop.xlane.xlu0 %6852
    %v6854 = vmul.f32 %v6808, %v2550
    %v6855 = vmul.f32 %v6811, %v2550
    %v6856 = vmul.f32 %v6814, %v2550
    %v6857 = vmul.f32 %v6817, %v2550
    %v6858 = vmul.f32 %v6820, %v2550
    %v6859 = vmul.f32 %v6823, %v2550
    %v6860 = vmul.f32 %v6826, %v2550
    %v6861 = vmul.f32 %v6829, %v2550
    %v6862 = vmul.f32 %v6832, %v2550
    %v6863 = vmul.f32 %v6835, %v2550
    %v6864 = vmul.f32 %v6838, %v2550
    %v6865 = vmul.f32 %v6841, %v2550
    %v6866 = vmul.f32 %v6844, %v2550
    %v6867 = vmul.f32 %v6847, %v2550
    %v6868 = vmul.f32 %v6850, %v2550
    %v6869 = vmul.f32 %v6853, %v2550
    %v6870 = vadd.f32 %v6854, 1e-12
    %v6871 = vadd.f32 %v6855, 1e-12
    %v6872 = vadd.f32 %v6856, 1e-12
    %v6873 = vadd.f32 %v6857, 1e-12
    %v6874 = vadd.f32 %v6858, 1e-12
    %v6875 = vadd.f32 %v6859, 1e-12
    %v6876 = vadd.f32 %v6860, 1e-12
    %v6877 = vadd.f32 %v6861, 1e-12
    %v6878 = vadd.f32 %v6862, 1e-12
    %v6879 = vadd.f32 %v6863, 1e-12
    %v6880 = vadd.f32 %v6864, 1e-12
    %v6881 = vadd.f32 %v6865, 1e-12
    %v6882 = vadd.f32 %v6866, 1e-12
    %v6883 = vadd.f32 %v6867, 1e-12
    %v6884 = vadd.f32 %v6868, 1e-12
    %v6885 = vadd.f32 %v6869, 1e-12
    %v6886 = vrsqrt.pop %v6870
    %v6887 = vmul.f32 %v6886, %v6870
    %v6888 = vmul.f32 %v6887, %v6886
    %v6889 = vmul.f32 0.5, %v6888
    %v6890 = vsub.f32 1.5, %v6889
    %v6891 = vmul.f32 %v6886, %v6890
    %vm6892 = vweird.f32 %v6870
    %vm6893 = vweird.f32 %v6886
    %vm6894 = vmor %vm6892, %vm6893
    %v6895 = vsel %vm6894, %v6886, %v6891
    %v6896 = vrsqrt.pop %v6871
    %v6897 = vmul.f32 %v6896, %v6871
    %v6898 = vmul.f32 %v6897, %v6896
    %v6899 = vmul.f32 0.5, %v6898
    %v6900 = vsub.f32 1.5, %v6899
    %v6901 = vmul.f32 %v6896, %v6900
    %vm6902 = vweird.f32 %v6871
    %vm6903 = vweird.f32 %v6896
    %vm6904 = vmor %vm6902, %vm6903
    %v6905 = vsel %vm6904, %v6896, %v6901
    %v6906 = vrsqrt.pop %v6872
    %v6907 = vmul.f32 %v6906, %v6872
    %v6908 = vmul.f32 %v6907, %v6906
    %v6909 = vmul.f32 0.5, %v6908
    %v6910 = vsub.f32 1.5, %v6909
    %v6911 = vmul.f32 %v6906, %v6910
    %vm6912 = vweird.f32 %v6872
    %vm6913 = vweird.f32 %v6906
    %vm6914 = vmor %vm6912, %vm6913
    %v6915 = vsel %vm6914, %v6906, %v6911
    %v6916 = vrsqrt.pop %v6873
    %v6917 = vmul.f32 %v6916, %v6873
    %v6918 = vmul.f32 %v6917, %v6916
    %v6919 = vmul.f32 0.5, %v6918
    %v6920 = vsub.f32 1.5, %v6919
    %v6921 = vmul.f32 %v6916, %v6920
    %vm6922 = vweird.f32 %v6873
    %vm6923 = vweird.f32 %v6916
    %vm6924 = vmor %vm6922, %vm6923
    %v6925 = vsel %vm6924, %v6916, %v6921
    %v6926 = vrsqrt.pop %v6874
    %v6927 = vmul.f32 %v6926, %v6874
    %v6928 = vmul.f32 %v6927, %v6926
    %v6929 = vmul.f32 0.5, %v6928
    %v6930 = vsub.f32 1.5, %v6929
    %v6931 = vmul.f32 %v6926, %v6930
    %vm6932 = vweird.f32 %v6874
    %vm6933 = vweird.f32 %v6926
    %vm6934 = vmor %vm6932, %vm6933
    %v6935 = vsel %vm6934, %v6926, %v6931
    %v6936 = vrsqrt.pop %v6875
    %v6937 = vmul.f32 %v6936, %v6875
    %v6938 = vmul.f32 %v6937, %v6936
    %v6939 = vmul.f32 0.5, %v6938
    %v6940 = vsub.f32 1.5, %v6939
    %v6941 = vmul.f32 %v6936, %v6940
    %vm6942 = vweird.f32 %v6875
    %vm6943 = vweird.f32 %v6936
    %vm6944 = vmor %vm6942, %vm6943
    %v6945 = vsel %vm6944, %v6936, %v6941
    %v6946 = vrsqrt.pop %v6876
    %v6947 = vmul.f32 %v6946, %v6876
    %v6948 = vmul.f32 %v6947, %v6946
    %v6949 = vmul.f32 0.5, %v6948
    %v6950 = vsub.f32 1.5, %v6949
    %v6951 = vmul.f32 %v6946, %v6950
    %vm6952 = vweird.f32 %v6876
    %vm6953 = vweird.f32 %v6946
    %vm6954 = vmor %vm6952, %vm6953
    %v6955 = vsel %vm6954, %v6946, %v6951
    %v6956 = vrsqrt.pop %v6877
    %v6957 = vmul.f32 %v6956, %v6877
    %v6958 = vmul.f32 %v6957, %v6956
    %v6959 = vmul.f32 0.5, %v6958
    %v6960 = vsub.f32 1.5, %v6959
    %v6961 = vmul.f32 %v6956, %v6960
    %vm6962 = vweird.f32 %v6877
    %vm6963 = vweird.f32 %v6956
    %vm6964 = vmor %vm6962, %vm6963
    %v6965 = vsel %vm6964, %v6956, %v6961
    %v6966 = vrsqrt.pop %v6878
    %v6967 = vmul.f32 %v6966, %v6878
    %v6968 = vmul.f32 %v6967, %v6966
    %v6969 = vmul.f32 0.5, %v6968
    %v6970 = vsub.f32 1.5, %v6969
    %v6971 = vmul.f32 %v6966, %v6970
    %vm6972 = vweird.f32 %v6878
    %vm6973 = vweird.f32 %v6966
    %vm6974 = vmor %vm6972, %vm6973
    %v6975 = vsel %vm6974, %v6966, %v6971
    %v6976 = vrsqrt.pop %v6879
    %v6977 = vmul.f32 %v6976, %v6879
    %v6978 = vmul.f32 %v6977, %v6976
    %v6979 = vmul.f32 0.5, %v6978
    %v6980 = vsub.f32 1.5, %v6979
    %v6981 = vmul.f32 %v6976, %v6980
    %vm6982 = vweird.f32 %v6879
    %vm6983 = vweird.f32 %v6976
    %vm6984 = vmor %vm6982, %vm6983
    %v6985 = vsel %vm6984, %v6976, %v6981
    %v6986 = vrsqrt.pop %v6880
    %v6987 = vmul.f32 %v6986, %v6880
    %v6988 = vmul.f32 %v6987, %v6986
    %v6989 = vmul.f32 0.5, %v6988
    %v6990 = vsub.f32 1.5, %v6989
    %v6991 = vmul.f32 %v6986, %v6990
    %vm6992 = vweird.f32 %v6880
    %vm6993 = vweird.f32 %v6986
    %vm6994 = vmor %vm6992, %vm6993
    %v6995 = vsel %vm6994, %v6986, %v6991
    %v6996 = vrsqrt.pop %v6881
    %v6997 = vmul.f32 %v6996, %v6881
    %v6998 = vmul.f32 %v6997, %v6996
    %v6999 = vmul.f32 0.5, %v6998
    %v7000 = vsub.f32 1.5, %v6999
    %v7001 = vmul.f32 %v6996, %v7000
    %vm7002 = vweird.f32 %v6881
    %vm7003 = vweird.f32 %v6996
    %vm7004 = vmor %vm7002, %vm7003
    %v7005 = vsel %vm7004, %v6996, %v7001
    %v7006 = vrsqrt.pop %v6882
    %v7007 = vmul.f32 %v7006, %v6882
    %v7008 = vmul.f32 %v7007, %v7006
    %v7009 = vmul.f32 0.5, %v7008
    %v7010 = vsub.f32 1.5, %v7009
    %v7011 = vmul.f32 %v7006, %v7010
    %vm7012 = vweird.f32 %v6882
    %vm7013 = vweird.f32 %v7006
    %vm7014 = vmor %vm7012, %vm7013
    %v7015 = vsel %vm7014, %v7006, %v7011
    %v7016 = vrsqrt.pop %v6883
    %v7017 = vmul.f32 %v7016, %v6883
    %v7018 = vmul.f32 %v7017, %v7016
    %v7019 = vmul.f32 0.5, %v7018
    %v7020 = vsub.f32 1.5, %v7019
    %v7021 = vmul.f32 %v7016, %v7020
    %vm7022 = vweird.f32 %v6883
    %vm7023 = vweird.f32 %v7016
    %vm7024 = vmor %vm7022, %vm7023
    %v7025 = vsel %vm7024, %v7016, %v7021
    %v7026 = vrsqrt.pop %v6884
    %v7027 = vmul.f32 %v7026, %v6884
    %v7028 = vmul.f32 %v7027, %v7026
    %v7029 = vmul.f32 0.5, %v7028
    %v7030 = vsub.f32 1.5, %v7029
    %v7031 = vmul.f32 %v7026, %v7030
    %vm7032 = vweird.f32 %v6884
    %vm7033 = vweird.f32 %v7026
    %vm7034 = vmor %vm7032, %vm7033
    %v7035 = vsel %vm7034, %v7026, %v7031
    %v7036 = vrsqrt.pop %v6885
    %v7037 = vmul.f32 %v7036, %v6885
    %v7038 = vmul.f32 %v7037, %v7036
    %v7039 = vmul.f32 0.5, %v7038
    %v7040 = vsub.f32 1.5, %v7039
    %v7041 = vmul.f32 %v7036, %v7040
    %vm7042 = vweird.f32 %v6885
    %vm7043 = vweird.f32 %v7036
    %vm7044 = vmor %vm7042, %vm7043
    %v7045 = vsel %vm7044, %v7036, %v7041
    %v7046 = vmul.f32 %v6774, %v6895
    %v7047 = vmul.f32 %v6775, %v6905
    %v7048 = vmul.f32 %v6776, %v6915
    %v7049 = vmul.f32 %v6777, %v6925
    %v7050 = vmul.f32 %v6778, %v6935
    %v7051 = vmul.f32 %v6779, %v6945
    %v7052 = vmul.f32 %v6780, %v6955
    %v7053 = vmul.f32 %v6781, %v6965
    %v7054 = vmul.f32 %v6782, %v6975
    %v7055 = vmul.f32 %v6783, %v6985
    %v7056 = vmul.f32 %v6784, %v6995
    %v7057 = vmul.f32 %v6785, %v7005
    %v7058 = vmul.f32 %v6786, %v7015
    %v7059 = vmul.f32 %v6787, %v7025
    %v7060 = vmul.f32 %v6788, %v7035
    %v7061 = vmul.f32 %v6789, %v7045
    %v7062 = vperm.slane %v3659, 4
    %v7063 = vmul.f32 %v7046, %v7062
    %v7064 = vmul.f32 %v7047, %v7062
    %v7065 = vmul.f32 %v7048, %v7062
    %v7066 = vmul.f32 %v7049, %v7062
    %v7067 = vmul.f32 %v7050, %v7062
    %v7068 = vmul.f32 %v7051, %v7062
    %v7069 = vmul.f32 %v7052, %v7062
    %v7070 = vmul.f32 %v7053, %v7062
    %v7071 = vmul.f32 %v7054, %v7062
    %v7072 = vmul.f32 %v7055, %v7062
    %v7073 = vmul.f32 %v7056, %v7062
    %v7074 = vmul.f32 %v7057, %v7062
    %v7075 = vmul.f32 %v7058, %v7062
    %v7076 = vmul.f32 %v7059, %v7062
    %v7077 = vmul.f32 %v7060, %v7062
    %v7078 = vmul.f32 %v7061, %v7062
    %v7079 = vperm.slane %v3659, 5
    %v7080 = vadd.f32 %v7063, %v7079
    %v7081 = vadd.f32 %v7064, %v7079
    %v7082 = vadd.f32 %v7065, %v7079
    %v7083 = vadd.f32 %v7066, %v7079
    %v7084 = vadd.f32 %v7067, %v7079
    %v7085 = vadd.f32 %v7068, %v7079
    %v7086 = vadd.f32 %v7069, %v7079
    %v7087 = vadd.f32 %v7070, %v7079
    %v7088 = vadd.f32 %v7071, %v7079
    %v7089 = vadd.f32 %v7072, %v7079
    %v7090 = vadd.f32 %v7073, %v7079
    %v7091 = vadd.f32 %v7074, %v7079
    %v7092 = vadd.f32 %v7075, %v7079
    %v7093 = vadd.f32 %v7076, %v7079
    %v7094 = vadd.f32 %v7077, %v7079
    %v7095 = vadd.f32 %v7078, %v7079
    %v7096 = vsel %vm243, %v7080, 0.0
    %v7097 = vsel %vm243, %v7081, 0.0
    %v7098 = vadd.f32 %v7096, %v7097
    %v7099 = vsel %vm243, %v7082, 0.0
    %v7100 = vadd.f32 %v7098, %v7099
    %v7101 = vsel %vm243, %v7083, 0.0
    %v7102 = vadd.f32 %v7100, %v7101
    %v7103 = vsel %vm243, %v7084, 0.0
    %v7104 = vadd.f32 %v7102, %v7103
    %v7105 = vsel %vm243, %v7085, 0.0
    %v7106 = vadd.f32 %v7104, %v7105
    %v7107 = vsel %vm243, %v7086, 0.0
    %v7108 = vadd.f32 %v7106, %v7107
    %v7109 = vsel %vm243, %v7087, 0.0
    %v7110 = vadd.f32 %v7108, %v7109
    %v7111 = vrot.slane %v7110, 4
    %v7112 = vadd.f32 %v7110, %v7111
    %v7113 = vrot.slane %v7112, 2
    %v7114 = vadd.f32 %v7112, %v7113
    %v7115 = vrot.slane %v7114, 1
    %v7116 = vadd.f32 %v7114, %v7115
    %v7117 = vsel %vm243, %v7088, 0.0
    %v7118 = vsel %vm243, %v7089, 0.0
    %v7119 = vadd.f32 %v7117, %v7118
    %v7120 = vsel %vm243, %v7090, 0.0
    %v7121 = vadd.f32 %v7119, %v7120
    %v7122 = vsel %vm243, %v7091, 0.0
    %v7123 = vadd.f32 %v7121, %v7122
    %v7124 = vsel %vm243, %v7092, 0.0
    %v7125 = vadd.f32 %v7123, %v7124
    %v7126 = vsel %vm243, %v7093, 0.0
    %v7127 = vadd.f32 %v7125, %v7126
    %v7128 = vsel %vm243, %v7094, 0.0
    %v7129 = vadd.f32 %v7127, %v7128
    %v7130 = vsel %vm243, %v7095, 0.0
    %v7131 = vadd.f32 %v7129, %v7130
    %v7132 = vrot.slane %v7131, 4
    %v7133 = vadd.f32 %v7131, %v7132
    %v7134 = vrot.slane %v7133, 2
    %v7135 = vadd.f32 %v7133, %v7134
    %v7136 = vrot.slane %v7135, 1
    %v7137 = vadd.f32 %v7135, %v7136
    %v7138 = vrcp.pop 64.0
    %v7139 = vmul.f32 64.0, %v7138
    %v7140 = vsub.f32 1.0, %v7139
    %v7141 = vmul.f32 %v7138, %v7140
    %v7142 = vadd.f32 %v7138, %v7141
    %vm7143 = vweird.f32 %v7138
    %v7144 = vsel %vm7143, %v7138, %v7142
    %v7145 = vmul.f32 %v7116, %v7144
    %v7146 = vmul.f32 %v7137, %v7144
    %v7147 = vpack.c.bf16 %v7145, %v7145
    %v7148 = vpack.c.bf16 %v7146, %v7146
    %v7149 = vld [vmem:[%s10] sm:$0xf]
    %v7150 = vld [vmem:[%s10 + $0x4] sm:$0xf]
    %v7151 = vld [vmem:[%s10 + $0x8] sm:$0xf]
    %v7152 = vld [vmem:[%s10 + $0xc] sm:$0xf]
    %v7153 = vld [vmem:[%s11] sm:$0x1]
    %v7155 = vperm.slane %v7153, 0
    %v7159 = vunpack.c.l.b16 %v7147
    %v7160 = vunpack.c.l.b16 %v7148
    %vm7161 = vcmask 1041409
    %v7162 = vsel %vm7161, %v7160, %v7159
    %v7163 = vpack.c.b16 %v7162, %v7162
    %v7168 = vunpack.c.l.b16 %v7149
    %v7169 = vunpack.c.l.b16 %v7150
    %v7170 = vunpack.c.l.b16 %v7151
    %v7171 = vunpack.c.l.b16 %v7152
    %v7172 = vpack.c.b16 %v7169, %v7168
    %v7173 = vpack.c.b16 %v7171, %v7170
    %v7177 = vsel %vm243, %v7163, 0
    %7179 = vmatpush.bf16.msra.mxu0 0
    %7180 = vmatpush.bf16.msra.mxu0 0
    %7181 = vmatpush.bf16.msra.mxu0 0
    %7182 = vmatpush.bf16.msra.mxu0 0
    %7183 = vmatpush.bf16.msra.mxu0 0
    %7184 = vmatpush.bf16.msra.mxu0 0
    %7185 = vmatpush.bf16.msra.mxu0 %v7173
    %7186 = vmatpush.bf16.msra.mxu0 %v7172
    %7187 = vmatmul.bf16.gmra.mxu0 %v7177
    %v7188 = vpop.f32.mrf.mxu0
    %v7189 = vadd.f32 %v7155, %v7188
    %v7190 = vpop.f32.mrf.mxu0
    %7191 = vdwg.mxu0
    %7192 = vst [vmem:[#allocation2] sm:$0x3] %v7189
    // Predicated region
    $region50: #{vot_forward.1} parent=1 // pred_check
      _
    $region51: #{vot_forward.1} parent=1 // pred_check_branch
      %7194 = sbr.rel (0) target = $region53
    $region52: #{vot_forward.1} parent=1 // pred_region
      %7196 = vsyncadd [#allocation3], 0
      %s7198 = sshll.u32 [#allocation2], 4
      %s7199 = int_to_ptr.vmem [resolvable:$true] %s7198
      %s7200 = sshll.u32 %s12, 4
      %s7201 = int_to_ptr.hbm [resolvable:$true] %s7200
      %7203 = dma.vmem_to_hbm [thread:$0]  %s7199, 32, %s7201, [#allocation3]
    $region53: #{vot_forward.1} parent=1 // pred_fallthru
      _
    // Predicated region
    $region54: #{vot_forward.1} parent=1 // pred_check
      _
    $region55: #{vot_forward.1} parent=1 // pred_check_branch
      %7205 = sbr.rel (0) target = $region57
    $region56: #{vot_forward.1} parent=1 // pred_region
      %7207 = dma.done [#allocation3], 32
    $region57: #{vot_forward.1} parent=1 // pred_fallthru
      _
    %7208 = vsyncpa [#allocation3], 1

</llo_original>
